<compile_context>
chip_gen: v7x
topology: tpu7x:2x2x1
jax: 0.10.0
libtpu: 0.0.40
codegen_flags: <defaults>
</compile_context>

<pallas_src>
import jax
import jax.numpy as jnp
from jax import lax
from jax.experimental import pallas as pl
from jax.experimental.pallas import tpu as pltpu

# ----------------------------- model configuration -----------------------------
V = 50            # num_embeddings
D = 32            # embedding dim
C = 4             # num classes
Co = 8            # conv output channels per kernel size
Ks = (3, 4, 5)    # conv kernel heights
L = 16            # sequence length (power of two -> row%L is a bitwise AND)
B = 2             # example batch used in __main__

K_MAX = max(Ks)
MAX_PAD = max((K - 1) // 2 for K in Ks)
F_DIM = len(Ks) * Co              # 24 concatenated pooled channels
FC_PAD = 128                      # FC output padded to a full lane width (unmasked store)

TILE_B = 8                        # sequences per grid step (multiple of 8 sublanes)
TILE_ROWS = TILE_B * L            # 128 token rows per grid step

assert L & (L - 1) == 0, "L must be a power of two for the cheap row%L mask"
HIGH = lax.Precision.HIGHEST


# ----------------------------------- kernel -----------------------------------
def _kernel(tok_ref, emb_w_ref, wf_ref, conv_b_ref, fcw_ref, fcb_ref, out_ref):
    # ---- embedding gather: one-hot [TILE_ROWS, V] @ embed_w, all on the MXU ----
    tok = tok_ref[...]                                               # [TILE_ROWS, 1] int32
    vocab_iota = lax.broadcasted_iota(jnp.int32, (TILE_ROWS, V), 1)
    onehot = (vocab_iota == tok).astype(jnp.float32)                 # exact 0/1 selection
    emb = jnp.dot(onehot, emb_w_ref[...],
                  preferred_element_type=jnp.float32, precision=HIGH)  # [TILE_ROWS, D]

    # position of each row inside its sequence
    l_ids = lax.broadcasted_iota(jnp.int32, (TILE_ROWS, D), 0) & (L - 1)

    # ---- fused conv: K_MAX sublane-aligned accumulated matmuls, taps via XLU roll ----
    wf = wf_ref[...]                                                 # [K_MAX*D, F_DIM]
    acc = jnp.zeros((TILE_ROWS, F_DIM), jnp.float32)
    for k in range(K_MAX):
        shift = k - MAX_PAD                                          # -2 .. +2
        if shift == 0:
            tap = emb
        else:
            # tap[row] = emb[row + shift]; rows whose in-sequence position falls outside
            # [0, L) are zeroed -> this mask IS the Conv2d zero padding (and kills the
            # cyclic wraparound of the roll).
            tap = pltpu.roll(emb, (-shift) % TILE_ROWS, axis=0)      # sublane rotate (XLU)
            valid = (l_ids + shift >= 0) & (l_ids + shift < L)
            tap = jnp.where(valid, tap, 0.0)
        acc = acc + jnp.dot(tap, wf[k * D:(k + 1) * D, :],           # 32-row aligned slice
                            preferred_element_type=jnp.float32, precision=HIGH)

    conv = jnp.maximum(acc + conv_b_ref[...], 0.0)                   # bias + ReLU

    # branches with L_out < L (even K): zero their spurious trailing rows before the max.
    # Exact because post-ReLU values are >= 0.
    out_l = lax.broadcasted_iota(jnp.int32, (TILE_ROWS, F_DIM), 0) & (L - 1)
    col_ids = lax.broadcasted_iota(jnp.int32, (TILE_ROWS, F_DIM), 1)
    for i, K in enumerate(Ks):
        l_out_i = L + 2 * ((K - 1) // 2) - K + 1
        if l_out_i < L:
            bad = (out_l >= l_out_i) & (col_ids >= i * Co) & (col_ids < (i + 1) * Co)
            conv = jnp.where(bad, 0.0, conv)

    # global max-pool over the sequence axis (clean multiple-of-8 sublane split)
    feat = jnp.max(conv.reshape(TILE_B, L, F_DIM), axis=1)           # [TILE_B, F_DIM]

    # dropout == identity (eval mode) -> Linear.  FC weight/bias are padded to 128
    # output lanes so this is a single unmasked lane-dense store.
    out_ref[...] = (jnp.dot(feat, fcw_ref[...],
                            preferred_element_type=jnp.float32, precision=HIGH)
                    + fcb_ref[...])


# ----------------------------------- wrapper -----------------------------------
@jax.jit
def textcnn_forward(tokens, embed_w, w_fused, conv_bias, fc_w_pad, fc_b_pad):
    """tokens: [B, L] int32.  Returns logits [B, C] float32."""
    Bx = tokens.shape[0]
    n_tiles = pl.cdiv(Bx, TILE_B)
    B_pad = n_tiles * TILE_B

    tok = jnp.zeros((B_pad, L), jnp.int32).at[:Bx].set(tokens.astype(jnp.int32))
    tok2d = tok.reshape(B_pad * L, 1)

    const = lambda i: (0, 0)      # weights stay VMEM-resident across grid steps

    flops = n_tiles * (2 * TILE_ROWS * V * D
                       + 2 * K_MAX * TILE_ROWS * D * F_DIM
                       + 2 * TILE_B * F_DIM * FC_PAD)
    bytes_accessed = 4 * (V * D + K_MAX * D * F_DIM + F_DIM
                          + F_DIM * FC_PAD + FC_PAD
                          + B_pad * L + B_pad * FC_PAD)

    out = pl.pallas_call(
        _kernel,
        out_shape=jax.ShapeDtypeStruct((B_pad, FC_PAD), jnp.float32),
        grid_spec=pltpu.PrefetchScalarGridSpec(
            num_scalar_prefetch=0,
            grid=(n_tiles,),
            in_specs=[
                pl.BlockSpec((TILE_ROWS, 1), lambda i: (i, 0)),      # tokens: streamed
                pl.BlockSpec((V, D), const),                         # embed_w: resident
                pl.BlockSpec((K_MAX * D, F_DIM), const),             # fused conv weight
                pl.BlockSpec((1, F_DIM), const),                     # conv biases
                pl.BlockSpec((F_DIM, FC_PAD), const),                # fc weight (lane-padded)
                pl.BlockSpec((1, FC_PAD), const),                    # fc bias (lane-padded)
            ],
            out_specs=pl.BlockSpec((TILE_B, FC_PAD), lambda i: (i, 0)),
        ),
        compiler_params=pltpu.CompilerParams(
            dimension_semantics=("parallel",)),        # shards grid across v7x's 2 TCs
        cost_estimate=pl.CostEstimate(flops=flops, transcendentals=0,
                                      bytes_accessed=bytes_accessed),
    )(tok2d, embed_w, w_fused, conv_bias, fc_w_pad, fc_b_pad)

    return out[:Bx, :C]


# --------------------------- parameters / reference ---------------------------
def init_params(key):
    """Deterministic synthetic parameters matching the PyTorch module's shapes."""
    keys = jax.random.split(key, 2 + 2 * len(Ks) + 2)
    embed_w = jax.random.normal(keys[0], (V, D), jnp.float32) * 0.1   # nn.Embedding(V, D)

    conv_params = []
    for i, K in enumerate(Ks):
        # PyTorch conv weight is [Co, Ci=1, K, D]; stored here as [K, D, Co].
        w = jax.random.normal(keys[1 + 2 * i], (K, D, Co), jnp.float32) * 0.05
        b = jax.random.normal(keys[2 + 2 * i], (Co,), jnp.float32) * 0.05
        conv_params.append((w, b))

    # PyTorch fc weight is [C, len(Ks)*Co]; stored transposed [len(Ks)*Co, C].
    fc_w_t = jax.random.normal(keys[-2], (F_DIM, C), jnp.float32) * 0.05
    fc_b = jax.random.normal(keys[-1], (C,), jnp.float32) * 0.05
    return embed_w, conv_params, fc_w_t, fc_b


def fuse_params(conv_params, fc_w_t, fc_b):
    """Fuse conv weights into [K_MAX*D, F_DIM]; pad FC weight/bias to 128 output lanes."""
    w_fused = jnp.zeros((K_MAX * D, F_DIM), jnp.float32)
    conv_biases = []
    for i, (K, (w, b)) in enumerate(zip(Ks, conv_params)):
        off = MAX_PAD - (K - 1) // 2     # tap offset of this branch inside the K_MAX window
        w_fused = w_fused.at[off * D:(off + K) * D, i * Co:(i + 1) * Co].set(
            w.reshape(K * D, Co))
        conv_biases.append(b)
    conv_bias = jnp.concatenate(conv_biases).reshape(1, F_DIM)
    fc_w_pad = jnp.zeros((F_DIM, FC_PAD), jnp.float32).at[:, :C].set(fc_w_t)
    fc_b_pad = jnp.zeros((1, FC_PAD), jnp.float32).at[0, :C].set(fc_b)
    return w_fused, conv_bias, fc_w_pad, fc_b_pad


def textcnn_reference(tokens, embed_w, conv_params, fc_w_t, fc_b):
    """Pure-JAX reference of the PyTorch eval-mode forward (shape-agnostic in batch)."""
    Bx, Lx = tokens.shape
    emb = jnp.take(embed_w, tokens, axis=0)                          # [Bx, Lx, D]
    feats = []
    for (w, b) in conv_params:
        K = w.shape[0]
        pad = (K - 1) // 2
        ep = jnp.pad(emb, ((0, 0), (pad, pad), (0, 0)))
        l_out = Lx + 2 * pad - K + 1
        acc = jnp.zeros((Bx, l_out, Co), jnp.float32)
        for k in range(K):
            acc = acc + jnp.einsum('bld,dc->blc', ep[:, k:k + l_out, :], w[k],
                                   precision=HIGH)
        acc = jax.nn.relu(acc + b)
        feats.append(jnp.max(acc, axis=1))                           # [Bx, Co]
    feat = jnp.concatenate(feats, axis=1)                            # [Bx, F_DIM]
    return jnp.dot(feat, fc_w_t, precision=HIGH) + fc_b


if __name__ == "__main__":
    key = jax.random.PRNGKey(0)
    k_tok, k_par, k_tok2 = jax.random.split(key, 3)

    tokens = jax.random.randint(k_tok, (B, L), 0, V, dtype=jnp.int32)
    embed_w, conv_params, fc_w_t, fc_b = init_params(k_par)
    w_fused, conv_bias, fc_w_pad, fc_b_pad = fuse_params(conv_params, fc_w_t, fc_b)

    logits = textcnn_forward(tokens, embed_w, w_fused, conv_bias, fc_w_pad, fc_b_pad)
    jax.block_until_ready(logits)
    assert logits.shape == (B, C) and logits.dtype == jnp.float32
    ref = textcnn_reference(tokens, embed_w, conv_params, fc_w_t, fc_b)
    assert jnp.allclose(logits, ref, rtol=1e-4, atol=1e-5), (logits, ref)

    # Multi-tile path: several grid steps with VMEM-resident weights.
    B_big = 40
    tokens_big = jax.random.randint(k_tok2, (B_big, L), 0, V, dtype=jnp.int32)
    logits_big = textcnn_forward(tokens_big, embed_w, w_fused, conv_bias,
                                 fc_w_pad, fc_b_pad)
    jax.block_until_ready(logits_big)
    ref_big = textcnn_reference(tokens_big, embed_w, conv_params, fc_w_t, fc_b)
    assert logits_big.shape == (B_big, C)
    assert jnp.allclose(logits_big, ref_big, rtol=1e-4, atol=1e-5), (logits_big, ref_big)

    print("KERNEL_OK")
</pallas_src>

<mosaic_0001>
module attributes {stable_mosaic.version = 11 : i64} {
  func.func @_kernel(%arg0: i32, %arg1: memref<128x1xi32, #tpu.memory_space<vmem>>, %arg2: memref<50x32xf32, #tpu.memory_space<vmem>>, %arg3: memref<160x24xf32, #tpu.memory_space<vmem>>, %arg4: memref<1x24xf32, #tpu.memory_space<vmem>>, %arg5: memref<24x128xf32, #tpu.memory_space<vmem>>, %arg6: memref<1x128xf32, #tpu.memory_space<vmem>>, %arg7: memref<8x128xf32, #tpu.memory_space<vmem>>) attributes {dimension_semantics = [#tpu.dimension_semantics<parallel>], iteration_bounds = array<i64: 1>, scalar_prefetch = 0 : i64, scratch_operands = 0 : i64, tpu.core_type = #tpu.core_type<tc>, window_params = [{transform_indices = @transform_0, window_bounds = array<i64: 128, 1>}, {pipeline_mode = #tpu.pipeline_mode<synchronous>, transform_indices = @transform_1, window_bounds = array<i64: 50, 32>}, {pipeline_mode = #tpu.pipeline_mode<synchronous>, transform_indices = @transform_2, window_bounds = array<i64: 160, 24>}, {pipeline_mode = #tpu.pipeline_mode<synchronous>, transform_indices = @transform_3, window_bounds = array<i64: 1, 24>}, {pipeline_mode = #tpu.pipeline_mode<synchronous>, transform_indices = @transform_4, window_bounds = array<i64: 24, 128>}, {pipeline_mode = #tpu.pipeline_mode<synchronous>, transform_indices = @transform_5, window_bounds = array<i64: 1, 128>}, {transform_indices = @transform_6, window_bounds = array<i64: 8, 128>}]} {
    %c0 = arith.constant 0 : index
    %c0_0 = arith.constant 0 : index
    %0 = vector.load %arg1[%c0, %c0_0] : memref<128x1xi32, #tpu.memory_space<vmem>>, vector<128x1xi32>
    %1 = tpu.iota {dimensions = array<i32: 1>} : vector<128x50xi32>
    %2 = vector.broadcast %0 : vector<128x1xi32> to vector<128x50xi32>
    %3 = arith.cmpi eq, %1, %2 : vector<128x50xi32>
    %4 = arith.extui %3 : vector<128x50xi1> to vector<128x50xi32>
    %5 = arith.sitofp %4 : vector<128x50xi32> to vector<128x50xf32>
    %c0_1 = arith.constant 0 : index
    %c0_2 = arith.constant 0 : index
    %6 = vector.load %arg2[%c0_1, %c0_2] : memref<50x32xf32, #tpu.memory_space<vmem>>, vector<50x32xf32>
    %cst = arith.constant dense<0.000000e+00> : vector<128x32xf32>
    %7 = tpu.matmul %5, %6, %cst {dimension_numbers = #tpu.dot_dimension_numbers<[1], [0], [0], [1], [0, 0, 1, 1], [], []>, precision = #tpu.contract_precision<fp32>} : vector<128x50xf32>, vector<50x32xf32>, vector<128x32xf32> -> vector<128x32xf32>
    %8 = tpu.iota {dimensions = array<i32: 0>} : vector<128x32xi32>
    %c15_i32 = arith.constant 15 : i32
    %9 = vector.broadcast %c15_i32 : i32 to vector<128x32xi32>
    %10 = arith.andi %8, %9 : vector<128x32xi32>
    %c0_3 = arith.constant 0 : index
    %c0_4 = arith.constant 0 : index
    %11 = vector.load %arg3[%c0_3, %c0_4] : memref<160x24xf32, #tpu.memory_space<vmem>>, vector<160x24xf32>
    %cst_5 = arith.constant 0.000000e+00 : f32
    %12 = vector.broadcast %cst_5 : f32 to vector<128x24xf32>
    %c2_i32 = arith.constant 2 : i32
    %13 = tpu.dynamic_rotate %7 by %c2_i32 dim 0 : vector<128x32xf32>, i32 -> vector<128x32xf32>
    %c-2_i32 = arith.constant -2 : i32
    %14 = vector.broadcast %c-2_i32 : i32 to vector<128x32xi32>
    %15 = arith.addi %10, %14 : vector<128x32xi32>
    %c0_i32 = arith.constant 0 : i32
    %16 = vector.broadcast %c0_i32 : i32 to vector<128x32xi32>
    %17 = arith.cmpi sge, %15, %16 : vector<128x32xi32>
    %c-2_i32_6 = arith.constant -2 : i32
    %18 = vector.broadcast %c-2_i32_6 : i32 to vector<128x32xi32>
    %19 = arith.addi %10, %18 : vector<128x32xi32>
    %c16_i32 = arith.constant 16 : i32
    %20 = vector.broadcast %c16_i32 : i32 to vector<128x32xi32>
    %21 = arith.cmpi slt, %19, %20 : vector<128x32xi32>
    %22 = arith.andi %17, %21 : vector<128x32xi1>
    %cst_7 = arith.constant 0.000000e+00 : f32
    %23 = vector.broadcast %cst_7 : f32 to vector<128x32xf32>
    %24 = arith.select %22, %13, %23 : vector<128x32xi1>, vector<128x32xf32>
    %25 = vector.extract_strided_slice %11 {offsets = [0, 0], sizes = [32, 24], strides = [1, 1]} : vector<160x24xf32> to vector<32x24xf32>
    %cst_8 = arith.constant dense<0.000000e+00> : vector<128x24xf32>
    %26 = tpu.matmul %24, %25, %cst_8 {dimension_numbers = #tpu.dot_dimension_numbers<[1], [0], [0], [1], [0, 0, 1, 1], [], []>, precision = #tpu.contract_precision<fp32>} : vector<128x32xf32>, vector<32x24xf32>, vector<128x24xf32> -> vector<128x24xf32>
    %27 = arith.addf %12, %26 : vector<128x24xf32>
    %c1_i32 = arith.constant 1 : i32
    %28 = tpu.dynamic_rotate %7 by %c1_i32 dim 0 : vector<128x32xf32>, i32 -> vector<128x32xf32>
    %c-1_i32 = arith.constant -1 : i32
    %29 = vector.broadcast %c-1_i32 : i32 to vector<128x32xi32>
    %30 = arith.addi %10, %29 : vector<128x32xi32>
    %c0_i32_9 = arith.constant 0 : i32
    %31 = vector.broadcast %c0_i32_9 : i32 to vector<128x32xi32>
    %32 = arith.cmpi sge, %30, %31 : vector<128x32xi32>
    %c-1_i32_10 = arith.constant -1 : i32
    %33 = vector.broadcast %c-1_i32_10 : i32 to vector<128x32xi32>
    %34 = arith.addi %10, %33 : vector<128x32xi32>
    %c16_i32_11 = arith.constant 16 : i32
    %35 = vector.broadcast %c16_i32_11 : i32 to vector<128x32xi32>
    %36 = arith.cmpi slt, %34, %35 : vector<128x32xi32>
    %37 = arith.andi %32, %36 : vector<128x32xi1>
    %cst_12 = arith.constant 0.000000e+00 : f32
    %38 = vector.broadcast %cst_12 : f32 to vector<128x32xf32>
    %39 = arith.select %37, %28, %38 : vector<128x32xi1>, vector<128x32xf32>
    %40 = vector.extract_strided_slice %11 {offsets = [32, 0], sizes = [32, 24], strides = [1, 1]} : vector<160x24xf32> to vector<32x24xf32>
    %cst_13 = arith.constant dense<0.000000e+00> : vector<128x24xf32>
    %41 = tpu.matmul %39, %40, %cst_13 {dimension_numbers = #tpu.dot_dimension_numbers<[1], [0], [0], [1], [0, 0, 1, 1], [], []>, precision = #tpu.contract_precision<fp32>} : vector<128x32xf32>, vector<32x24xf32>, vector<128x24xf32> -> vector<128x24xf32>
    %42 = arith.addf %27, %41 : vector<128x24xf32>
    %43 = vector.extract_strided_slice %11 {offsets = [64, 0], sizes = [32, 24], strides = [1, 1]} : vector<160x24xf32> to vector<32x24xf32>
    %cst_14 = arith.constant dense<0.000000e+00> : vector<128x24xf32>
    %44 = tpu.matmul %7, %43, %cst_14 {dimension_numbers = #tpu.dot_dimension_numbers<[1], [0], [0], [1], [0, 0, 1, 1], [], []>, precision = #tpu.contract_precision<fp32>} : vector<128x32xf32>, vector<32x24xf32>, vector<128x24xf32> -> vector<128x24xf32>
    %45 = arith.addf %42, %44 : vector<128x24xf32>
    %c127_i32 = arith.constant 127 : i32
    %46 = tpu.dynamic_rotate %7 by %c127_i32 dim 0 : vector<128x32xf32>, i32 -> vector<128x32xf32>
    %c1_i32_15 = arith.constant 1 : i32
    %47 = vector.broadcast %c1_i32_15 : i32 to vector<128x32xi32>
    %48 = arith.addi %10, %47 : vector<128x32xi32>
    %c0_i32_16 = arith.constant 0 : i32
    %49 = vector.broadcast %c0_i32_16 : i32 to vector<128x32xi32>
    %50 = arith.cmpi sge, %48, %49 : vector<128x32xi32>
    %c1_i32_17 = arith.constant 1 : i32
    %51 = vector.broadcast %c1_i32_17 : i32 to vector<128x32xi32>
    %52 = arith.addi %10, %51 : vector<128x32xi32>
    %c16_i32_18 = arith.constant 16 : i32
    %53 = vector.broadcast %c16_i32_18 : i32 to vector<128x32xi32>
    %54 = arith.cmpi slt, %52, %53 : vector<128x32xi32>
    %55 = arith.andi %50, %54 : vector<128x32xi1>
    %cst_19 = arith.constant 0.000000e+00 : f32
    %56 = vector.broadcast %cst_19 : f32 to vector<128x32xf32>
    %57 = arith.select %55, %46, %56 : vector<128x32xi1>, vector<128x32xf32>
    %58 = vector.extract_strided_slice %11 {offsets = [96, 0], sizes = [32, 24], strides = [1, 1]} : vector<160x24xf32> to vector<32x24xf32>
    %cst_20 = arith.constant dense<0.000000e+00> : vector<128x24xf32>
    %59 = tpu.matmul %57, %58, %cst_20 {dimension_numbers = #tpu.dot_dimension_numbers<[1], [0], [0], [1], [0, 0, 1, 1], [], []>, precision = #tpu.contract_precision<fp32>} : vector<128x32xf32>, vector<32x24xf32>, vector<128x24xf32> -> vector<128x24xf32>
    %60 = arith.addf %45, %59 : vector<128x24xf32>
    %c126_i32 = arith.constant 126 : i32
    %61 = tpu.dynamic_rotate %7 by %c126_i32 dim 0 : vector<128x32xf32>, i32 -> vector<128x32xf32>
    %c2_i32_21 = arith.constant 2 : i32
    %62 = vector.broadcast %c2_i32_21 : i32 to vector<128x32xi32>
    %63 = arith.addi %10, %62 : vector<128x32xi32>
    %c0_i32_22 = arith.constant 0 : i32
    %64 = vector.broadcast %c0_i32_22 : i32 to vector<128x32xi32>
    %65 = arith.cmpi sge, %63, %64 : vector<128x32xi32>
    %c2_i32_23 = arith.constant 2 : i32
    %66 = vector.broadcast %c2_i32_23 : i32 to vector<128x32xi32>
    %67 = arith.addi %10, %66 : vector<128x32xi32>
    %c16_i32_24 = arith.constant 16 : i32
    %68 = vector.broadcast %c16_i32_24 : i32 to vector<128x32xi32>
    %69 = arith.cmpi slt, %67, %68 : vector<128x32xi32>
    %70 = arith.andi %65, %69 : vector<128x32xi1>
    %cst_25 = arith.constant 0.000000e+00 : f32
    %71 = vector.broadcast %cst_25 : f32 to vector<128x32xf32>
    %72 = arith.select %70, %61, %71 : vector<128x32xi1>, vector<128x32xf32>
    %73 = vector.extract_strided_slice %11 {offsets = [128, 0], sizes = [32, 24], strides = [1, 1]} : vector<160x24xf32> to vector<32x24xf32>
    %cst_26 = arith.constant dense<0.000000e+00> : vector<128x24xf32>
    %74 = tpu.matmul %72, %73, %cst_26 {dimension_numbers = #tpu.dot_dimension_numbers<[1], [0], [0], [1], [0, 0, 1, 1], [], []>, precision = #tpu.contract_precision<fp32>} : vector<128x32xf32>, vector<32x24xf32>, vector<128x24xf32> -> vector<128x24xf32>
    %75 = arith.addf %60, %74 : vector<128x24xf32>
    %c0_27 = arith.constant 0 : index
    %c0_28 = arith.constant 0 : index
    %76 = vector.load %arg4[%c0_27, %c0_28] : memref<1x24xf32, #tpu.memory_space<vmem>>, vector<1x24xf32>
    %77 = vector.broadcast %76 : vector<1x24xf32> to vector<128x24xf32>
    %78 = arith.addf %75, %77 : vector<128x24xf32>
    %cst_29 = arith.constant 0.000000e+00 : f32
    %79 = vector.broadcast %cst_29 : f32 to vector<128x24xf32>
    %80 = arith.maximumf %78, %79 : vector<128x24xf32>
    %81 = tpu.iota {dimensions = array<i32: 0>} : vector<128x24xi32>
    %c15_i32_30 = arith.constant 15 : i32
    %82 = vector.broadcast %c15_i32_30 : i32 to vector<128x24xi32>
    %83 = arith.andi %81, %82 : vector<128x24xi32>
    %84 = tpu.iota {dimensions = array<i32: 1>} : vector<128x24xi32>
    %c15_i32_31 = arith.constant 15 : i32
    %85 = vector.broadcast %c15_i32_31 : i32 to vector<128x24xi32>
    %86 = arith.cmpi sge, %83, %85 : vector<128x24xi32>
    %c8_i32 = arith.constant 8 : i32
    %87 = vector.broadcast %c8_i32 : i32 to vector<128x24xi32>
    %88 = arith.cmpi sge, %84, %87 : vector<128x24xi32>
    %89 = arith.andi %86, %88 : vector<128x24xi1>
    %c16_i32_32 = arith.constant 16 : i32
    %90 = vector.broadcast %c16_i32_32 : i32 to vector<128x24xi32>
    %91 = arith.cmpi slt, %84, %90 : vector<128x24xi32>
    %92 = arith.andi %89, %91 : vector<128x24xi1>
    %cst_33 = arith.constant 0.000000e+00 : f32
    %93 = vector.broadcast %cst_33 : f32 to vector<128x24xf32>
    %94 = arith.select %92, %93, %80 : vector<128x24xi1>, vector<128x24xf32>
    %95 = vector.shape_cast %94 : vector<128x24xf32> to vector<8x16x24xf32>
    %cst_34 = arith.constant dense<0xFF800000> : vector<8x24xf32>
    %96 = vector.multi_reduction <maximumf>, %95, %cst_34 [1] : vector<8x16x24xf32> to vector<8x24xf32>
    %c0_35 = arith.constant 0 : index
    %c0_36 = arith.constant 0 : index
    %97 = vector.load %arg5[%c0_35, %c0_36] : memref<24x128xf32, #tpu.memory_space<vmem>>, vector<24x128xf32>
    %cst_37 = arith.constant dense<0.000000e+00> : vector<8x128xf32>
    %98 = tpu.matmul %96, %97, %cst_37 {dimension_numbers = #tpu.dot_dimension_numbers<[1], [0], [0], [1], [0, 0, 1, 1], [], []>, precision = #tpu.contract_precision<fp32>} : vector<8x24xf32>, vector<24x128xf32>, vector<8x128xf32> -> vector<8x128xf32>
    %c0_38 = arith.constant 0 : index
    %c0_39 = arith.constant 0 : index
    %99 = vector.load %arg6[%c0_38, %c0_39] : memref<1x128xf32, #tpu.memory_space<vmem>>, vector<1x128xf32>
    %100 = vector.broadcast %99 : vector<1x128xf32> to vector<8x128xf32>
    %101 = arith.addf %98, %100 : vector<8x128xf32>
    %c0_40 = arith.constant 0 : index
    %c0_41 = arith.constant 0 : index
    %102 = vector.load %arg7[%c0_40, %c0_41] : memref<8x128xf32, #tpu.memory_space<vmem>>, vector<8x128xf32>
    tpu.vector_store %arg7[%c0_40, %c0_41], %101 {strides = array<i32>} : memref<8x128xf32, #tpu.memory_space<vmem>>, vector<8x128xf32>,
    return
  }
  func.func @transform_0(%arg0: i32) -> (i32, i32) {
    %c0_i32 = arith.constant 0 : i32
    %c0_i32_0 = arith.constant 0 : i32
    return %arg0, %c0_i32 : i32, i32
  }
  func.func @transform_1(%arg0: i32) -> (i32, i32) {
    %c0_i32 = arith.constant 0 : i32
    %c0_i32_0 = arith.constant 0 : i32
    %c0_i32_1 = arith.constant 0 : i32
    return %c0_i32, %c0_i32_0 : i32, i32
  }
  func.func @transform_2(%arg0: i32) -> (i32, i32) {
    %c0_i32 = arith.constant 0 : i32
    %c0_i32_0 = arith.constant 0 : i32
    %c0_i32_1 = arith.constant 0 : i32
    return %c0_i32, %c0_i32_0 : i32, i32
  }
  func.func @transform_3(%arg0: i32) -> (i32, i32) {
    %c0_i32 = arith.constant 0 : i32
    %c0_i32_0 = arith.constant 0 : i32
    %c0_i32_1 = arith.constant 0 : i32
    return %c0_i32, %c0_i32_0 : i32, i32
  }
  func.func @transform_4(%arg0: i32) -> (i32, i32) {
    %c0_i32 = arith.constant 0 : i32
    %c0_i32_0 = arith.constant 0 : i32
    %c0_i32_1 = arith.constant 0 : i32
    return %c0_i32, %c0_i32_0 : i32, i32
  }
  func.func @transform_5(%arg0: i32) -> (i32, i32) {
    %c0_i32 = arith.constant 0 : i32
    %c0_i32_0 = arith.constant 0 : i32
    %c0_i32_1 = arith.constant 0 : i32
    return %c0_i32, %c0_i32_0 : i32, i32
  }
  func.func @transform_6(%arg0: i32) -> (i32, i32) {
    %c0_i32 = arith.constant 0 : i32
    %c0_i32_0 = arith.constant 0 : i32
    return %arg0, %c0_i32 : i32, i32
  }
}

</mosaic_0001>

<llo_original>
// kernel: textcnn_forward.1
$region0: #{textcnn_forward.1}
  #allocation0 [shape = 'u32[]', space=smem, size = 0x4, offset = 0x4, fixed_abs, tag = 'smem constant byte address 0x4 - core index']
  #allocation1 [shape = 'u32[144,128]{1,0:T(1,128)}', space=vmem, size = 0x12000, scoped, tag = 'internal scratch']
  %s0 = inlined_call_operand.vmem [shape: s32[128,1], index: 0, kind: input, shape index: {}]
  %s1 = inlined_call_operand.vmem [shape: f32[50,32], index: 1, kind: input, shape index: {}]
  %s2 = inlined_call_operand.vmem [shape: f32[160,24], index: 2, kind: input, shape index: {}]
  %s3 = inlined_call_operand.vmem [shape: f32[1,24], index: 3, kind: input, shape index: {}]
  %s4 = inlined_call_operand.vmem [shape: f32[24,128], index: 4, kind: input, shape index: {}]
  %s5 = inlined_call_operand.vmem [shape: f32[1,128], index: 5, kind: input, shape index: {}]
  %s6 = inlined_call_operand.vmem [shape: f32[8,128], index: 6, kind: output, shape index: {}]
  %s7 = sld [smem:[#allocation0]]
  $region34: #{textcnn_forward.1} parent=0
    _
  %s9 = ssub.s32 1, %s7
  %s10 = scalar_select 0, %s9, %s7
  // Predicated region
  $region2: #{textcnn_forward.1} parent=0 // pred_check
    _
  $region3: #{textcnn_forward.1} parent=0 // pred_check_branch
    %12 = sbr.rel (0) target = $region5
  $region4: #{textcnn_forward.1} parent=0 // pred_region
    _
  $region5: #{textcnn_forward.1} parent=0 // pred_fallthru
    _
  // Predicated region
  $region6: #{textcnn_forward.1} parent=0 // pred_check
    _
  $region7: #{textcnn_forward.1} parent=0 // pred_check_branch
    %14 = sbr.rel (0) target = $region9
  $region8: #{textcnn_forward.1} parent=0 // pred_region
    _
  $region9: #{textcnn_forward.1} parent=0 // pred_fallthru
    _
  // Predicated region
  $region10: #{textcnn_forward.1} parent=0 // pred_check
    _
  $region11: #{textcnn_forward.1} parent=0 // pred_check_branch
    %16 = sbr.rel (0) target = $region13
  $region12: #{textcnn_forward.1} parent=0 // pred_region
    _
  $region13: #{textcnn_forward.1} parent=0 // pred_fallthru
    _
  // Predicated region
  $region14: #{textcnn_forward.1} parent=0 // pred_check
    _
  $region15: #{textcnn_forward.1} parent=0 // pred_check_branch
    %18 = sbr.rel (0) target = $region17
  $region16: #{textcnn_forward.1} parent=0 // pred_region
    _
  $region17: #{textcnn_forward.1} parent=0 // pred_fallthru
    _
  // Predicated region
  $region18: #{textcnn_forward.1} parent=0 // pred_check
    _
  $region19: #{textcnn_forward.1} parent=0 // pred_check_branch
    %20 = sbr.rel (0) target = $region21
  $region20: #{textcnn_forward.1} parent=0 // pred_region
    _
  $region21: #{textcnn_forward.1} parent=0 // pred_fallthru
    _
  // Predicated region
  $region22: #{textcnn_forward.1} parent=0 // pred_check
    _
  $region23: #{textcnn_forward.1} parent=0 // pred_check_branch
    %22 = sbr.rel (0) target = $region25
  $region24: #{textcnn_forward.1} parent=0 // pred_region
    _
  $region25: #{textcnn_forward.1} parent=0 // pred_fallthru
    _
  %v23 = vld [vmem:[%s0] sm:$0xff]
  %v24 = vld [vmem:[%s0 + $0x8] sm:$0xff]
  %v25 = vld [vmem:[%s0 + $0x10] sm:$0xff]
  %v26 = vld [vmem:[%s0 + $0x18] sm:$0xff]
  %v27 = vld [vmem:[%s0 + $0x20] sm:$0xff]
  %v28 = vld [vmem:[%s0 + $0x28] sm:$0xff]
  %v29 = vld [vmem:[%s0 + $0x30] sm:$0xff]
  %v30 = vld [vmem:[%s0 + $0x38] sm:$0xff]
  %v31 = vld [vmem:[%s0 + $0x40] sm:$0xff]
  %v32 = vld [vmem:[%s0 + $0x48] sm:$0xff]
  %v33 = vld [vmem:[%s0 + $0x50] sm:$0xff]
  %v34 = vld [vmem:[%s0 + $0x58] sm:$0xff]
  %v35 = vld [vmem:[%s0 + $0x60] sm:$0xff]
  %v36 = vld [vmem:[%s0 + $0x68] sm:$0xff]
  %v37 = vld [vmem:[%s0 + $0x70] sm:$0xff]
  %v38 = vld [vmem:[%s0 + $0x78] sm:$0xff]
  %v39 = vlaneseq
  %v40 = vand.u32 %v39, 127
  %41 = vset.pattern.permute.xlu0 0
  %42 = vperm.xlu0 %41, %v23
  %v43 = vpop.permute.xlu0 %42
  %44 = vset.pattern.permute.xlu0 0
  %45 = vperm.xlu0 %44, %v24
  %v46 = vpop.permute.xlu0 %45
  %47 = vset.pattern.permute.xlu0 0
  %48 = vperm.xlu0 %47, %v25
  %v49 = vpop.permute.xlu0 %48
  %50 = vset.pattern.permute.xlu0 0
  %51 = vperm.xlu0 %50, %v26
  %v52 = vpop.permute.xlu0 %51
  %53 = vset.pattern.permute.xlu0 0
  %54 = vperm.xlu0 %53, %v27
  %v55 = vpop.permute.xlu0 %54
  %56 = vset.pattern.permute.xlu0 0
  %57 = vperm.xlu0 %56, %v28
  %v58 = vpop.permute.xlu0 %57
  %59 = vset.pattern.permute.xlu0 0
  %60 = vperm.xlu0 %59, %v29
  %v61 = vpop.permute.xlu0 %60
  %62 = vset.pattern.permute.xlu0 0
  %63 = vperm.xlu0 %62, %v30
  %v64 = vpop.permute.xlu0 %63
  %65 = vset.pattern.permute.xlu0 0
  %66 = vperm.xlu0 %65, %v31
  %v67 = vpop.permute.xlu0 %66
  %68 = vset.pattern.permute.xlu0 0
  %69 = vperm.xlu0 %68, %v32
  %v70 = vpop.permute.xlu0 %69
  %71 = vset.pattern.permute.xlu0 0
  %72 = vperm.xlu0 %71, %v33
  %v73 = vpop.permute.xlu0 %72
  %74 = vset.pattern.permute.xlu0 0
  %75 = vperm.xlu0 %74, %v34
  %v76 = vpop.permute.xlu0 %75
  %77 = vset.pattern.permute.xlu0 0
  %78 = vperm.xlu0 %77, %v35
  %v79 = vpop.permute.xlu0 %78
  %80 = vset.pattern.permute.xlu0 0
  %81 = vperm.xlu0 %80, %v36
  %v82 = vpop.permute.xlu0 %81
  %83 = vset.pattern.permute.xlu0 0
  %84 = vperm.xlu0 %83, %v37
  %v85 = vpop.permute.xlu0 %84
  %86 = vset.pattern.permute.xlu0 0
  %87 = vperm.xlu0 %86, %v38
  %v88 = vpop.permute.xlu0 %87
  %vm89 = vcmp.eq.s32.totalorder %v40, %v43
  %vm90 = vcmp.eq.s32.totalorder %v40, %v46
  %vm91 = vcmp.eq.s32.totalorder %v40, %v49
  %vm92 = vcmp.eq.s32.totalorder %v40, %v52
  %vm93 = vcmp.eq.s32.totalorder %v40, %v55
  %vm94 = vcmp.eq.s32.totalorder %v40, %v58
  %vm95 = vcmp.eq.s32.totalorder %v40, %v61
  %vm96 = vcmp.eq.s32.totalorder %v40, %v64
  %vm97 = vcmp.eq.s32.totalorder %v40, %v67
  %vm98 = vcmp.eq.s32.totalorder %v40, %v70
  %vm99 = vcmp.eq.s32.totalorder %v40, %v73
  %vm100 = vcmp.eq.s32.totalorder %v40, %v76
  %vm101 = vcmp.eq.s32.totalorder %v40, %v79
  %vm102 = vcmp.eq.s32.totalorder %v40, %v82
  %vm103 = vcmp.eq.s32.totalorder %v40, %v85
  %vm104 = vcmp.eq.s32.totalorder %v40, %v88
  %v105 = vsel %vm89, 1, 0
  %v106 = vsel %vm90, 1, 0
  %v107 = vsel %vm91, 1, 0
  %v108 = vsel %vm92, 1, 0
  %v109 = vsel %vm93, 1, 0
  %v110 = vsel %vm94, 1, 0
  %v111 = vsel %vm95, 1, 0
  %v112 = vsel %vm96, 1, 0
  %v113 = vsel %vm97, 1, 0
  %v114 = vsel %vm98, 1, 0
  %v115 = vsel %vm99, 1, 0
  %v116 = vsel %vm100, 1, 0
  %v117 = vsel %vm101, 1, 0
  %v118 = vsel %vm102, 1, 0
  %v119 = vsel %vm103, 1, 0
  %v120 = vsel %vm104, 1, 0
  %v121 = vcvt.s32.f32 %v105
  %v122 = vcvt.s32.f32 %v106
  %v123 = vcvt.s32.f32 %v107
  %v124 = vcvt.s32.f32 %v108
  %v125 = vcvt.s32.f32 %v109
  %v126 = vcvt.s32.f32 %v110
  %v127 = vcvt.s32.f32 %v111
  %v128 = vcvt.s32.f32 %v112
  %v129 = vcvt.s32.f32 %v113
  %v130 = vcvt.s32.f32 %v114
  %v131 = vcvt.s32.f32 %v115
  %v132 = vcvt.s32.f32 %v116
  %v133 = vcvt.s32.f32 %v117
  %v134 = vcvt.s32.f32 %v118
  %v135 = vcvt.s32.f32 %v119
  %v136 = vcvt.s32.f32 %v120
  %v137 = vld [vmem:[%s1] sm:$0xff]
  %v138 = vld [vmem:[%s1 + $0x8] sm:$0xff]
  %v139 = vld [vmem:[%s1 + $0x10] sm:$0xff]
  %v140 = vld [vmem:[%s1 + $0x18] sm:$0xff]
  %v141 = vld [vmem:[%s1 + $0x20] sm:$0xff]
  %v142 = vld [vmem:[%s1 + $0x28] sm:$0xff]
  %v143 = vld [vmem:[%s1 + $0x30] sm:$0x3]
  %vm144 = vcmask 408576
  %v146 = vsel %vm144, %v121, 0
  %v149 = vsel %vm144, %v122, 0
  %v152 = vsel %vm144, %v123, 0
  %v155 = vsel %vm144, %v124, 0
  %v158 = vsel %vm144, %v125, 0
  %v161 = vsel %vm144, %v126, 0
  %v164 = vsel %vm144, %v127, 0
  %v167 = vsel %vm144, %v128, 0
  %v170 = vsel %vm144, %v129, 0
  %v173 = vsel %vm144, %v130, 0
  %v176 = vsel %vm144, %v131, 0
  %v179 = vsel %vm144, %v132, 0
  %v182 = vsel %vm144, %v133, 0
  %v185 = vsel %vm144, %v134, 0
  %v188 = vsel %vm144, %v135, 0
  %v191 = vsel %vm144, %v136, 0
  %vm193 = vcmask 1041408
  %v195 = vsel %vm193, %v143, 0
  %197 = vmatprep.subr.mxu0 0.0
  %v198 = vand.u32 %v137, 4294901760
  %199 = vmatpush1.msra.mxu0 %v198
  %200 = vmatprep.subr.mxu0 0.0
  %v201 = vand.u32 %v138, 4294901760
  %202 = vmatpush1.msra.mxu0 %v201
  %203 = vmatprep.subr.mxu0 0.0
  %v204 = vand.u32 %v139, 4294901760
  %205 = vmatpush1.msra.mxu0 %v204
  %206 = vmatprep.subr.mxu0 0.0
  %v207 = vand.u32 %v140, 4294901760
  %208 = vmatpush1.msra.mxu0 %v207
  %209 = vmatprep.subr.mxu0 0.0
  %v210 = vand.u32 %v141, 4294901760
  %211 = vmatpush1.msra.mxu0 %v210
  %212 = vmatprep.subr.mxu0 0.0
  %v213 = vand.u32 %v142, 4294901760
  %214 = vmatpush1.msra.mxu0 %v213
  %215 = vmatprep.subr.mxu0 0.0
  %v216 = vand.u32 %v195, 4294901760
  %217 = vmatpush1.msra.mxu0 %v216
  %218 = vmatprep.subr.mxu0 0.0
  %219 = vmatpush1.msra.mxu0 0.0
  %220 = vmatprep.subr.mxu0 0.0
  %221 = vmatpush1.msra.mxu0 0.0
  %222 = vmatprep.subr.mxu0 0.0
  %223 = vmatpush1.msra.mxu0 0.0
  %224 = vmatprep.subr.mxu0 0.0
  %225 = vmatpush1.msra.mxu0 0.0
  %226 = vmatprep.subr.mxu0 0.0
  %227 = vmatpush1.msra.mxu0 0.0
  %228 = vmatprep.subr.mxu0 0.0
  %229 = vmatpush1.msra.mxu0 0.0
  %230 = vmatprep.subr.mxu0 0.0
  %231 = vmatpush1.msra.mxu0 0.0
  %232 = vmatprep.subr.mxu0 0.0
  %233 = vmatpush1.msra.mxu0 0.0
  %234 = vmatprep.subr.mxu0 0.0
  %235 = vmatpush1.msra.mxu0 0.0
  %236 = vmatprep.subr.mxu0 0.0
  %237 = vmatpush1.msra.mxu0 0.0
  %238 = vmatprep.subr.mxu0 0.0
  %239 = vmatpush1.msra.mxu0 0.0
  %240 = vmatprep.subr.mxu0 0.0
  %241 = vmatpush1.msra.mxu0 0.0
  %242 = vmatprep.subr.mxu0 0.0
  %243 = vmatpush1.msra.mxu0 0.0
  %244 = vmatprep.subr.mxu0 0.0
  %245 = vmatpush1.msra.mxu0 0.0
  %246 = vmatprep.subr.mxu0 0.0
  %247 = vmatpush1.msra.mxu0 0.0
  %248 = vmatprep.subr.mxu0 0.0
  %249 = vmatpush1.msra.mxu0 0.0
  %250 = vmatprep.subr.mxu0 0.0
  %251 = vmatpush1.msra.mxu0 0.0
  %252 = vmatprep.subr.mxu0 0.0
  %253 = vmatpush1.msra.mxu0 0.0
  %254 = vmatprep.subr.mxu0 0.0
  %255 = vmatpush1.msra.mxu0 0.0
  %256 = vmatprep.subr.mxu0 0.0
  %257 = vmatpush1.msra.mxu0 0.0
  %258 = vmatprep.subr.mxu0 0.0
  %259 = vmatpush1.msra.mxu0 0.0
  %260 = vmatprep.subr.mxu0 0.0
  %261 = vmatpush1.msra.mxu0 0.0
  %262 = vmatprep.subr.mxu0 0.0
  %263 = vmatpush1.msra.mxu0 0.0
  %264 = vmatprep.subr.mxu0 0.0
  %265 = vmatpush1.msra.mxu0 0.0
  %266 = vmatprep.subr.mxu0 0.0
  %267 = vmatpush1.msra.mxu0 0.0
  %268 = vmatprep.mubr.f32.mxu0 0.0
  %v269 = vand.u32 %v146, 4294901760
  %v270 = vsub.f32 %v146, %v269
  %v271 = vand.u32 %v270, 4294901760
  %v272 = vsub.f32 %v270, %v271
  %v273 = vand.u32 %v272, 4294901760
  %274 = vmatmul.mubr.f32.gmra.mrb[0].mxu0 %v273
  %v275 = vpop.f32.mrb[0].mxu0
  %v276 = vadd.f32 0.0, %v275
  %v277 = vpop.f32.mrb[0].mxu0
  %278 = vmatprep.mubr.f32.mxu0 0.0
  %v279 = vand.u32 %v149, 4294901760
  %v280 = vsub.f32 %v149, %v279
  %v281 = vand.u32 %v280, 4294901760
  %v282 = vsub.f32 %v280, %v281
  %v283 = vand.u32 %v282, 4294901760
  %284 = vmatmul.mubr.f32.gmra.mrb[0].mxu0 %v283
  %v285 = vpop.f32.mrb[0].mxu0
  %v286 = vadd.f32 0.0, %v285
  %v287 = vpop.f32.mrb[0].mxu0
  %288 = vmatprep.mubr.f32.mxu0 0.0
  %v289 = vand.u32 %v152, 4294901760
  %v290 = vsub.f32 %v152, %v289
  %v291 = vand.u32 %v290, 4294901760
  %v292 = vsub.f32 %v290, %v291
  %v293 = vand.u32 %v292, 4294901760
  %294 = vmatmul.mubr.f32.gmra.mrb[0].mxu0 %v293
  %v295 = vpop.f32.mrb[0].mxu0
  %v296 = vadd.f32 0.0, %v295
  %v297 = vpop.f32.mrb[0].mxu0
  %298 = vmatprep.mubr.f32.mxu0 0.0
  %v299 = vand.u32 %v155, 4294901760
  %v300 = vsub.f32 %v155, %v299
  %v301 = vand.u32 %v300, 4294901760
  %v302 = vsub.f32 %v300, %v301
  %v303 = vand.u32 %v302, 4294901760
  %304 = vmatmul.mubr.f32.gmra.mrb[0].mxu0 %v303
  %v305 = vpop.f32.mrb[0].mxu0
  %v306 = vadd.f32 0.0, %v305
  %v307 = vpop.f32.mrb[0].mxu0
  %308 = vmatprep.mubr.f32.mxu0 0.0
  %v309 = vand.u32 %v158, 4294901760
  %v310 = vsub.f32 %v158, %v309
  %v311 = vand.u32 %v310, 4294901760
  %v312 = vsub.f32 %v310, %v311
  %v313 = vand.u32 %v312, 4294901760
  %314 = vmatmul.mubr.f32.gmra.mrb[0].mxu0 %v313
  %v315 = vpop.f32.mrb[0].mxu0
  %v316 = vadd.f32 0.0, %v315
  %v317 = vpop.f32.mrb[0].mxu0
  %318 = vmatprep.mubr.f32.mxu0 0.0
  %v319 = vand.u32 %v161, 4294901760
  %v320 = vsub.f32 %v161, %v319
  %v321 = vand.u32 %v320, 4294901760
  %v322 = vsub.f32 %v320, %v321
  %v323 = vand.u32 %v322, 4294901760
  %324 = vmatmul.mubr.f32.gmra.mrb[0].mxu0 %v323
  %v325 = vpop.f32.mrb[0].mxu0
  %v326 = vadd.f32 0.0, %v325
  %v327 = vpop.f32.mrb[0].mxu0
  %328 = vmatprep.mubr.f32.mxu0 0.0
  %v329 = vand.u32 %v164, 4294901760
  %v330 = vsub.f32 %v164, %v329
  %v331 = vand.u32 %v330, 4294901760
  %v332 = vsub.f32 %v330, %v331
  %v333 = vand.u32 %v332, 4294901760
  %334 = vmatmul.mubr.f32.gmra.mrb[0].mxu0 %v333
  %v335 = vpop.f32.mrb[0].mxu0
  %v336 = vadd.f32 0.0, %v335
  %v337 = vpop.f32.mrb[0].mxu0
  %338 = vmatprep.mubr.f32.mxu0 0.0
  %v339 = vand.u32 %v167, 4294901760
  %v340 = vsub.f32 %v167, %v339
  %v341 = vand.u32 %v340, 4294901760
  %v342 = vsub.f32 %v340, %v341
  %v343 = vand.u32 %v342, 4294901760
  %344 = vmatmul.mubr.f32.gmra.mrb[0].mxu0 %v343
  %v345 = vpop.f32.mrb[0].mxu0
  %v346 = vadd.f32 0.0, %v345
  %v347 = vpop.f32.mrb[0].mxu0
  %348 = vmatprep.mubr.f32.mxu0 0.0
  %v349 = vand.u32 %v170, 4294901760
  %v350 = vsub.f32 %v170, %v349
  %v351 = vand.u32 %v350, 4294901760
  %v352 = vsub.f32 %v350, %v351
  %v353 = vand.u32 %v352, 4294901760
  %354 = vmatmul.mubr.f32.gmra.mrb[0].mxu0 %v353
  %v355 = vpop.f32.mrb[0].mxu0
  %v356 = vadd.f32 0.0, %v355
  %v357 = vpop.f32.mrb[0].mxu0
  %358 = vmatprep.mubr.f32.mxu0 0.0
  %v359 = vand.u32 %v173, 4294901760
  %v360 = vsub.f32 %v173, %v359
  %v361 = vand.u32 %v360, 4294901760
  %v362 = vsub.f32 %v360, %v361
  %v363 = vand.u32 %v362, 4294901760
  %364 = vmatmul.mubr.f32.gmra.mrb[0].mxu0 %v363
  %v365 = vpop.f32.mrb[0].mxu0
  %v366 = vadd.f32 0.0, %v365
  %v367 = vpop.f32.mrb[0].mxu0
  %368 = vmatprep.mubr.f32.mxu0 0.0
  %v369 = vand.u32 %v176, 4294901760
  %v370 = vsub.f32 %v176, %v369
  %v371 = vand.u32 %v370, 4294901760
  %v372 = vsub.f32 %v370, %v371
  %v373 = vand.u32 %v372, 4294901760
  %374 = vmatmul.mubr.f32.gmra.mrb[0].mxu0 %v373
  %v375 = vpop.f32.mrb[0].mxu0
  %v376 = vadd.f32 0.0, %v375
  %v377 = vpop.f32.mrb[0].mxu0
  %378 = vmatprep.mubr.f32.mxu0 0.0
  %v379 = vand.u32 %v179, 4294901760
  %v380 = vsub.f32 %v179, %v379
  %v381 = vand.u32 %v380, 4294901760
  %v382 = vsub.f32 %v380, %v381
  %v383 = vand.u32 %v382, 4294901760
  %384 = vmatmul.mubr.f32.gmra.mrb[0].mxu0 %v383
  %v385 = vpop.f32.mrb[0].mxu0
  %v386 = vadd.f32 0.0, %v385
  %v387 = vpop.f32.mrb[0].mxu0
  %388 = vmatprep.mubr.f32.mxu0 0.0
  %v389 = vand.u32 %v182, 4294901760
  %v390 = vsub.f32 %v182, %v389
  %v391 = vand.u32 %v390, 4294901760
  %v392 = vsub.f32 %v390, %v391
  %v393 = vand.u32 %v392, 4294901760
  %394 = vmatmul.mubr.f32.gmra.mrb[0].mxu0 %v393
  %v395 = vpop.f32.mrb[0].mxu0
  %v396 = vadd.f32 0.0, %v395
  %v397 = vpop.f32.mrb[0].mxu0
  %398 = vmatprep.mubr.f32.mxu0 0.0
  %v399 = vand.u32 %v185, 4294901760
  %v400 = vsub.f32 %v185, %v399
  %v401 = vand.u32 %v400, 4294901760
  %v402 = vsub.f32 %v400, %v401
  %v403 = vand.u32 %v402, 4294901760
  %404 = vmatmul.mubr.f32.gmra.mrb[0].mxu0 %v403
  %v405 = vpop.f32.mrb[0].mxu0
  %v406 = vadd.f32 0.0, %v405
  %v407 = vpop.f32.mrb[0].mxu0
  %408 = vmatprep.mubr.f32.mxu0 0.0
  %v409 = vand.u32 %v188, 4294901760
  %v410 = vsub.f32 %v188, %v409
  %v411 = vand.u32 %v410, 4294901760
  %v412 = vsub.f32 %v410, %v411
  %v413 = vand.u32 %v412, 4294901760
  %414 = vmatmul.mubr.f32.gmra.mrb[0].mxu0 %v413
  %v415 = vpop.f32.mrb[0].mxu0
  %v416 = vadd.f32 0.0, %v415
  %v417 = vpop.f32.mrb[0].mxu0
  %418 = vmatprep.mubr.f32.mxu0 0.0
  %v419 = vand.u32 %v191, 4294901760
  %v420 = vsub.f32 %v191, %v419
  %v421 = vand.u32 %v420, 4294901760
  %v422 = vsub.f32 %v420, %v421
  %v423 = vand.u32 %v422, 4294901760
  %424 = vmatmul.mubr.f32.gmra.mrb[0].mxu0 %v423
  %v425 = vpop.f32.mrb[0].mxu0
  %v426 = vadd.f32 0.0, %v425
  %v427 = vpop.f32.mrb[0].mxu0
  %428 = vdwg.mxu0
  %429 = vmatprep.subr.mxu0 0.0
  %v430 = vand.u32 %v137, 4294901760
  %v431 = vsub.f32 %v137, %v430
  %v432 = vand.u32 %v431, 4294901760
  %v433 = vsub.f32 %v431, %v432
  %v434 = vand.u32 %v433, 4294901760
  %435 = vmatpush1.msra.mxu0 %v434
  %436 = vmatprep.subr.mxu0 0.0
  %v437 = vand.u32 %v138, 4294901760
  %v438 = vsub.f32 %v138, %v437
  %v439 = vand.u32 %v438, 4294901760
  %v440 = vsub.f32 %v438, %v439
  %v441 = vand.u32 %v440, 4294901760
  %442 = vmatpush1.msra.mxu0 %v441
  %443 = vmatprep.subr.mxu0 0.0
  %v444 = vand.u32 %v139, 4294901760
  %v445 = vsub.f32 %v139, %v444
  %v446 = vand.u32 %v445, 4294901760
  %v447 = vsub.f32 %v445, %v446
  %v448 = vand.u32 %v447, 4294901760
  %449 = vmatpush1.msra.mxu0 %v448
  %450 = vmatprep.subr.mxu0 0.0
  %v451 = vand.u32 %v140, 4294901760
  %v452 = vsub.f32 %v140, %v451
  %v453 = vand.u32 %v452, 4294901760
  %v454 = vsub.f32 %v452, %v453
  %v455 = vand.u32 %v454, 4294901760
  %456 = vmatpush1.msra.mxu0 %v455
  %457 = vmatprep.subr.mxu0 0.0
  %v458 = vand.u32 %v141, 4294901760
  %v459 = vsub.f32 %v141, %v458
  %v460 = vand.u32 %v459, 4294901760
  %v461 = vsub.f32 %v459, %v460
  %v462 = vand.u32 %v461, 4294901760
  %463 = vmatpush1.msra.mxu0 %v462
  %464 = vmatprep.subr.mxu0 0.0
  %v465 = vand.u32 %v142, 4294901760
  %v466 = vsub.f32 %v142, %v465
  %v467 = vand.u32 %v466, 4294901760
  %v468 = vsub.f32 %v466, %v467
  %v469 = vand.u32 %v468, 4294901760
  %470 = vmatpush1.msra.mxu0 %v469
  %471 = vmatprep.subr.mxu0 0.0
  %v472 = vand.u32 %v195, 4294901760
  %v473 = vsub.f32 %v195, %v472
  %v474 = vand.u32 %v473, 4294901760
  %v475 = vsub.f32 %v473, %v474
  %v476 = vand.u32 %v475, 4294901760
  %477 = vmatpush1.msra.mxu0 %v476
  %478 = vmatprep.subr.mxu0 0.0
  %479 = vmatpush1.msra.mxu0 0.0
  %480 = vmatprep.subr.mxu0 0.0
  %481 = vmatpush1.msra.mxu0 0.0
  %482 = vmatprep.subr.mxu0 0.0
  %483 = vmatpush1.msra.mxu0 0.0
  %484 = vmatprep.subr.mxu0 0.0
  %485 = vmatpush1.msra.mxu0 0.0
  %486 = vmatprep.subr.mxu0 0.0
  %487 = vmatpush1.msra.mxu0 0.0
  %488 = vmatprep.subr.mxu0 0.0
  %489 = vmatpush1.msra.mxu0 0.0
  %490 = vmatprep.subr.mxu0 0.0
  %491 = vmatpush1.msra.mxu0 0.0
  %492 = vmatprep.subr.mxu0 0.0
  %493 = vmatpush1.msra.mxu0 0.0
  %494 = vmatprep.subr.mxu0 0.0
  %495 = vmatpush1.msra.mxu0 0.0
  %496 = vmatprep.subr.mxu0 0.0
  %497 = vmatpush1.msra.mxu0 0.0
  %498 = vmatprep.subr.mxu0 0.0
  %499 = vmatpush1.msra.mxu0 0.0
  %500 = vmatprep.subr.mxu0 0.0
  %501 = vmatpush1.msra.mxu0 0.0
  %502 = vmatprep.subr.mxu0 0.0
  %503 = vmatpush1.msra.mxu0 0.0
  %504 = vmatprep.subr.mxu0 0.0
  %505 = vmatpush1.msra.mxu0 0.0
  %506 = vmatprep.subr.mxu0 0.0
  %507 = vmatpush1.msra.mxu0 0.0
  %508 = vmatprep.subr.mxu0 0.0
  %509 = vmatpush1.msra.mxu0 0.0
  %510 = vmatprep.subr.mxu0 0.0
  %511 = vmatpush1.msra.mxu0 0.0
  %512 = vmatprep.subr.mxu0 0.0
  %513 = vmatpush1.msra.mxu0 0.0
  %514 = vmatprep.subr.mxu0 0.0
  %515 = vmatpush1.msra.mxu0 0.0
  %516 = vmatprep.subr.mxu0 0.0
  %517 = vmatpush1.msra.mxu0 0.0
  %518 = vmatprep.subr.mxu0 0.0
  %519 = vmatpush1.msra.mxu0 0.0
  %520 = vmatprep.subr.mxu0 0.0
  %521 = vmatpush1.msra.mxu0 0.0
  %522 = vmatprep.subr.mxu0 0.0
  %523 = vmatpush1.msra.mxu0 0.0
  %524 = vmatprep.subr.mxu0 0.0
  %525 = vmatpush1.msra.mxu0 0.0
  %526 = vmatprep.subr.mxu0 0.0
  %527 = vmatpush1.msra.mxu0 0.0
  %528 = vmatprep.mubr.f32.mxu0 0.0
  %v529 = vand.u32 %v146, 4294901760
  %530 = vmatmul.mubr.f32.gmra.mrb[0].mxu0 %v529
  %v531 = vpop.f32.mrb[0].mxu0
  %v532 = vadd.f32 %v276, %v531
  %v533 = vpop.f32.mrb[0].mxu0
  %534 = vmatprep.mubr.f32.mxu0 0.0
  %v535 = vand.u32 %v149, 4294901760
  %536 = vmatmul.mubr.f32.gmra.mrb[0].mxu0 %v535
  %v537 = vpop.f32.mrb[0].mxu0
  %v538 = vadd.f32 %v286, %v537
  %v539 = vpop.f32.mrb[0].mxu0
  %540 = vmatprep.mubr.f32.mxu0 0.0
  %v541 = vand.u32 %v152, 4294901760
  %542 = vmatmul.mubr.f32.gmra.mrb[0].mxu0 %v541
  %v543 = vpop.f32.mrb[0].mxu0
  %v544 = vadd.f32 %v296, %v543
  %v545 = vpop.f32.mrb[0].mxu0
  %546 = vmatprep.mubr.f32.mxu0 0.0
  %v547 = vand.u32 %v155, 4294901760
  %548 = vmatmul.mubr.f32.gmra.mrb[0].mxu0 %v547
  %v549 = vpop.f32.mrb[0].mxu0
  %v550 = vadd.f32 %v306, %v549
  %v551 = vpop.f32.mrb[0].mxu0
  %552 = vmatprep.mubr.f32.mxu0 0.0
  %v553 = vand.u32 %v158, 4294901760
  %554 = vmatmul.mubr.f32.gmra.mrb[0].mxu0 %v553
  %v555 = vpop.f32.mrb[0].mxu0
  %v556 = vadd.f32 %v316, %v555
  %v557 = vpop.f32.mrb[0].mxu0
  %558 = vmatprep.mubr.f32.mxu0 0.0
  %v559 = vand.u32 %v161, 4294901760
  %560 = vmatmul.mubr.f32.gmra.mrb[0].mxu0 %v559
  %v561 = vpop.f32.mrb[0].mxu0
  %v562 = vadd.f32 %v326, %v561
  %v563 = vpop.f32.mrb[0].mxu0
  %564 = vmatprep.mubr.f32.mxu0 0.0
  %v565 = vand.u32 %v164, 4294901760
  %566 = vmatmul.mubr.f32.gmra.mrb[0].mxu0 %v565
  %v567 = vpop.f32.mrb[0].mxu0
  %v568 = vadd.f32 %v336, %v567
  %v569 = vpop.f32.mrb[0].mxu0
  %570 = vmatprep.mubr.f32.mxu0 0.0
  %v571 = vand.u32 %v167, 4294901760
  %572 = vmatmul.mubr.f32.gmra.mrb[0].mxu0 %v571
  %v573 = vpop.f32.mrb[0].mxu0
  %v574 = vadd.f32 %v346, %v573
  %v575 = vpop.f32.mrb[0].mxu0
  %576 = vmatprep.mubr.f32.mxu0 0.0
  %v577 = vand.u32 %v170, 4294901760
  %578 = vmatmul.mubr.f32.gmra.mrb[0].mxu0 %v577
  %v579 = vpop.f32.mrb[0].mxu0
  %v580 = vadd.f32 %v356, %v579
  %v581 = vpop.f32.mrb[0].mxu0
  %582 = vmatprep.mubr.f32.mxu0 0.0
  %v583 = vand.u32 %v173, 4294901760
  %584 = vmatmul.mubr.f32.gmra.mrb[0].mxu0 %v583
  %v585 = vpop.f32.mrb[0].mxu0
  %v586 = vadd.f32 %v366, %v585
  %v587 = vpop.f32.mrb[0].mxu0
  %588 = vmatprep.mubr.f32.mxu0 0.0
  %v589 = vand.u32 %v176, 4294901760
  %590 = vmatmul.mubr.f32.gmra.mrb[0].mxu0 %v589
  %v591 = vpop.f32.mrb[0].mxu0
  %v592 = vadd.f32 %v376, %v591
  %v593 = vpop.f32.mrb[0].mxu0
  %594 = vmatprep.mubr.f32.mxu0 0.0
  %v595 = vand.u32 %v179, 4294901760
  %596 = vmatmul.mubr.f32.gmra.mrb[0].mxu0 %v595
  %v597 = vpop.f32.mrb[0].mxu0
  %v598 = vadd.f32 %v386, %v597
  %v599 = vpop.f32.mrb[0].mxu0
  %600 = vmatprep.mubr.f32.mxu0 0.0
  %v601 = vand.u32 %v182, 4294901760
  %602 = vmatmul.mubr.f32.gmra.mrb[0].mxu0 %v601
  %v603 = vpop.f32.mrb[0].mxu0
  %v604 = vadd.f32 %v396, %v603
  %v605 = vpop.f32.mrb[0].mxu0
  %606 = vmatprep.mubr.f32.mxu0 0.0
  %v607 = vand.u32 %v185, 4294901760
  %608 = vmatmul.mubr.f32.gmra.mrb[0].mxu0 %v607
  %v609 = vpop.f32.mrb[0].mxu0
  %v610 = vadd.f32 %v406, %v609
  %v611 = vpop.f32.mrb[0].mxu0
  %612 = vmatprep.mubr.f32.mxu0 0.0
  %v613 = vand.u32 %v188, 4294901760
  %614 = vmatmul.mubr.f32.gmra.mrb[0].mxu0 %v613
  %v615 = vpop.f32.mrb[0].mxu0
  %v616 = vadd.f32 %v416, %v615
  %v617 = vpop.f32.mrb[0].mxu0
  %618 = vmatprep.mubr.f32.mxu0 0.0
  %v619 = vand.u32 %v191, 4294901760
  %620 = vmatmul.mubr.f32.gmra.mrb[0].mxu0 %v619
  %v621 = vpop.f32.mrb[0].mxu0
  %v622 = vadd.f32 %v426, %v621
  %v623 = vpop.f32.mrb[0].mxu0
  %624 = vdwg.mxu0
  %625 = vmatprep.subr.mxu0 0.0
  %v626 = vand.u32 %v137, 4294901760
  %v627 = vsub.f32 %v137, %v626
  %628 = vmatpush1.msra.mxu0 %v627
  %629 = vmatprep.subr.mxu0 0.0
  %v630 = vand.u32 %v138, 4294901760
  %v631 = vsub.f32 %v138, %v630
  %632 = vmatpush1.msra.mxu0 %v631
  %633 = vmatprep.subr.mxu0 0.0
  %v634 = vand.u32 %v139, 4294901760
  %v635 = vsub.f32 %v139, %v634
  %636 = vmatpush1.msra.mxu0 %v635
  %637 = vmatprep.subr.mxu0 0.0
  %v638 = vand.u32 %v140, 4294901760
  %v639 = vsub.f32 %v140, %v638
  %640 = vmatpush1.msra.mxu0 %v639
  %641 = vmatprep.subr.mxu0 0.0
  %v642 = vand.u32 %v141, 4294901760
  %v643 = vsub.f32 %v141, %v642
  %644 = vmatpush1.msra.mxu0 %v643
  %645 = vmatprep.subr.mxu0 0.0
  %v646 = vand.u32 %v142, 4294901760
  %v647 = vsub.f32 %v142, %v646
  %648 = vmatpush1.msra.mxu0 %v647
  %649 = vmatprep.subr.mxu0 0.0
  %v650 = vand.u32 %v195, 4294901760
  %v651 = vsub.f32 %v195, %v650
  %652 = vmatpush1.msra.mxu0 %v651
  %653 = vmatprep.subr.mxu0 0.0
  %654 = vmatpush1.msra.mxu0 0.0
  %655 = vmatprep.subr.mxu0 0.0
  %656 = vmatpush1.msra.mxu0 0.0
  %657 = vmatprep.subr.mxu0 0.0
  %658 = vmatpush1.msra.mxu0 0.0
  %659 = vmatprep.subr.mxu0 0.0
  %660 = vmatpush1.msra.mxu0 0.0
  %661 = vmatprep.subr.mxu0 0.0
  %662 = vmatpush1.msra.mxu0 0.0
  %663 = vmatprep.subr.mxu0 0.0
  %664 = vmatpush1.msra.mxu0 0.0
  %665 = vmatprep.subr.mxu0 0.0
  %666 = vmatpush1.msra.mxu0 0.0
  %667 = vmatprep.subr.mxu0 0.0
  %668 = vmatpush1.msra.mxu0 0.0
  %669 = vmatprep.subr.mxu0 0.0
  %670 = vmatpush1.msra.mxu0 0.0
  %671 = vmatprep.subr.mxu0 0.0
  %672 = vmatpush1.msra.mxu0 0.0
  %673 = vmatprep.subr.mxu0 0.0
  %674 = vmatpush1.msra.mxu0 0.0
  %675 = vmatprep.subr.mxu0 0.0
  %676 = vmatpush1.msra.mxu0 0.0
  %677 = vmatprep.subr.mxu0 0.0
  %678 = vmatpush1.msra.mxu0 0.0
  %679 = vmatprep.subr.mxu0 0.0
  %680 = vmatpush1.msra.mxu0 0.0
  %681 = vmatprep.subr.mxu0 0.0
  %682 = vmatpush1.msra.mxu0 0.0
  %683 = vmatprep.subr.mxu0 0.0
  %684 = vmatpush1.msra.mxu0 0.0
  %685 = vmatprep.subr.mxu0 0.0
  %686 = vmatpush1.msra.mxu0 0.0
  %687 = vmatprep.subr.mxu0 0.0
  %688 = vmatpush1.msra.mxu0 0.0
  %689 = vmatprep.subr.mxu0 0.0
  %690 = vmatpush1.msra.mxu0 0.0
  %691 = vmatprep.subr.mxu0 0.0
  %692 = vmatpush1.msra.mxu0 0.0
  %693 = vmatprep.subr.mxu0 0.0
  %694 = vmatpush1.msra.mxu0 0.0
  %695 = vmatprep.subr.mxu0 0.0
  %696 = vmatpush1.msra.mxu0 0.0
  %697 = vmatprep.subr.mxu0 0.0
  %698 = vmatpush1.msra.mxu0 0.0
  %699 = vmatprep.subr.mxu0 0.0
  %700 = vmatpush1.msra.mxu0 0.0
  %701 = vmatprep.subr.mxu0 0.0
  %702 = vmatpush1.msra.mxu0 0.0
  %703 = vmatprep.mubr.f32.mxu0 0.0
  %v704 = vand.u32 %v146, 4294901760
  %v705 = vsub.f32 %v146, %v704
  %706 = vmatmul.mubr.f32.gmra.mrb[0].mxu0 %v705
  %v707 = vpop.f32.mrb[0].mxu0
  %v708 = vadd.f32 %v532, %v707
  %v709 = vpop.f32.mrb[0].mxu0
  %710 = vmatprep.mubr.f32.mxu0 0.0
  %v711 = vand.u32 %v149, 4294901760
  %v712 = vsub.f32 %v149, %v711
  %713 = vmatmul.mubr.f32.gmra.mrb[0].mxu0 %v712
  %v714 = vpop.f32.mrb[0].mxu0
  %v715 = vadd.f32 %v538, %v714
  %v716 = vpop.f32.mrb[0].mxu0
  %717 = vmatprep.mubr.f32.mxu0 0.0
  %v718 = vand.u32 %v152, 4294901760
  %v719 = vsub.f32 %v152, %v718
  %720 = vmatmul.mubr.f32.gmra.mrb[0].mxu0 %v719
  %v721 = vpop.f32.mrb[0].mxu0
  %v722 = vadd.f32 %v544, %v721
  %v723 = vpop.f32.mrb[0].mxu0
  %724 = vmatprep.mubr.f32.mxu0 0.0
  %v725 = vand.u32 %v155, 4294901760
  %v726 = vsub.f32 %v155, %v725
  %727 = vmatmul.mubr.f32.gmra.mrb[0].mxu0 %v726
  %v728 = vpop.f32.mrb[0].mxu0
  %v729 = vadd.f32 %v550, %v728
  %v730 = vpop.f32.mrb[0].mxu0
  %731 = vmatprep.mubr.f32.mxu0 0.0
  %v732 = vand.u32 %v158, 4294901760
  %v733 = vsub.f32 %v158, %v732
  %734 = vmatmul.mubr.f32.gmra.mrb[0].mxu0 %v733
  %v735 = vpop.f32.mrb[0].mxu0
  %v736 = vadd.f32 %v556, %v735
  %v737 = vpop.f32.mrb[0].mxu0
  %738 = vmatprep.mubr.f32.mxu0 0.0
  %v739 = vand.u32 %v161, 4294901760
  %v740 = vsub.f32 %v161, %v739
  %741 = vmatmul.mubr.f32.gmra.mrb[0].mxu0 %v740
  %v742 = vpop.f32.mrb[0].mxu0
  %v743 = vadd.f32 %v562, %v742
  %v744 = vpop.f32.mrb[0].mxu0
  %745 = vmatprep.mubr.f32.mxu0 0.0
  %v746 = vand.u32 %v164, 4294901760
  %v747 = vsub.f32 %v164, %v746
  %748 = vmatmul.mubr.f32.gmra.mrb[0].mxu0 %v747
  %v749 = vpop.f32.mrb[0].mxu0
  %v750 = vadd.f32 %v568, %v749
  %v751 = vpop.f32.mrb[0].mxu0
  %752 = vmatprep.mubr.f32.mxu0 0.0
  %v753 = vand.u32 %v167, 4294901760
  %v754 = vsub.f32 %v167, %v753
  %755 = vmatmul.mubr.f32.gmra.mrb[0].mxu0 %v754
  %v756 = vpop.f32.mrb[0].mxu0
  %v757 = vadd.f32 %v574, %v756
  %v758 = vpop.f32.mrb[0].mxu0
  %759 = vmatprep.mubr.f32.mxu0 0.0
  %v760 = vand.u32 %v170, 4294901760
  %v761 = vsub.f32 %v170, %v760
  %762 = vmatmul.mubr.f32.gmra.mrb[0].mxu0 %v761
  %v763 = vpop.f32.mrb[0].mxu0
  %v764 = vadd.f32 %v580, %v763
  %v765 = vpop.f32.mrb[0].mxu0
  %766 = vmatprep.mubr.f32.mxu0 0.0
  %v767 = vand.u32 %v173, 4294901760
  %v768 = vsub.f32 %v173, %v767
  %769 = vmatmul.mubr.f32.gmra.mrb[0].mxu0 %v768
  %v770 = vpop.f32.mrb[0].mxu0
  %v771 = vadd.f32 %v586, %v770
  %v772 = vpop.f32.mrb[0].mxu0
  %773 = vmatprep.mubr.f32.mxu0 0.0
  %v774 = vand.u32 %v176, 4294901760
  %v775 = vsub.f32 %v176, %v774
  %776 = vmatmul.mubr.f32.gmra.mrb[0].mxu0 %v775
  %v777 = vpop.f32.mrb[0].mxu0
  %v778 = vadd.f32 %v592, %v777
  %v779 = vpop.f32.mrb[0].mxu0
  %780 = vmatprep.mubr.f32.mxu0 0.0
  %v781 = vand.u32 %v179, 4294901760
  %v782 = vsub.f32 %v179, %v781
  %783 = vmatmul.mubr.f32.gmra.mrb[0].mxu0 %v782
  %v784 = vpop.f32.mrb[0].mxu0
  %v785 = vadd.f32 %v598, %v784
  %v786 = vpop.f32.mrb[0].mxu0
  %787 = vmatprep.mubr.f32.mxu0 0.0
  %v788 = vand.u32 %v182, 4294901760
  %v789 = vsub.f32 %v182, %v788
  %790 = vmatmul.mubr.f32.gmra.mrb[0].mxu0 %v789
  %v791 = vpop.f32.mrb[0].mxu0
  %v792 = vadd.f32 %v604, %v791
  %v793 = vpop.f32.mrb[0].mxu0
  %794 = vmatprep.mubr.f32.mxu0 0.0
  %v795 = vand.u32 %v185, 4294901760
  %v796 = vsub.f32 %v185, %v795
  %797 = vmatmul.mubr.f32.gmra.mrb[0].mxu0 %v796
  %v798 = vpop.f32.mrb[0].mxu0
  %v799 = vadd.f32 %v610, %v798
  %v800 = vpop.f32.mrb[0].mxu0
  %801 = vmatprep.mubr.f32.mxu0 0.0
  %v802 = vand.u32 %v188, 4294901760
  %v803 = vsub.f32 %v188, %v802
  %804 = vmatmul.mubr.f32.gmra.mrb[0].mxu0 %v803
  %v805 = vpop.f32.mrb[0].mxu0
  %v806 = vadd.f32 %v616, %v805
  %v807 = vpop.f32.mrb[0].mxu0
  %808 = vmatprep.mubr.f32.mxu0 0.0
  %v809 = vand.u32 %v191, 4294901760
  %v810 = vsub.f32 %v191, %v809
  %811 = vmatmul.mubr.f32.gmra.mrb[0].mxu0 %v810
  %v812 = vpop.f32.mrb[0].mxu0
  %v813 = vadd.f32 %v622, %v812
  %v814 = vpop.f32.mrb[0].mxu0
  %815 = vdwg.mxu0
  %816 = vmatprep.subr.mxu0 0.0
  %v817 = vand.u32 %v137, 4294901760
  %818 = vmatpush1.msra.mxu0 %v817
  %819 = vmatprep.subr.mxu0 0.0
  %v820 = vand.u32 %v138, 4294901760
  %821 = vmatpush1.msra.mxu0 %v820
  %822 = vmatprep.subr.mxu0 0.0
  %v823 = vand.u32 %v139, 4294901760
  %824 = vmatpush1.msra.mxu0 %v823
  %825 = vmatprep.subr.mxu0 0.0
  %v826 = vand.u32 %v140, 4294901760
  %827 = vmatpush1.msra.mxu0 %v826
  %828 = vmatprep.subr.mxu0 0.0
  %v829 = vand.u32 %v141, 4294901760
  %830 = vmatpush1.msra.mxu0 %v829
  %831 = vmatprep.subr.mxu0 0.0
  %v832 = vand.u32 %v142, 4294901760
  %833 = vmatpush1.msra.mxu0 %v832
  %834 = vmatprep.subr.mxu0 0.0
  %v835 = vand.u32 %v195, 4294901760
  %836 = vmatpush1.msra.mxu0 %v835
  %837 = vmatprep.subr.mxu0 0.0
  %838 = vmatpush1.msra.mxu0 0.0
  %839 = vmatprep.subr.mxu0 0.0
  %840 = vmatpush1.msra.mxu0 0.0
  %841 = vmatprep.subr.mxu0 0.0
  %842 = vmatpush1.msra.mxu0 0.0
  %843 = vmatprep.subr.mxu0 0.0
  %844 = vmatpush1.msra.mxu0 0.0
  %845 = vmatprep.subr.mxu0 0.0
  %846 = vmatpush1.msra.mxu0 0.0
  %847 = vmatprep.subr.mxu0 0.0
  %848 = vmatpush1.msra.mxu0 0.0
  %849 = vmatprep.subr.mxu0 0.0
  %850 = vmatpush1.msra.mxu0 0.0
  %851 = vmatprep.subr.mxu0 0.0
  %852 = vmatpush1.msra.mxu0 0.0
  %853 = vmatprep.subr.mxu0 0.0
  %854 = vmatpush1.msra.mxu0 0.0
  %855 = vmatprep.subr.mxu0 0.0
  %856 = vmatpush1.msra.mxu0 0.0
  %857 = vmatprep.subr.mxu0 0.0
  %858 = vmatpush1.msra.mxu0 0.0
  %859 = vmatprep.subr.mxu0 0.0
  %860 = vmatpush1.msra.mxu0 0.0
  %861 = vmatprep.subr.mxu0 0.0
  %862 = vmatpush1.msra.mxu0 0.0
  %863 = vmatprep.subr.mxu0 0.0
  %864 = vmatpush1.msra.mxu0 0.0
  %865 = vmatprep.subr.mxu0 0.0
  %866 = vmatpush1.msra.mxu0 0.0
  %867 = vmatprep.subr.mxu0 0.0
  %868 = vmatpush1.msra.mxu0 0.0
  %869 = vmatprep.subr.mxu0 0.0
  %870 = vmatpush1.msra.mxu0 0.0
  %871 = vmatprep.subr.mxu0 0.0
  %872 = vmatpush1.msra.mxu0 0.0
  %873 = vmatprep.subr.mxu0 0.0
  %874 = vmatpush1.msra.mxu0 0.0
  %875 = vmatprep.subr.mxu0 0.0
  %876 = vmatpush1.msra.mxu0 0.0
  %877 = vmatprep.subr.mxu0 0.0
  %878 = vmatpush1.msra.mxu0 0.0
  %879 = vmatprep.subr.mxu0 0.0
  %880 = vmatpush1.msra.mxu0 0.0
  %881 = vmatprep.subr.mxu0 0.0
  %882 = vmatpush1.msra.mxu0 0.0
  %883 = vmatprep.subr.mxu0 0.0
  %884 = vmatpush1.msra.mxu0 0.0
  %885 = vmatprep.subr.mxu0 0.0
  %886 = vmatpush1.msra.mxu0 0.0
  %887 = vmatprep.mubr.f32.mxu0 0.0
  %v888 = vand.u32 %v146, 4294901760
  %v889 = vsub.f32 %v146, %v888
  %v890 = vand.u32 %v889, 4294901760
  %891 = vmatmul.mubr.f32.gmra.mrb[0].mxu0 %v890
  %v892 = vpop.f32.mrb[0].mxu0
  %v893 = vadd.f32 %v708, %v892
  %v894 = vpop.f32.mrb[0].mxu0
  %895 = vmatprep.mubr.f32.mxu0 0.0
  %v896 = vand.u32 %v149, 4294901760
  %v897 = vsub.f32 %v149, %v896
  %v898 = vand.u32 %v897, 4294901760
  %899 = vmatmul.mubr.f32.gmra.mrb[0].mxu0 %v898
  %v900 = vpop.f32.mrb[0].mxu0
  %v901 = vadd.f32 %v715, %v900
  %v902 = vpop.f32.mrb[0].mxu0
  %903 = vmatprep.mubr.f32.mxu0 0.0
  %v904 = vand.u32 %v152, 4294901760
  %v905 = vsub.f32 %v152, %v904
  %v906 = vand.u32 %v905, 4294901760
  %907 = vmatmul.mubr.f32.gmra.mrb[0].mxu0 %v906
  %v908 = vpop.f32.mrb[0].mxu0
  %v909 = vadd.f32 %v722, %v908
  %v910 = vpop.f32.mrb[0].mxu0
  %911 = vmatprep.mubr.f32.mxu0 0.0
  %v912 = vand.u32 %v155, 4294901760
  %v913 = vsub.f32 %v155, %v912
  %v914 = vand.u32 %v913, 4294901760
  %915 = vmatmul.mubr.f32.gmra.mrb[0].mxu0 %v914
  %v916 = vpop.f32.mrb[0].mxu0
  %v917 = vadd.f32 %v729, %v916
  %v918 = vpop.f32.mrb[0].mxu0
  %919 = vmatprep.mubr.f32.mxu0 0.0
  %v920 = vand.u32 %v158, 4294901760
  %v921 = vsub.f32 %v158, %v920
  %v922 = vand.u32 %v921, 4294901760
  %923 = vmatmul.mubr.f32.gmra.mrb[0].mxu0 %v922
  %v924 = vpop.f32.mrb[0].mxu0
  %v925 = vadd.f32 %v736, %v924
  %v926 = vpop.f32.mrb[0].mxu0
  %927 = vmatprep.mubr.f32.mxu0 0.0
  %v928 = vand.u32 %v161, 4294901760
  %v929 = vsub.f32 %v161, %v928
  %v930 = vand.u32 %v929, 4294901760
  %931 = vmatmul.mubr.f32.gmra.mrb[0].mxu0 %v930
  %v932 = vpop.f32.mrb[0].mxu0
  %v933 = vadd.f32 %v743, %v932
  %v934 = vpop.f32.mrb[0].mxu0
  %935 = vmatprep.mubr.f32.mxu0 0.0
  %v936 = vand.u32 %v164, 4294901760
  %v937 = vsub.f32 %v164, %v936
  %v938 = vand.u32 %v937, 4294901760
  %939 = vmatmul.mubr.f32.gmra.mrb[0].mxu0 %v938
  %v940 = vpop.f32.mrb[0].mxu0
  %v941 = vadd.f32 %v750, %v940
  %v942 = vpop.f32.mrb[0].mxu0
  %943 = vmatprep.mubr.f32.mxu0 0.0
  %v944 = vand.u32 %v167, 4294901760
  %v945 = vsub.f32 %v167, %v944
  %v946 = vand.u32 %v945, 4294901760
  %947 = vmatmul.mubr.f32.gmra.mrb[0].mxu0 %v946
  %v948 = vpop.f32.mrb[0].mxu0
  %v949 = vadd.f32 %v757, %v948
  %v950 = vpop.f32.mrb[0].mxu0
  %951 = vmatprep.mubr.f32.mxu0 0.0
  %v952 = vand.u32 %v170, 4294901760
  %v953 = vsub.f32 %v170, %v952
  %v954 = vand.u32 %v953, 4294901760
  %955 = vmatmul.mubr.f32.gmra.mrb[0].mxu0 %v954
  %v956 = vpop.f32.mrb[0].mxu0
  %v957 = vadd.f32 %v764, %v956
  %v958 = vpop.f32.mrb[0].mxu0
  %959 = vmatprep.mubr.f32.mxu0 0.0
  %v960 = vand.u32 %v173, 4294901760
  %v961 = vsub.f32 %v173, %v960
  %v962 = vand.u32 %v961, 4294901760
  %963 = vmatmul.mubr.f32.gmra.mrb[0].mxu0 %v962
  %v964 = vpop.f32.mrb[0].mxu0
  %v965 = vadd.f32 %v771, %v964
  %v966 = vpop.f32.mrb[0].mxu0
  %967 = vmatprep.mubr.f32.mxu0 0.0
  %v968 = vand.u32 %v176, 4294901760
  %v969 = vsub.f32 %v176, %v968
  %v970 = vand.u32 %v969, 4294901760
  %971 = vmatmul.mubr.f32.gmra.mrb[0].mxu0 %v970
  %v972 = vpop.f32.mrb[0].mxu0
  %v973 = vadd.f32 %v778, %v972
  %v974 = vpop.f32.mrb[0].mxu0
  %975 = vmatprep.mubr.f32.mxu0 0.0
  %v976 = vand.u32 %v179, 4294901760
  %v977 = vsub.f32 %v179, %v976
  %v978 = vand.u32 %v977, 4294901760
  %979 = vmatmul.mubr.f32.gmra.mrb[0].mxu0 %v978
  %v980 = vpop.f32.mrb[0].mxu0
  %v981 = vadd.f32 %v785, %v980
  %v982 = vpop.f32.mrb[0].mxu0
  %983 = vmatprep.mubr.f32.mxu0 0.0
  %v984 = vand.u32 %v182, 4294901760
  %v985 = vsub.f32 %v182, %v984
  %v986 = vand.u32 %v985, 4294901760
  %987 = vmatmul.mubr.f32.gmra.mrb[0].mxu0 %v986
  %v988 = vpop.f32.mrb[0].mxu0
  %v989 = vadd.f32 %v792, %v988
  %v990 = vpop.f32.mrb[0].mxu0
  %991 = vmatprep.mubr.f32.mxu0 0.0
  %v992 = vand.u32 %v185, 4294901760
  %v993 = vsub.f32 %v185, %v992
  %v994 = vand.u32 %v993, 4294901760
  %995 = vmatmul.mubr.f32.gmra.mrb[0].mxu0 %v994
  %v996 = vpop.f32.mrb[0].mxu0
  %v997 = vadd.f32 %v799, %v996
  %v998 = vpop.f32.mrb[0].mxu0
  %999 = vmatprep.mubr.f32.mxu0 0.0
  %v1000 = vand.u32 %v188, 4294901760
  %v1001 = vsub.f32 %v188, %v1000
  %v1002 = vand.u32 %v1001, 4294901760
  %1003 = vmatmul.mubr.f32.gmra.mrb[0].mxu0 %v1002
  %v1004 = vpop.f32.mrb[0].mxu0
  %v1005 = vadd.f32 %v806, %v1004
  %v1006 = vpop.f32.mrb[0].mxu0
  %1007 = vmatprep.mubr.f32.mxu0 0.0
  %v1008 = vand.u32 %v191, 4294901760
  %v1009 = vsub.f32 %v191, %v1008
  %v1010 = vand.u32 %v1009, 4294901760
  %1011 = vmatmul.mubr.f32.gmra.mrb[0].mxu0 %v1010
  %v1012 = vpop.f32.mrb[0].mxu0
  %v1013 = vadd.f32 %v813, %v1012
  %v1014 = vpop.f32.mrb[0].mxu0
  %1015 = vdwg.mxu0
  %1016 = vmatprep.subr.mxu0 0.0
  %v1017 = vand.u32 %v137, 4294901760
  %v1018 = vsub.f32 %v137, %v1017
  %v1019 = vand.u32 %v1018, 4294901760
  %1020 = vmatpush1.msra.mxu0 %v1019
  %1021 = vmatprep.subr.mxu0 0.0
  %v1022 = vand.u32 %v138, 4294901760
  %v1023 = vsub.f32 %v138, %v1022
  %v1024 = vand.u32 %v1023, 4294901760
  %1025 = vmatpush1.msra.mxu0 %v1024
  %1026 = vmatprep.subr.mxu0 0.0
  %v1027 = vand.u32 %v139, 4294901760
  %v1028 = vsub.f32 %v139, %v1027
  %v1029 = vand.u32 %v1028, 4294901760
  %1030 = vmatpush1.msra.mxu0 %v1029
  %1031 = vmatprep.subr.mxu0 0.0
  %v1032 = vand.u32 %v140, 4294901760
  %v1033 = vsub.f32 %v140, %v1032
  %v1034 = vand.u32 %v1033, 4294901760
  %1035 = vmatpush1.msra.mxu0 %v1034
  %1036 = vmatprep.subr.mxu0 0.0
  %v1037 = vand.u32 %v141, 4294901760
  %v1038 = vsub.f32 %v141, %v1037
  %v1039 = vand.u32 %v1038, 4294901760
  %1040 = vmatpush1.msra.mxu0 %v1039
  %1041 = vmatprep.subr.mxu0 0.0
  %v1042 = vand.u32 %v142, 4294901760
  %v1043 = vsub.f32 %v142, %v1042
  %v1044 = vand.u32 %v1043, 4294901760
  %1045 = vmatpush1.msra.mxu0 %v1044
  %1046 = vmatprep.subr.mxu0 0.0
  %v1047 = vand.u32 %v195, 4294901760
  %v1048 = vsub.f32 %v195, %v1047
  %v1049 = vand.u32 %v1048, 4294901760
  %1050 = vmatpush1.msra.mxu0 %v1049
  %1051 = vmatprep.subr.mxu0 0.0
  %1052 = vmatpush1.msra.mxu0 0.0
  %1053 = vmatprep.subr.mxu0 0.0
  %1054 = vmatpush1.msra.mxu0 0.0
  %1055 = vmatprep.subr.mxu0 0.0
  %1056 = vmatpush1.msra.mxu0 0.0
  %1057 = vmatprep.subr.mxu0 0.0
  %1058 = vmatpush1.msra.mxu0 0.0
  %1059 = vmatprep.subr.mxu0 0.0
  %1060 = vmatpush1.msra.mxu0 0.0
  %1061 = vmatprep.subr.mxu0 0.0
  %1062 = vmatpush1.msra.mxu0 0.0
  %1063 = vmatprep.subr.mxu0 0.0
  %1064 = vmatpush1.msra.mxu0 0.0
  %1065 = vmatprep.subr.mxu0 0.0
  %1066 = vmatpush1.msra.mxu0 0.0
  %1067 = vmatprep.subr.mxu0 0.0
  %1068 = vmatpush1.msra.mxu0 0.0
  %1069 = vmatprep.subr.mxu0 0.0
  %1070 = vmatpush1.msra.mxu0 0.0
  %1071 = vmatprep.subr.mxu0 0.0
  %1072 = vmatpush1.msra.mxu0 0.0
  %1073 = vmatprep.subr.mxu0 0.0
  %1074 = vmatpush1.msra.mxu0 0.0
  %1075 = vmatprep.subr.mxu0 0.0
  %1076 = vmatpush1.msra.mxu0 0.0
  %1077 = vmatprep.subr.mxu0 0.0
  %1078 = vmatpush1.msra.mxu0 0.0
  %1079 = vmatprep.subr.mxu0 0.0
  %1080 = vmatpush1.msra.mxu0 0.0
  %1081 = vmatprep.subr.mxu0 0.0
  %1082 = vmatpush1.msra.mxu0 0.0
  %1083 = vmatprep.subr.mxu0 0.0
  %1084 = vmatpush1.msra.mxu0 0.0
  %1085 = vmatprep.subr.mxu0 0.0
  %1086 = vmatpush1.msra.mxu0 0.0
  %1087 = vmatprep.subr.mxu0 0.0
  %1088 = vmatpush1.msra.mxu0 0.0
  %1089 = vmatprep.subr.mxu0 0.0
  %1090 = vmatpush1.msra.mxu0 0.0
  %1091 = vmatprep.subr.mxu0 0.0
  %1092 = vmatpush1.msra.mxu0 0.0
  %1093 = vmatprep.subr.mxu0 0.0
  %1094 = vmatpush1.msra.mxu0 0.0
  %1095 = vmatprep.subr.mxu0 0.0
  %1096 = vmatpush1.msra.mxu0 0.0
  %1097 = vmatprep.subr.mxu0 0.0
  %1098 = vmatpush1.msra.mxu0 0.0
  %1099 = vmatprep.subr.mxu0 0.0
  %1100 = vmatpush1.msra.mxu0 0.0
  %1101 = vmatprep.mubr.f32.mxu0 0.0
  %v1102 = vand.u32 %v146, 4294901760
  %1103 = vmatmul.mubr.f32.gmra.mrb[0].mxu0 %v1102
  %v1104 = vpop.f32.mrb[0].mxu0
  %v1105 = vadd.f32 %v893, %v1104
  %v1106 = vpop.f32.mrb[0].mxu0
  %1107 = vmatprep.mubr.f32.mxu0 0.0
  %v1108 = vand.u32 %v149, 4294901760
  %1109 = vmatmul.mubr.f32.gmra.mrb[0].mxu0 %v1108
  %v1110 = vpop.f32.mrb[0].mxu0
  %v1111 = vadd.f32 %v901, %v1110
  %v1112 = vpop.f32.mrb[0].mxu0
  %1113 = vmatprep.mubr.f32.mxu0 0.0
  %v1114 = vand.u32 %v152, 4294901760
  %1115 = vmatmul.mubr.f32.gmra.mrb[0].mxu0 %v1114
  %v1116 = vpop.f32.mrb[0].mxu0
  %v1117 = vadd.f32 %v909, %v1116
  %v1118 = vpop.f32.mrb[0].mxu0
  %1119 = vmatprep.mubr.f32.mxu0 0.0
  %v1120 = vand.u32 %v155, 4294901760
  %1121 = vmatmul.mubr.f32.gmra.mrb[0].mxu0 %v1120
  %v1122 = vpop.f32.mrb[0].mxu0
  %v1123 = vadd.f32 %v917, %v1122
  %v1124 = vpop.f32.mrb[0].mxu0
  %1125 = vmatprep.mubr.f32.mxu0 0.0
  %v1126 = vand.u32 %v158, 4294901760
  %1127 = vmatmul.mubr.f32.gmra.mrb[0].mxu0 %v1126
  %v1128 = vpop.f32.mrb[0].mxu0
  %v1129 = vadd.f32 %v925, %v1128
  %v1130 = vpop.f32.mrb[0].mxu0
  %1131 = vmatprep.mubr.f32.mxu0 0.0
  %v1132 = vand.u32 %v161, 4294901760
  %1133 = vmatmul.mubr.f32.gmra.mrb[0].mxu0 %v1132
  %v1134 = vpop.f32.mrb[0].mxu0
  %v1135 = vadd.f32 %v933, %v1134
  %v1136 = vpop.f32.mrb[0].mxu0
  %1137 = vmatprep.mubr.f32.mxu0 0.0
  %v1138 = vand.u32 %v164, 4294901760
  %1139 = vmatmul.mubr.f32.gmra.mrb[0].mxu0 %v1138
  %v1140 = vpop.f32.mrb[0].mxu0
  %v1141 = vadd.f32 %v941, %v1140
  %v1142 = vpop.f32.mrb[0].mxu0
  %1143 = vmatprep.mubr.f32.mxu0 0.0
  %v1144 = vand.u32 %v167, 4294901760
  %1145 = vmatmul.mubr.f32.gmra.mrb[0].mxu0 %v1144
  %v1146 = vpop.f32.mrb[0].mxu0
  %v1147 = vadd.f32 %v949, %v1146
  %v1148 = vpop.f32.mrb[0].mxu0
  %1149 = vmatprep.mubr.f32.mxu0 0.0
  %v1150 = vand.u32 %v170, 4294901760
  %1151 = vmatmul.mubr.f32.gmra.mrb[0].mxu0 %v1150
  %v1152 = vpop.f32.mrb[0].mxu0
  %v1153 = vadd.f32 %v957, %v1152
  %v1154 = vpop.f32.mrb[0].mxu0
  %1155 = vmatprep.mubr.f32.mxu0 0.0
  %v1156 = vand.u32 %v173, 4294901760
  %1157 = vmatmul.mubr.f32.gmra.mrb[0].mxu0 %v1156
  %v1158 = vpop.f32.mrb[0].mxu0
  %v1159 = vadd.f32 %v965, %v1158
  %v1160 = vpop.f32.mrb[0].mxu0
  %1161 = vmatprep.mubr.f32.mxu0 0.0
  %v1162 = vand.u32 %v176, 4294901760
  %1163 = vmatmul.mubr.f32.gmra.mrb[0].mxu0 %v1162
  %v1164 = vpop.f32.mrb[0].mxu0
  %v1165 = vadd.f32 %v973, %v1164
  %v1166 = vpop.f32.mrb[0].mxu0
  %1167 = vmatprep.mubr.f32.mxu0 0.0
  %v1168 = vand.u32 %v179, 4294901760
  %1169 = vmatmul.mubr.f32.gmra.mrb[0].mxu0 %v1168
  %v1170 = vpop.f32.mrb[0].mxu0
  %v1171 = vadd.f32 %v981, %v1170
  %v1172 = vpop.f32.mrb[0].mxu0
  %1173 = vmatprep.mubr.f32.mxu0 0.0
  %v1174 = vand.u32 %v182, 4294901760
  %1175 = vmatmul.mubr.f32.gmra.mrb[0].mxu0 %v1174
  %v1176 = vpop.f32.mrb[0].mxu0
  %v1177 = vadd.f32 %v989, %v1176
  %v1178 = vpop.f32.mrb[0].mxu0
  %1179 = vmatprep.mubr.f32.mxu0 0.0
  %v1180 = vand.u32 %v185, 4294901760
  %1181 = vmatmul.mubr.f32.gmra.mrb[0].mxu0 %v1180
  %v1182 = vpop.f32.mrb[0].mxu0
  %v1183 = vadd.f32 %v997, %v1182
  %v1184 = vpop.f32.mrb[0].mxu0
  %1185 = vmatprep.mubr.f32.mxu0 0.0
  %v1186 = vand.u32 %v188, 4294901760
  %1187 = vmatmul.mubr.f32.gmra.mrb[0].mxu0 %v1186
  %v1188 = vpop.f32.mrb[0].mxu0
  %v1189 = vadd.f32 %v1005, %v1188
  %v1190 = vpop.f32.mrb[0].mxu0
  %1191 = vmatprep.mubr.f32.mxu0 0.0
  %v1192 = vand.u32 %v191, 4294901760
  %1193 = vmatmul.mubr.f32.gmra.mrb[0].mxu0 %v1192
  %v1194 = vpop.f32.mrb[0].mxu0
  %v1195 = vadd.f32 %v1013, %v1194
  %v1196 = vpop.f32.mrb[0].mxu0
  %1197 = vdwg.mxu0
  %1198 = vmatprep.subr.mxu0 0.0
  %v1199 = vand.u32 %v137, 4294901760
  %1200 = vmatpush1.msra.mxu0 %v1199
  %1201 = vmatprep.subr.mxu0 0.0
  %v1202 = vand.u32 %v138, 4294901760
  %1203 = vmatpush1.msra.mxu0 %v1202
  %1204 = vmatprep.subr.mxu0 0.0
  %v1205 = vand.u32 %v139, 4294901760
  %1206 = vmatpush1.msra.mxu0 %v1205
  %1207 = vmatprep.subr.mxu0 0.0
  %v1208 = vand.u32 %v140, 4294901760
  %1209 = vmatpush1.msra.mxu0 %v1208
  %1210 = vmatprep.subr.mxu0 0.0
  %v1211 = vand.u32 %v141, 4294901760
  %1212 = vmatpush1.msra.mxu0 %v1211
  %1213 = vmatprep.subr.mxu0 0.0
  %v1214 = vand.u32 %v142, 4294901760
  %1215 = vmatpush1.msra.mxu0 %v1214
  %1216 = vmatprep.subr.mxu0 0.0
  %v1217 = vand.u32 %v195, 4294901760
  %1218 = vmatpush1.msra.mxu0 %v1217
  %1219 = vmatprep.subr.mxu0 0.0
  %1220 = vmatpush1.msra.mxu0 0.0
  %1221 = vmatprep.subr.mxu0 0.0
  %1222 = vmatpush1.msra.mxu0 0.0
  %1223 = vmatprep.subr.mxu0 0.0
  %1224 = vmatpush1.msra.mxu0 0.0
  %1225 = vmatprep.subr.mxu0 0.0
  %1226 = vmatpush1.msra.mxu0 0.0
  %1227 = vmatprep.subr.mxu0 0.0
  %1228 = vmatpush1.msra.mxu0 0.0
  %1229 = vmatprep.subr.mxu0 0.0
  %1230 = vmatpush1.msra.mxu0 0.0
  %1231 = vmatprep.subr.mxu0 0.0
  %1232 = vmatpush1.msra.mxu0 0.0
  %1233 = vmatprep.subr.mxu0 0.0
  %1234 = vmatpush1.msra.mxu0 0.0
  %1235 = vmatprep.subr.mxu0 0.0
  %1236 = vmatpush1.msra.mxu0 0.0
  %1237 = vmatprep.subr.mxu0 0.0
  %1238 = vmatpush1.msra.mxu0 0.0
  %1239 = vmatprep.subr.mxu0 0.0
  %1240 = vmatpush1.msra.mxu0 0.0
  %1241 = vmatprep.subr.mxu0 0.0
  %1242 = vmatpush1.msra.mxu0 0.0
  %1243 = vmatprep.subr.mxu0 0.0
  %1244 = vmatpush1.msra.mxu0 0.0
  %1245 = vmatprep.subr.mxu0 0.0
  %1246 = vmatpush1.msra.mxu0 0.0
  %1247 = vmatprep.subr.mxu0 0.0
  %1248 = vmatpush1.msra.mxu0 0.0
  %1249 = vmatprep.subr.mxu0 0.0
  %1250 = vmatpush1.msra.mxu0 0.0
  %1251 = vmatprep.subr.mxu0 0.0
  %1252 = vmatpush1.msra.mxu0 0.0
  %1253 = vmatprep.subr.mxu0 0.0
  %1254 = vmatpush1.msra.mxu0 0.0
  %1255 = vmatprep.subr.mxu0 0.0
  %1256 = vmatpush1.msra.mxu0 0.0
  %1257 = vmatprep.subr.mxu0 0.0
  %1258 = vmatpush1.msra.mxu0 0.0
  %1259 = vmatprep.subr.mxu0 0.0
  %1260 = vmatpush1.msra.mxu0 0.0
  %1261 = vmatprep.subr.mxu0 0.0
  %1262 = vmatpush1.msra.mxu0 0.0
  %1263 = vmatprep.subr.mxu0 0.0
  %1264 = vmatpush1.msra.mxu0 0.0
  %1265 = vmatprep.subr.mxu0 0.0
  %1266 = vmatpush1.msra.mxu0 0.0
  %1267 = vmatprep.subr.mxu0 0.0
  %1268 = vmatpush1.msra.mxu0 0.0
  %1269 = vmatprep.mubr.f32.mxu0 0.0
  %v1270 = vand.u32 %v146, 4294901760
  %1271 = vmatmul.mubr.f32.gmra.mrb[0].mxu0 %v1270
  %v1272 = vpop.f32.mrb[0].mxu0
  %v1273 = vadd.f32 %v1105, %v1272
  %v1274 = vpop.f32.mrb[0].mxu0
  %1275 = vmatprep.mubr.f32.mxu0 0.0
  %v1276 = vand.u32 %v149, 4294901760
  %1277 = vmatmul.mubr.f32.gmra.mrb[0].mxu0 %v1276
  %v1278 = vpop.f32.mrb[0].mxu0
  %v1279 = vadd.f32 %v1111, %v1278
  %v1280 = vpop.f32.mrb[0].mxu0
  %1281 = vmatprep.mubr.f32.mxu0 0.0
  %v1282 = vand.u32 %v152, 4294901760
  %1283 = vmatmul.mubr.f32.gmra.mrb[0].mxu0 %v1282
  %v1284 = vpop.f32.mrb[0].mxu0
  %v1285 = vadd.f32 %v1117, %v1284
  %v1286 = vpop.f32.mrb[0].mxu0
  %1287 = vmatprep.mubr.f32.mxu0 0.0
  %v1288 = vand.u32 %v155, 4294901760
  %1289 = vmatmul.mubr.f32.gmra.mrb[0].mxu0 %v1288
  %v1290 = vpop.f32.mrb[0].mxu0
  %v1291 = vadd.f32 %v1123, %v1290
  %v1292 = vpop.f32.mrb[0].mxu0
  %1293 = vmatprep.mubr.f32.mxu0 0.0
  %v1294 = vand.u32 %v158, 4294901760
  %1295 = vmatmul.mubr.f32.gmra.mrb[0].mxu0 %v1294
  %v1296 = vpop.f32.mrb[0].mxu0
  %v1297 = vadd.f32 %v1129, %v1296
  %v1298 = vpop.f32.mrb[0].mxu0
  %1299 = vmatprep.mubr.f32.mxu0 0.0
  %v1300 = vand.u32 %v161, 4294901760
  %1301 = vmatmul.mubr.f32.gmra.mrb[0].mxu0 %v1300
  %v1302 = vpop.f32.mrb[0].mxu0
  %v1303 = vadd.f32 %v1135, %v1302
  %v1304 = vpop.f32.mrb[0].mxu0
  %1305 = vmatprep.mubr.f32.mxu0 0.0
  %v1306 = vand.u32 %v164, 4294901760
  %1307 = vmatmul.mubr.f32.gmra.mrb[0].mxu0 %v1306
  %v1308 = vpop.f32.mrb[0].mxu0
  %v1309 = vadd.f32 %v1141, %v1308
  %v1310 = vpop.f32.mrb[0].mxu0
  %1311 = vmatprep.mubr.f32.mxu0 0.0
  %v1312 = vand.u32 %v167, 4294901760
  %1313 = vmatmul.mubr.f32.gmra.mrb[0].mxu0 %v1312
  %v1314 = vpop.f32.mrb[0].mxu0
  %v1315 = vadd.f32 %v1147, %v1314
  %v1316 = vpop.f32.mrb[0].mxu0
  %1317 = vmatprep.mubr.f32.mxu0 0.0
  %v1318 = vand.u32 %v170, 4294901760
  %1319 = vmatmul.mubr.f32.gmra.mrb[0].mxu0 %v1318
  %v1320 = vpop.f32.mrb[0].mxu0
  %v1321 = vadd.f32 %v1153, %v1320
  %v1322 = vpop.f32.mrb[0].mxu0
  %1323 = vmatprep.mubr.f32.mxu0 0.0
  %v1324 = vand.u32 %v173, 4294901760
  %1325 = vmatmul.mubr.f32.gmra.mrb[0].mxu0 %v1324
  %v1326 = vpop.f32.mrb[0].mxu0
  %v1327 = vadd.f32 %v1159, %v1326
  %v1328 = vpop.f32.mrb[0].mxu0
  %1329 = vmatprep.mubr.f32.mxu0 0.0
  %v1330 = vand.u32 %v176, 4294901760
  %1331 = vmatmul.mubr.f32.gmra.mrb[0].mxu0 %v1330
  %v1332 = vpop.f32.mrb[0].mxu0
  %v1333 = vadd.f32 %v1165, %v1332
  %v1334 = vpop.f32.mrb[0].mxu0
  %1335 = vmatprep.mubr.f32.mxu0 0.0
  %v1336 = vand.u32 %v179, 4294901760
  %1337 = vmatmul.mubr.f32.gmra.mrb[0].mxu0 %v1336
  %v1338 = vpop.f32.mrb[0].mxu0
  %v1339 = vadd.f32 %v1171, %v1338
  %v1340 = vpop.f32.mrb[0].mxu0
  %1341 = vmatprep.mubr.f32.mxu0 0.0
  %v1342 = vand.u32 %v182, 4294901760
  %1343 = vmatmul.mubr.f32.gmra.mrb[0].mxu0 %v1342
  %v1344 = vpop.f32.mrb[0].mxu0
  %v1345 = vadd.f32 %v1177, %v1344
  %v1346 = vpop.f32.mrb[0].mxu0
  %1347 = vmatprep.mubr.f32.mxu0 0.0
  %v1348 = vand.u32 %v185, 4294901760
  %1349 = vmatmul.mubr.f32.gmra.mrb[0].mxu0 %v1348
  %v1350 = vpop.f32.mrb[0].mxu0
  %v1351 = vadd.f32 %v1183, %v1350
  %v1352 = vpop.f32.mrb[0].mxu0
  %1353 = vmatprep.mubr.f32.mxu0 0.0
  %v1354 = vand.u32 %v188, 4294901760
  %1355 = vmatmul.mubr.f32.gmra.mrb[0].mxu0 %v1354
  %v1356 = vpop.f32.mrb[0].mxu0
  %v1357 = vadd.f32 %v1189, %v1356
  %v1358 = vpop.f32.mrb[0].mxu0
  %1359 = vmatprep.mubr.f32.mxu0 0.0
  %v1360 = vand.u32 %v191, 4294901760
  %1361 = vmatmul.mubr.f32.gmra.mrb[0].mxu0 %v1360
  %v1362 = vpop.f32.mrb[0].mxu0
  %v1363 = vadd.f32 %v1195, %v1362
  %v1364 = vpop.f32.mrb[0].mxu0
  %1365 = vdwg.mxu0
  %v1366 = vlaneseq
  %v1367 = vshrl.u32 %v1366, 7
  %v1368 = vadd.s32 %v1367, 8
  %v1369 = vadd.s32 %v1367, 16
  %v1370 = vadd.s32 %v1367, 24
  %v1371 = vadd.s32 %v1367, 32
  %v1372 = vadd.s32 %v1367, 40
  %v1373 = vadd.s32 %v1367, 48
  %v1374 = vadd.s32 %v1367, 56
  %v1375 = vadd.s32 %v1367, 64
  %v1376 = vadd.s32 %v1367, 72
  %v1377 = vadd.s32 %v1367, 80
  %v1378 = vadd.s32 %v1367, 88
  %v1379 = vadd.s32 %v1367, 96
  %v1380 = vadd.s32 %v1367, 104
  %v1381 = vadd.s32 %v1367, 112
  %v1382 = vadd.s32 %v1367, 120
  %v1383 = vand.u32 %v1367, 15
  %v1384 = vand.u32 %v1368, 15
  %v1385 = vand.u32 %v1369, 15
  %v1386 = vand.u32 %v1370, 15
  %v1387 = vand.u32 %v1371, 15
  %v1388 = vand.u32 %v1372, 15
  %v1389 = vand.u32 %v1373, 15
  %v1390 = vand.u32 %v1374, 15
  %v1391 = vand.u32 %v1375, 15
  %v1392 = vand.u32 %v1376, 15
  %v1393 = vand.u32 %v1377, 15
  %v1394 = vand.u32 %v1378, 15
  %v1395 = vand.u32 %v1379, 15
  %v1396 = vand.u32 %v1380, 15
  %v1397 = vand.u32 %v1381, 15
  %v1398 = vand.u32 %v1382, 15
  %v1399 = vld [vmem:[%s2] sm:$0xff]
  %v1400 = vld [vmem:[%s2 + $0x8] sm:$0xff]
  %v1401 = vld [vmem:[%s2 + $0x10] sm:$0xff]
  %v1402 = vld [vmem:[%s2 + $0x18] sm:$0xff]
  %v1403 = vld [vmem:[%s2 + $0x20] sm:$0xff]
  %v1404 = vld [vmem:[%s2 + $0x28] sm:$0xff]
  %v1405 = vld [vmem:[%s2 + $0x30] sm:$0xff]
  %v1406 = vld [vmem:[%s2 + $0x38] sm:$0xff]
  %v1407 = vld [vmem:[%s2 + $0x40] sm:$0xff]
  %v1408 = vld [vmem:[%s2 + $0x48] sm:$0xff]
  %v1409 = vld [vmem:[%s2 + $0x50] sm:$0xff]
  %v1410 = vld [vmem:[%s2 + $0x58] sm:$0xff]
  %v1411 = vld [vmem:[%s2 + $0x60] sm:$0xff]
  %v1412 = vld [vmem:[%s2 + $0x68] sm:$0xff]
  %v1413 = vld [vmem:[%s2 + $0x70] sm:$0xff]
  %v1414 = vld [vmem:[%s2 + $0x78] sm:$0xff]
  %v1415 = vld [vmem:[%s2 + $0x80] sm:$0xff]
  %v1416 = vld [vmem:[%s2 + $0x88] sm:$0xff]
  %v1417 = vld [vmem:[%s2 + $0x90] sm:$0xff]
  %v1418 = vld [vmem:[%s2 + $0x98] sm:$0xff]
  %v1419 = vrot.slane %v1273, 6
  %v1420 = vrot.slane %v1279, 6
  %v1421 = vrot.slane %v1285, 6
  %v1422 = vrot.slane %v1291, 6
  %v1423 = vrot.slane %v1297, 6
  %v1424 = vrot.slane %v1303, 6
  %v1425 = vrot.slane %v1309, 6
  %v1426 = vrot.slane %v1315, 6
  %v1427 = vrot.slane %v1321, 6
  %v1428 = vrot.slane %v1327, 6
  %v1429 = vrot.slane %v1333, 6
  %v1430 = vrot.slane %v1339, 6
  %v1431 = vrot.slane %v1345, 6
  %v1432 = vrot.slane %v1351, 6
  %v1433 = vrot.slane %v1357, 6
  %v1434 = vrot.slane %v1363, 6
  %vm1435 = vcmp.lt.s32.totalorder %v1367, 2
  %v1436 = vsel %vm1435, %v1433, %v1434
  %v1437 = vsel %vm1435, %v1432, %v1433
  %v1438 = vsel %vm1435, %v1431, %v1432
  %v1439 = vsel %vm1435, %v1430, %v1431
  %v1440 = vsel %vm1435, %v1429, %v1430
  %v1441 = vsel %vm1435, %v1428, %v1429
  %v1442 = vsel %vm1435, %v1427, %v1428
  %v1443 = vsel %vm1435, %v1426, %v1427
  %v1444 = vsel %vm1435, %v1425, %v1426
  %v1445 = vsel %vm1435, %v1424, %v1425
  %v1446 = vsel %vm1435, %v1423, %v1424
  %v1447 = vsel %vm1435, %v1422, %v1423
  %v1448 = vsel %vm1435, %v1421, %v1422
  %v1449 = vsel %vm1435, %v1420, %v1421
  %v1450 = vsel %vm1435, %v1419, %v1420
  %v1451 = vsel %vm1435, %v1434, %v1419
  %v1452 = vadd.s32 %v1383, 4294967294
  %v1453 = vadd.s32 %v1384, 4294967294
  %v1454 = vadd.s32 %v1385, 4294967294
  %v1455 = vadd.s32 %v1386, 4294967294
  %v1456 = vadd.s32 %v1387, 4294967294
  %v1457 = vadd.s32 %v1388, 4294967294
  %v1458 = vadd.s32 %v1389, 4294967294
  %v1459 = vadd.s32 %v1390, 4294967294
  %v1460 = vadd.s32 %v1391, 4294967294
  %v1461 = vadd.s32 %v1392, 4294967294
  %v1462 = vadd.s32 %v1393, 4294967294
  %v1463 = vadd.s32 %v1394, 4294967294
  %v1464 = vadd.s32 %v1395, 4294967294
  %v1465 = vadd.s32 %v1396, 4294967294
  %v1466 = vadd.s32 %v1397, 4294967294
  %v1467 = vadd.s32 %v1398, 4294967294
  %vm1468 = vcmp.ge.s32.totalorder %v1452, 0
  %vm1469 = vcmp.ge.s32.totalorder %v1453, 0
  %vm1470 = vcmp.ge.s32.totalorder %v1454, 0
  %vm1471 = vcmp.ge.s32.totalorder %v1455, 0
  %vm1472 = vcmp.ge.s32.totalorder %v1456, 0
  %vm1473 = vcmp.ge.s32.totalorder %v1457, 0
  %vm1474 = vcmp.ge.s32.totalorder %v1458, 0
  %vm1475 = vcmp.ge.s32.totalorder %v1459, 0
  %vm1476 = vcmp.ge.s32.totalorder %v1460, 0
  %vm1477 = vcmp.ge.s32.totalorder %v1461, 0
  %vm1478 = vcmp.ge.s32.totalorder %v1462, 0
  %vm1479 = vcmp.ge.s32.totalorder %v1463, 0
  %vm1480 = vcmp.ge.s32.totalorder %v1464, 0
  %vm1481 = vcmp.ge.s32.totalorder %v1465, 0
  %vm1482 = vcmp.ge.s32.totalorder %v1466, 0
  %vm1483 = vcmp.ge.s32.totalorder %v1467, 0
  %vm1484 = vcmp.lt.s32.totalorder %v1452, 16
  %vm1485 = vcmp.lt.s32.totalorder %v1453, 16
  %vm1486 = vcmp.lt.s32.totalorder %v1454, 16
  %vm1487 = vcmp.lt.s32.totalorder %v1455, 16
  %vm1488 = vcmp.lt.s32.totalorder %v1456, 16
  %vm1489 = vcmp.lt.s32.totalorder %v1457, 16
  %vm1490 = vcmp.lt.s32.totalorder %v1458, 16
  %vm1491 = vcmp.lt.s32.totalorder %v1459, 16
  %vm1492 = vcmp.lt.s32.totalorder %v1460, 16
  %vm1493 = vcmp.lt.s32.totalorder %v1461, 16
  %vm1494 = vcmp.lt.s32.totalorder %v1462, 16
  %vm1495 = vcmp.lt.s32.totalorder %v1463, 16
  %vm1496 = vcmp.lt.s32.totalorder %v1464, 16
  %vm1497 = vcmp.lt.s32.totalorder %v1465, 16
  %vm1498 = vcmp.lt.s32.totalorder %v1466, 16
  %vm1499 = vcmp.lt.s32.totalorder %v1467, 16
  %vm1500 = vmand %vm1468, %vm1484
  %vm1501 = vmand %vm1469, %vm1485
  %vm1502 = vmand %vm1470, %vm1486
  %vm1503 = vmand %vm1471, %vm1487
  %vm1504 = vmand %vm1472, %vm1488
  %vm1505 = vmand %vm1473, %vm1489
  %vm1506 = vmand %vm1474, %vm1490
  %vm1507 = vmand %vm1475, %vm1491
  %vm1508 = vmand %vm1476, %vm1492
  %vm1509 = vmand %vm1477, %vm1493
  %vm1510 = vmand %vm1478, %vm1494
  %vm1511 = vmand %vm1479, %vm1495
  %vm1512 = vmand %vm1480, %vm1496
  %vm1513 = vmand %vm1481, %vm1497
  %vm1514 = vmand %vm1482, %vm1498
  %vm1515 = vmand %vm1483, %vm1499
  %v1516 = vsel %vm1500, %v1451, 0.0
  %v1517 = vsel %vm1501, %v1450, 0.0
  %v1518 = vsel %vm1502, %v1449, 0.0
  %v1519 = vsel %vm1503, %v1448, 0.0
  %v1520 = vsel %vm1504, %v1447, 0.0
  %v1521 = vsel %vm1505, %v1446, 0.0
  %v1522 = vsel %vm1506, %v1445, 0.0
  %v1523 = vsel %vm1507, %v1444, 0.0
  %v1524 = vsel %vm1508, %v1443, 0.0
  %v1525 = vsel %vm1509, %v1442, 0.0
  %v1526 = vsel %vm1510, %v1441, 0.0
  %v1527 = vsel %vm1511, %v1440, 0.0
  %v1528 = vsel %vm1512, %v1439, 0.0
  %v1529 = vsel %vm1513, %v1438, 0.0
  %v1530 = vsel %vm1514, %v1437, 0.0
  %v1531 = vsel %vm1515, %v1436, 0.0
  %v1532 = vrot.slane %v1273, 7
  %v1533 = vrot.slane %v1279, 7
  %v1534 = vrot.slane %v1285, 7
  %v1535 = vrot.slane %v1291, 7
  %v1536 = vrot.slane %v1297, 7
  %v1537 = vrot.slane %v1303, 7
  %v1538 = vrot.slane %v1309, 7
  %v1539 = vrot.slane %v1315, 7
  %v1540 = vrot.slane %v1321, 7
  %v1541 = vrot.slane %v1327, 7
  %v1542 = vrot.slane %v1333, 7
  %v1543 = vrot.slane %v1339, 7
  %v1544 = vrot.slane %v1345, 7
  %v1545 = vrot.slane %v1351, 7
  %v1546 = vrot.slane %v1357, 7
  %v1547 = vrot.slane %v1363, 7
  %vm1548 = vcmp.lt.s32.totalorder %v1367, 1
  %v1549 = vsel %vm1548, %v1546, %v1547
  %v1550 = vsel %vm1548, %v1545, %v1546
  %v1551 = vsel %vm1548, %v1544, %v1545
  %v1552 = vsel %vm1548, %v1543, %v1544
  %v1553 = vsel %vm1548, %v1542, %v1543
  %v1554 = vsel %vm1548, %v1541, %v1542
  %v1555 = vsel %vm1548, %v1540, %v1541
  %v1556 = vsel %vm1548, %v1539, %v1540
  %v1557 = vsel %vm1548, %v1538, %v1539
  %v1558 = vsel %vm1548, %v1537, %v1538
  %v1559 = vsel %vm1548, %v1536, %v1537
  %v1560 = vsel %vm1548, %v1535, %v1536
  %v1561 = vsel %vm1548, %v1534, %v1535
  %v1562 = vsel %vm1548, %v1533, %v1534
  %v1563 = vsel %vm1548, %v1532, %v1533
  %v1564 = vsel %vm1548, %v1547, %v1532
  %v1565 = vadd.s32 %v1383, 4294967295
  %v1566 = vadd.s32 %v1384, 4294967295
  %v1567 = vadd.s32 %v1385, 4294967295
  %v1568 = vadd.s32 %v1386, 4294967295
  %v1569 = vadd.s32 %v1387, 4294967295
  %v1570 = vadd.s32 %v1388, 4294967295
  %v1571 = vadd.s32 %v1389, 4294967295
  %v1572 = vadd.s32 %v1390, 4294967295
  %v1573 = vadd.s32 %v1391, 4294967295
  %v1574 = vadd.s32 %v1392, 4294967295
  %v1575 = vadd.s32 %v1393, 4294967295
  %v1576 = vadd.s32 %v1394, 4294967295
  %v1577 = vadd.s32 %v1395, 4294967295
  %v1578 = vadd.s32 %v1396, 4294967295
  %v1579 = vadd.s32 %v1397, 4294967295
  %v1580 = vadd.s32 %v1398, 4294967295
  %vm1581 = vcmp.ge.s32.totalorder %v1565, 0
  %vm1582 = vcmp.ge.s32.totalorder %v1566, 0
  %vm1583 = vcmp.ge.s32.totalorder %v1567, 0
  %vm1584 = vcmp.ge.s32.totalorder %v1568, 0
  %vm1585 = vcmp.ge.s32.totalorder %v1569, 0
  %vm1586 = vcmp.ge.s32.totalorder %v1570, 0
  %vm1587 = vcmp.ge.s32.totalorder %v1571, 0
  %vm1588 = vcmp.ge.s32.totalorder %v1572, 0
  %vm1589 = vcmp.ge.s32.totalorder %v1573, 0
  %vm1590 = vcmp.ge.s32.totalorder %v1574, 0
  %vm1591 = vcmp.ge.s32.totalorder %v1575, 0
  %vm1592 = vcmp.ge.s32.totalorder %v1576, 0
  %vm1593 = vcmp.ge.s32.totalorder %v1577, 0
  %vm1594 = vcmp.ge.s32.totalorder %v1578, 0
  %vm1595 = vcmp.ge.s32.totalorder %v1579, 0
  %vm1596 = vcmp.ge.s32.totalorder %v1580, 0
  %vm1597 = vcmp.lt.s32.totalorder %v1565, 16
  %vm1598 = vcmp.lt.s32.totalorder %v1566, 16
  %vm1599 = vcmp.lt.s32.totalorder %v1567, 16
  %vm1600 = vcmp.lt.s32.totalorder %v1568, 16
  %vm1601 = vcmp.lt.s32.totalorder %v1569, 16
  %vm1602 = vcmp.lt.s32.totalorder %v1570, 16
  %vm1603 = vcmp.lt.s32.totalorder %v1571, 16
  %vm1604 = vcmp.lt.s32.totalorder %v1572, 16
  %vm1605 = vcmp.lt.s32.totalorder %v1573, 16
  %vm1606 = vcmp.lt.s32.totalorder %v1574, 16
  %vm1607 = vcmp.lt.s32.totalorder %v1575, 16
  %vm1608 = vcmp.lt.s32.totalorder %v1576, 16
  %vm1609 = vcmp.lt.s32.totalorder %v1577, 16
  %vm1610 = vcmp.lt.s32.totalorder %v1578, 16
  %vm1611 = vcmp.lt.s32.totalorder %v1579, 16
  %vm1612 = vcmp.lt.s32.totalorder %v1580, 16
  %vm1613 = vmand %vm1581, %vm1597
  %vm1614 = vmand %vm1582, %vm1598
  %vm1615 = vmand %vm1583, %vm1599
  %vm1616 = vmand %vm1584, %vm1600
  %vm1617 = vmand %vm1585, %vm1601
  %vm1618 = vmand %vm1586, %vm1602
  %vm1619 = vmand %vm1587, %vm1603
  %vm1620 = vmand %vm1588, %vm1604
  %vm1621 = vmand %vm1589, %vm1605
  %vm1622 = vmand %vm1590, %vm1606
  %vm1623 = vmand %vm1591, %vm1607
  %vm1624 = vmand %vm1592, %vm1608
  %vm1625 = vmand %vm1593, %vm1609
  %vm1626 = vmand %vm1594, %vm1610
  %vm1627 = vmand %vm1595, %vm1611
  %vm1628 = vmand %vm1596, %vm1612
  %v1629 = vsel %vm1613, %v1564, 0.0
  %v1630 = vsel %vm1614, %v1563, 0.0
  %v1631 = vsel %vm1615, %v1562, 0.0
  %v1632 = vsel %vm1616, %v1561, 0.0
  %v1633 = vsel %vm1617, %v1560, 0.0
  %v1634 = vsel %vm1618, %v1559, 0.0
  %v1635 = vsel %vm1619, %v1558, 0.0
  %v1636 = vsel %vm1620, %v1557, 0.0
  %v1637 = vsel %vm1621, %v1556, 0.0
  %v1638 = vsel %vm1622, %v1555, 0.0
  %v1639 = vsel %vm1623, %v1554, 0.0
  %v1640 = vsel %vm1624, %v1553, 0.0
  %v1641 = vsel %vm1625, %v1552, 0.0
  %v1642 = vsel %vm1626, %v1551, 0.0
  %v1643 = vsel %vm1627, %v1550, 0.0
  %v1644 = vsel %vm1628, %v1549, 0.0
  %vm1645 = vcmask 261120
  %v1647 = vsel %vm1645, %v1629, 0
  %v1650 = vsel %vm1645, %v1630, 0
  %v1653 = vsel %vm1645, %v1631, 0
  %v1656 = vsel %vm1645, %v1632, 0
  %v1659 = vsel %vm1645, %v1633, 0
  %v1662 = vsel %vm1645, %v1634, 0
  %v1665 = vsel %vm1645, %v1635, 0
  %v1668 = vsel %vm1645, %v1636, 0
  %v1671 = vsel %vm1645, %v1637, 0
  %v1674 = vsel %vm1645, %v1638, 0
  %v1677 = vsel %vm1645, %v1639, 0
  %v1680 = vsel %vm1645, %v1640, 0
  %v1683 = vsel %vm1645, %v1641, 0
  %v1686 = vsel %vm1645, %v1642, 0
  %v1689 = vsel %vm1645, %v1643, 0
  %v1692 = vsel %vm1645, %v1644, 0
  %1694 = vmatprep.subr.mxu0 0.0
  %v1695 = vand.u32 %v1403, 4294901760
  %1696 = vmatpush1.msra.mxu0 %v1695
  %1697 = vmatprep.subr.mxu0 0.0
  %v1698 = vand.u32 %v1404, 4294901760
  %1699 = vmatpush1.msra.mxu0 %v1698
  %1700 = vmatprep.subr.mxu0 0.0
  %v1701 = vand.u32 %v1405, 4294901760
  %1702 = vmatpush1.msra.mxu0 %v1701
  %1703 = vmatprep.subr.mxu0 0.0
  %v1704 = vand.u32 %v1406, 4294901760
  %1705 = vmatpush1.msra.mxu0 %v1704
  %1706 = vmatprep.subr.mxu0 0.0
  %1707 = vmatpush1.msra.mxu0 0.0
  %1708 = vmatprep.subr.mxu0 0.0
  %1709 = vmatpush1.msra.mxu0 0.0
  %1710 = vmatprep.subr.mxu0 0.0
  %1711 = vmatpush1.msra.mxu0 0.0
  %1712 = vmatprep.subr.mxu0 0.0
  %1713 = vmatpush1.msra.mxu0 0.0
  %1714 = vmatprep.subr.mxu0 0.0
  %1715 = vmatpush1.msra.mxu0 0.0
  %1716 = vmatprep.subr.mxu0 0.0
  %1717 = vmatpush1.msra.mxu0 0.0
  %1718 = vmatprep.subr.mxu0 0.0
  %1719 = vmatpush1.msra.mxu0 0.0
  %1720 = vmatprep.subr.mxu0 0.0
  %1721 = vmatpush1.msra.mxu0 0.0
  %1722 = vmatprep.subr.mxu0 0.0
  %1723 = vmatpush1.msra.mxu0 0.0
  %1724 = vmatprep.subr.mxu0 0.0
  %1725 = vmatpush1.msra.mxu0 0.0
  %1726 = vmatprep.subr.mxu0 0.0
  %1727 = vmatpush1.msra.mxu0 0.0
  %1728 = vmatprep.subr.mxu0 0.0
  %1729 = vmatpush1.msra.mxu0 0.0
  %1730 = vmatprep.subr.mxu0 0.0
  %1731 = vmatpush1.msra.mxu0 0.0
  %1732 = vmatprep.subr.mxu0 0.0
  %1733 = vmatpush1.msra.mxu0 0.0
  %1734 = vmatprep.subr.mxu0 0.0
  %1735 = vmatpush1.msra.mxu0 0.0
  %1736 = vmatprep.subr.mxu0 0.0
  %1737 = vmatpush1.msra.mxu0 0.0
  %1738 = vmatprep.subr.mxu0 0.0
  %1739 = vmatpush1.msra.mxu0 0.0
  %1740 = vmatprep.subr.mxu0 0.0
  %1741 = vmatpush1.msra.mxu0 0.0
  %1742 = vmatprep.subr.mxu0 0.0
  %1743 = vmatpush1.msra.mxu0 0.0
  %1744 = vmatprep.subr.mxu0 0.0
  %1745 = vmatpush1.msra.mxu0 0.0
  %1746 = vmatprep.subr.mxu0 0.0
  %1747 = vmatpush1.msra.mxu0 0.0
  %1748 = vmatprep.subr.mxu0 0.0
  %1749 = vmatpush1.msra.mxu0 0.0
  %1750 = vmatprep.subr.mxu0 0.0
  %1751 = vmatpush1.msra.mxu0 0.0
  %1752 = vmatprep.subr.mxu0 0.0
  %1753 = vmatpush1.msra.mxu0 0.0
  %1754 = vmatprep.subr.mxu0 0.0
  %1755 = vmatpush1.msra.mxu0 0.0
  %1756 = vmatprep.subr.mxu0 0.0
  %1757 = vmatpush1.msra.mxu0 0.0
  %1758 = vmatprep.subr.mxu0 0.0
  %1759 = vmatpush1.msra.mxu0 0.0
  %1760 = vmatprep.subr.mxu0 0.0
  %1761 = vmatpush1.msra.mxu0 0.0
  %1762 = vmatprep.mubr.f32.mxu0 0.0
  %v1763 = vand.u32 %v1647, 4294901760
  %v1764 = vsub.f32 %v1647, %v1763
  %v1765 = vand.u32 %v1764, 4294901760
  %v1766 = vsub.f32 %v1764, %v1765
  %v1767 = vand.u32 %v1766, 4294901760
  %1768 = vmatmul.mubr.f32.gmra.mrb[0].mxu0 %v1767
  %v1769 = vpop.f32.mrb[0].mxu0
  %v1770 = vadd.f32 0.0, %v1769
  %v1771 = vpop.f32.mrb[0].mxu0
  %1772 = vmatprep.mubr.f32.mxu0 0.0
  %v1773 = vand.u32 %v1650, 4294901760
  %v1774 = vsub.f32 %v1650, %v1773
  %v1775 = vand.u32 %v1774, 4294901760
  %v1776 = vsub.f32 %v1774, %v1775
  %v1777 = vand.u32 %v1776, 4294901760
  %1778 = vmatmul.mubr.f32.gmra.mrb[0].mxu0 %v1777
  %v1779 = vpop.f32.mrb[0].mxu0
  %v1780 = vadd.f32 0.0, %v1779
  %v1781 = vpop.f32.mrb[0].mxu0
  %1782 = vmatprep.mubr.f32.mxu0 0.0
  %v1783 = vand.u32 %v1653, 4294901760
  %v1784 = vsub.f32 %v1653, %v1783
  %v1785 = vand.u32 %v1784, 4294901760
  %v1786 = vsub.f32 %v1784, %v1785
  %v1787 = vand.u32 %v1786, 4294901760
  %1788 = vmatmul.mubr.f32.gmra.mrb[0].mxu0 %v1787
  %v1789 = vpop.f32.mrb[0].mxu0
  %v1790 = vadd.f32 0.0, %v1789
  %v1791 = vpop.f32.mrb[0].mxu0
  %1792 = vmatprep.mubr.f32.mxu0 0.0
  %v1793 = vand.u32 %v1656, 4294901760
  %v1794 = vsub.f32 %v1656, %v1793
  %v1795 = vand.u32 %v1794, 4294901760
  %v1796 = vsub.f32 %v1794, %v1795
  %v1797 = vand.u32 %v1796, 4294901760
  %1798 = vmatmul.mubr.f32.gmra.mrb[0].mxu0 %v1797
  %v1799 = vpop.f32.mrb[0].mxu0
  %v1800 = vadd.f32 0.0, %v1799
  %v1801 = vpop.f32.mrb[0].mxu0
  %1802 = vmatprep.mubr.f32.mxu0 0.0
  %v1803 = vand.u32 %v1659, 4294901760
  %v1804 = vsub.f32 %v1659, %v1803
  %v1805 = vand.u32 %v1804, 4294901760
  %v1806 = vsub.f32 %v1804, %v1805
  %v1807 = vand.u32 %v1806, 4294901760
  %1808 = vmatmul.mubr.f32.gmra.mrb[0].mxu0 %v1807
  %v1809 = vpop.f32.mrb[0].mxu0
  %v1810 = vadd.f32 0.0, %v1809
  %v1811 = vpop.f32.mrb[0].mxu0
  %1812 = vmatprep.mubr.f32.mxu0 0.0
  %v1813 = vand.u32 %v1662, 4294901760
  %v1814 = vsub.f32 %v1662, %v1813
  %v1815 = vand.u32 %v1814, 4294901760
  %v1816 = vsub.f32 %v1814, %v1815
  %v1817 = vand.u32 %v1816, 4294901760
  %1818 = vmatmul.mubr.f32.gmra.mrb[0].mxu0 %v1817
  %v1819 = vpop.f32.mrb[0].mxu0
  %v1820 = vadd.f32 0.0, %v1819
  %v1821 = vpop.f32.mrb[0].mxu0
  %1822 = vmatprep.mubr.f32.mxu0 0.0
  %v1823 = vand.u32 %v1665, 4294901760
  %v1824 = vsub.f32 %v1665, %v1823
  %v1825 = vand.u32 %v1824, 4294901760
  %v1826 = vsub.f32 %v1824, %v1825
  %v1827 = vand.u32 %v1826, 4294901760
  %1828 = vmatmul.mubr.f32.gmra.mrb[0].mxu0 %v1827
  %v1829 = vpop.f32.mrb[0].mxu0
  %v1830 = vadd.f32 0.0, %v1829
  %v1831 = vpop.f32.mrb[0].mxu0
  %1832 = vmatprep.mubr.f32.mxu0 0.0
  %v1833 = vand.u32 %v1668, 4294901760
  %v1834 = vsub.f32 %v1668, %v1833
  %v1835 = vand.u32 %v1834, 4294901760
  %v1836 = vsub.f32 %v1834, %v1835
  %v1837 = vand.u32 %v1836, 4294901760
  %1838 = vmatmul.mubr.f32.gmra.mrb[0].mxu0 %v1837
  %v1839 = vpop.f32.mrb[0].mxu0
  %v1840 = vadd.f32 0.0, %v1839
  %v1841 = vpop.f32.mrb[0].mxu0
  %1842 = vmatprep.mubr.f32.mxu0 0.0
  %v1843 = vand.u32 %v1671, 4294901760
  %v1844 = vsub.f32 %v1671, %v1843
  %v1845 = vand.u32 %v1844, 4294901760
  %v1846 = vsub.f32 %v1844, %v1845
  %v1847 = vand.u32 %v1846, 4294901760
  %1848 = vmatmul.mubr.f32.gmra.mrb[0].mxu0 %v1847
  %v1849 = vpop.f32.mrb[0].mxu0
  %v1850 = vadd.f32 0.0, %v1849
  %v1851 = vpop.f32.mrb[0].mxu0
  %1852 = vmatprep.mubr.f32.mxu0 0.0
  %v1853 = vand.u32 %v1674, 4294901760
  %v1854 = vsub.f32 %v1674, %v1853
  %v1855 = vand.u32 %v1854, 4294901760
  %v1856 = vsub.f32 %v1854, %v1855
  %v1857 = vand.u32 %v1856, 4294901760
  %1858 = vmatmul.mubr.f32.gmra.mrb[0].mxu0 %v1857
  %v1859 = vpop.f32.mrb[0].mxu0
  %v1860 = vadd.f32 0.0, %v1859
  %v1861 = vpop.f32.mrb[0].mxu0
  %1862 = vmatprep.mubr.f32.mxu0 0.0
  %v1863 = vand.u32 %v1677, 4294901760
  %v1864 = vsub.f32 %v1677, %v1863
  %v1865 = vand.u32 %v1864, 4294901760
  %v1866 = vsub.f32 %v1864, %v1865
  %v1867 = vand.u32 %v1866, 4294901760
  %1868 = vmatmul.mubr.f32.gmra.mrb[0].mxu0 %v1867
  %v1869 = vpop.f32.mrb[0].mxu0
  %v1870 = vadd.f32 0.0, %v1869
  %v1871 = vpop.f32.mrb[0].mxu0
  %1872 = vmatprep.mubr.f32.mxu0 0.0
  %v1873 = vand.u32 %v1680, 4294901760
  %v1874 = vsub.f32 %v1680, %v1873
  %v1875 = vand.u32 %v1874, 4294901760
  %v1876 = vsub.f32 %v1874, %v1875
  %v1877 = vand.u32 %v1876, 4294901760
  %1878 = vmatmul.mubr.f32.gmra.mrb[0].mxu0 %v1877
  %v1879 = vpop.f32.mrb[0].mxu0
  %v1880 = vadd.f32 0.0, %v1879
  %v1881 = vpop.f32.mrb[0].mxu0
  %1882 = vmatprep.mubr.f32.mxu0 0.0
  %v1883 = vand.u32 %v1683, 4294901760
  %v1884 = vsub.f32 %v1683, %v1883
  %v1885 = vand.u32 %v1884, 4294901760
  %v1886 = vsub.f32 %v1884, %v1885
  %v1887 = vand.u32 %v1886, 4294901760
  %1888 = vmatmul.mubr.f32.gmra.mrb[0].mxu0 %v1887
  %v1889 = vpop.f32.mrb[0].mxu0
  %v1890 = vadd.f32 0.0, %v1889
  %v1891 = vpop.f32.mrb[0].mxu0
  %1892 = vmatprep.mubr.f32.mxu0 0.0
  %v1893 = vand.u32 %v1686, 4294901760
  %v1894 = vsub.f32 %v1686, %v1893
  %v1895 = vand.u32 %v1894, 4294901760
  %v1896 = vsub.f32 %v1894, %v1895
  %v1897 = vand.u32 %v1896, 4294901760
  %1898 = vmatmul.mubr.f32.gmra.mrb[0].mxu0 %v1897
  %v1899 = vpop.f32.mrb[0].mxu0
  %v1900 = vadd.f32 0.0, %v1899
  %v1901 = vpop.f32.mrb[0].mxu0
  %1902 = vmatprep.mubr.f32.mxu0 0.0
  %v1903 = vand.u32 %v1689, 4294901760
  %v1904 = vsub.f32 %v1689, %v1903
  %v1905 = vand.u32 %v1904, 4294901760
  %v1906 = vsub.f32 %v1904, %v1905
  %v1907 = vand.u32 %v1906, 4294901760
  %1908 = vmatmul.mubr.f32.gmra.mrb[0].mxu0 %v1907
  %v1909 = vpop.f32.mrb[0].mxu0
  %v1910 = vadd.f32 0.0, %v1909
  %v1911 = vpop.f32.mrb[0].mxu0
  %1912 = vmatprep.mubr.f32.mxu0 0.0
  %v1913 = vand.u32 %v1692, 4294901760
  %v1914 = vsub.f32 %v1692, %v1913
  %v1915 = vand.u32 %v1914, 4294901760
  %v1916 = vsub.f32 %v1914, %v1915
  %v1917 = vand.u32 %v1916, 4294901760
  %1918 = vmatmul.mubr.f32.gmra.mrb[0].mxu0 %v1917
  %v1919 = vpop.f32.mrb[0].mxu0
  %v1920 = vadd.f32 0.0, %v1919
  %v1921 = vpop.f32.mrb[0].mxu0
  %1922 = vdwg.mxu0
  %1923 = vmatprep.subr.mxu0 0.0
  %v1924 = vand.u32 %v1403, 4294901760
  %v1925 = vsub.f32 %v1403, %v1924
  %v1926 = vand.u32 %v1925, 4294901760
  %v1927 = vsub.f32 %v1925, %v1926
  %v1928 = vand.u32 %v1927, 4294901760
  %1929 = vmatpush1.msra.mxu0 %v1928
  %1930 = vmatprep.subr.mxu0 0.0
  %v1931 = vand.u32 %v1404, 4294901760
  %v1932 = vsub.f32 %v1404, %v1931
  %v1933 = vand.u32 %v1932, 4294901760
  %v1934 = vsub.f32 %v1932, %v1933
  %v1935 = vand.u32 %v1934, 4294901760
  %1936 = vmatpush1.msra.mxu0 %v1935
  %1937 = vmatprep.subr.mxu0 0.0
  %v1938 = vand.u32 %v1405, 4294901760
  %v1939 = vsub.f32 %v1405, %v1938
  %v1940 = vand.u32 %v1939, 4294901760
  %v1941 = vsub.f32 %v1939, %v1940
  %v1942 = vand.u32 %v1941, 4294901760
  %1943 = vmatpush1.msra.mxu0 %v1942
  %1944 = vmatprep.subr.mxu0 0.0
  %v1945 = vand.u32 %v1406, 4294901760
  %v1946 = vsub.f32 %v1406, %v1945
  %v1947 = vand.u32 %v1946, 4294901760
  %v1948 = vsub.f32 %v1946, %v1947
  %v1949 = vand.u32 %v1948, 4294901760
  %1950 = vmatpush1.msra.mxu0 %v1949
  %1951 = vmatprep.subr.mxu0 0.0
  %1952 = vmatpush1.msra.mxu0 0.0
  %1953 = vmatprep.subr.mxu0 0.0
  %1954 = vmatpush1.msra.mxu0 0.0
  %1955 = vmatprep.subr.mxu0 0.0
  %1956 = vmatpush1.msra.mxu0 0.0
  %1957 = vmatprep.subr.mxu0 0.0
  %1958 = vmatpush1.msra.mxu0 0.0
  %1959 = vmatprep.subr.mxu0 0.0
  %1960 = vmatpush1.msra.mxu0 0.0
  %1961 = vmatprep.subr.mxu0 0.0
  %1962 = vmatpush1.msra.mxu0 0.0
  %1963 = vmatprep.subr.mxu0 0.0
  %1964 = vmatpush1.msra.mxu0 0.0
  %1965 = vmatprep.subr.mxu0 0.0
  %1966 = vmatpush1.msra.mxu0 0.0
  %1967 = vmatprep.subr.mxu0 0.0
  %1968 = vmatpush1.msra.mxu0 0.0
  %1969 = vmatprep.subr.mxu0 0.0
  %1970 = vmatpush1.msra.mxu0 0.0
  %1971 = vmatprep.subr.mxu0 0.0
  %1972 = vmatpush1.msra.mxu0 0.0
  %1973 = vmatprep.subr.mxu0 0.0
  %1974 = vmatpush1.msra.mxu0 0.0
  %1975 = vmatprep.subr.mxu0 0.0
  %1976 = vmatpush1.msra.mxu0 0.0
  %1977 = vmatprep.subr.mxu0 0.0
  %1978 = vmatpush1.msra.mxu0 0.0
  %1979 = vmatprep.subr.mxu0 0.0
  %1980 = vmatpush1.msra.mxu0 0.0
  %1981 = vmatprep.subr.mxu0 0.0
  %1982 = vmatpush1.msra.mxu0 0.0
  %1983 = vmatprep.subr.mxu0 0.0
  %1984 = vmatpush1.msra.mxu0 0.0
  %1985 = vmatprep.subr.mxu0 0.0
  %1986 = vmatpush1.msra.mxu0 0.0
  %1987 = vmatprep.subr.mxu0 0.0
  %1988 = vmatpush1.msra.mxu0 0.0
  %1989 = vmatprep.subr.mxu0 0.0
  %1990 = vmatpush1.msra.mxu0 0.0
  %1991 = vmatprep.subr.mxu0 0.0
  %1992 = vmatpush1.msra.mxu0 0.0
  %1993 = vmatprep.subr.mxu0 0.0
  %1994 = vmatpush1.msra.mxu0 0.0
  %1995 = vmatprep.subr.mxu0 0.0
  %1996 = vmatpush1.msra.mxu0 0.0
  %1997 = vmatprep.subr.mxu0 0.0
  %1998 = vmatpush1.msra.mxu0 0.0
  %1999 = vmatprep.subr.mxu0 0.0
  %2000 = vmatpush1.msra.mxu0 0.0
  %2001 = vmatprep.subr.mxu0 0.0
  %2002 = vmatpush1.msra.mxu0 0.0
  %2003 = vmatprep.subr.mxu0 0.0
  %2004 = vmatpush1.msra.mxu0 0.0
  %2005 = vmatprep.subr.mxu0 0.0
  %2006 = vmatpush1.msra.mxu0 0.0
  %2007 = vmatprep.mubr.f32.mxu0 0.0
  %v2008 = vand.u32 %v1647, 4294901760
  %2009 = vmatmul.mubr.f32.gmra.mrb[0].mxu0 %v2008
  %v2010 = vpop.f32.mrb[0].mxu0
  %v2011 = vadd.f32 %v1770, %v2010
  %v2012 = vpop.f32.mrb[0].mxu0
  %2013 = vmatprep.mubr.f32.mxu0 0.0
  %v2014 = vand.u32 %v1650, 4294901760
  %2015 = vmatmul.mubr.f32.gmra.mrb[0].mxu0 %v2014
  %v2016 = vpop.f32.mrb[0].mxu0
  %v2017 = vadd.f32 %v1780, %v2016
  %v2018 = vpop.f32.mrb[0].mxu0
  %2019 = vmatprep.mubr.f32.mxu0 0.0
  %v2020 = vand.u32 %v1653, 4294901760
  %2021 = vmatmul.mubr.f32.gmra.mrb[0].mxu0 %v2020
  %v2022 = vpop.f32.mrb[0].mxu0
  %v2023 = vadd.f32 %v1790, %v2022
  %v2024 = vpop.f32.mrb[0].mxu0
  %2025 = vmatprep.mubr.f32.mxu0 0.0
  %v2026 = vand.u32 %v1656, 4294901760
  %2027 = vmatmul.mubr.f32.gmra.mrb[0].mxu0 %v2026
  %v2028 = vpop.f32.mrb[0].mxu0
  %v2029 = vadd.f32 %v1800, %v2028
  %v2030 = vpop.f32.mrb[0].mxu0
  %2031 = vmatprep.mubr.f32.mxu0 0.0
  %v2032 = vand.u32 %v1659, 4294901760
  %2033 = vmatmul.mubr.f32.gmra.mrb[0].mxu0 %v2032
  %v2034 = vpop.f32.mrb[0].mxu0
  %v2035 = vadd.f32 %v1810, %v2034
  %v2036 = vpop.f32.mrb[0].mxu0
  %2037 = vmatprep.mubr.f32.mxu0 0.0
  %v2038 = vand.u32 %v1662, 4294901760
  %2039 = vmatmul.mubr.f32.gmra.mrb[0].mxu0 %v2038
  %v2040 = vpop.f32.mrb[0].mxu0
  %v2041 = vadd.f32 %v1820, %v2040
  %v2042 = vpop.f32.mrb[0].mxu0
  %2043 = vmatprep.mubr.f32.mxu0 0.0
  %v2044 = vand.u32 %v1665, 4294901760
  %2045 = vmatmul.mubr.f32.gmra.mrb[0].mxu0 %v2044
  %v2046 = vpop.f32.mrb[0].mxu0
  %v2047 = vadd.f32 %v1830, %v2046
  %v2048 = vpop.f32.mrb[0].mxu0
  %2049 = vmatprep.mubr.f32.mxu0 0.0
  %v2050 = vand.u32 %v1668, 4294901760
  %2051 = vmatmul.mubr.f32.gmra.mrb[0].mxu0 %v2050
  %v2052 = vpop.f32.mrb[0].mxu0
  %v2053 = vadd.f32 %v1840, %v2052
  %v2054 = vpop.f32.mrb[0].mxu0
  %2055 = vmatprep.mubr.f32.mxu0 0.0
  %v2056 = vand.u32 %v1671, 4294901760
  %2057 = vmatmul.mubr.f32.gmra.mrb[0].mxu0 %v2056
  %v2058 = vpop.f32.mrb[0].mxu0
  %v2059 = vadd.f32 %v1850, %v2058
  %v2060 = vpop.f32.mrb[0].mxu0
  %2061 = vmatprep.mubr.f32.mxu0 0.0
  %v2062 = vand.u32 %v1674, 4294901760
  %2063 = vmatmul.mubr.f32.gmra.mrb[0].mxu0 %v2062
  %v2064 = vpop.f32.mrb[0].mxu0
  %v2065 = vadd.f32 %v1860, %v2064
  %v2066 = vpop.f32.mrb[0].mxu0
  %2067 = vmatprep.mubr.f32.mxu0 0.0
  %v2068 = vand.u32 %v1677, 4294901760
  %2069 = vmatmul.mubr.f32.gmra.mrb[0].mxu0 %v2068
  %v2070 = vpop.f32.mrb[0].mxu0
  %v2071 = vadd.f32 %v1870, %v2070
  %v2072 = vpop.f32.mrb[0].mxu0
  %2073 = vmatprep.mubr.f32.mxu0 0.0
  %v2074 = vand.u32 %v1680, 4294901760
  %2075 = vmatmul.mubr.f32.gmra.mrb[0].mxu0 %v2074
  %v2076 = vpop.f32.mrb[0].mxu0
  %v2077 = vadd.f32 %v1880, %v2076
  %v2078 = vpop.f32.mrb[0].mxu0
  %2079 = vmatprep.mubr.f32.mxu0 0.0
  %v2080 = vand.u32 %v1683, 4294901760
  %2081 = vmatmul.mubr.f32.gmra.mrb[0].mxu0 %v2080
  %v2082 = vpop.f32.mrb[0].mxu0
  %v2083 = vadd.f32 %v1890, %v2082
  %v2084 = vpop.f32.mrb[0].mxu0
  %2085 = vmatprep.mubr.f32.mxu0 0.0
  %v2086 = vand.u32 %v1686, 4294901760
  %2087 = vmatmul.mubr.f32.gmra.mrb[0].mxu0 %v2086
  %v2088 = vpop.f32.mrb[0].mxu0
  %v2089 = vadd.f32 %v1900, %v2088
  %v2090 = vpop.f32.mrb[0].mxu0
  %2091 = vmatprep.mubr.f32.mxu0 0.0
  %v2092 = vand.u32 %v1689, 4294901760
  %2093 = vmatmul.mubr.f32.gmra.mrb[0].mxu0 %v2092
  %v2094 = vpop.f32.mrb[0].mxu0
  %v2095 = vadd.f32 %v1910, %v2094
  %v2096 = vpop.f32.mrb[0].mxu0
  %2097 = vmatprep.mubr.f32.mxu0 0.0
  %v2098 = vand.u32 %v1692, 4294901760
  %2099 = vmatmul.mubr.f32.gmra.mrb[0].mxu0 %v2098
  %v2100 = vpop.f32.mrb[0].mxu0
  %v2101 = vadd.f32 %v1920, %v2100
  %v2102 = vpop.f32.mrb[0].mxu0
  %2103 = vdwg.mxu0
  %2104 = vmatprep.subr.mxu0 0.0
  %v2105 = vand.u32 %v1403, 4294901760
  %v2106 = vsub.f32 %v1403, %v2105
  %2107 = vmatpush1.msra.mxu0 %v2106
  %2108 = vmatprep.subr.mxu0 0.0
  %v2109 = vand.u32 %v1404, 4294901760
  %v2110 = vsub.f32 %v1404, %v2109
  %2111 = vmatpush1.msra.mxu0 %v2110
  %2112 = vmatprep.subr.mxu0 0.0
  %v2113 = vand.u32 %v1405, 4294901760
  %v2114 = vsub.f32 %v1405, %v2113
  %2115 = vmatpush1.msra.mxu0 %v2114
  %2116 = vmatprep.subr.mxu0 0.0
  %v2117 = vand.u32 %v1406, 4294901760
  %v2118 = vsub.f32 %v1406, %v2117
  %2119 = vmatpush1.msra.mxu0 %v2118
  %2120 = vmatprep.subr.mxu0 0.0
  %2121 = vmatpush1.msra.mxu0 0.0
  %2122 = vmatprep.subr.mxu0 0.0
  %2123 = vmatpush1.msra.mxu0 0.0
  %2124 = vmatprep.subr.mxu0 0.0
  %2125 = vmatpush1.msra.mxu0 0.0
  %2126 = vmatprep.subr.mxu0 0.0
  %2127 = vmatpush1.msra.mxu0 0.0
  %2128 = vmatprep.subr.mxu0 0.0
  %2129 = vmatpush1.msra.mxu0 0.0
  %2130 = vmatprep.subr.mxu0 0.0
  %2131 = vmatpush1.msra.mxu0 0.0
  %2132 = vmatprep.subr.mxu0 0.0
  %2133 = vmatpush1.msra.mxu0 0.0
  %2134 = vmatprep.subr.mxu0 0.0
  %2135 = vmatpush1.msra.mxu0 0.0
  %2136 = vmatprep.subr.mxu0 0.0
  %2137 = vmatpush1.msra.mxu0 0.0
  %2138 = vmatprep.subr.mxu0 0.0
  %2139 = vmatpush1.msra.mxu0 0.0
  %2140 = vmatprep.subr.mxu0 0.0
  %2141 = vmatpush1.msra.mxu0 0.0
  %2142 = vmatprep.subr.mxu0 0.0
  %2143 = vmatpush1.msra.mxu0 0.0
  %2144 = vmatprep.subr.mxu0 0.0
  %2145 = vmatpush1.msra.mxu0 0.0
  %2146 = vmatprep.subr.mxu0 0.0
  %2147 = vmatpush1.msra.mxu0 0.0
  %2148 = vmatprep.subr.mxu0 0.0
  %2149 = vmatpush1.msra.mxu0 0.0
  %2150 = vmatprep.subr.mxu0 0.0
  %2151 = vmatpush1.msra.mxu0 0.0
  %2152 = vmatprep.subr.mxu0 0.0
  %2153 = vmatpush1.msra.mxu0 0.0
  %2154 = vmatprep.subr.mxu0 0.0
  %2155 = vmatpush1.msra.mxu0 0.0
  %2156 = vmatprep.subr.mxu0 0.0
  %2157 = vmatpush1.msra.mxu0 0.0
  %2158 = vmatprep.subr.mxu0 0.0
  %2159 = vmatpush1.msra.mxu0 0.0
  %2160 = vmatprep.subr.mxu0 0.0
  %2161 = vmatpush1.msra.mxu0 0.0
  %2162 = vmatprep.subr.mxu0 0.0
  %2163 = vmatpush1.msra.mxu0 0.0
  %2164 = vmatprep.subr.mxu0 0.0
  %2165 = vmatpush1.msra.mxu0 0.0
  %2166 = vmatprep.subr.mxu0 0.0
  %2167 = vmatpush1.msra.mxu0 0.0
  %2168 = vmatprep.subr.mxu0 0.0
  %2169 = vmatpush1.msra.mxu0 0.0
  %2170 = vmatprep.subr.mxu0 0.0
  %2171 = vmatpush1.msra.mxu0 0.0
  %2172 = vmatprep.subr.mxu0 0.0
  %2173 = vmatpush1.msra.mxu0 0.0
  %2174 = vmatprep.subr.mxu0 0.0
  %2175 = vmatpush1.msra.mxu0 0.0
  %2176 = vmatprep.mubr.f32.mxu0 0.0
  %v2177 = vand.u32 %v1647, 4294901760
  %v2178 = vsub.f32 %v1647, %v2177
  %2179 = vmatmul.mubr.f32.gmra.mrb[0].mxu0 %v2178
  %v2180 = vpop.f32.mrb[0].mxu0
  %v2181 = vadd.f32 %v2011, %v2180
  %v2182 = vpop.f32.mrb[0].mxu0
  %2183 = vmatprep.mubr.f32.mxu0 0.0
  %v2184 = vand.u32 %v1650, 4294901760
  %v2185 = vsub.f32 %v1650, %v2184
  %2186 = vmatmul.mubr.f32.gmra.mrb[0].mxu0 %v2185
  %v2187 = vpop.f32.mrb[0].mxu0
  %v2188 = vadd.f32 %v2017, %v2187
  %v2189 = vpop.f32.mrb[0].mxu0
  %2190 = vmatprep.mubr.f32.mxu0 0.0
  %v2191 = vand.u32 %v1653, 4294901760
  %v2192 = vsub.f32 %v1653, %v2191
  %2193 = vmatmul.mubr.f32.gmra.mrb[0].mxu0 %v2192
  %v2194 = vpop.f32.mrb[0].mxu0
  %v2195 = vadd.f32 %v2023, %v2194
  %v2196 = vpop.f32.mrb[0].mxu0
  %2197 = vmatprep.mubr.f32.mxu0 0.0
  %v2198 = vand.u32 %v1656, 4294901760
  %v2199 = vsub.f32 %v1656, %v2198
  %2200 = vmatmul.mubr.f32.gmra.mrb[0].mxu0 %v2199
  %v2201 = vpop.f32.mrb[0].mxu0
  %v2202 = vadd.f32 %v2029, %v2201
  %v2203 = vpop.f32.mrb[0].mxu0
  %2204 = vmatprep.mubr.f32.mxu0 0.0
  %v2205 = vand.u32 %v1659, 4294901760
  %v2206 = vsub.f32 %v1659, %v2205
  %2207 = vmatmul.mubr.f32.gmra.mrb[0].mxu0 %v2206
  %v2208 = vpop.f32.mrb[0].mxu0
  %v2209 = vadd.f32 %v2035, %v2208
  %v2210 = vpop.f32.mrb[0].mxu0
  %2211 = vmatprep.mubr.f32.mxu0 0.0
  %v2212 = vand.u32 %v1662, 4294901760
  %v2213 = vsub.f32 %v1662, %v2212
  %2214 = vmatmul.mubr.f32.gmra.mrb[0].mxu0 %v2213
  %v2215 = vpop.f32.mrb[0].mxu0
  %v2216 = vadd.f32 %v2041, %v2215
  %v2217 = vpop.f32.mrb[0].mxu0
  %2218 = vmatprep.mubr.f32.mxu0 0.0
  %v2219 = vand.u32 %v1665, 4294901760
  %v2220 = vsub.f32 %v1665, %v2219
  %2221 = vmatmul.mubr.f32.gmra.mrb[0].mxu0 %v2220
  %v2222 = vpop.f32.mrb[0].mxu0
  %v2223 = vadd.f32 %v2047, %v2222
  %v2224 = vpop.f32.mrb[0].mxu0
  %2225 = vmatprep.mubr.f32.mxu0 0.0
  %v2226 = vand.u32 %v1668, 4294901760
  %v2227 = vsub.f32 %v1668, %v2226
  %2228 = vmatmul.mubr.f32.gmra.mrb[0].mxu0 %v2227
  %v2229 = vpop.f32.mrb[0].mxu0
  %v2230 = vadd.f32 %v2053, %v2229
  %v2231 = vpop.f32.mrb[0].mxu0
  %2232 = vmatprep.mubr.f32.mxu0 0.0
  %v2233 = vand.u32 %v1671, 4294901760
  %v2234 = vsub.f32 %v1671, %v2233
  %2235 = vmatmul.mubr.f32.gmra.mrb[0].mxu0 %v2234
  %v2236 = vpop.f32.mrb[0].mxu0
  %v2237 = vadd.f32 %v2059, %v2236
  %v2238 = vpop.f32.mrb[0].mxu0
  %2239 = vmatprep.mubr.f32.mxu0 0.0
  %v2240 = vand.u32 %v1674, 4294901760
  %v2241 = vsub.f32 %v1674, %v2240
  %2242 = vmatmul.mubr.f32.gmra.mrb[0].mxu0 %v2241
  %v2243 = vpop.f32.mrb[0].mxu0
  %v2244 = vadd.f32 %v2065, %v2243
  %v2245 = vpop.f32.mrb[0].mxu0
  %2246 = vmatprep.mubr.f32.mxu0 0.0
  %v2247 = vand.u32 %v1677, 4294901760
  %v2248 = vsub.f32 %v1677, %v2247
  %2249 = vmatmul.mubr.f32.gmra.mrb[0].mxu0 %v2248
  %v2250 = vpop.f32.mrb[0].mxu0
  %v2251 = vadd.f32 %v2071, %v2250
  %v2252 = vpop.f32.mrb[0].mxu0
  %2253 = vmatprep.mubr.f32.mxu0 0.0
  %v2254 = vand.u32 %v1680, 4294901760
  %v2255 = vsub.f32 %v1680, %v2254
  %2256 = vmatmul.mubr.f32.gmra.mrb[0].mxu0 %v2255
  %v2257 = vpop.f32.mrb[0].mxu0
  %v2258 = vadd.f32 %v2077, %v2257
  %v2259 = vpop.f32.mrb[0].mxu0
  %2260 = vmatprep.mubr.f32.mxu0 0.0
  %v2261 = vand.u32 %v1683, 4294901760
  %v2262 = vsub.f32 %v1683, %v2261
  %2263 = vmatmul.mubr.f32.gmra.mrb[0].mxu0 %v2262
  %v2264 = vpop.f32.mrb[0].mxu0
  %v2265 = vadd.f32 %v2083, %v2264
  %v2266 = vpop.f32.mrb[0].mxu0
  %2267 = vmatprep.mubr.f32.mxu0 0.0
  %v2268 = vand.u32 %v1686, 4294901760
  %v2269 = vsub.f32 %v1686, %v2268
  %2270 = vmatmul.mubr.f32.gmra.mrb[0].mxu0 %v2269
  %v2271 = vpop.f32.mrb[0].mxu0
  %v2272 = vadd.f32 %v2089, %v2271
  %v2273 = vpop.f32.mrb[0].mxu0
  %2274 = vmatprep.mubr.f32.mxu0 0.0
  %v2275 = vand.u32 %v1689, 4294901760
  %v2276 = vsub.f32 %v1689, %v2275
  %2277 = vmatmul.mubr.f32.gmra.mrb[0].mxu0 %v2276
  %v2278 = vpop.f32.mrb[0].mxu0
  %v2279 = vadd.f32 %v2095, %v2278
  %v2280 = vpop.f32.mrb[0].mxu0
  %2281 = vmatprep.mubr.f32.mxu0 0.0
  %v2282 = vand.u32 %v1692, 4294901760
  %v2283 = vsub.f32 %v1692, %v2282
  %2284 = vmatmul.mubr.f32.gmra.mrb[0].mxu0 %v2283
  %v2285 = vpop.f32.mrb[0].mxu0
  %v2286 = vadd.f32 %v2101, %v2285
  %v2287 = vpop.f32.mrb[0].mxu0
  %2288 = vdwg.mxu0
  %2289 = vmatprep.subr.mxu0 0.0
  %v2290 = vand.u32 %v1403, 4294901760
  %2291 = vmatpush1.msra.mxu0 %v2290
  %2292 = vmatprep.subr.mxu0 0.0
  %v2293 = vand.u32 %v1404, 4294901760
  %2294 = vmatpush1.msra.mxu0 %v2293
  %2295 = vmatprep.subr.mxu0 0.0
  %v2296 = vand.u32 %v1405, 4294901760
  %2297 = vmatpush1.msra.mxu0 %v2296
  %2298 = vmatprep.subr.mxu0 0.0
  %v2299 = vand.u32 %v1406, 4294901760
  %2300 = vmatpush1.msra.mxu0 %v2299
  %2301 = vmatprep.subr.mxu0 0.0
  %2302 = vmatpush1.msra.mxu0 0.0
  %2303 = vmatprep.subr.mxu0 0.0
  %2304 = vmatpush1.msra.mxu0 0.0
  %2305 = vmatprep.subr.mxu0 0.0
  %2306 = vmatpush1.msra.mxu0 0.0
  %2307 = vmatprep.subr.mxu0 0.0
  %2308 = vmatpush1.msra.mxu0 0.0
  %2309 = vmatprep.subr.mxu0 0.0
  %2310 = vmatpush1.msra.mxu0 0.0
  %2311 = vmatprep.subr.mxu0 0.0
  %2312 = vmatpush1.msra.mxu0 0.0
  %2313 = vmatprep.subr.mxu0 0.0
  %2314 = vmatpush1.msra.mxu0 0.0
  %2315 = vmatprep.subr.mxu0 0.0
  %2316 = vmatpush1.msra.mxu0 0.0
  %2317 = vmatprep.subr.mxu0 0.0
  %2318 = vmatpush1.msra.mxu0 0.0
  %2319 = vmatprep.subr.mxu0 0.0
  %2320 = vmatpush1.msra.mxu0 0.0
  %2321 = vmatprep.subr.mxu0 0.0
  %2322 = vmatpush1.msra.mxu0 0.0
  %2323 = vmatprep.subr.mxu0 0.0
  %2324 = vmatpush1.msra.mxu0 0.0
  %2325 = vmatprep.subr.mxu0 0.0
  %2326 = vmatpush1.msra.mxu0 0.0
  %2327 = vmatprep.subr.mxu0 0.0
  %2328 = vmatpush1.msra.mxu0 0.0
  %2329 = vmatprep.subr.mxu0 0.0
  %2330 = vmatpush1.msra.mxu0 0.0
  %2331 = vmatprep.subr.mxu0 0.0
  %2332 = vmatpush1.msra.mxu0 0.0
  %2333 = vmatprep.subr.mxu0 0.0
  %2334 = vmatpush1.msra.mxu0 0.0
  %2335 = vmatprep.subr.mxu0 0.0
  %2336 = vmatpush1.msra.mxu0 0.0
  %2337 = vmatprep.subr.mxu0 0.0
  %2338 = vmatpush1.msra.mxu0 0.0
  %2339 = vmatprep.subr.mxu0 0.0
  %2340 = vmatpush1.msra.mxu0 0.0
  %2341 = vmatprep.subr.mxu0 0.0
  %2342 = vmatpush1.msra.mxu0 0.0
  %2343 = vmatprep.subr.mxu0 0.0
  %2344 = vmatpush1.msra.mxu0 0.0
  %2345 = vmatprep.subr.mxu0 0.0
  %2346 = vmatpush1.msra.mxu0 0.0
  %2347 = vmatprep.subr.mxu0 0.0
  %2348 = vmatpush1.msra.mxu0 0.0
  %2349 = vmatprep.subr.mxu0 0.0
  %2350 = vmatpush1.msra.mxu0 0.0
  %2351 = vmatprep.subr.mxu0 0.0
  %2352 = vmatpush1.msra.mxu0 0.0
  %2353 = vmatprep.subr.mxu0 0.0
  %2354 = vmatpush1.msra.mxu0 0.0
  %2355 = vmatprep.subr.mxu0 0.0
  %2356 = vmatpush1.msra.mxu0 0.0
  %2357 = vmatprep.mubr.f32.mxu0 0.0
  %v2358 = vand.u32 %v1647, 4294901760
  %v2359 = vsub.f32 %v1647, %v2358
  %v2360 = vand.u32 %v2359, 4294901760
  %2361 = vmatmul.mubr.f32.gmra.mrb[0].mxu0 %v2360
  %v2362 = vpop.f32.mrb[0].mxu0
  %v2363 = vadd.f32 %v2181, %v2362
  %v2364 = vpop.f32.mrb[0].mxu0
  %2365 = vmatprep.mubr.f32.mxu0 0.0
  %v2366 = vand.u32 %v1650, 4294901760
  %v2367 = vsub.f32 %v1650, %v2366
  %v2368 = vand.u32 %v2367, 4294901760
  %2369 = vmatmul.mubr.f32.gmra.mrb[0].mxu0 %v2368
  %v2370 = vpop.f32.mrb[0].mxu0
  %v2371 = vadd.f32 %v2188, %v2370
  %v2372 = vpop.f32.mrb[0].mxu0
  %2373 = vmatprep.mubr.f32.mxu0 0.0
  %v2374 = vand.u32 %v1653, 4294901760
  %v2375 = vsub.f32 %v1653, %v2374
  %v2376 = vand.u32 %v2375, 4294901760
  %2377 = vmatmul.mubr.f32.gmra.mrb[0].mxu0 %v2376
  %v2378 = vpop.f32.mrb[0].mxu0
  %v2379 = vadd.f32 %v2195, %v2378
  %v2380 = vpop.f32.mrb[0].mxu0
  %2381 = vmatprep.mubr.f32.mxu0 0.0
  %v2382 = vand.u32 %v1656, 4294901760
  %v2383 = vsub.f32 %v1656, %v2382
  %v2384 = vand.u32 %v2383, 4294901760
  %2385 = vmatmul.mubr.f32.gmra.mrb[0].mxu0 %v2384
  %v2386 = vpop.f32.mrb[0].mxu0
  %v2387 = vadd.f32 %v2202, %v2386
  %v2388 = vpop.f32.mrb[0].mxu0
  %2389 = vmatprep.mubr.f32.mxu0 0.0
  %v2390 = vand.u32 %v1659, 4294901760
  %v2391 = vsub.f32 %v1659, %v2390
  %v2392 = vand.u32 %v2391, 4294901760
  %2393 = vmatmul.mubr.f32.gmra.mrb[0].mxu0 %v2392
  %v2394 = vpop.f32.mrb[0].mxu0
  %v2395 = vadd.f32 %v2209, %v2394
  %v2396 = vpop.f32.mrb[0].mxu0
  %2397 = vmatprep.mubr.f32.mxu0 0.0
  %v2398 = vand.u32 %v1662, 4294901760
  %v2399 = vsub.f32 %v1662, %v2398
  %v2400 = vand.u32 %v2399, 4294901760
  %2401 = vmatmul.mubr.f32.gmra.mrb[0].mxu0 %v2400
  %v2402 = vpop.f32.mrb[0].mxu0
  %v2403 = vadd.f32 %v2216, %v2402
  %v2404 = vpop.f32.mrb[0].mxu0
  %2405 = vmatprep.mubr.f32.mxu0 0.0
  %v2406 = vand.u32 %v1665, 4294901760
  %v2407 = vsub.f32 %v1665, %v2406
  %v2408 = vand.u32 %v2407, 4294901760
  %2409 = vmatmul.mubr.f32.gmra.mrb[0].mxu0 %v2408
  %v2410 = vpop.f32.mrb[0].mxu0
  %v2411 = vadd.f32 %v2223, %v2410
  %v2412 = vpop.f32.mrb[0].mxu0
  %2413 = vmatprep.mubr.f32.mxu0 0.0
  %v2414 = vand.u32 %v1668, 4294901760
  %v2415 = vsub.f32 %v1668, %v2414
  %v2416 = vand.u32 %v2415, 4294901760
  %2417 = vmatmul.mubr.f32.gmra.mrb[0].mxu0 %v2416
  %v2418 = vpop.f32.mrb[0].mxu0
  %v2419 = vadd.f32 %v2230, %v2418
  %v2420 = vpop.f32.mrb[0].mxu0
  %2421 = vmatprep.mubr.f32.mxu0 0.0
  %v2422 = vand.u32 %v1671, 4294901760
  %v2423 = vsub.f32 %v1671, %v2422
  %v2424 = vand.u32 %v2423, 4294901760
  %2425 = vmatmul.mubr.f32.gmra.mrb[0].mxu0 %v2424
  %v2426 = vpop.f32.mrb[0].mxu0
  %v2427 = vadd.f32 %v2237, %v2426
  %v2428 = vpop.f32.mrb[0].mxu0
  %2429 = vmatprep.mubr.f32.mxu0 0.0
  %v2430 = vand.u32 %v1674, 4294901760
  %v2431 = vsub.f32 %v1674, %v2430
  %v2432 = vand.u32 %v2431, 4294901760
  %2433 = vmatmul.mubr.f32.gmra.mrb[0].mxu0 %v2432
  %v2434 = vpop.f32.mrb[0].mxu0
  %v2435 = vadd.f32 %v2244, %v2434
  %v2436 = vpop.f32.mrb[0].mxu0
  %2437 = vmatprep.mubr.f32.mxu0 0.0
  %v2438 = vand.u32 %v1677, 4294901760
  %v2439 = vsub.f32 %v1677, %v2438
  %v2440 = vand.u32 %v2439, 4294901760
  %2441 = vmatmul.mubr.f32.gmra.mrb[0].mxu0 %v2440
  %v2442 = vpop.f32.mrb[0].mxu0
  %v2443 = vadd.f32 %v2251, %v2442
  %v2444 = vpop.f32.mrb[0].mxu0
  %2445 = vmatprep.mubr.f32.mxu0 0.0
  %v2446 = vand.u32 %v1680, 4294901760
  %v2447 = vsub.f32 %v1680, %v2446
  %v2448 = vand.u32 %v2447, 4294901760
  %2449 = vmatmul.mubr.f32.gmra.mrb[0].mxu0 %v2448
  %v2450 = vpop.f32.mrb[0].mxu0
  %v2451 = vadd.f32 %v2258, %v2450
  %v2452 = vpop.f32.mrb[0].mxu0
  %2453 = vmatprep.mubr.f32.mxu0 0.0
  %v2454 = vand.u32 %v1683, 4294901760
  %v2455 = vsub.f32 %v1683, %v2454
  %v2456 = vand.u32 %v2455, 4294901760
  %2457 = vmatmul.mubr.f32.gmra.mrb[0].mxu0 %v2456
  %v2458 = vpop.f32.mrb[0].mxu0
  %v2459 = vadd.f32 %v2265, %v2458
  %v2460 = vpop.f32.mrb[0].mxu0
  %2461 = vmatprep.mubr.f32.mxu0 0.0
  %v2462 = vand.u32 %v1686, 4294901760
  %v2463 = vsub.f32 %v1686, %v2462
  %v2464 = vand.u32 %v2463, 4294901760
  %2465 = vmatmul.mubr.f32.gmra.mrb[0].mxu0 %v2464
  %v2466 = vpop.f32.mrb[0].mxu0
  %v2467 = vadd.f32 %v2272, %v2466
  %v2468 = vpop.f32.mrb[0].mxu0
  %2469 = vmatprep.mubr.f32.mxu0 0.0
  %v2470 = vand.u32 %v1689, 4294901760
  %v2471 = vsub.f32 %v1689, %v2470
  %v2472 = vand.u32 %v2471, 4294901760
  %2473 = vmatmul.mubr.f32.gmra.mrb[0].mxu0 %v2472
  %v2474 = vpop.f32.mrb[0].mxu0
  %v2475 = vadd.f32 %v2279, %v2474
  %v2476 = vpop.f32.mrb[0].mxu0
  %2477 = vmatprep.mubr.f32.mxu0 0.0
  %v2478 = vand.u32 %v1692, 4294901760
  %v2479 = vsub.f32 %v1692, %v2478
  %v2480 = vand.u32 %v2479, 4294901760
  %2481 = vmatmul.mubr.f32.gmra.mrb[0].mxu0 %v2480
  %v2482 = vpop.f32.mrb[0].mxu0
  %v2483 = vadd.f32 %v2286, %v2482
  %v2484 = vpop.f32.mrb[0].mxu0
  %2485 = vdwg.mxu0
  %2486 = vmatprep.subr.mxu0 0.0
  %v2487 = vand.u32 %v1403, 4294901760
  %v2488 = vsub.f32 %v1403, %v2487
  %v2489 = vand.u32 %v2488, 4294901760
  %2490 = vmatpush1.msra.mxu0 %v2489
  %2491 = vmatprep.subr.mxu0 0.0
  %v2492 = vand.u32 %v1404, 4294901760
  %v2493 = vsub.f32 %v1404, %v2492
  %v2494 = vand.u32 %v2493, 4294901760
  %2495 = vmatpush1.msra.mxu0 %v2494
  %2496 = vmatprep.subr.mxu0 0.0
  %v2497 = vand.u32 %v1405, 4294901760
  %v2498 = vsub.f32 %v1405, %v2497
  %v2499 = vand.u32 %v2498, 4294901760
  %2500 = vmatpush1.msra.mxu0 %v2499
  %2501 = vmatprep.subr.mxu0 0.0
  %v2502 = vand.u32 %v1406, 4294901760
  %v2503 = vsub.f32 %v1406, %v2502
  %v2504 = vand.u32 %v2503, 4294901760
  %2505 = vmatpush1.msra.mxu0 %v2504
  %2506 = vmatprep.subr.mxu0 0.0
  %2507 = vmatpush1.msra.mxu0 0.0
  %2508 = vmatprep.subr.mxu0 0.0
  %2509 = vmatpush1.msra.mxu0 0.0
  %2510 = vmatprep.subr.mxu0 0.0
  %2511 = vmatpush1.msra.mxu0 0.0
  %2512 = vmatprep.subr.mxu0 0.0
  %2513 = vmatpush1.msra.mxu0 0.0
  %2514 = vmatprep.subr.mxu0 0.0
  %2515 = vmatpush1.msra.mxu0 0.0
  %2516 = vmatprep.subr.mxu0 0.0
  %2517 = vmatpush1.msra.mxu0 0.0
  %2518 = vmatprep.subr.mxu0 0.0
  %2519 = vmatpush1.msra.mxu0 0.0
  %2520 = vmatprep.subr.mxu0 0.0
  %2521 = vmatpush1.msra.mxu0 0.0
  %2522 = vmatprep.subr.mxu0 0.0
  %2523 = vmatpush1.msra.mxu0 0.0
  %2524 = vmatprep.subr.mxu0 0.0
  %2525 = vmatpush1.msra.mxu0 0.0
  %2526 = vmatprep.subr.mxu0 0.0
  %2527 = vmatpush1.msra.mxu0 0.0
  %2528 = vmatprep.subr.mxu0 0.0
  %2529 = vmatpush1.msra.mxu0 0.0
  %2530 = vmatprep.subr.mxu0 0.0
  %2531 = vmatpush1.msra.mxu0 0.0
  %2532 = vmatprep.subr.mxu0 0.0
  %2533 = vmatpush1.msra.mxu0 0.0
  %2534 = vmatprep.subr.mxu0 0.0
  %2535 = vmatpush1.msra.mxu0 0.0
  %2536 = vmatprep.subr.mxu0 0.0
  %2537 = vmatpush1.msra.mxu0 0.0
  %2538 = vmatprep.subr.mxu0 0.0
  %2539 = vmatpush1.msra.mxu0 0.0
  %2540 = vmatprep.subr.mxu0 0.0
  %2541 = vmatpush1.msra.mxu0 0.0
  %2542 = vmatprep.subr.mxu0 0.0
  %2543 = vmatpush1.msra.mxu0 0.0
  %2544 = vmatprep.subr.mxu0 0.0
  %2545 = vmatpush1.msra.mxu0 0.0
  %2546 = vmatprep.subr.mxu0 0.0
  %2547 = vmatpush1.msra.mxu0 0.0
  %2548 = vmatprep.subr.mxu0 0.0
  %2549 = vmatpush1.msra.mxu0 0.0
  %2550 = vmatprep.subr.mxu0 0.0
  %2551 = vmatpush1.msra.mxu0 0.0
  %2552 = vmatprep.subr.mxu0 0.0
  %2553 = vmatpush1.msra.mxu0 0.0
  %2554 = vmatprep.subr.mxu0 0.0
  %2555 = vmatpush1.msra.mxu0 0.0
  %2556 = vmatprep.subr.mxu0 0.0
  %2557 = vmatpush1.msra.mxu0 0.0
  %2558 = vmatprep.subr.mxu0 0.0
  %2559 = vmatpush1.msra.mxu0 0.0
  %2560 = vmatprep.subr.mxu0 0.0
  %2561 = vmatpush1.msra.mxu0 0.0
  %2562 = vmatprep.mubr.f32.mxu0 0.0
  %v2563 = vand.u32 %v1647, 4294901760
  %2564 = vmatmul.mubr.f32.gmra.mrb[0].mxu0 %v2563
  %v2565 = vpop.f32.mrb[0].mxu0
  %v2566 = vadd.f32 %v2363, %v2565
  %v2567 = vpop.f32.mrb[0].mxu0
  %2568 = vmatprep.mubr.f32.mxu0 0.0
  %v2569 = vand.u32 %v1650, 4294901760
  %2570 = vmatmul.mubr.f32.gmra.mrb[0].mxu0 %v2569
  %v2571 = vpop.f32.mrb[0].mxu0
  %v2572 = vadd.f32 %v2371, %v2571
  %v2573 = vpop.f32.mrb[0].mxu0
  %2574 = vmatprep.mubr.f32.mxu0 0.0
  %v2575 = vand.u32 %v1653, 4294901760
  %2576 = vmatmul.mubr.f32.gmra.mrb[0].mxu0 %v2575
  %v2577 = vpop.f32.mrb[0].mxu0
  %v2578 = vadd.f32 %v2379, %v2577
  %v2579 = vpop.f32.mrb[0].mxu0
  %2580 = vmatprep.mubr.f32.mxu0 0.0
  %v2581 = vand.u32 %v1656, 4294901760
  %2582 = vmatmul.mubr.f32.gmra.mrb[0].mxu0 %v2581
  %v2583 = vpop.f32.mrb[0].mxu0
  %v2584 = vadd.f32 %v2387, %v2583
  %v2585 = vpop.f32.mrb[0].mxu0
  %2586 = vmatprep.mubr.f32.mxu0 0.0
  %v2587 = vand.u32 %v1659, 4294901760
  %2588 = vmatmul.mubr.f32.gmra.mrb[0].mxu0 %v2587
  %v2589 = vpop.f32.mrb[0].mxu0
  %v2590 = vadd.f32 %v2395, %v2589
  %v2591 = vpop.f32.mrb[0].mxu0
  %2592 = vmatprep.mubr.f32.mxu0 0.0
  %v2593 = vand.u32 %v1662, 4294901760
  %2594 = vmatmul.mubr.f32.gmra.mrb[0].mxu0 %v2593
  %v2595 = vpop.f32.mrb[0].mxu0
  %v2596 = vadd.f32 %v2403, %v2595
  %v2597 = vpop.f32.mrb[0].mxu0
  %2598 = vmatprep.mubr.f32.mxu0 0.0
  %v2599 = vand.u32 %v1665, 4294901760
  %2600 = vmatmul.mubr.f32.gmra.mrb[0].mxu0 %v2599
  %v2601 = vpop.f32.mrb[0].mxu0
  %v2602 = vadd.f32 %v2411, %v2601
  %v2603 = vpop.f32.mrb[0].mxu0
  %2604 = vmatprep.mubr.f32.mxu0 0.0
  %v2605 = vand.u32 %v1668, 4294901760
  %2606 = vmatmul.mubr.f32.gmra.mrb[0].mxu0 %v2605
  %v2607 = vpop.f32.mrb[0].mxu0
  %v2608 = vadd.f32 %v2419, %v2607
  %v2609 = vpop.f32.mrb[0].mxu0
  %2610 = vmatprep.mubr.f32.mxu0 0.0
  %v2611 = vand.u32 %v1671, 4294901760
  %2612 = vmatmul.mubr.f32.gmra.mrb[0].mxu0 %v2611
  %v2613 = vpop.f32.mrb[0].mxu0
  %v2614 = vadd.f32 %v2427, %v2613
  %v2615 = vpop.f32.mrb[0].mxu0
  %2616 = vmatprep.mubr.f32.mxu0 0.0
  %v2617 = vand.u32 %v1674, 4294901760
  %2618 = vmatmul.mubr.f32.gmra.mrb[0].mxu0 %v2617
  %v2619 = vpop.f32.mrb[0].mxu0
  %v2620 = vadd.f32 %v2435, %v2619
  %v2621 = vpop.f32.mrb[0].mxu0
  %2622 = vmatprep.mubr.f32.mxu0 0.0
  %v2623 = vand.u32 %v1677, 4294901760
  %2624 = vmatmul.mubr.f32.gmra.mrb[0].mxu0 %v2623
  %v2625 = vpop.f32.mrb[0].mxu0
  %v2626 = vadd.f32 %v2443, %v2625
  %v2627 = vpop.f32.mrb[0].mxu0
  %2628 = vmatprep.mubr.f32.mxu0 0.0
  %v2629 = vand.u32 %v1680, 4294901760
  %2630 = vmatmul.mubr.f32.gmra.mrb[0].mxu0 %v2629
  %v2631 = vpop.f32.mrb[0].mxu0
  %v2632 = vadd.f32 %v2451, %v2631
  %v2633 = vpop.f32.mrb[0].mxu0
  %2634 = vmatprep.mubr.f32.mxu0 0.0
  %v2635 = vand.u32 %v1683, 4294901760
  %2636 = vmatmul.mubr.f32.gmra.mrb[0].mxu0 %v2635
  %v2637 = vpop.f32.mrb[0].mxu0
  %v2638 = vadd.f32 %v2459, %v2637
  %v2639 = vpop.f32.mrb[0].mxu0
  %2640 = vmatprep.mubr.f32.mxu0 0.0
  %v2641 = vand.u32 %v1686, 4294901760
  %2642 = vmatmul.mubr.f32.gmra.mrb[0].mxu0 %v2641
  %v2643 = vpop.f32.mrb[0].mxu0
  %v2644 = vadd.f32 %v2467, %v2643
  %v2645 = vpop.f32.mrb[0].mxu0
  %2646 = vmatprep.mubr.f32.mxu0 0.0
  %v2647 = vand.u32 %v1689, 4294901760
  %2648 = vmatmul.mubr.f32.gmra.mrb[0].mxu0 %v2647
  %v2649 = vpop.f32.mrb[0].mxu0
  %v2650 = vadd.f32 %v2475, %v2649
  %v2651 = vpop.f32.mrb[0].mxu0
  %2652 = vmatprep.mubr.f32.mxu0 0.0
  %v2653 = vand.u32 %v1692, 4294901760
  %2654 = vmatmul.mubr.f32.gmra.mrb[0].mxu0 %v2653
  %v2655 = vpop.f32.mrb[0].mxu0
  %v2656 = vadd.f32 %v2483, %v2655
  %v2657 = vpop.f32.mrb[0].mxu0
  %2658 = vdwg.mxu0
  %2659 = vmatprep.subr.mxu0 0.0
  %v2660 = vand.u32 %v1403, 4294901760
  %2661 = vmatpush1.msra.mxu0 %v2660
  %2662 = vmatprep.subr.mxu0 0.0
  %v2663 = vand.u32 %v1404, 4294901760
  %2664 = vmatpush1.msra.mxu0 %v2663
  %2665 = vmatprep.subr.mxu0 0.0
  %v2666 = vand.u32 %v1405, 4294901760
  %2667 = vmatpush1.msra.mxu0 %v2666
  %2668 = vmatprep.subr.mxu0 0.0
  %v2669 = vand.u32 %v1406, 4294901760
  %2670 = vmatpush1.msra.mxu0 %v2669
  %2671 = vmatprep.subr.mxu0 0.0
  %2672 = vmatpush1.msra.mxu0 0.0
  %2673 = vmatprep.subr.mxu0 0.0
  %2674 = vmatpush1.msra.mxu0 0.0
  %2675 = vmatprep.subr.mxu0 0.0
  %2676 = vmatpush1.msra.mxu0 0.0
  %2677 = vmatprep.subr.mxu0 0.0
  %2678 = vmatpush1.msra.mxu0 0.0
  %2679 = vmatprep.subr.mxu0 0.0
  %2680 = vmatpush1.msra.mxu0 0.0
  %2681 = vmatprep.subr.mxu0 0.0
  %2682 = vmatpush1.msra.mxu0 0.0
  %2683 = vmatprep.subr.mxu0 0.0
  %2684 = vmatpush1.msra.mxu0 0.0
  %2685 = vmatprep.subr.mxu0 0.0
  %2686 = vmatpush1.msra.mxu0 0.0
  %2687 = vmatprep.subr.mxu0 0.0
  %2688 = vmatpush1.msra.mxu0 0.0
  %2689 = vmatprep.subr.mxu0 0.0
  %2690 = vmatpush1.msra.mxu0 0.0
  %2691 = vmatprep.subr.mxu0 0.0
  %2692 = vmatpush1.msra.mxu0 0.0
  %2693 = vmatprep.subr.mxu0 0.0
  %2694 = vmatpush1.msra.mxu0 0.0
  %2695 = vmatprep.subr.mxu0 0.0
  %2696 = vmatpush1.msra.mxu0 0.0
  %2697 = vmatprep.subr.mxu0 0.0
  %2698 = vmatpush1.msra.mxu0 0.0
  %2699 = vmatprep.subr.mxu0 0.0
  %2700 = vmatpush1.msra.mxu0 0.0
  %2701 = vmatprep.subr.mxu0 0.0
  %2702 = vmatpush1.msra.mxu0 0.0
  %2703 = vmatprep.subr.mxu0 0.0
  %2704 = vmatpush1.msra.mxu0 0.0
  %2705 = vmatprep.subr.mxu0 0.0
  %2706 = vmatpush1.msra.mxu0 0.0
  %2707 = vmatprep.subr.mxu0 0.0
  %2708 = vmatpush1.msra.mxu0 0.0
  %2709 = vmatprep.subr.mxu0 0.0
  %2710 = vmatpush1.msra.mxu0 0.0
  %2711 = vmatprep.subr.mxu0 0.0
  %2712 = vmatpush1.msra.mxu0 0.0
  %2713 = vmatprep.subr.mxu0 0.0
  %2714 = vmatpush1.msra.mxu0 0.0
  %2715 = vmatprep.subr.mxu0 0.0
  %2716 = vmatpush1.msra.mxu0 0.0
  %2717 = vmatprep.subr.mxu0 0.0
  %2718 = vmatpush1.msra.mxu0 0.0
  %2719 = vmatprep.subr.mxu0 0.0
  %2720 = vmatpush1.msra.mxu0 0.0
  %2721 = vmatprep.subr.mxu0 0.0
  %2722 = vmatpush1.msra.mxu0 0.0
  %2723 = vmatprep.subr.mxu0 0.0
  %2724 = vmatpush1.msra.mxu0 0.0
  %2725 = vmatprep.subr.mxu0 0.0
  %2726 = vmatpush1.msra.mxu0 0.0
  %2727 = vmatprep.mubr.f32.mxu0 0.0
  %v2728 = vand.u32 %v1647, 4294901760
  %2729 = vmatmul.mubr.f32.gmra.mrb[0].mxu0 %v2728
  %v2730 = vpop.f32.mrb[0].mxu0
  %v2731 = vadd.f32 %v2566, %v2730
  %v2732 = vpop.f32.mrb[0].mxu0
  %2733 = vmatprep.mubr.f32.mxu0 0.0
  %v2734 = vand.u32 %v1650, 4294901760
  %2735 = vmatmul.mubr.f32.gmra.mrb[0].mxu0 %v2734
  %v2736 = vpop.f32.mrb[0].mxu0
  %v2737 = vadd.f32 %v2572, %v2736
  %v2738 = vpop.f32.mrb[0].mxu0
  %2739 = vmatprep.mubr.f32.mxu0 0.0
  %v2740 = vand.u32 %v1653, 4294901760
  %2741 = vmatmul.mubr.f32.gmra.mrb[0].mxu0 %v2740
  %v2742 = vpop.f32.mrb[0].mxu0
  %v2743 = vadd.f32 %v2578, %v2742
  %v2744 = vpop.f32.mrb[0].mxu0
  %2745 = vmatprep.mubr.f32.mxu0 0.0
  %v2746 = vand.u32 %v1656, 4294901760
  %2747 = vmatmul.mubr.f32.gmra.mrb[0].mxu0 %v2746
  %v2748 = vpop.f32.mrb[0].mxu0
  %v2749 = vadd.f32 %v2584, %v2748
  %v2750 = vpop.f32.mrb[0].mxu0
  %2751 = vmatprep.mubr.f32.mxu0 0.0
  %v2752 = vand.u32 %v1659, 4294901760
  %2753 = vmatmul.mubr.f32.gmra.mrb[0].mxu0 %v2752
  %v2754 = vpop.f32.mrb[0].mxu0
  %v2755 = vadd.f32 %v2590, %v2754
  %v2756 = vpop.f32.mrb[0].mxu0
  %2757 = vmatprep.mubr.f32.mxu0 0.0
  %v2758 = vand.u32 %v1662, 4294901760
  %2759 = vmatmul.mubr.f32.gmra.mrb[0].mxu0 %v2758
  %v2760 = vpop.f32.mrb[0].mxu0
  %v2761 = vadd.f32 %v2596, %v2760
  %v2762 = vpop.f32.mrb[0].mxu0
  %2763 = vmatprep.mubr.f32.mxu0 0.0
  %v2764 = vand.u32 %v1665, 4294901760
  %2765 = vmatmul.mubr.f32.gmra.mrb[0].mxu0 %v2764
  %v2766 = vpop.f32.mrb[0].mxu0
  %v2767 = vadd.f32 %v2602, %v2766
  %v2768 = vpop.f32.mrb[0].mxu0
  %2769 = vmatprep.mubr.f32.mxu0 0.0
  %v2770 = vand.u32 %v1668, 4294901760
  %2771 = vmatmul.mubr.f32.gmra.mrb[0].mxu0 %v2770
  %v2772 = vpop.f32.mrb[0].mxu0
  %v2773 = vadd.f32 %v2608, %v2772
  %v2774 = vpop.f32.mrb[0].mxu0
  %2775 = vmatprep.mubr.f32.mxu0 0.0
  %v2776 = vand.u32 %v1671, 4294901760
  %2777 = vmatmul.mubr.f32.gmra.mrb[0].mxu0 %v2776
  %v2778 = vpop.f32.mrb[0].mxu0
  %v2779 = vadd.f32 %v2614, %v2778
  %v2780 = vpop.f32.mrb[0].mxu0
  %2781 = vmatprep.mubr.f32.mxu0 0.0
  %v2782 = vand.u32 %v1674, 4294901760
  %2783 = vmatmul.mubr.f32.gmra.mrb[0].mxu0 %v2782
  %v2784 = vpop.f32.mrb[0].mxu0
  %v2785 = vadd.f32 %v2620, %v2784
  %v2786 = vpop.f32.mrb[0].mxu0
  %2787 = vmatprep.mubr.f32.mxu0 0.0
  %v2788 = vand.u32 %v1677, 4294901760
  %2789 = vmatmul.mubr.f32.gmra.mrb[0].mxu0 %v2788
  %v2790 = vpop.f32.mrb[0].mxu0
  %v2791 = vadd.f32 %v2626, %v2790
  %v2792 = vpop.f32.mrb[0].mxu0
  %2793 = vmatprep.mubr.f32.mxu0 0.0
  %v2794 = vand.u32 %v1680, 4294901760
  %2795 = vmatmul.mubr.f32.gmra.mrb[0].mxu0 %v2794
  %v2796 = vpop.f32.mrb[0].mxu0
  %v2797 = vadd.f32 %v2632, %v2796
  %v2798 = vpop.f32.mrb[0].mxu0
  %2799 = vmatprep.mubr.f32.mxu0 0.0
  %v2800 = vand.u32 %v1683, 4294901760
  %2801 = vmatmul.mubr.f32.gmra.mrb[0].mxu0 %v2800
  %v2802 = vpop.f32.mrb[0].mxu0
  %v2803 = vadd.f32 %v2638, %v2802
  %v2804 = vpop.f32.mrb[0].mxu0
  %2805 = vmatprep.mubr.f32.mxu0 0.0
  %v2806 = vand.u32 %v1686, 4294901760
  %2807 = vmatmul.mubr.f32.gmra.mrb[0].mxu0 %v2806
  %v2808 = vpop.f32.mrb[0].mxu0
  %v2809 = vadd.f32 %v2644, %v2808
  %v2810 = vpop.f32.mrb[0].mxu0
  %2811 = vmatprep.mubr.f32.mxu0 0.0
  %v2812 = vand.u32 %v1689, 4294901760
  %2813 = vmatmul.mubr.f32.gmra.mrb[0].mxu0 %v2812
  %v2814 = vpop.f32.mrb[0].mxu0
  %v2815 = vadd.f32 %v2650, %v2814
  %v2816 = vpop.f32.mrb[0].mxu0
  %2817 = vmatprep.mubr.f32.mxu0 0.0
  %v2818 = vand.u32 %v1692, 4294901760
  %2819 = vmatmul.mubr.f32.gmra.mrb[0].mxu0 %v2818
  %v2820 = vpop.f32.mrb[0].mxu0
  %v2821 = vadd.f32 %v2656, %v2820
  %v2822 = vpop.f32.mrb[0].mxu0
  %2823 = vdwg.mxu0
  %v2825 = vsel %vm1645, %v1516, 0
  %v2828 = vsel %vm1645, %v1517, 0
  %v2831 = vsel %vm1645, %v1518, 0
  %v2834 = vsel %vm1645, %v1519, 0
  %v2837 = vsel %vm1645, %v1520, 0
  %v2840 = vsel %vm1645, %v1521, 0
  %v2843 = vsel %vm1645, %v1522, 0
  %v2846 = vsel %vm1645, %v1523, 0
  %v2849 = vsel %vm1645, %v1524, 0
  %v2852 = vsel %vm1645, %v1525, 0
  %v2855 = vsel %vm1645, %v1526, 0
  %v2858 = vsel %vm1645, %v1527, 0
  %v2861 = vsel %vm1645, %v1528, 0
  %v2864 = vsel %vm1645, %v1529, 0
  %v2867 = vsel %vm1645, %v1530, 0
  %v2870 = vsel %vm1645, %v1531, 0
  %2872 = vmatprep.subr.mxu0 0.0
  %v2873 = vand.u32 %v1399, 4294901760
  %2874 = vmatpush1.msra.mxu0 %v2873
  %2875 = vmatprep.subr.mxu0 0.0
  %v2876 = vand.u32 %v1400, 4294901760
  %2877 = vmatpush1.msra.mxu0 %v2876
  %2878 = vmatprep.subr.mxu0 0.0
  %v2879 = vand.u32 %v1401, 4294901760
  %2880 = vmatpush1.msra.mxu0 %v2879
  %2881 = vmatprep.subr.mxu0 0.0
  %v2882 = vand.u32 %v1402, 4294901760
  %2883 = vmatpush1.msra.mxu0 %v2882
  %2884 = vmatprep.subr.mxu0 0.0
  %2885 = vmatpush1.msra.mxu0 0.0
  %2886 = vmatprep.subr.mxu0 0.0
  %2887 = vmatpush1.msra.mxu0 0.0
  %2888 = vmatprep.subr.mxu0 0.0
  %2889 = vmatpush1.msra.mxu0 0.0
  %2890 = vmatprep.subr.mxu0 0.0
  %2891 = vmatpush1.msra.mxu0 0.0
  %2892 = vmatprep.subr.mxu0 0.0
  %2893 = vmatpush1.msra.mxu0 0.0
  %2894 = vmatprep.subr.mxu0 0.0
  %2895 = vmatpush1.msra.mxu0 0.0
  %2896 = vmatprep.subr.mxu0 0.0
  %2897 = vmatpush1.msra.mxu0 0.0
  %2898 = vmatprep.subr.mxu0 0.0
  %2899 = vmatpush1.msra.mxu0 0.0
  %2900 = vmatprep.subr.mxu0 0.0
  %2901 = vmatpush1.msra.mxu0 0.0
  %2902 = vmatprep.subr.mxu0 0.0
  %2903 = vmatpush1.msra.mxu0 0.0
  %2904 = vmatprep.subr.mxu0 0.0
  %2905 = vmatpush1.msra.mxu0 0.0
  %2906 = vmatprep.subr.mxu0 0.0
  %2907 = vmatpush1.msra.mxu0 0.0
  %2908 = vmatprep.subr.mxu0 0.0
  %2909 = vmatpush1.msra.mxu0 0.0
  %2910 = vmatprep.subr.mxu0 0.0
  %2911 = vmatpush1.msra.mxu0 0.0
  %2912 = vmatprep.subr.mxu0 0.0
  %2913 = vmatpush1.msra.mxu0 0.0
  %2914 = vmatprep.subr.mxu0 0.0
  %2915 = vmatpush1.msra.mxu0 0.0
  %2916 = vmatprep.subr.mxu0 0.0
  %2917 = vmatpush1.msra.mxu0 0.0
  %2918 = vmatprep.subr.mxu0 0.0
  %2919 = vmatpush1.msra.mxu0 0.0
  %2920 = vmatprep.subr.mxu0 0.0
  %2921 = vmatpush1.msra.mxu0 0.0
  %2922 = vmatprep.subr.mxu0 0.0
  %2923 = vmatpush1.msra.mxu0 0.0
  %2924 = vmatprep.subr.mxu0 0.0
  %2925 = vmatpush1.msra.mxu0 0.0
  %2926 = vmatprep.subr.mxu0 0.0
  %2927 = vmatpush1.msra.mxu0 0.0
  %2928 = vmatprep.subr.mxu0 0.0
  %2929 = vmatpush1.msra.mxu0 0.0
  %2930 = vmatprep.subr.mxu0 0.0
  %2931 = vmatpush1.msra.mxu0 0.0
  %2932 = vmatprep.subr.mxu0 0.0
  %2933 = vmatpush1.msra.mxu0 0.0
  %2934 = vmatprep.subr.mxu0 0.0
  %2935 = vmatpush1.msra.mxu0 0.0
  %2936 = vmatprep.subr.mxu0 0.0
  %2937 = vmatpush1.msra.mxu0 0.0
  %2938 = vmatprep.subr.mxu0 0.0
  %2939 = vmatpush1.msra.mxu0 0.0
  %2940 = vmatprep.mubr.f32.mxu0 0.0
  %v2941 = vand.u32 %v2825, 4294901760
  %v2942 = vsub.f32 %v2825, %v2941
  %v2943 = vand.u32 %v2942, 4294901760
  %v2944 = vsub.f32 %v2942, %v2943
  %v2945 = vand.u32 %v2944, 4294901760
  %2946 = vmatmul.mubr.f32.gmra.mrb[0].mxu0 %v2945
  %v2947 = vpop.f32.mrb[0].mxu0
  %v2948 = vadd.f32 %v2731, %v2947
  %v2949 = vpop.f32.mrb[0].mxu0
  %2950 = vmatprep.mubr.f32.mxu0 0.0
  %v2951 = vand.u32 %v2828, 4294901760
  %v2952 = vsub.f32 %v2828, %v2951
  %v2953 = vand.u32 %v2952, 4294901760
  %v2954 = vsub.f32 %v2952, %v2953
  %v2955 = vand.u32 %v2954, 4294901760
  %2956 = vmatmul.mubr.f32.gmra.mrb[0].mxu0 %v2955
  %v2957 = vpop.f32.mrb[0].mxu0
  %v2958 = vadd.f32 %v2737, %v2957
  %v2959 = vpop.f32.mrb[0].mxu0
  %2960 = vmatprep.mubr.f32.mxu0 0.0
  %v2961 = vand.u32 %v2831, 4294901760
  %v2962 = vsub.f32 %v2831, %v2961
  %v2963 = vand.u32 %v2962, 4294901760
  %v2964 = vsub.f32 %v2962, %v2963
  %v2965 = vand.u32 %v2964, 4294901760
  %2966 = vmatmul.mubr.f32.gmra.mrb[0].mxu0 %v2965
  %v2967 = vpop.f32.mrb[0].mxu0
  %v2968 = vadd.f32 %v2743, %v2967
  %v2969 = vpop.f32.mrb[0].mxu0
  %2970 = vmatprep.mubr.f32.mxu0 0.0
  %v2971 = vand.u32 %v2834, 4294901760
  %v2972 = vsub.f32 %v2834, %v2971
  %v2973 = vand.u32 %v2972, 4294901760
  %v2974 = vsub.f32 %v2972, %v2973
  %v2975 = vand.u32 %v2974, 4294901760
  %2976 = vmatmul.mubr.f32.gmra.mrb[0].mxu0 %v2975
  %v2977 = vpop.f32.mrb[0].mxu0
  %v2978 = vadd.f32 %v2749, %v2977
  %v2979 = vpop.f32.mrb[0].mxu0
  %2980 = vmatprep.mubr.f32.mxu0 0.0
  %v2981 = vand.u32 %v2837, 4294901760
  %v2982 = vsub.f32 %v2837, %v2981
  %v2983 = vand.u32 %v2982, 4294901760
  %v2984 = vsub.f32 %v2982, %v2983
  %v2985 = vand.u32 %v2984, 4294901760
  %2986 = vmatmul.mubr.f32.gmra.mrb[0].mxu0 %v2985
  %v2987 = vpop.f32.mrb[0].mxu0
  %v2988 = vadd.f32 %v2755, %v2987
  %v2989 = vpop.f32.mrb[0].mxu0
  %2990 = vmatprep.mubr.f32.mxu0 0.0
  %v2991 = vand.u32 %v2840, 4294901760
  %v2992 = vsub.f32 %v2840, %v2991
  %v2993 = vand.u32 %v2992, 4294901760
  %v2994 = vsub.f32 %v2992, %v2993
  %v2995 = vand.u32 %v2994, 4294901760
  %2996 = vmatmul.mubr.f32.gmra.mrb[0].mxu0 %v2995
  %v2997 = vpop.f32.mrb[0].mxu0
  %v2998 = vadd.f32 %v2761, %v2997
  %v2999 = vpop.f32.mrb[0].mxu0
  %3000 = vmatprep.mubr.f32.mxu0 0.0
  %v3001 = vand.u32 %v2843, 4294901760
  %v3002 = vsub.f32 %v2843, %v3001
  %v3003 = vand.u32 %v3002, 4294901760
  %v3004 = vsub.f32 %v3002, %v3003
  %v3005 = vand.u32 %v3004, 4294901760
  %3006 = vmatmul.mubr.f32.gmra.mrb[0].mxu0 %v3005
  %v3007 = vpop.f32.mrb[0].mxu0
  %v3008 = vadd.f32 %v2767, %v3007
  %v3009 = vpop.f32.mrb[0].mxu0
  %3010 = vmatprep.mubr.f32.mxu0 0.0
  %v3011 = vand.u32 %v2846, 4294901760
  %v3012 = vsub.f32 %v2846, %v3011
  %v3013 = vand.u32 %v3012, 4294901760
  %v3014 = vsub.f32 %v3012, %v3013
  %v3015 = vand.u32 %v3014, 4294901760
  %3016 = vmatmul.mubr.f32.gmra.mrb[0].mxu0 %v3015
  %v3017 = vpop.f32.mrb[0].mxu0
  %v3018 = vadd.f32 %v2773, %v3017
  %v3019 = vpop.f32.mrb[0].mxu0
  %3020 = vmatprep.mubr.f32.mxu0 0.0
  %v3021 = vand.u32 %v2849, 4294901760
  %v3022 = vsub.f32 %v2849, %v3021
  %v3023 = vand.u32 %v3022, 4294901760
  %v3024 = vsub.f32 %v3022, %v3023
  %v3025 = vand.u32 %v3024, 4294901760
  %3026 = vmatmul.mubr.f32.gmra.mrb[0].mxu0 %v3025
  %v3027 = vpop.f32.mrb[0].mxu0
  %v3028 = vadd.f32 %v2779, %v3027
  %v3029 = vpop.f32.mrb[0].mxu0
  %3030 = vmatprep.mubr.f32.mxu0 0.0
  %v3031 = vand.u32 %v2852, 4294901760
  %v3032 = vsub.f32 %v2852, %v3031
  %v3033 = vand.u32 %v3032, 4294901760
  %v3034 = vsub.f32 %v3032, %v3033
  %v3035 = vand.u32 %v3034, 4294901760
  %3036 = vmatmul.mubr.f32.gmra.mrb[0].mxu0 %v3035
  %v3037 = vpop.f32.mrb[0].mxu0
  %v3038 = vadd.f32 %v2785, %v3037
  %v3039 = vpop.f32.mrb[0].mxu0
  %3040 = vmatprep.mubr.f32.mxu0 0.0
  %v3041 = vand.u32 %v2855, 4294901760
  %v3042 = vsub.f32 %v2855, %v3041
  %v3043 = vand.u32 %v3042, 4294901760
  %v3044 = vsub.f32 %v3042, %v3043
  %v3045 = vand.u32 %v3044, 4294901760
  %3046 = vmatmul.mubr.f32.gmra.mrb[0].mxu0 %v3045
  %v3047 = vpop.f32.mrb[0].mxu0
  %v3048 = vadd.f32 %v2791, %v3047
  %v3049 = vpop.f32.mrb[0].mxu0
  %3050 = vmatprep.mubr.f32.mxu0 0.0
  %v3051 = vand.u32 %v2858, 4294901760
  %v3052 = vsub.f32 %v2858, %v3051
  %v3053 = vand.u32 %v3052, 4294901760
  %v3054 = vsub.f32 %v3052, %v3053
  %v3055 = vand.u32 %v3054, 4294901760
  %3056 = vmatmul.mubr.f32.gmra.mrb[0].mxu0 %v3055
  %v3057 = vpop.f32.mrb[0].mxu0
  %v3058 = vadd.f32 %v2797, %v3057
  %v3059 = vpop.f32.mrb[0].mxu0
  %3060 = vmatprep.mubr.f32.mxu0 0.0
  %v3061 = vand.u32 %v2861, 4294901760
  %v3062 = vsub.f32 %v2861, %v3061
  %v3063 = vand.u32 %v3062, 4294901760
  %v3064 = vsub.f32 %v3062, %v3063
  %v3065 = vand.u32 %v3064, 4294901760
  %3066 = vmatmul.mubr.f32.gmra.mrb[0].mxu0 %v3065
  %v3067 = vpop.f32.mrb[0].mxu0
  %v3068 = vadd.f32 %v2803, %v3067
  %v3069 = vpop.f32.mrb[0].mxu0
  %3070 = vmatprep.mubr.f32.mxu0 0.0
  %v3071 = vand.u32 %v2864, 4294901760
  %v3072 = vsub.f32 %v2864, %v3071
  %v3073 = vand.u32 %v3072, 4294901760
  %v3074 = vsub.f32 %v3072, %v3073
  %v3075 = vand.u32 %v3074, 4294901760
  %3076 = vmatmul.mubr.f32.gmra.mrb[0].mxu0 %v3075
  %v3077 = vpop.f32.mrb[0].mxu0
  %v3078 = vadd.f32 %v2809, %v3077
  %v3079 = vpop.f32.mrb[0].mxu0
  %3080 = vmatprep.mubr.f32.mxu0 0.0
  %v3081 = vand.u32 %v2867, 4294901760
  %v3082 = vsub.f32 %v2867, %v3081
  %v3083 = vand.u32 %v3082, 4294901760
  %v3084 = vsub.f32 %v3082, %v3083
  %v3085 = vand.u32 %v3084, 4294901760
  %3086 = vmatmul.mubr.f32.gmra.mrb[0].mxu0 %v3085
  %v3087 = vpop.f32.mrb[0].mxu0
  %v3088 = vadd.f32 %v2815, %v3087
  %v3089 = vpop.f32.mrb[0].mxu0
  %3090 = vmatprep.mubr.f32.mxu0 0.0
  %v3091 = vand.u32 %v2870, 4294901760
  %v3092 = vsub.f32 %v2870, %v3091
  %v3093 = vand.u32 %v3092, 4294901760
  %v3094 = vsub.f32 %v3092, %v3093
  %v3095 = vand.u32 %v3094, 4294901760
  %3096 = vmatmul.mubr.f32.gmra.mrb[0].mxu0 %v3095
  %v3097 = vpop.f32.mrb[0].mxu0
  %v3098 = vadd.f32 %v2821, %v3097
  %v3099 = vpop.f32.mrb[0].mxu0
  %3100 = vdwg.mxu0
  %3101 = vmatprep.subr.mxu0 0.0
  %v3102 = vand.u32 %v1399, 4294901760
  %v3103 = vsub.f32 %v1399, %v3102
  %v3104 = vand.u32 %v3103, 4294901760
  %v3105 = vsub.f32 %v3103, %v3104
  %v3106 = vand.u32 %v3105, 4294901760
  %3107 = vmatpush1.msra.mxu0 %v3106
  %3108 = vmatprep.subr.mxu0 0.0
  %v3109 = vand.u32 %v1400, 4294901760
  %v3110 = vsub.f32 %v1400, %v3109
  %v3111 = vand.u32 %v3110, 4294901760
  %v3112 = vsub.f32 %v3110, %v3111
  %v3113 = vand.u32 %v3112, 4294901760
  %3114 = vmatpush1.msra.mxu0 %v3113
  %3115 = vmatprep.subr.mxu0 0.0
  %v3116 = vand.u32 %v1401, 4294901760
  %v3117 = vsub.f32 %v1401, %v3116
  %v3118 = vand.u32 %v3117, 4294901760
  %v3119 = vsub.f32 %v3117, %v3118
  %v3120 = vand.u32 %v3119, 4294901760
  %3121 = vmatpush1.msra.mxu0 %v3120
  %3122 = vmatprep.subr.mxu0 0.0
  %v3123 = vand.u32 %v1402, 4294901760
  %v3124 = vsub.f32 %v1402, %v3123
  %v3125 = vand.u32 %v3124, 4294901760
  %v3126 = vsub.f32 %v3124, %v3125
  %v3127 = vand.u32 %v3126, 4294901760
  %3128 = vmatpush1.msra.mxu0 %v3127
  %3129 = vmatprep.subr.mxu0 0.0
  %3130 = vmatpush1.msra.mxu0 0.0
  %3131 = vmatprep.subr.mxu0 0.0
  %3132 = vmatpush1.msra.mxu0 0.0
  %3133 = vmatprep.subr.mxu0 0.0
  %3134 = vmatpush1.msra.mxu0 0.0
  %3135 = vmatprep.subr.mxu0 0.0
  %3136 = vmatpush1.msra.mxu0 0.0
  %3137 = vmatprep.subr.mxu0 0.0
  %3138 = vmatpush1.msra.mxu0 0.0
  %3139 = vmatprep.subr.mxu0 0.0
  %3140 = vmatpush1.msra.mxu0 0.0
  %3141 = vmatprep.subr.mxu0 0.0
  %3142 = vmatpush1.msra.mxu0 0.0
  %3143 = vmatprep.subr.mxu0 0.0
  %3144 = vmatpush1.msra.mxu0 0.0
  %3145 = vmatprep.subr.mxu0 0.0
  %3146 = vmatpush1.msra.mxu0 0.0
  %3147 = vmatprep.subr.mxu0 0.0
  %3148 = vmatpush1.msra.mxu0 0.0
  %3149 = vmatprep.subr.mxu0 0.0
  %3150 = vmatpush1.msra.mxu0 0.0
  %3151 = vmatprep.subr.mxu0 0.0
  %3152 = vmatpush1.msra.mxu0 0.0
  %3153 = vmatprep.subr.mxu0 0.0
  %3154 = vmatpush1.msra.mxu0 0.0
  %3155 = vmatprep.subr.mxu0 0.0
  %3156 = vmatpush1.msra.mxu0 0.0
  %3157 = vmatprep.subr.mxu0 0.0
  %3158 = vmatpush1.msra.mxu0 0.0
  %3159 = vmatprep.subr.mxu0 0.0
  %3160 = vmatpush1.msra.mxu0 0.0
  %3161 = vmatprep.subr.mxu0 0.0
  %3162 = vmatpush1.msra.mxu0 0.0
  %3163 = vmatprep.subr.mxu0 0.0
  %3164 = vmatpush1.msra.mxu0 0.0
  %3165 = vmatprep.subr.mxu0 0.0
  %3166 = vmatpush1.msra.mxu0 0.0
  %3167 = vmatprep.subr.mxu0 0.0
  %3168 = vmatpush1.msra.mxu0 0.0
  %3169 = vmatprep.subr.mxu0 0.0
  %3170 = vmatpush1.msra.mxu0 0.0
  %3171 = vmatprep.subr.mxu0 0.0
  %3172 = vmatpush1.msra.mxu0 0.0
  %3173 = vmatprep.subr.mxu0 0.0
  %3174 = vmatpush1.msra.mxu0 0.0
  %3175 = vmatprep.subr.mxu0 0.0
  %3176 = vmatpush1.msra.mxu0 0.0
  %3177 = vmatprep.subr.mxu0 0.0
  %3178 = vmatpush1.msra.mxu0 0.0
  %3179 = vmatprep.subr.mxu0 0.0
  %3180 = vmatpush1.msra.mxu0 0.0
  %3181 = vmatprep.subr.mxu0 0.0
  %3182 = vmatpush1.msra.mxu0 0.0
  %3183 = vmatprep.subr.mxu0 0.0
  %3184 = vmatpush1.msra.mxu0 0.0
  %3185 = vmatprep.mubr.f32.mxu0 0.0
  %v3186 = vand.u32 %v2825, 4294901760
  %3187 = vmatmul.mubr.f32.gmra.mrb[0].mxu0 %v3186
  %v3188 = vpop.f32.mrb[0].mxu0
  %v3189 = vadd.f32 %v2948, %v3188
  %v3190 = vpop.f32.mrb[0].mxu0
  %3191 = vmatprep.mubr.f32.mxu0 0.0
  %v3192 = vand.u32 %v2828, 4294901760
  %3193 = vmatmul.mubr.f32.gmra.mrb[0].mxu0 %v3192
  %v3194 = vpop.f32.mrb[0].mxu0
  %v3195 = vadd.f32 %v2958, %v3194
  %v3196 = vpop.f32.mrb[0].mxu0
  %3197 = vmatprep.mubr.f32.mxu0 0.0
  %v3198 = vand.u32 %v2831, 4294901760
  %3199 = vmatmul.mubr.f32.gmra.mrb[0].mxu0 %v3198
  %v3200 = vpop.f32.mrb[0].mxu0
  %v3201 = vadd.f32 %v2968, %v3200
  %v3202 = vpop.f32.mrb[0].mxu0
  %3203 = vmatprep.mubr.f32.mxu0 0.0
  %v3204 = vand.u32 %v2834, 4294901760
  %3205 = vmatmul.mubr.f32.gmra.mrb[0].mxu0 %v3204
  %v3206 = vpop.f32.mrb[0].mxu0
  %v3207 = vadd.f32 %v2978, %v3206
  %v3208 = vpop.f32.mrb[0].mxu0
  %3209 = vmatprep.mubr.f32.mxu0 0.0
  %v3210 = vand.u32 %v2837, 4294901760
  %3211 = vmatmul.mubr.f32.gmra.mrb[0].mxu0 %v3210
  %v3212 = vpop.f32.mrb[0].mxu0
  %v3213 = vadd.f32 %v2988, %v3212
  %v3214 = vpop.f32.mrb[0].mxu0
  %3215 = vmatprep.mubr.f32.mxu0 0.0
  %v3216 = vand.u32 %v2840, 4294901760
  %3217 = vmatmul.mubr.f32.gmra.mrb[0].mxu0 %v3216
  %v3218 = vpop.f32.mrb[0].mxu0
  %v3219 = vadd.f32 %v2998, %v3218
  %v3220 = vpop.f32.mrb[0].mxu0
  %3221 = vmatprep.mubr.f32.mxu0 0.0
  %v3222 = vand.u32 %v2843, 4294901760
  %3223 = vmatmul.mubr.f32.gmra.mrb[0].mxu0 %v3222
  %v3224 = vpop.f32.mrb[0].mxu0
  %v3225 = vadd.f32 %v3008, %v3224
  %v3226 = vpop.f32.mrb[0].mxu0
  %3227 = vmatprep.mubr.f32.mxu0 0.0
  %v3228 = vand.u32 %v2846, 4294901760
  %3229 = vmatmul.mubr.f32.gmra.mrb[0].mxu0 %v3228
  %v3230 = vpop.f32.mrb[0].mxu0
  %v3231 = vadd.f32 %v3018, %v3230
  %v3232 = vpop.f32.mrb[0].mxu0
  %3233 = vmatprep.mubr.f32.mxu0 0.0
  %v3234 = vand.u32 %v2849, 4294901760
  %3235 = vmatmul.mubr.f32.gmra.mrb[0].mxu0 %v3234
  %v3236 = vpop.f32.mrb[0].mxu0
  %v3237 = vadd.f32 %v3028, %v3236
  %v3238 = vpop.f32.mrb[0].mxu0
  %3239 = vmatprep.mubr.f32.mxu0 0.0
  %v3240 = vand.u32 %v2852, 4294901760
  %3241 = vmatmul.mubr.f32.gmra.mrb[0].mxu0 %v3240
  %v3242 = vpop.f32.mrb[0].mxu0
  %v3243 = vadd.f32 %v3038, %v3242
  %v3244 = vpop.f32.mrb[0].mxu0
  %3245 = vmatprep.mubr.f32.mxu0 0.0
  %v3246 = vand.u32 %v2855, 4294901760
  %3247 = vmatmul.mubr.f32.gmra.mrb[0].mxu0 %v3246
  %v3248 = vpop.f32.mrb[0].mxu0
  %v3249 = vadd.f32 %v3048, %v3248
  %v3250 = vpop.f32.mrb[0].mxu0
  %3251 = vmatprep.mubr.f32.mxu0 0.0
  %v3252 = vand.u32 %v2858, 4294901760
  %3253 = vmatmul.mubr.f32.gmra.mrb[0].mxu0 %v3252
  %v3254 = vpop.f32.mrb[0].mxu0
  %v3255 = vadd.f32 %v3058, %v3254
  %v3256 = vpop.f32.mrb[0].mxu0
  %3257 = vmatprep.mubr.f32.mxu0 0.0
  %v3258 = vand.u32 %v2861, 4294901760
  %3259 = vmatmul.mubr.f32.gmra.mrb[0].mxu0 %v3258
  %v3260 = vpop.f32.mrb[0].mxu0
  %v3261 = vadd.f32 %v3068, %v3260
  %v3262 = vpop.f32.mrb[0].mxu0
  %3263 = vmatprep.mubr.f32.mxu0 0.0
  %v3264 = vand.u32 %v2864, 4294901760
  %3265 = vmatmul.mubr.f32.gmra.mrb[0].mxu0 %v3264
  %v3266 = vpop.f32.mrb[0].mxu0
  %v3267 = vadd.f32 %v3078, %v3266
  %v3268 = vpop.f32.mrb[0].mxu0
  %3269 = vmatprep.mubr.f32.mxu0 0.0
  %v3270 = vand.u32 %v2867, 4294901760
  %3271 = vmatmul.mubr.f32.gmra.mrb[0].mxu0 %v3270
  %v3272 = vpop.f32.mrb[0].mxu0
  %v3273 = vadd.f32 %v3088, %v3272
  %v3274 = vpop.f32.mrb[0].mxu0
  %3275 = vmatprep.mubr.f32.mxu0 0.0
  %v3276 = vand.u32 %v2870, 4294901760
  %3277 = vmatmul.mubr.f32.gmra.mrb[0].mxu0 %v3276
  %v3278 = vpop.f32.mrb[0].mxu0
  %v3279 = vadd.f32 %v3098, %v3278
  %v3280 = vpop.f32.mrb[0].mxu0
  %3281 = vdwg.mxu0
  %3282 = vmatprep.subr.mxu0 0.0
  %v3283 = vand.u32 %v1399, 4294901760
  %v3284 = vsub.f32 %v1399, %v3283
  %3285 = vmatpush1.msra.mxu0 %v3284
  %3286 = vmatprep.subr.mxu0 0.0
  %v3287 = vand.u32 %v1400, 4294901760
  %v3288 = vsub.f32 %v1400, %v3287
  %3289 = vmatpush1.msra.mxu0 %v3288
  %3290 = vmatprep.subr.mxu0 0.0
  %v3291 = vand.u32 %v1401, 4294901760
  %v3292 = vsub.f32 %v1401, %v3291
  %3293 = vmatpush1.msra.mxu0 %v3292
  %3294 = vmatprep.subr.mxu0 0.0
  %v3295 = vand.u32 %v1402, 4294901760
  %v3296 = vsub.f32 %v1402, %v3295
  %3297 = vmatpush1.msra.mxu0 %v3296
  %3298 = vmatprep.subr.mxu0 0.0
  %3299 = vmatpush1.msra.mxu0 0.0
  %3300 = vmatprep.subr.mxu0 0.0
  %3301 = vmatpush1.msra.mxu0 0.0
  %3302 = vmatprep.subr.mxu0 0.0
  %3303 = vmatpush1.msra.mxu0 0.0
  %3304 = vmatprep.subr.mxu0 0.0
  %3305 = vmatpush1.msra.mxu0 0.0
  %3306 = vmatprep.subr.mxu0 0.0
  %3307 = vmatpush1.msra.mxu0 0.0
  %3308 = vmatprep.subr.mxu0 0.0
  %3309 = vmatpush1.msra.mxu0 0.0
  %3310 = vmatprep.subr.mxu0 0.0
  %3311 = vmatpush1.msra.mxu0 0.0
  %3312 = vmatprep.subr.mxu0 0.0
  %3313 = vmatpush1.msra.mxu0 0.0
  %3314 = vmatprep.subr.mxu0 0.0
  %3315 = vmatpush1.msra.mxu0 0.0
  %3316 = vmatprep.subr.mxu0 0.0
  %3317 = vmatpush1.msra.mxu0 0.0
  %3318 = vmatprep.subr.mxu0 0.0
  %3319 = vmatpush1.msra.mxu0 0.0
  %3320 = vmatprep.subr.mxu0 0.0
  %3321 = vmatpush1.msra.mxu0 0.0
  %3322 = vmatprep.subr.mxu0 0.0
  %3323 = vmatpush1.msra.mxu0 0.0
  %3324 = vmatprep.subr.mxu0 0.0
  %3325 = vmatpush1.msra.mxu0 0.0
  %3326 = vmatprep.subr.mxu0 0.0
  %3327 = vmatpush1.msra.mxu0 0.0
  %3328 = vmatprep.subr.mxu0 0.0
  %3329 = vmatpush1.msra.mxu0 0.0
  %3330 = vmatprep.subr.mxu0 0.0
  %3331 = vmatpush1.msra.mxu0 0.0
  %3332 = vmatprep.subr.mxu0 0.0
  %3333 = vmatpush1.msra.mxu0 0.0
  %3334 = vmatprep.subr.mxu0 0.0
  %3335 = vmatpush1.msra.mxu0 0.0
  %3336 = vmatprep.subr.mxu0 0.0
  %3337 = vmatpush1.msra.mxu0 0.0
  %3338 = vmatprep.subr.mxu0 0.0
  %3339 = vmatpush1.msra.mxu0 0.0
  %3340 = vmatprep.subr.mxu0 0.0
  %3341 = vmatpush1.msra.mxu0 0.0
  %3342 = vmatprep.subr.mxu0 0.0
  %3343 = vmatpush1.msra.mxu0 0.0
  %3344 = vmatprep.subr.mxu0 0.0
  %3345 = vmatpush1.msra.mxu0 0.0
  %3346 = vmatprep.subr.mxu0 0.0
  %3347 = vmatpush1.msra.mxu0 0.0
  %3348 = vmatprep.subr.mxu0 0.0
  %3349 = vmatpush1.msra.mxu0 0.0
  %3350 = vmatprep.subr.mxu0 0.0
  %3351 = vmatpush1.msra.mxu0 0.0
  %3352 = vmatprep.subr.mxu0 0.0
  %3353 = vmatpush1.msra.mxu0 0.0
  %3354 = vmatprep.mubr.f32.mxu0 0.0
  %v3355 = vand.u32 %v2825, 4294901760
  %v3356 = vsub.f32 %v2825, %v3355
  %3357 = vmatmul.mubr.f32.gmra.mrb[0].mxu0 %v3356
  %v3358 = vpop.f32.mrb[0].mxu0
  %v3359 = vadd.f32 %v3189, %v3358
  %v3360 = vpop.f32.mrb[0].mxu0
  %3361 = vmatprep.mubr.f32.mxu0 0.0
  %v3362 = vand.u32 %v2828, 4294901760
  %v3363 = vsub.f32 %v2828, %v3362
  %3364 = vmatmul.mubr.f32.gmra.mrb[0].mxu0 %v3363
  %v3365 = vpop.f32.mrb[0].mxu0
  %v3366 = vadd.f32 %v3195, %v3365
  %v3367 = vpop.f32.mrb[0].mxu0
  %3368 = vmatprep.mubr.f32.mxu0 0.0
  %v3369 = vand.u32 %v2831, 4294901760
  %v3370 = vsub.f32 %v2831, %v3369
  %3371 = vmatmul.mubr.f32.gmra.mrb[0].mxu0 %v3370
  %v3372 = vpop.f32.mrb[0].mxu0
  %v3373 = vadd.f32 %v3201, %v3372
  %v3374 = vpop.f32.mrb[0].mxu0
  %3375 = vmatprep.mubr.f32.mxu0 0.0
  %v3376 = vand.u32 %v2834, 4294901760
  %v3377 = vsub.f32 %v2834, %v3376
  %3378 = vmatmul.mubr.f32.gmra.mrb[0].mxu0 %v3377
  %v3379 = vpop.f32.mrb[0].mxu0
  %v3380 = vadd.f32 %v3207, %v3379
  %v3381 = vpop.f32.mrb[0].mxu0
  %3382 = vmatprep.mubr.f32.mxu0 0.0
  %v3383 = vand.u32 %v2837, 4294901760
  %v3384 = vsub.f32 %v2837, %v3383
  %3385 = vmatmul.mubr.f32.gmra.mrb[0].mxu0 %v3384
  %v3386 = vpop.f32.mrb[0].mxu0
  %v3387 = vadd.f32 %v3213, %v3386
  %v3388 = vpop.f32.mrb[0].mxu0
  %3389 = vmatprep.mubr.f32.mxu0 0.0
  %v3390 = vand.u32 %v2840, 4294901760
  %v3391 = vsub.f32 %v2840, %v3390
  %3392 = vmatmul.mubr.f32.gmra.mrb[0].mxu0 %v3391
  %v3393 = vpop.f32.mrb[0].mxu0
  %v3394 = vadd.f32 %v3219, %v3393
  %v3395 = vpop.f32.mrb[0].mxu0
  %3396 = vmatprep.mubr.f32.mxu0 0.0
  %v3397 = vand.u32 %v2843, 4294901760
  %v3398 = vsub.f32 %v2843, %v3397
  %3399 = vmatmul.mubr.f32.gmra.mrb[0].mxu0 %v3398
  %v3400 = vpop.f32.mrb[0].mxu0
  %v3401 = vadd.f32 %v3225, %v3400
  %v3402 = vpop.f32.mrb[0].mxu0
  %3403 = vmatprep.mubr.f32.mxu0 0.0
  %v3404 = vand.u32 %v2846, 4294901760
  %v3405 = vsub.f32 %v2846, %v3404
  %3406 = vmatmul.mubr.f32.gmra.mrb[0].mxu0 %v3405
  %v3407 = vpop.f32.mrb[0].mxu0
  %v3408 = vadd.f32 %v3231, %v3407
  %v3409 = vpop.f32.mrb[0].mxu0
  %3410 = vmatprep.mubr.f32.mxu0 0.0
  %v3411 = vand.u32 %v2849, 4294901760
  %v3412 = vsub.f32 %v2849, %v3411
  %3413 = vmatmul.mubr.f32.gmra.mrb[0].mxu0 %v3412
  %v3414 = vpop.f32.mrb[0].mxu0
  %v3415 = vadd.f32 %v3237, %v3414
  %v3416 = vpop.f32.mrb[0].mxu0
  %3417 = vmatprep.mubr.f32.mxu0 0.0
  %v3418 = vand.u32 %v2852, 4294901760
  %v3419 = vsub.f32 %v2852, %v3418
  %3420 = vmatmul.mubr.f32.gmra.mrb[0].mxu0 %v3419
  %v3421 = vpop.f32.mrb[0].mxu0
  %v3422 = vadd.f32 %v3243, %v3421
  %v3423 = vpop.f32.mrb[0].mxu0
  %3424 = vmatprep.mubr.f32.mxu0 0.0
  %v3425 = vand.u32 %v2855, 4294901760
  %v3426 = vsub.f32 %v2855, %v3425
  %3427 = vmatmul.mubr.f32.gmra.mrb[0].mxu0 %v3426
  %v3428 = vpop.f32.mrb[0].mxu0
  %v3429 = vadd.f32 %v3249, %v3428
  %v3430 = vpop.f32.mrb[0].mxu0
  %3431 = vmatprep.mubr.f32.mxu0 0.0
  %v3432 = vand.u32 %v2858, 4294901760
  %v3433 = vsub.f32 %v2858, %v3432
  %3434 = vmatmul.mubr.f32.gmra.mrb[0].mxu0 %v3433
  %v3435 = vpop.f32.mrb[0].mxu0
  %v3436 = vadd.f32 %v3255, %v3435
  %v3437 = vpop.f32.mrb[0].mxu0
  %3438 = vmatprep.mubr.f32.mxu0 0.0
  %v3439 = vand.u32 %v2861, 4294901760
  %v3440 = vsub.f32 %v2861, %v3439
  %3441 = vmatmul.mubr.f32.gmra.mrb[0].mxu0 %v3440
  %v3442 = vpop.f32.mrb[0].mxu0
  %v3443 = vadd.f32 %v3261, %v3442
  %v3444 = vpop.f32.mrb[0].mxu0
  %3445 = vmatprep.mubr.f32.mxu0 0.0
  %v3446 = vand.u32 %v2864, 4294901760
  %v3447 = vsub.f32 %v2864, %v3446
  %3448 = vmatmul.mubr.f32.gmra.mrb[0].mxu0 %v3447
  %v3449 = vpop.f32.mrb[0].mxu0
  %v3450 = vadd.f32 %v3267, %v3449
  %v3451 = vpop.f32.mrb[0].mxu0
  %3452 = vmatprep.mubr.f32.mxu0 0.0
  %v3453 = vand.u32 %v2867, 4294901760
  %v3454 = vsub.f32 %v2867, %v3453
  %3455 = vmatmul.mubr.f32.gmra.mrb[0].mxu0 %v3454
  %v3456 = vpop.f32.mrb[0].mxu0
  %v3457 = vadd.f32 %v3273, %v3456
  %v3458 = vpop.f32.mrb[0].mxu0
  %3459 = vmatprep.mubr.f32.mxu0 0.0
  %v3460 = vand.u32 %v2870, 4294901760
  %v3461 = vsub.f32 %v2870, %v3460
  %3462 = vmatmul.mubr.f32.gmra.mrb[0].mxu0 %v3461
  %v3463 = vpop.f32.mrb[0].mxu0
  %v3464 = vadd.f32 %v3279, %v3463
  %v3465 = vpop.f32.mrb[0].mxu0
  %3466 = vdwg.mxu0
  %3467 = vmatprep.subr.mxu0 0.0
  %v3468 = vand.u32 %v1399, 4294901760
  %3469 = vmatpush1.msra.mxu0 %v3468
  %3470 = vmatprep.subr.mxu0 0.0
  %v3471 = vand.u32 %v1400, 4294901760
  %3472 = vmatpush1.msra.mxu0 %v3471
  %3473 = vmatprep.subr.mxu0 0.0
  %v3474 = vand.u32 %v1401, 4294901760
  %3475 = vmatpush1.msra.mxu0 %v3474
  %3476 = vmatprep.subr.mxu0 0.0
  %v3477 = vand.u32 %v1402, 4294901760
  %3478 = vmatpush1.msra.mxu0 %v3477
  %3479 = vmatprep.subr.mxu0 0.0
  %3480 = vmatpush1.msra.mxu0 0.0
  %3481 = vmatprep.subr.mxu0 0.0
  %3482 = vmatpush1.msra.mxu0 0.0
  %3483 = vmatprep.subr.mxu0 0.0
  %3484 = vmatpush1.msra.mxu0 0.0
  %3485 = vmatprep.subr.mxu0 0.0
  %3486 = vmatpush1.msra.mxu0 0.0
  %3487 = vmatprep.subr.mxu0 0.0
  %3488 = vmatpush1.msra.mxu0 0.0
  %3489 = vmatprep.subr.mxu0 0.0
  %3490 = vmatpush1.msra.mxu0 0.0
  %3491 = vmatprep.subr.mxu0 0.0
  %3492 = vmatpush1.msra.mxu0 0.0
  %3493 = vmatprep.subr.mxu0 0.0
  %3494 = vmatpush1.msra.mxu0 0.0
  %3495 = vmatprep.subr.mxu0 0.0
  %3496 = vmatpush1.msra.mxu0 0.0
  %3497 = vmatprep.subr.mxu0 0.0
  %3498 = vmatpush1.msra.mxu0 0.0
  %3499 = vmatprep.subr.mxu0 0.0
  %3500 = vmatpush1.msra.mxu0 0.0
  %3501 = vmatprep.subr.mxu0 0.0
  %3502 = vmatpush1.msra.mxu0 0.0
  %3503 = vmatprep.subr.mxu0 0.0
  %3504 = vmatpush1.msra.mxu0 0.0
  %3505 = vmatprep.subr.mxu0 0.0
  %3506 = vmatpush1.msra.mxu0 0.0
  %3507 = vmatprep.subr.mxu0 0.0
  %3508 = vmatpush1.msra.mxu0 0.0
  %3509 = vmatprep.subr.mxu0 0.0
  %3510 = vmatpush1.msra.mxu0 0.0
  %3511 = vmatprep.subr.mxu0 0.0
  %3512 = vmatpush1.msra.mxu0 0.0
  %3513 = vmatprep.subr.mxu0 0.0
  %3514 = vmatpush1.msra.mxu0 0.0
  %3515 = vmatprep.subr.mxu0 0.0
  %3516 = vmatpush1.msra.mxu0 0.0
  %3517 = vmatprep.subr.mxu0 0.0
  %3518 = vmatpush1.msra.mxu0 0.0
  %3519 = vmatprep.subr.mxu0 0.0
  %3520 = vmatpush1.msra.mxu0 0.0
  %3521 = vmatprep.subr.mxu0 0.0
  %3522 = vmatpush1.msra.mxu0 0.0
  %3523 = vmatprep.subr.mxu0 0.0
  %3524 = vmatpush1.msra.mxu0 0.0
  %3525 = vmatprep.subr.mxu0 0.0
  %3526 = vmatpush1.msra.mxu0 0.0
  %3527 = vmatprep.subr.mxu0 0.0
  %3528 = vmatpush1.msra.mxu0 0.0
  %3529 = vmatprep.subr.mxu0 0.0
  %3530 = vmatpush1.msra.mxu0 0.0
  %3531 = vmatprep.subr.mxu0 0.0
  %3532 = vmatpush1.msra.mxu0 0.0
  %3533 = vmatprep.subr.mxu0 0.0
  %3534 = vmatpush1.msra.mxu0 0.0
  %3535 = vmatprep.mubr.f32.mxu0 0.0
  %v3536 = vand.u32 %v2825, 4294901760
  %v3537 = vsub.f32 %v2825, %v3536
  %v3538 = vand.u32 %v3537, 4294901760
  %3539 = vmatmul.mubr.f32.gmra.mrb[0].mxu0 %v3538
  %v3540 = vpop.f32.mrb[0].mxu0
  %v3541 = vadd.f32 %v3359, %v3540
  %v3542 = vpop.f32.mrb[0].mxu0
  %3543 = vmatprep.mubr.f32.mxu0 0.0
  %v3544 = vand.u32 %v2828, 4294901760
  %v3545 = vsub.f32 %v2828, %v3544
  %v3546 = vand.u32 %v3545, 4294901760
  %3547 = vmatmul.mubr.f32.gmra.mrb[0].mxu0 %v3546
  %v3548 = vpop.f32.mrb[0].mxu0
  %v3549 = vadd.f32 %v3366, %v3548
  %v3550 = vpop.f32.mrb[0].mxu0
  %3551 = vmatprep.mubr.f32.mxu0 0.0
  %v3552 = vand.u32 %v2831, 4294901760
  %v3553 = vsub.f32 %v2831, %v3552
  %v3554 = vand.u32 %v3553, 4294901760
  %3555 = vmatmul.mubr.f32.gmra.mrb[0].mxu0 %v3554
  %v3556 = vpop.f32.mrb[0].mxu0
  %v3557 = vadd.f32 %v3373, %v3556
  %v3558 = vpop.f32.mrb[0].mxu0
  %3559 = vmatprep.mubr.f32.mxu0 0.0
  %v3560 = vand.u32 %v2834, 4294901760
  %v3561 = vsub.f32 %v2834, %v3560
  %v3562 = vand.u32 %v3561, 4294901760
  %3563 = vmatmul.mubr.f32.gmra.mrb[0].mxu0 %v3562
  %v3564 = vpop.f32.mrb[0].mxu0
  %v3565 = vadd.f32 %v3380, %v3564
  %v3566 = vpop.f32.mrb[0].mxu0
  %3567 = vmatprep.mubr.f32.mxu0 0.0
  %v3568 = vand.u32 %v2837, 4294901760
  %v3569 = vsub.f32 %v2837, %v3568
  %v3570 = vand.u32 %v3569, 4294901760
  %3571 = vmatmul.mubr.f32.gmra.mrb[0].mxu0 %v3570
  %v3572 = vpop.f32.mrb[0].mxu0
  %v3573 = vadd.f32 %v3387, %v3572
  %v3574 = vpop.f32.mrb[0].mxu0
  %3575 = vmatprep.mubr.f32.mxu0 0.0
  %v3576 = vand.u32 %v2840, 4294901760
  %v3577 = vsub.f32 %v2840, %v3576
  %v3578 = vand.u32 %v3577, 4294901760
  %3579 = vmatmul.mubr.f32.gmra.mrb[0].mxu0 %v3578
  %v3580 = vpop.f32.mrb[0].mxu0
  %v3581 = vadd.f32 %v3394, %v3580
  %v3582 = vpop.f32.mrb[0].mxu0
  %3583 = vmatprep.mubr.f32.mxu0 0.0
  %v3584 = vand.u32 %v2843, 4294901760
  %v3585 = vsub.f32 %v2843, %v3584
  %v3586 = vand.u32 %v3585, 4294901760
  %3587 = vmatmul.mubr.f32.gmra.mrb[0].mxu0 %v3586
  %v3588 = vpop.f32.mrb[0].mxu0
  %v3589 = vadd.f32 %v3401, %v3588
  %v3590 = vpop.f32.mrb[0].mxu0
  %3591 = vmatprep.mubr.f32.mxu0 0.0
  %v3592 = vand.u32 %v2846, 4294901760
  %v3593 = vsub.f32 %v2846, %v3592
  %v3594 = vand.u32 %v3593, 4294901760
  %3595 = vmatmul.mubr.f32.gmra.mrb[0].mxu0 %v3594
  %v3596 = vpop.f32.mrb[0].mxu0
  %v3597 = vadd.f32 %v3408, %v3596
  %v3598 = vpop.f32.mrb[0].mxu0
  %3599 = vmatprep.mubr.f32.mxu0 0.0
  %v3600 = vand.u32 %v2849, 4294901760
  %v3601 = vsub.f32 %v2849, %v3600
  %v3602 = vand.u32 %v3601, 4294901760
  %3603 = vmatmul.mubr.f32.gmra.mrb[0].mxu0 %v3602
  %v3604 = vpop.f32.mrb[0].mxu0
  %v3605 = vadd.f32 %v3415, %v3604
  %v3606 = vpop.f32.mrb[0].mxu0
  %3607 = vmatprep.mubr.f32.mxu0 0.0
  %v3608 = vand.u32 %v2852, 4294901760
  %v3609 = vsub.f32 %v2852, %v3608
  %v3610 = vand.u32 %v3609, 4294901760
  %3611 = vmatmul.mubr.f32.gmra.mrb[0].mxu0 %v3610
  %v3612 = vpop.f32.mrb[0].mxu0
  %v3613 = vadd.f32 %v3422, %v3612
  %v3614 = vpop.f32.mrb[0].mxu0
  %3615 = vmatprep.mubr.f32.mxu0 0.0
  %v3616 = vand.u32 %v2855, 4294901760
  %v3617 = vsub.f32 %v2855, %v3616
  %v3618 = vand.u32 %v3617, 4294901760
  %3619 = vmatmul.mubr.f32.gmra.mrb[0].mxu0 %v3618
  %v3620 = vpop.f32.mrb[0].mxu0
  %v3621 = vadd.f32 %v3429, %v3620
  %v3622 = vpop.f32.mrb[0].mxu0
  %3623 = vmatprep.mubr.f32.mxu0 0.0
  %v3624 = vand.u32 %v2858, 4294901760
  %v3625 = vsub.f32 %v2858, %v3624
  %v3626 = vand.u32 %v3625, 4294901760
  %3627 = vmatmul.mubr.f32.gmra.mrb[0].mxu0 %v3626
  %v3628 = vpop.f32.mrb[0].mxu0
  %v3629 = vadd.f32 %v3436, %v3628
  %v3630 = vpop.f32.mrb[0].mxu0
  %3631 = vmatprep.mubr.f32.mxu0 0.0
  %v3632 = vand.u32 %v2861, 4294901760
  %v3633 = vsub.f32 %v2861, %v3632
  %v3634 = vand.u32 %v3633, 4294901760
  %3635 = vmatmul.mubr.f32.gmra.mrb[0].mxu0 %v3634
  %v3636 = vpop.f32.mrb[0].mxu0
  %v3637 = vadd.f32 %v3443, %v3636
  %v3638 = vpop.f32.mrb[0].mxu0
  %3639 = vmatprep.mubr.f32.mxu0 0.0
  %v3640 = vand.u32 %v2864, 4294901760
  %v3641 = vsub.f32 %v2864, %v3640
  %v3642 = vand.u32 %v3641, 4294901760
  %3643 = vmatmul.mubr.f32.gmra.mrb[0].mxu0 %v3642
  %v3644 = vpop.f32.mrb[0].mxu0
  %v3645 = vadd.f32 %v3450, %v3644
  %v3646 = vpop.f32.mrb[0].mxu0
  %3647 = vmatprep.mubr.f32.mxu0 0.0
  %v3648 = vand.u32 %v2867, 4294901760
  %v3649 = vsub.f32 %v2867, %v3648
  %v3650 = vand.u32 %v3649, 4294901760
  %3651 = vmatmul.mubr.f32.gmra.mrb[0].mxu0 %v3650
  %v3652 = vpop.f32.mrb[0].mxu0
  %v3653 = vadd.f32 %v3457, %v3652
  %v3654 = vpop.f32.mrb[0].mxu0
  %3655 = vmatprep.mubr.f32.mxu0 0.0
  %v3656 = vand.u32 %v2870, 4294901760
  %v3657 = vsub.f32 %v2870, %v3656
  %v3658 = vand.u32 %v3657, 4294901760
  %3659 = vmatmul.mubr.f32.gmra.mrb[0].mxu0 %v3658
  %v3660 = vpop.f32.mrb[0].mxu0
  %v3661 = vadd.f32 %v3464, %v3660
  %v3662 = vpop.f32.mrb[0].mxu0
  %3663 = vdwg.mxu0
  %3664 = vmatprep.subr.mxu0 0.0
  %v3665 = vand.u32 %v1399, 4294901760
  %v3666 = vsub.f32 %v1399, %v3665
  %v3667 = vand.u32 %v3666, 4294901760
  %3668 = vmatpush1.msra.mxu0 %v3667
  %3669 = vmatprep.subr.mxu0 0.0
  %v3670 = vand.u32 %v1400, 4294901760
  %v3671 = vsub.f32 %v1400, %v3670
  %v3672 = vand.u32 %v3671, 4294901760
  %3673 = vmatpush1.msra.mxu0 %v3672
  %3674 = vmatprep.subr.mxu0 0.0
  %v3675 = vand.u32 %v1401, 4294901760
  %v3676 = vsub.f32 %v1401, %v3675
  %v3677 = vand.u32 %v3676, 4294901760
  %3678 = vmatpush1.msra.mxu0 %v3677
  %3679 = vmatprep.subr.mxu0 0.0
  %v3680 = vand.u32 %v1402, 4294901760
  %v3681 = vsub.f32 %v1402, %v3680
  %v3682 = vand.u32 %v3681, 4294901760
  %3683 = vmatpush1.msra.mxu0 %v3682
  %3684 = vmatprep.subr.mxu0 0.0
  %3685 = vmatpush1.msra.mxu0 0.0
  %3686 = vmatprep.subr.mxu0 0.0
  %3687 = vmatpush1.msra.mxu0 0.0
  %3688 = vmatprep.subr.mxu0 0.0
  %3689 = vmatpush1.msra.mxu0 0.0
  %3690 = vmatprep.subr.mxu0 0.0
  %3691 = vmatpush1.msra.mxu0 0.0
  %3692 = vmatprep.subr.mxu0 0.0
  %3693 = vmatpush1.msra.mxu0 0.0
  %3694 = vmatprep.subr.mxu0 0.0
  %3695 = vmatpush1.msra.mxu0 0.0
  %3696 = vmatprep.subr.mxu0 0.0
  %3697 = vmatpush1.msra.mxu0 0.0
  %3698 = vmatprep.subr.mxu0 0.0
  %3699 = vmatpush1.msra.mxu0 0.0
  %3700 = vmatprep.subr.mxu0 0.0
  %3701 = vmatpush1.msra.mxu0 0.0
  %3702 = vmatprep.subr.mxu0 0.0
  %3703 = vmatpush1.msra.mxu0 0.0
  %3704 = vmatprep.subr.mxu0 0.0
  %3705 = vmatpush1.msra.mxu0 0.0
  %3706 = vmatprep.subr.mxu0 0.0
  %3707 = vmatpush1.msra.mxu0 0.0
  %3708 = vmatprep.subr.mxu0 0.0
  %3709 = vmatpush1.msra.mxu0 0.0
  %3710 = vmatprep.subr.mxu0 0.0
  %3711 = vmatpush1.msra.mxu0 0.0
  %3712 = vmatprep.subr.mxu0 0.0
  %3713 = vmatpush1.msra.mxu0 0.0
  %3714 = vmatprep.subr.mxu0 0.0
  %3715 = vmatpush1.msra.mxu0 0.0
  %3716 = vmatprep.subr.mxu0 0.0
  %3717 = vmatpush1.msra.mxu0 0.0
  %3718 = vmatprep.subr.mxu0 0.0
  %3719 = vmatpush1.msra.mxu0 0.0
  %3720 = vmatprep.subr.mxu0 0.0
  %3721 = vmatpush1.msra.mxu0 0.0
  %3722 = vmatprep.subr.mxu0 0.0
  %3723 = vmatpush1.msra.mxu0 0.0
  %3724 = vmatprep.subr.mxu0 0.0
  %3725 = vmatpush1.msra.mxu0 0.0
  %3726 = vmatprep.subr.mxu0 0.0
  %3727 = vmatpush1.msra.mxu0 0.0
  %3728 = vmatprep.subr.mxu0 0.0
  %3729 = vmatpush1.msra.mxu0 0.0
  %3730 = vmatprep.subr.mxu0 0.0
  %3731 = vmatpush1.msra.mxu0 0.0
  %3732 = vmatprep.subr.mxu0 0.0
  %3733 = vmatpush1.msra.mxu0 0.0
  %3734 = vmatprep.subr.mxu0 0.0
  %3735 = vmatpush1.msra.mxu0 0.0
  %3736 = vmatprep.subr.mxu0 0.0
  %3737 = vmatpush1.msra.mxu0 0.0
  %3738 = vmatprep.subr.mxu0 0.0
  %3739 = vmatpush1.msra.mxu0 0.0
  %3740 = vmatprep.mubr.f32.mxu0 0.0
  %v3741 = vand.u32 %v2825, 4294901760
  %3742 = vmatmul.mubr.f32.gmra.mrb[0].mxu0 %v3741
  %v3743 = vpop.f32.mrb[0].mxu0
  %v3744 = vadd.f32 %v3541, %v3743
  %v3745 = vpop.f32.mrb[0].mxu0
  %3746 = vmatprep.mubr.f32.mxu0 0.0
  %v3747 = vand.u32 %v2828, 4294901760
  %3748 = vmatmul.mubr.f32.gmra.mrb[0].mxu0 %v3747
  %v3749 = vpop.f32.mrb[0].mxu0
  %v3750 = vadd.f32 %v3549, %v3749
  %v3751 = vpop.f32.mrb[0].mxu0
  %3752 = vmatprep.mubr.f32.mxu0 0.0
  %v3753 = vand.u32 %v2831, 4294901760
  %3754 = vmatmul.mubr.f32.gmra.mrb[0].mxu0 %v3753
  %v3755 = vpop.f32.mrb[0].mxu0
  %v3756 = vadd.f32 %v3557, %v3755
  %v3757 = vpop.f32.mrb[0].mxu0
  %3758 = vmatprep.mubr.f32.mxu0 0.0
  %v3759 = vand.u32 %v2834, 4294901760
  %3760 = vmatmul.mubr.f32.gmra.mrb[0].mxu0 %v3759
  %v3761 = vpop.f32.mrb[0].mxu0
  %v3762 = vadd.f32 %v3565, %v3761
  %v3763 = vpop.f32.mrb[0].mxu0
  %3764 = vmatprep.mubr.f32.mxu0 0.0
  %v3765 = vand.u32 %v2837, 4294901760
  %3766 = vmatmul.mubr.f32.gmra.mrb[0].mxu0 %v3765
  %v3767 = vpop.f32.mrb[0].mxu0
  %v3768 = vadd.f32 %v3573, %v3767
  %v3769 = vpop.f32.mrb[0].mxu0
  %3770 = vmatprep.mubr.f32.mxu0 0.0
  %v3771 = vand.u32 %v2840, 4294901760
  %3772 = vmatmul.mubr.f32.gmra.mrb[0].mxu0 %v3771
  %v3773 = vpop.f32.mrb[0].mxu0
  %v3774 = vadd.f32 %v3581, %v3773
  %v3775 = vpop.f32.mrb[0].mxu0
  %3776 = vmatprep.mubr.f32.mxu0 0.0
  %v3777 = vand.u32 %v2843, 4294901760
  %3778 = vmatmul.mubr.f32.gmra.mrb[0].mxu0 %v3777
  %v3779 = vpop.f32.mrb[0].mxu0
  %v3780 = vadd.f32 %v3589, %v3779
  %v3781 = vpop.f32.mrb[0].mxu0
  %3782 = vmatprep.mubr.f32.mxu0 0.0
  %v3783 = vand.u32 %v2846, 4294901760
  %3784 = vmatmul.mubr.f32.gmra.mrb[0].mxu0 %v3783
  %v3785 = vpop.f32.mrb[0].mxu0
  %v3786 = vadd.f32 %v3597, %v3785
  %v3787 = vpop.f32.mrb[0].mxu0
  %3788 = vmatprep.mubr.f32.mxu0 0.0
  %v3789 = vand.u32 %v2849, 4294901760
  %3790 = vmatmul.mubr.f32.gmra.mrb[0].mxu0 %v3789
  %v3791 = vpop.f32.mrb[0].mxu0
  %v3792 = vadd.f32 %v3605, %v3791
  %v3793 = vpop.f32.mrb[0].mxu0
  %3794 = vmatprep.mubr.f32.mxu0 0.0
  %v3795 = vand.u32 %v2852, 4294901760
  %3796 = vmatmul.mubr.f32.gmra.mrb[0].mxu0 %v3795
  %v3797 = vpop.f32.mrb[0].mxu0
  %v3798 = vadd.f32 %v3613, %v3797
  %v3799 = vpop.f32.mrb[0].mxu0
  %3800 = vmatprep.mubr.f32.mxu0 0.0
  %v3801 = vand.u32 %v2855, 4294901760
  %3802 = vmatmul.mubr.f32.gmra.mrb[0].mxu0 %v3801
  %v3803 = vpop.f32.mrb[0].mxu0
  %v3804 = vadd.f32 %v3621, %v3803
  %v3805 = vpop.f32.mrb[0].mxu0
  %3806 = vmatprep.mubr.f32.mxu0 0.0
  %v3807 = vand.u32 %v2858, 4294901760
  %3808 = vmatmul.mubr.f32.gmra.mrb[0].mxu0 %v3807
  %v3809 = vpop.f32.mrb[0].mxu0
  %v3810 = vadd.f32 %v3629, %v3809
  %v3811 = vpop.f32.mrb[0].mxu0
  %3812 = vmatprep.mubr.f32.mxu0 0.0
  %v3813 = vand.u32 %v2861, 4294901760
  %3814 = vmatmul.mubr.f32.gmra.mrb[0].mxu0 %v3813
  %v3815 = vpop.f32.mrb[0].mxu0
  %v3816 = vadd.f32 %v3637, %v3815
  %v3817 = vpop.f32.mrb[0].mxu0
  %3818 = vmatprep.mubr.f32.mxu0 0.0
  %v3819 = vand.u32 %v2864, 4294901760
  %3820 = vmatmul.mubr.f32.gmra.mrb[0].mxu0 %v3819
  %v3821 = vpop.f32.mrb[0].mxu0
  %v3822 = vadd.f32 %v3645, %v3821
  %v3823 = vpop.f32.mrb[0].mxu0
  %3824 = vmatprep.mubr.f32.mxu0 0.0
  %v3825 = vand.u32 %v2867, 4294901760
  %3826 = vmatmul.mubr.f32.gmra.mrb[0].mxu0 %v3825
  %v3827 = vpop.f32.mrb[0].mxu0
  %v3828 = vadd.f32 %v3653, %v3827
  %v3829 = vpop.f32.mrb[0].mxu0
  %3830 = vmatprep.mubr.f32.mxu0 0.0
  %v3831 = vand.u32 %v2870, 4294901760
  %3832 = vmatmul.mubr.f32.gmra.mrb[0].mxu0 %v3831
  %v3833 = vpop.f32.mrb[0].mxu0
  %v3834 = vadd.f32 %v3661, %v3833
  %v3835 = vpop.f32.mrb[0].mxu0
  %3836 = vdwg.mxu0
  %3837 = vmatprep.subr.mxu0 0.0
  %v3838 = vand.u32 %v1399, 4294901760
  %3839 = vmatpush1.msra.mxu0 %v3838
  %3840 = vmatprep.subr.mxu0 0.0
  %v3841 = vand.u32 %v1400, 4294901760
  %3842 = vmatpush1.msra.mxu0 %v3841
  %3843 = vmatprep.subr.mxu0 0.0
  %v3844 = vand.u32 %v1401, 4294901760
  %3845 = vmatpush1.msra.mxu0 %v3844
  %3846 = vmatprep.subr.mxu0 0.0
  %v3847 = vand.u32 %v1402, 4294901760
  %3848 = vmatpush1.msra.mxu0 %v3847
  %3849 = vmatprep.subr.mxu0 0.0
  %3850 = vmatpush1.msra.mxu0 0.0
  %3851 = vmatprep.subr.mxu0 0.0
  %3852 = vmatpush1.msra.mxu0 0.0
  %3853 = vmatprep.subr.mxu0 0.0
  %3854 = vmatpush1.msra.mxu0 0.0
  %3855 = vmatprep.subr.mxu0 0.0
  %3856 = vmatpush1.msra.mxu0 0.0
  %3857 = vmatprep.subr.mxu0 0.0
  %3858 = vmatpush1.msra.mxu0 0.0
  %3859 = vmatprep.subr.mxu0 0.0
  %3860 = vmatpush1.msra.mxu0 0.0
  %3861 = vmatprep.subr.mxu0 0.0
  %3862 = vmatpush1.msra.mxu0 0.0
  %3863 = vmatprep.subr.mxu0 0.0
  %3864 = vmatpush1.msra.mxu0 0.0
  %3865 = vmatprep.subr.mxu0 0.0
  %3866 = vmatpush1.msra.mxu0 0.0
  %3867 = vmatprep.subr.mxu0 0.0
  %3868 = vmatpush1.msra.mxu0 0.0
  %3869 = vmatprep.subr.mxu0 0.0
  %3870 = vmatpush1.msra.mxu0 0.0
  %3871 = vmatprep.subr.mxu0 0.0
  %3872 = vmatpush1.msra.mxu0 0.0
  %3873 = vmatprep.subr.mxu0 0.0
  %3874 = vmatpush1.msra.mxu0 0.0
  %3875 = vmatprep.subr.mxu0 0.0
  %3876 = vmatpush1.msra.mxu0 0.0
  %3877 = vmatprep.subr.mxu0 0.0
  %3878 = vmatpush1.msra.mxu0 0.0
  %3879 = vmatprep.subr.mxu0 0.0
  %3880 = vmatpush1.msra.mxu0 0.0
  %3881 = vmatprep.subr.mxu0 0.0
  %3882 = vmatpush1.msra.mxu0 0.0
  %3883 = vmatprep.subr.mxu0 0.0
  %3884 = vmatpush1.msra.mxu0 0.0
  %3885 = vmatprep.subr.mxu0 0.0
  %3886 = vmatpush1.msra.mxu0 0.0
  %3887 = vmatprep.subr.mxu0 0.0
  %3888 = vmatpush1.msra.mxu0 0.0
  %3889 = vmatprep.subr.mxu0 0.0
  %3890 = vmatpush1.msra.mxu0 0.0
  %3891 = vmatprep.subr.mxu0 0.0
  %3892 = vmatpush1.msra.mxu0 0.0
  %3893 = vmatprep.subr.mxu0 0.0
  %3894 = vmatpush1.msra.mxu0 0.0
  %3895 = vmatprep.subr.mxu0 0.0
  %3896 = vmatpush1.msra.mxu0 0.0
  %3897 = vmatprep.subr.mxu0 0.0
  %3898 = vmatpush1.msra.mxu0 0.0
  %3899 = vmatprep.subr.mxu0 0.0
  %3900 = vmatpush1.msra.mxu0 0.0
  %3901 = vmatprep.subr.mxu0 0.0
  %3902 = vmatpush1.msra.mxu0 0.0
  %3903 = vmatprep.subr.mxu0 0.0
  %3904 = vmatpush1.msra.mxu0 0.0
  %3905 = vmatprep.mubr.f32.mxu0 0.0
  %v3906 = vand.u32 %v2825, 4294901760
  %3907 = vmatmul.mubr.f32.gmra.mrb[0].mxu0 %v3906
  %v3908 = vpop.f32.mrb[0].mxu0
  %v3909 = vadd.f32 %v3744, %v3908
  %v3910 = vpop.f32.mrb[0].mxu0
  %3911 = vmatprep.mubr.f32.mxu0 0.0
  %v3912 = vand.u32 %v2828, 4294901760
  %3913 = vmatmul.mubr.f32.gmra.mrb[0].mxu0 %v3912
  %v3914 = vpop.f32.mrb[0].mxu0
  %v3915 = vadd.f32 %v3750, %v3914
  %v3916 = vpop.f32.mrb[0].mxu0
  %3917 = vmatprep.mubr.f32.mxu0 0.0
  %v3918 = vand.u32 %v2831, 4294901760
  %3919 = vmatmul.mubr.f32.gmra.mrb[0].mxu0 %v3918
  %v3920 = vpop.f32.mrb[0].mxu0
  %v3921 = vadd.f32 %v3756, %v3920
  %v3922 = vpop.f32.mrb[0].mxu0
  %3923 = vmatprep.mubr.f32.mxu0 0.0
  %v3924 = vand.u32 %v2834, 4294901760
  %3925 = vmatmul.mubr.f32.gmra.mrb[0].mxu0 %v3924
  %v3926 = vpop.f32.mrb[0].mxu0
  %v3927 = vadd.f32 %v3762, %v3926
  %v3928 = vpop.f32.mrb[0].mxu0
  %3929 = vmatprep.mubr.f32.mxu0 0.0
  %v3930 = vand.u32 %v2837, 4294901760
  %3931 = vmatmul.mubr.f32.gmra.mrb[0].mxu0 %v3930
  %v3932 = vpop.f32.mrb[0].mxu0
  %v3933 = vadd.f32 %v3768, %v3932
  %v3934 = vpop.f32.mrb[0].mxu0
  %3935 = vmatprep.mubr.f32.mxu0 0.0
  %v3936 = vand.u32 %v2840, 4294901760
  %3937 = vmatmul.mubr.f32.gmra.mrb[0].mxu0 %v3936
  %v3938 = vpop.f32.mrb[0].mxu0
  %v3939 = vadd.f32 %v3774, %v3938
  %v3940 = vpop.f32.mrb[0].mxu0
  %3941 = vmatprep.mubr.f32.mxu0 0.0
  %v3942 = vand.u32 %v2843, 4294901760
  %3943 = vmatmul.mubr.f32.gmra.mrb[0].mxu0 %v3942
  %v3944 = vpop.f32.mrb[0].mxu0
  %v3945 = vadd.f32 %v3780, %v3944
  %v3946 = vpop.f32.mrb[0].mxu0
  %3947 = vmatprep.mubr.f32.mxu0 0.0
  %v3948 = vand.u32 %v2846, 4294901760
  %3949 = vmatmul.mubr.f32.gmra.mrb[0].mxu0 %v3948
  %v3950 = vpop.f32.mrb[0].mxu0
  %v3951 = vadd.f32 %v3786, %v3950
  %v3952 = vpop.f32.mrb[0].mxu0
  %3953 = vmatprep.mubr.f32.mxu0 0.0
  %v3954 = vand.u32 %v2849, 4294901760
  %3955 = vmatmul.mubr.f32.gmra.mrb[0].mxu0 %v3954
  %v3956 = vpop.f32.mrb[0].mxu0
  %v3957 = vadd.f32 %v3792, %v3956
  %v3958 = vpop.f32.mrb[0].mxu0
  %3959 = vmatprep.mubr.f32.mxu0 0.0
  %v3960 = vand.u32 %v2852, 4294901760
  %3961 = vmatmul.mubr.f32.gmra.mrb[0].mxu0 %v3960
  %v3962 = vpop.f32.mrb[0].mxu0
  %v3963 = vadd.f32 %v3798, %v3962
  %v3964 = vpop.f32.mrb[0].mxu0
  %3965 = vmatprep.mubr.f32.mxu0 0.0
  %v3966 = vand.u32 %v2855, 4294901760
  %3967 = vmatmul.mubr.f32.gmra.mrb[0].mxu0 %v3966
  %v3968 = vpop.f32.mrb[0].mxu0
  %v3969 = vadd.f32 %v3804, %v3968
  %v3970 = vpop.f32.mrb[0].mxu0
  %3971 = vmatprep.mubr.f32.mxu0 0.0
  %v3972 = vand.u32 %v2858, 4294901760
  %3973 = vmatmul.mubr.f32.gmra.mrb[0].mxu0 %v3972
  %v3974 = vpop.f32.mrb[0].mxu0
  %v3975 = vadd.f32 %v3810, %v3974
  %v3976 = vpop.f32.mrb[0].mxu0
  %3977 = vmatprep.mubr.f32.mxu0 0.0
  %v3978 = vand.u32 %v2861, 4294901760
  %3979 = vmatmul.mubr.f32.gmra.mrb[0].mxu0 %v3978
  %v3980 = vpop.f32.mrb[0].mxu0
  %v3981 = vadd.f32 %v3816, %v3980
  %v3982 = vpop.f32.mrb[0].mxu0
  %3983 = vmatprep.mubr.f32.mxu0 0.0
  %v3984 = vand.u32 %v2864, 4294901760
  %3985 = vmatmul.mubr.f32.gmra.mrb[0].mxu0 %v3984
  %v3986 = vpop.f32.mrb[0].mxu0
  %v3987 = vadd.f32 %v3822, %v3986
  %v3988 = vpop.f32.mrb[0].mxu0
  %3989 = vmatprep.mubr.f32.mxu0 0.0
  %v3990 = vand.u32 %v2867, 4294901760
  %3991 = vmatmul.mubr.f32.gmra.mrb[0].mxu0 %v3990
  %v3992 = vpop.f32.mrb[0].mxu0
  %v3993 = vadd.f32 %v3828, %v3992
  %v3994 = vpop.f32.mrb[0].mxu0
  %3995 = vmatprep.mubr.f32.mxu0 0.0
  %v3996 = vand.u32 %v2870, 4294901760
  %3997 = vmatmul.mubr.f32.gmra.mrb[0].mxu0 %v3996
  %v3998 = vpop.f32.mrb[0].mxu0
  %v3999 = vadd.f32 %v3834, %v3998
  %v4000 = vpop.f32.mrb[0].mxu0
  %4001 = vdwg.mxu0
  %v4003 = vsel %vm1645, %v1273, 0
  %v4006 = vsel %vm1645, %v1279, 0
  %v4009 = vsel %vm1645, %v1285, 0
  %v4012 = vsel %vm1645, %v1291, 0
  %v4015 = vsel %vm1645, %v1297, 0
  %v4018 = vsel %vm1645, %v1303, 0
  %v4021 = vsel %vm1645, %v1309, 0
  %v4024 = vsel %vm1645, %v1315, 0
  %v4027 = vsel %vm1645, %v1321, 0
  %v4030 = vsel %vm1645, %v1327, 0
  %v4033 = vsel %vm1645, %v1333, 0
  %v4036 = vsel %vm1645, %v1339, 0
  %v4039 = vsel %vm1645, %v1345, 0
  %v4042 = vsel %vm1645, %v1351, 0
  %v4045 = vsel %vm1645, %v1357, 0
  %v4048 = vsel %vm1645, %v1363, 0
  %4050 = vmatprep.subr.mxu0 0.0
  %v4051 = vand.u32 %v1407, 4294901760
  %4052 = vmatpush1.msra.mxu0 %v4051
  %4053 = vmatprep.subr.mxu0 0.0
  %v4054 = vand.u32 %v1408, 4294901760
  %4055 = vmatpush1.msra.mxu0 %v4054
  %4056 = vmatprep.subr.mxu0 0.0
  %v4057 = vand.u32 %v1409, 4294901760
  %4058 = vmatpush1.msra.mxu0 %v4057
  %4059 = vmatprep.subr.mxu0 0.0
  %v4060 = vand.u32 %v1410, 4294901760
  %4061 = vmatpush1.msra.mxu0 %v4060
  %4062 = vmatprep.subr.mxu0 0.0
  %4063 = vmatpush1.msra.mxu0 0.0
  %4064 = vmatprep.subr.mxu0 0.0
  %4065 = vmatpush1.msra.mxu0 0.0
  %4066 = vmatprep.subr.mxu0 0.0
  %4067 = vmatpush1.msra.mxu0 0.0
  %4068 = vmatprep.subr.mxu0 0.0
  %4069 = vmatpush1.msra.mxu0 0.0
  %4070 = vmatprep.subr.mxu0 0.0
  %4071 = vmatpush1.msra.mxu0 0.0
  %4072 = vmatprep.subr.mxu0 0.0
  %4073 = vmatpush1.msra.mxu0 0.0
  %4074 = vmatprep.subr.mxu0 0.0
  %4075 = vmatpush1.msra.mxu0 0.0
  %4076 = vmatprep.subr.mxu0 0.0
  %4077 = vmatpush1.msra.mxu0 0.0
  %4078 = vmatprep.subr.mxu0 0.0
  %4079 = vmatpush1.msra.mxu0 0.0
  %4080 = vmatprep.subr.mxu0 0.0
  %4081 = vmatpush1.msra.mxu0 0.0
  %4082 = vmatprep.subr.mxu0 0.0
  %4083 = vmatpush1.msra.mxu0 0.0
  %4084 = vmatprep.subr.mxu0 0.0
  %4085 = vmatpush1.msra.mxu0 0.0
  %4086 = vmatprep.subr.mxu0 0.0
  %4087 = vmatpush1.msra.mxu0 0.0
  %4088 = vmatprep.subr.mxu0 0.0
  %4089 = vmatpush1.msra.mxu0 0.0
  %4090 = vmatprep.subr.mxu0 0.0
  %4091 = vmatpush1.msra.mxu0 0.0
  %4092 = vmatprep.subr.mxu0 0.0
  %4093 = vmatpush1.msra.mxu0 0.0
  %4094 = vmatprep.subr.mxu0 0.0
  %4095 = vmatpush1.msra.mxu0 0.0
  %4096 = vmatprep.subr.mxu0 0.0
  %4097 = vmatpush1.msra.mxu0 0.0
  %4098 = vmatprep.subr.mxu0 0.0
  %4099 = vmatpush1.msra.mxu0 0.0
  %4100 = vmatprep.subr.mxu0 0.0
  %4101 = vmatpush1.msra.mxu0 0.0
  %4102 = vmatprep.subr.mxu0 0.0
  %4103 = vmatpush1.msra.mxu0 0.0
  %4104 = vmatprep.subr.mxu0 0.0
  %4105 = vmatpush1.msra.mxu0 0.0
  %4106 = vmatprep.subr.mxu0 0.0
  %4107 = vmatpush1.msra.mxu0 0.0
  %4108 = vmatprep.subr.mxu0 0.0
  %4109 = vmatpush1.msra.mxu0 0.0
  %4110 = vmatprep.subr.mxu0 0.0
  %4111 = vmatpush1.msra.mxu0 0.0
  %4112 = vmatprep.subr.mxu0 0.0
  %4113 = vmatpush1.msra.mxu0 0.0
  %4114 = vmatprep.subr.mxu0 0.0
  %4115 = vmatpush1.msra.mxu0 0.0
  %4116 = vmatprep.subr.mxu0 0.0
  %4117 = vmatpush1.msra.mxu0 0.0
  %4118 = vmatprep.mubr.f32.mxu0 0.0
  %v4119 = vand.u32 %v4003, 4294901760
  %v4120 = vsub.f32 %v4003, %v4119
  %v4121 = vand.u32 %v4120, 4294901760
  %v4122 = vsub.f32 %v4120, %v4121
  %v4123 = vand.u32 %v4122, 4294901760
  %4124 = vmatmul.mubr.f32.gmra.mrb[0].mxu0 %v4123
  %v4125 = vpop.f32.mrb[0].mxu0
  %v4126 = vadd.f32 0.0, %v4125
  %v4127 = vpop.f32.mrb[0].mxu0
  %4128 = vmatprep.mubr.f32.mxu0 0.0
  %v4129 = vand.u32 %v4006, 4294901760
  %v4130 = vsub.f32 %v4006, %v4129
  %v4131 = vand.u32 %v4130, 4294901760
  %v4132 = vsub.f32 %v4130, %v4131
  %v4133 = vand.u32 %v4132, 4294901760
  %4134 = vmatmul.mubr.f32.gmra.mrb[0].mxu0 %v4133
  %v4135 = vpop.f32.mrb[0].mxu0
  %v4136 = vadd.f32 0.0, %v4135
  %v4137 = vpop.f32.mrb[0].mxu0
  %4138 = vmatprep.mubr.f32.mxu0 0.0
  %v4139 = vand.u32 %v4009, 4294901760
  %v4140 = vsub.f32 %v4009, %v4139
  %v4141 = vand.u32 %v4140, 4294901760
  %v4142 = vsub.f32 %v4140, %v4141
  %v4143 = vand.u32 %v4142, 4294901760
  %4144 = vmatmul.mubr.f32.gmra.mrb[0].mxu0 %v4143
  %v4145 = vpop.f32.mrb[0].mxu0
  %v4146 = vadd.f32 0.0, %v4145
  %v4147 = vpop.f32.mrb[0].mxu0
  %4148 = vmatprep.mubr.f32.mxu0 0.0
  %v4149 = vand.u32 %v4012, 4294901760
  %v4150 = vsub.f32 %v4012, %v4149
  %v4151 = vand.u32 %v4150, 4294901760
  %v4152 = vsub.f32 %v4150, %v4151
  %v4153 = vand.u32 %v4152, 4294901760
  %4154 = vmatmul.mubr.f32.gmra.mrb[0].mxu0 %v4153
  %v4155 = vpop.f32.mrb[0].mxu0
  %v4156 = vadd.f32 0.0, %v4155
  %v4157 = vpop.f32.mrb[0].mxu0
  %4158 = vmatprep.mubr.f32.mxu0 0.0
  %v4159 = vand.u32 %v4015, 4294901760
  %v4160 = vsub.f32 %v4015, %v4159
  %v4161 = vand.u32 %v4160, 4294901760
  %v4162 = vsub.f32 %v4160, %v4161
  %v4163 = vand.u32 %v4162, 4294901760
  %4164 = vmatmul.mubr.f32.gmra.mrb[0].mxu0 %v4163
  %v4165 = vpop.f32.mrb[0].mxu0
  %v4166 = vadd.f32 0.0, %v4165
  %v4167 = vpop.f32.mrb[0].mxu0
  %4168 = vmatprep.mubr.f32.mxu0 0.0
  %v4169 = vand.u32 %v4018, 4294901760
  %v4170 = vsub.f32 %v4018, %v4169
  %v4171 = vand.u32 %v4170, 4294901760
  %v4172 = vsub.f32 %v4170, %v4171
  %v4173 = vand.u32 %v4172, 4294901760
  %4174 = vmatmul.mubr.f32.gmra.mrb[0].mxu0 %v4173
  %v4175 = vpop.f32.mrb[0].mxu0
  %v4176 = vadd.f32 0.0, %v4175
  %v4177 = vpop.f32.mrb[0].mxu0
  %4178 = vmatprep.mubr.f32.mxu0 0.0
  %v4179 = vand.u32 %v4021, 4294901760
  %v4180 = vsub.f32 %v4021, %v4179
  %v4181 = vand.u32 %v4180, 4294901760
  %v4182 = vsub.f32 %v4180, %v4181
  %v4183 = vand.u32 %v4182, 4294901760
  %4184 = vmatmul.mubr.f32.gmra.mrb[0].mxu0 %v4183
  %v4185 = vpop.f32.mrb[0].mxu0
  %v4186 = vadd.f32 0.0, %v4185
  %v4187 = vpop.f32.mrb[0].mxu0
  %4188 = vmatprep.mubr.f32.mxu0 0.0
  %v4189 = vand.u32 %v4024, 4294901760
  %v4190 = vsub.f32 %v4024, %v4189
  %v4191 = vand.u32 %v4190, 4294901760
  %v4192 = vsub.f32 %v4190, %v4191
  %v4193 = vand.u32 %v4192, 4294901760
  %4194 = vmatmul.mubr.f32.gmra.mrb[0].mxu0 %v4193
  %v4195 = vpop.f32.mrb[0].mxu0
  %v4196 = vadd.f32 0.0, %v4195
  %v4197 = vpop.f32.mrb[0].mxu0
  %4198 = vmatprep.mubr.f32.mxu0 0.0
  %v4199 = vand.u32 %v4027, 4294901760
  %v4200 = vsub.f32 %v4027, %v4199
  %v4201 = vand.u32 %v4200, 4294901760
  %v4202 = vsub.f32 %v4200, %v4201
  %v4203 = vand.u32 %v4202, 4294901760
  %4204 = vmatmul.mubr.f32.gmra.mrb[0].mxu0 %v4203
  %v4205 = vpop.f32.mrb[0].mxu0
  %v4206 = vadd.f32 0.0, %v4205
  %v4207 = vpop.f32.mrb[0].mxu0
  %4208 = vmatprep.mubr.f32.mxu0 0.0
  %v4209 = vand.u32 %v4030, 4294901760
  %v4210 = vsub.f32 %v4030, %v4209
  %v4211 = vand.u32 %v4210, 4294901760
  %v4212 = vsub.f32 %v4210, %v4211
  %v4213 = vand.u32 %v4212, 4294901760
  %4214 = vmatmul.mubr.f32.gmra.mrb[0].mxu0 %v4213
  %v4215 = vpop.f32.mrb[0].mxu0
  %v4216 = vadd.f32 0.0, %v4215
  %v4217 = vpop.f32.mrb[0].mxu0
  %4218 = vmatprep.mubr.f32.mxu0 0.0
  %v4219 = vand.u32 %v4033, 4294901760
  %v4220 = vsub.f32 %v4033, %v4219
  %v4221 = vand.u32 %v4220, 4294901760
  %v4222 = vsub.f32 %v4220, %v4221
  %v4223 = vand.u32 %v4222, 4294901760
  %4224 = vmatmul.mubr.f32.gmra.mrb[0].mxu0 %v4223
  %v4225 = vpop.f32.mrb[0].mxu0
  %v4226 = vadd.f32 0.0, %v4225
  %v4227 = vpop.f32.mrb[0].mxu0
  %4228 = vmatprep.mubr.f32.mxu0 0.0
  %v4229 = vand.u32 %v4036, 4294901760
  %v4230 = vsub.f32 %v4036, %v4229
  %v4231 = vand.u32 %v4230, 4294901760
  %v4232 = vsub.f32 %v4230, %v4231
  %v4233 = vand.u32 %v4232, 4294901760
  %4234 = vmatmul.mubr.f32.gmra.mrb[0].mxu0 %v4233
  %v4235 = vpop.f32.mrb[0].mxu0
  %v4236 = vadd.f32 0.0, %v4235
  %v4237 = vpop.f32.mrb[0].mxu0
  %4238 = vmatprep.mubr.f32.mxu0 0.0
  %v4239 = vand.u32 %v4039, 4294901760
  %v4240 = vsub.f32 %v4039, %v4239
  %v4241 = vand.u32 %v4240, 4294901760
  %v4242 = vsub.f32 %v4240, %v4241
  %v4243 = vand.u32 %v4242, 4294901760
  %4244 = vmatmul.mubr.f32.gmra.mrb[0].mxu0 %v4243
  %v4245 = vpop.f32.mrb[0].mxu0
  %v4246 = vadd.f32 0.0, %v4245
  %v4247 = vpop.f32.mrb[0].mxu0
  %4248 = vmatprep.mubr.f32.mxu0 0.0
  %v4249 = vand.u32 %v4042, 4294901760
  %v4250 = vsub.f32 %v4042, %v4249
  %v4251 = vand.u32 %v4250, 4294901760
  %v4252 = vsub.f32 %v4250, %v4251
  %v4253 = vand.u32 %v4252, 4294901760
  %4254 = vmatmul.mubr.f32.gmra.mrb[0].mxu0 %v4253
  %v4255 = vpop.f32.mrb[0].mxu0
  %v4256 = vadd.f32 0.0, %v4255
  %v4257 = vpop.f32.mrb[0].mxu0
  %4258 = vmatprep.mubr.f32.mxu0 0.0
  %v4259 = vand.u32 %v4045, 4294901760
  %v4260 = vsub.f32 %v4045, %v4259
  %v4261 = vand.u32 %v4260, 4294901760
  %v4262 = vsub.f32 %v4260, %v4261
  %v4263 = vand.u32 %v4262, 4294901760
  %4264 = vmatmul.mubr.f32.gmra.mrb[0].mxu0 %v4263
  %v4265 = vpop.f32.mrb[0].mxu0
  %v4266 = vadd.f32 0.0, %v4265
  %v4267 = vpop.f32.mrb[0].mxu0
  %4268 = vmatprep.mubr.f32.mxu0 0.0
  %v4269 = vand.u32 %v4048, 4294901760
  %v4270 = vsub.f32 %v4048, %v4269
  %v4271 = vand.u32 %v4270, 4294901760
  %v4272 = vsub.f32 %v4270, %v4271
  %v4273 = vand.u32 %v4272, 4294901760
  %4274 = vmatmul.mubr.f32.gmra.mrb[0].mxu0 %v4273
  %v4275 = vpop.f32.mrb[0].mxu0
  %v4276 = vadd.f32 0.0, %v4275
  %v4277 = vpop.f32.mrb[0].mxu0
  %4278 = vdwg.mxu0
  %4279 = vmatprep.subr.mxu0 0.0
  %v4280 = vand.u32 %v1407, 4294901760
  %v4281 = vsub.f32 %v1407, %v4280
  %v4282 = vand.u32 %v4281, 4294901760
  %v4283 = vsub.f32 %v4281, %v4282
  %v4284 = vand.u32 %v4283, 4294901760
  %4285 = vmatpush1.msra.mxu0 %v4284
  %4286 = vmatprep.subr.mxu0 0.0
  %v4287 = vand.u32 %v1408, 4294901760
  %v4288 = vsub.f32 %v1408, %v4287
  %v4289 = vand.u32 %v4288, 4294901760
  %v4290 = vsub.f32 %v4288, %v4289
  %v4291 = vand.u32 %v4290, 4294901760
  %4292 = vmatpush1.msra.mxu0 %v4291
  %4293 = vmatprep.subr.mxu0 0.0
  %v4294 = vand.u32 %v1409, 4294901760
  %v4295 = vsub.f32 %v1409, %v4294
  %v4296 = vand.u32 %v4295, 4294901760
  %v4297 = vsub.f32 %v4295, %v4296
  %v4298 = vand.u32 %v4297, 4294901760
  %4299 = vmatpush1.msra.mxu0 %v4298
  %4300 = vmatprep.subr.mxu0 0.0
  %v4301 = vand.u32 %v1410, 4294901760
  %v4302 = vsub.f32 %v1410, %v4301
  %v4303 = vand.u32 %v4302, 4294901760
  %v4304 = vsub.f32 %v4302, %v4303
  %v4305 = vand.u32 %v4304, 4294901760
  %4306 = vmatpush1.msra.mxu0 %v4305
  %4307 = vmatprep.subr.mxu0 0.0
  %4308 = vmatpush1.msra.mxu0 0.0
  %4309 = vmatprep.subr.mxu0 0.0
  %4310 = vmatpush1.msra.mxu0 0.0
  %4311 = vmatprep.subr.mxu0 0.0
  %4312 = vmatpush1.msra.mxu0 0.0
  %4313 = vmatprep.subr.mxu0 0.0
  %4314 = vmatpush1.msra.mxu0 0.0
  %4315 = vmatprep.subr.mxu0 0.0
  %4316 = vmatpush1.msra.mxu0 0.0
  %4317 = vmatprep.subr.mxu0 0.0
  %4318 = vmatpush1.msra.mxu0 0.0
  %4319 = vmatprep.subr.mxu0 0.0
  %4320 = vmatpush1.msra.mxu0 0.0
  %4321 = vmatprep.subr.mxu0 0.0
  %4322 = vmatpush1.msra.mxu0 0.0
  %4323 = vmatprep.subr.mxu0 0.0
  %4324 = vmatpush1.msra.mxu0 0.0
  %4325 = vmatprep.subr.mxu0 0.0
  %4326 = vmatpush1.msra.mxu0 0.0
  %4327 = vmatprep.subr.mxu0 0.0
  %4328 = vmatpush1.msra.mxu0 0.0
  %4329 = vmatprep.subr.mxu0 0.0
  %4330 = vmatpush1.msra.mxu0 0.0
  %4331 = vmatprep.subr.mxu0 0.0
  %4332 = vmatpush1.msra.mxu0 0.0
  %4333 = vmatprep.subr.mxu0 0.0
  %4334 = vmatpush1.msra.mxu0 0.0
  %4335 = vmatprep.subr.mxu0 0.0
  %4336 = vmatpush1.msra.mxu0 0.0
  %4337 = vmatprep.subr.mxu0 0.0
  %4338 = vmatpush1.msra.mxu0 0.0
  %4339 = vmatprep.subr.mxu0 0.0
  %4340 = vmatpush1.msra.mxu0 0.0
  %4341 = vmatprep.subr.mxu0 0.0
  %4342 = vmatpush1.msra.mxu0 0.0
  %4343 = vmatprep.subr.mxu0 0.0
  %4344 = vmatpush1.msra.mxu0 0.0
  %4345 = vmatprep.subr.mxu0 0.0
  %4346 = vmatpush1.msra.mxu0 0.0
  %4347 = vmatprep.subr.mxu0 0.0
  %4348 = vmatpush1.msra.mxu0 0.0
  %4349 = vmatprep.subr.mxu0 0.0
  %4350 = vmatpush1.msra.mxu0 0.0
  %4351 = vmatprep.subr.mxu0 0.0
  %4352 = vmatpush1.msra.mxu0 0.0
  %4353 = vmatprep.subr.mxu0 0.0
  %4354 = vmatpush1.msra.mxu0 0.0
  %4355 = vmatprep.subr.mxu0 0.0
  %4356 = vmatpush1.msra.mxu0 0.0
  %4357 = vmatprep.subr.mxu0 0.0
  %4358 = vmatpush1.msra.mxu0 0.0
  %4359 = vmatprep.subr.mxu0 0.0
  %4360 = vmatpush1.msra.mxu0 0.0
  %4361 = vmatprep.subr.mxu0 0.0
  %4362 = vmatpush1.msra.mxu0 0.0
  %4363 = vmatprep.mubr.f32.mxu0 0.0
  %v4364 = vand.u32 %v4003, 4294901760
  %4365 = vmatmul.mubr.f32.gmra.mrb[0].mxu0 %v4364
  %v4366 = vpop.f32.mrb[0].mxu0
  %v4367 = vadd.f32 %v4126, %v4366
  %v4368 = vpop.f32.mrb[0].mxu0
  %4369 = vmatprep.mubr.f32.mxu0 0.0
  %v4370 = vand.u32 %v4006, 4294901760
  %4371 = vmatmul.mubr.f32.gmra.mrb[0].mxu0 %v4370
  %v4372 = vpop.f32.mrb[0].mxu0
  %v4373 = vadd.f32 %v4136, %v4372
  %v4374 = vpop.f32.mrb[0].mxu0
  %4375 = vmatprep.mubr.f32.mxu0 0.0
  %v4376 = vand.u32 %v4009, 4294901760
  %4377 = vmatmul.mubr.f32.gmra.mrb[0].mxu0 %v4376
  %v4378 = vpop.f32.mrb[0].mxu0
  %v4379 = vadd.f32 %v4146, %v4378
  %v4380 = vpop.f32.mrb[0].mxu0
  %4381 = vmatprep.mubr.f32.mxu0 0.0
  %v4382 = vand.u32 %v4012, 4294901760
  %4383 = vmatmul.mubr.f32.gmra.mrb[0].mxu0 %v4382
  %v4384 = vpop.f32.mrb[0].mxu0
  %v4385 = vadd.f32 %v4156, %v4384
  %v4386 = vpop.f32.mrb[0].mxu0
  %4387 = vmatprep.mubr.f32.mxu0 0.0
  %v4388 = vand.u32 %v4015, 4294901760
  %4389 = vmatmul.mubr.f32.gmra.mrb[0].mxu0 %v4388
  %v4390 = vpop.f32.mrb[0].mxu0
  %v4391 = vadd.f32 %v4166, %v4390
  %v4392 = vpop.f32.mrb[0].mxu0
  %4393 = vmatprep.mubr.f32.mxu0 0.0
  %v4394 = vand.u32 %v4018, 4294901760
  %4395 = vmatmul.mubr.f32.gmra.mrb[0].mxu0 %v4394
  %v4396 = vpop.f32.mrb[0].mxu0
  %v4397 = vadd.f32 %v4176, %v4396
  %v4398 = vpop.f32.mrb[0].mxu0
  %4399 = vmatprep.mubr.f32.mxu0 0.0
  %v4400 = vand.u32 %v4021, 4294901760
  %4401 = vmatmul.mubr.f32.gmra.mrb[0].mxu0 %v4400
  %v4402 = vpop.f32.mrb[0].mxu0
  %v4403 = vadd.f32 %v4186, %v4402
  %v4404 = vpop.f32.mrb[0].mxu0
  %4405 = vmatprep.mubr.f32.mxu0 0.0
  %v4406 = vand.u32 %v4024, 4294901760
  %4407 = vmatmul.mubr.f32.gmra.mrb[0].mxu0 %v4406
  %v4408 = vpop.f32.mrb[0].mxu0
  %v4409 = vadd.f32 %v4196, %v4408
  %v4410 = vpop.f32.mrb[0].mxu0
  %4411 = vmatprep.mubr.f32.mxu0 0.0
  %v4412 = vand.u32 %v4027, 4294901760
  %4413 = vmatmul.mubr.f32.gmra.mrb[0].mxu0 %v4412
  %v4414 = vpop.f32.mrb[0].mxu0
  %v4415 = vadd.f32 %v4206, %v4414
  %v4416 = vpop.f32.mrb[0].mxu0
  %4417 = vmatprep.mubr.f32.mxu0 0.0
  %v4418 = vand.u32 %v4030, 4294901760
  %4419 = vmatmul.mubr.f32.gmra.mrb[0].mxu0 %v4418
  %v4420 = vpop.f32.mrb[0].mxu0
  %v4421 = vadd.f32 %v4216, %v4420
  %v4422 = vpop.f32.mrb[0].mxu0
  %4423 = vmatprep.mubr.f32.mxu0 0.0
  %v4424 = vand.u32 %v4033, 4294901760
  %4425 = vmatmul.mubr.f32.gmra.mrb[0].mxu0 %v4424
  %v4426 = vpop.f32.mrb[0].mxu0
  %v4427 = vadd.f32 %v4226, %v4426
  %v4428 = vpop.f32.mrb[0].mxu0
  %4429 = vmatprep.mubr.f32.mxu0 0.0
  %v4430 = vand.u32 %v4036, 4294901760
  %4431 = vmatmul.mubr.f32.gmra.mrb[0].mxu0 %v4430
  %v4432 = vpop.f32.mrb[0].mxu0
  %v4433 = vadd.f32 %v4236, %v4432
  %v4434 = vpop.f32.mrb[0].mxu0
  %4435 = vmatprep.mubr.f32.mxu0 0.0
  %v4436 = vand.u32 %v4039, 4294901760
  %4437 = vmatmul.mubr.f32.gmra.mrb[0].mxu0 %v4436
  %v4438 = vpop.f32.mrb[0].mxu0
  %v4439 = vadd.f32 %v4246, %v4438
  %v4440 = vpop.f32.mrb[0].mxu0
  %4441 = vmatprep.mubr.f32.mxu0 0.0
  %v4442 = vand.u32 %v4042, 4294901760
  %4443 = vmatmul.mubr.f32.gmra.mrb[0].mxu0 %v4442
  %v4444 = vpop.f32.mrb[0].mxu0
  %v4445 = vadd.f32 %v4256, %v4444
  %v4446 = vpop.f32.mrb[0].mxu0
  %4447 = vmatprep.mubr.f32.mxu0 0.0
  %v4448 = vand.u32 %v4045, 4294901760
  %4449 = vmatmul.mubr.f32.gmra.mrb[0].mxu0 %v4448
  %v4450 = vpop.f32.mrb[0].mxu0
  %v4451 = vadd.f32 %v4266, %v4450
  %v4452 = vpop.f32.mrb[0].mxu0
  %4453 = vmatprep.mubr.f32.mxu0 0.0
  %v4454 = vand.u32 %v4048, 4294901760
  %4455 = vmatmul.mubr.f32.gmra.mrb[0].mxu0 %v4454
  %v4456 = vpop.f32.mrb[0].mxu0
  %v4457 = vadd.f32 %v4276, %v4456
  %v4458 = vpop.f32.mrb[0].mxu0
  %4459 = vdwg.mxu0
  %4460 = vmatprep.subr.mxu0 0.0
  %v4461 = vand.u32 %v1407, 4294901760
  %v4462 = vsub.f32 %v1407, %v4461
  %4463 = vmatpush1.msra.mxu0 %v4462
  %4464 = vmatprep.subr.mxu0 0.0
  %v4465 = vand.u32 %v1408, 4294901760
  %v4466 = vsub.f32 %v1408, %v4465
  %4467 = vmatpush1.msra.mxu0 %v4466
  %4468 = vmatprep.subr.mxu0 0.0
  %v4469 = vand.u32 %v1409, 4294901760
  %v4470 = vsub.f32 %v1409, %v4469
  %4471 = vmatpush1.msra.mxu0 %v4470
  %4472 = vmatprep.subr.mxu0 0.0
  %v4473 = vand.u32 %v1410, 4294901760
  %v4474 = vsub.f32 %v1410, %v4473
  %4475 = vmatpush1.msra.mxu0 %v4474
  %4476 = vmatprep.subr.mxu0 0.0
  %4477 = vmatpush1.msra.mxu0 0.0
  %4478 = vmatprep.subr.mxu0 0.0
  %4479 = vmatpush1.msra.mxu0 0.0
  %4480 = vmatprep.subr.mxu0 0.0
  %4481 = vmatpush1.msra.mxu0 0.0
  %4482 = vmatprep.subr.mxu0 0.0
  %4483 = vmatpush1.msra.mxu0 0.0
  %4484 = vmatprep.subr.mxu0 0.0
  %4485 = vmatpush1.msra.mxu0 0.0
  %4486 = vmatprep.subr.mxu0 0.0
  %4487 = vmatpush1.msra.mxu0 0.0
  %4488 = vmatprep.subr.mxu0 0.0
  %4489 = vmatpush1.msra.mxu0 0.0
  %4490 = vmatprep.subr.mxu0 0.0
  %4491 = vmatpush1.msra.mxu0 0.0
  %4492 = vmatprep.subr.mxu0 0.0
  %4493 = vmatpush1.msra.mxu0 0.0
  %4494 = vmatprep.subr.mxu0 0.0
  %4495 = vmatpush1.msra.mxu0 0.0
  %4496 = vmatprep.subr.mxu0 0.0
  %4497 = vmatpush1.msra.mxu0 0.0
  %4498 = vmatprep.subr.mxu0 0.0
  %4499 = vmatpush1.msra.mxu0 0.0
  %4500 = vmatprep.subr.mxu0 0.0
  %4501 = vmatpush1.msra.mxu0 0.0
  %4502 = vmatprep.subr.mxu0 0.0
  %4503 = vmatpush1.msra.mxu0 0.0
  %4504 = vmatprep.subr.mxu0 0.0
  %4505 = vmatpush1.msra.mxu0 0.0
  %4506 = vmatprep.subr.mxu0 0.0
  %4507 = vmatpush1.msra.mxu0 0.0
  %4508 = vmatprep.subr.mxu0 0.0
  %4509 = vmatpush1.msra.mxu0 0.0
  %4510 = vmatprep.subr.mxu0 0.0
  %4511 = vmatpush1.msra.mxu0 0.0
  %4512 = vmatprep.subr.mxu0 0.0
  %4513 = vmatpush1.msra.mxu0 0.0
  %4514 = vmatprep.subr.mxu0 0.0
  %4515 = vmatpush1.msra.mxu0 0.0
  %4516 = vmatprep.subr.mxu0 0.0
  %4517 = vmatpush1.msra.mxu0 0.0
  %4518 = vmatprep.subr.mxu0 0.0
  %4519 = vmatpush1.msra.mxu0 0.0
  %4520 = vmatprep.subr.mxu0 0.0
  %4521 = vmatpush1.msra.mxu0 0.0
  %4522 = vmatprep.subr.mxu0 0.0
  %4523 = vmatpush1.msra.mxu0 0.0
  %4524 = vmatprep.subr.mxu0 0.0
  %4525 = vmatpush1.msra.mxu0 0.0
  %4526 = vmatprep.subr.mxu0 0.0
  %4527 = vmatpush1.msra.mxu0 0.0
  %4528 = vmatprep.subr.mxu0 0.0
  %4529 = vmatpush1.msra.mxu0 0.0
  %4530 = vmatprep.subr.mxu0 0.0
  %4531 = vmatpush1.msra.mxu0 0.0
  %4532 = vmatprep.mubr.f32.mxu0 0.0
  %v4533 = vand.u32 %v4003, 4294901760
  %v4534 = vsub.f32 %v4003, %v4533
  %4535 = vmatmul.mubr.f32.gmra.mrb[0].mxu0 %v4534
  %v4536 = vpop.f32.mrb[0].mxu0
  %v4537 = vadd.f32 %v4367, %v4536
  %v4538 = vpop.f32.mrb[0].mxu0
  %4539 = vmatprep.mubr.f32.mxu0 0.0
  %v4540 = vand.u32 %v4006, 4294901760
  %v4541 = vsub.f32 %v4006, %v4540
  %4542 = vmatmul.mubr.f32.gmra.mrb[0].mxu0 %v4541
  %v4543 = vpop.f32.mrb[0].mxu0
  %v4544 = vadd.f32 %v4373, %v4543
  %v4545 = vpop.f32.mrb[0].mxu0
  %4546 = vmatprep.mubr.f32.mxu0 0.0
  %v4547 = vand.u32 %v4009, 4294901760
  %v4548 = vsub.f32 %v4009, %v4547
  %4549 = vmatmul.mubr.f32.gmra.mrb[0].mxu0 %v4548
  %v4550 = vpop.f32.mrb[0].mxu0
  %v4551 = vadd.f32 %v4379, %v4550
  %v4552 = vpop.f32.mrb[0].mxu0
  %4553 = vmatprep.mubr.f32.mxu0 0.0
  %v4554 = vand.u32 %v4012, 4294901760
  %v4555 = vsub.f32 %v4012, %v4554
  %4556 = vmatmul.mubr.f32.gmra.mrb[0].mxu0 %v4555
  %v4557 = vpop.f32.mrb[0].mxu0
  %v4558 = vadd.f32 %v4385, %v4557
  %v4559 = vpop.f32.mrb[0].mxu0
  %4560 = vmatprep.mubr.f32.mxu0 0.0
  %v4561 = vand.u32 %v4015, 4294901760
  %v4562 = vsub.f32 %v4015, %v4561
  %4563 = vmatmul.mubr.f32.gmra.mrb[0].mxu0 %v4562
  %v4564 = vpop.f32.mrb[0].mxu0
  %v4565 = vadd.f32 %v4391, %v4564
  %v4566 = vpop.f32.mrb[0].mxu0
  %4567 = vmatprep.mubr.f32.mxu0 0.0
  %v4568 = vand.u32 %v4018, 4294901760
  %v4569 = vsub.f32 %v4018, %v4568
  %4570 = vmatmul.mubr.f32.gmra.mrb[0].mxu0 %v4569
  %v4571 = vpop.f32.mrb[0].mxu0
  %v4572 = vadd.f32 %v4397, %v4571
  %v4573 = vpop.f32.mrb[0].mxu0
  %4574 = vmatprep.mubr.f32.mxu0 0.0
  %v4575 = vand.u32 %v4021, 4294901760
  %v4576 = vsub.f32 %v4021, %v4575
  %4577 = vmatmul.mubr.f32.gmra.mrb[0].mxu0 %v4576
  %v4578 = vpop.f32.mrb[0].mxu0
  %v4579 = vadd.f32 %v4403, %v4578
  %v4580 = vpop.f32.mrb[0].mxu0
  %4581 = vmatprep.mubr.f32.mxu0 0.0
  %v4582 = vand.u32 %v4024, 4294901760
  %v4583 = vsub.f32 %v4024, %v4582
  %4584 = vmatmul.mubr.f32.gmra.mrb[0].mxu0 %v4583
  %v4585 = vpop.f32.mrb[0].mxu0
  %v4586 = vadd.f32 %v4409, %v4585
  %v4587 = vpop.f32.mrb[0].mxu0
  %4588 = vmatprep.mubr.f32.mxu0 0.0
  %v4589 = vand.u32 %v4027, 4294901760
  %v4590 = vsub.f32 %v4027, %v4589
  %4591 = vmatmul.mubr.f32.gmra.mrb[0].mxu0 %v4590
  %v4592 = vpop.f32.mrb[0].mxu0
  %v4593 = vadd.f32 %v4415, %v4592
  %v4594 = vpop.f32.mrb[0].mxu0
  %4595 = vmatprep.mubr.f32.mxu0 0.0
  %v4596 = vand.u32 %v4030, 4294901760
  %v4597 = vsub.f32 %v4030, %v4596
  %4598 = vmatmul.mubr.f32.gmra.mrb[0].mxu0 %v4597
  %v4599 = vpop.f32.mrb[0].mxu0
  %v4600 = vadd.f32 %v4421, %v4599
  %v4601 = vpop.f32.mrb[0].mxu0
  %4602 = vmatprep.mubr.f32.mxu0 0.0
  %v4603 = vand.u32 %v4033, 4294901760
  %v4604 = vsub.f32 %v4033, %v4603
  %4605 = vmatmul.mubr.f32.gmra.mrb[0].mxu0 %v4604
  %v4606 = vpop.f32.mrb[0].mxu0
  %v4607 = vadd.f32 %v4427, %v4606
  %v4608 = vpop.f32.mrb[0].mxu0
  %4609 = vmatprep.mubr.f32.mxu0 0.0
  %v4610 = vand.u32 %v4036, 4294901760
  %v4611 = vsub.f32 %v4036, %v4610
  %4612 = vmatmul.mubr.f32.gmra.mrb[0].mxu0 %v4611
  %v4613 = vpop.f32.mrb[0].mxu0
  %v4614 = vadd.f32 %v4433, %v4613
  %v4615 = vpop.f32.mrb[0].mxu0
  %4616 = vmatprep.mubr.f32.mxu0 0.0
  %v4617 = vand.u32 %v4039, 4294901760
  %v4618 = vsub.f32 %v4039, %v4617
  %4619 = vmatmul.mubr.f32.gmra.mrb[0].mxu0 %v4618
  %v4620 = vpop.f32.mrb[0].mxu0
  %v4621 = vadd.f32 %v4439, %v4620
  %v4622 = vpop.f32.mrb[0].mxu0
  %4623 = vmatprep.mubr.f32.mxu0 0.0
  %v4624 = vand.u32 %v4042, 4294901760
  %v4625 = vsub.f32 %v4042, %v4624
  %4626 = vmatmul.mubr.f32.gmra.mrb[0].mxu0 %v4625
  %v4627 = vpop.f32.mrb[0].mxu0
  %v4628 = vadd.f32 %v4445, %v4627
  %v4629 = vpop.f32.mrb[0].mxu0
  %4630 = vmatprep.mubr.f32.mxu0 0.0
  %v4631 = vand.u32 %v4045, 4294901760
  %v4632 = vsub.f32 %v4045, %v4631
  %4633 = vmatmul.mubr.f32.gmra.mrb[0].mxu0 %v4632
  %v4634 = vpop.f32.mrb[0].mxu0
  %v4635 = vadd.f32 %v4451, %v4634
  %v4636 = vpop.f32.mrb[0].mxu0
  %4637 = vmatprep.mubr.f32.mxu0 0.0
  %v4638 = vand.u32 %v4048, 4294901760
  %v4639 = vsub.f32 %v4048, %v4638
  %4640 = vmatmul.mubr.f32.gmra.mrb[0].mxu0 %v4639
  %v4641 = vpop.f32.mrb[0].mxu0
  %v4642 = vadd.f32 %v4457, %v4641
  %v4643 = vpop.f32.mrb[0].mxu0
  %4644 = vdwg.mxu0
  %4645 = vmatprep.subr.mxu0 0.0
  %v4646 = vand.u32 %v1407, 4294901760
  %4647 = vmatpush1.msra.mxu0 %v4646
  %4648 = vmatprep.subr.mxu0 0.0
  %v4649 = vand.u32 %v1408, 4294901760
  %4650 = vmatpush1.msra.mxu0 %v4649
  %4651 = vmatprep.subr.mxu0 0.0
  %v4652 = vand.u32 %v1409, 4294901760
  %4653 = vmatpush1.msra.mxu0 %v4652
  %4654 = vmatprep.subr.mxu0 0.0
  %v4655 = vand.u32 %v1410, 4294901760
  %4656 = vmatpush1.msra.mxu0 %v4655
  %4657 = vmatprep.subr.mxu0 0.0
  %4658 = vmatpush1.msra.mxu0 0.0
  %4659 = vmatprep.subr.mxu0 0.0
  %4660 = vmatpush1.msra.mxu0 0.0
  %4661 = vmatprep.subr.mxu0 0.0
  %4662 = vmatpush1.msra.mxu0 0.0
  %4663 = vmatprep.subr.mxu0 0.0
  %4664 = vmatpush1.msra.mxu0 0.0
  %4665 = vmatprep.subr.mxu0 0.0
  %4666 = vmatpush1.msra.mxu0 0.0
  %4667 = vmatprep.subr.mxu0 0.0
  %4668 = vmatpush1.msra.mxu0 0.0
  %4669 = vmatprep.subr.mxu0 0.0
  %4670 = vmatpush1.msra.mxu0 0.0
  %4671 = vmatprep.subr.mxu0 0.0
  %4672 = vmatpush1.msra.mxu0 0.0
  %4673 = vmatprep.subr.mxu0 0.0
  %4674 = vmatpush1.msra.mxu0 0.0
  %4675 = vmatprep.subr.mxu0 0.0
  %4676 = vmatpush1.msra.mxu0 0.0
  %4677 = vmatprep.subr.mxu0 0.0
  %4678 = vmatpush1.msra.mxu0 0.0
  %4679 = vmatprep.subr.mxu0 0.0
  %4680 = vmatpush1.msra.mxu0 0.0
  %4681 = vmatprep.subr.mxu0 0.0
  %4682 = vmatpush1.msra.mxu0 0.0
  %4683 = vmatprep.subr.mxu0 0.0
  %4684 = vmatpush1.msra.mxu0 0.0
  %4685 = vmatprep.subr.mxu0 0.0
  %4686 = vmatpush1.msra.mxu0 0.0
  %4687 = vmatprep.subr.mxu0 0.0
  %4688 = vmatpush1.msra.mxu0 0.0
  %4689 = vmatprep.subr.mxu0 0.0
  %4690 = vmatpush1.msra.mxu0 0.0
  %4691 = vmatprep.subr.mxu0 0.0
  %4692 = vmatpush1.msra.mxu0 0.0
  %4693 = vmatprep.subr.mxu0 0.0
  %4694 = vmatpush1.msra.mxu0 0.0
  %4695 = vmatprep.subr.mxu0 0.0
  %4696 = vmatpush1.msra.mxu0 0.0
  %4697 = vmatprep.subr.mxu0 0.0
  %4698 = vmatpush1.msra.mxu0 0.0
  %4699 = vmatprep.subr.mxu0 0.0
  %4700 = vmatpush1.msra.mxu0 0.0
  %4701 = vmatprep.subr.mxu0 0.0
  %4702 = vmatpush1.msra.mxu0 0.0
  %4703 = vmatprep.subr.mxu0 0.0
  %4704 = vmatpush1.msra.mxu0 0.0
  %4705 = vmatprep.subr.mxu0 0.0
  %4706 = vmatpush1.msra.mxu0 0.0
  %4707 = vmatprep.subr.mxu0 0.0
  %4708 = vmatpush1.msra.mxu0 0.0
  %4709 = vmatprep.subr.mxu0 0.0
  %4710 = vmatpush1.msra.mxu0 0.0
  %4711 = vmatprep.subr.mxu0 0.0
  %4712 = vmatpush1.msra.mxu0 0.0
  %4713 = vmatprep.mubr.f32.mxu0 0.0
  %v4714 = vand.u32 %v4003, 4294901760
  %v4715 = vsub.f32 %v4003, %v4714
  %v4716 = vand.u32 %v4715, 4294901760
  %4717 = vmatmul.mubr.f32.gmra.mrb[0].mxu0 %v4716
  %v4718 = vpop.f32.mrb[0].mxu0
  %v4719 = vadd.f32 %v4537, %v4718
  %v4720 = vpop.f32.mrb[0].mxu0
  %4721 = vmatprep.mubr.f32.mxu0 0.0
  %v4722 = vand.u32 %v4006, 4294901760
  %v4723 = vsub.f32 %v4006, %v4722
  %v4724 = vand.u32 %v4723, 4294901760
  %4725 = vmatmul.mubr.f32.gmra.mrb[0].mxu0 %v4724
  %v4726 = vpop.f32.mrb[0].mxu0
  %v4727 = vadd.f32 %v4544, %v4726
  %v4728 = vpop.f32.mrb[0].mxu0
  %4729 = vmatprep.mubr.f32.mxu0 0.0
  %v4730 = vand.u32 %v4009, 4294901760
  %v4731 = vsub.f32 %v4009, %v4730
  %v4732 = vand.u32 %v4731, 4294901760
  %4733 = vmatmul.mubr.f32.gmra.mrb[0].mxu0 %v4732
  %v4734 = vpop.f32.mrb[0].mxu0
  %v4735 = vadd.f32 %v4551, %v4734
  %v4736 = vpop.f32.mrb[0].mxu0
  %4737 = vmatprep.mubr.f32.mxu0 0.0
  %v4738 = vand.u32 %v4012, 4294901760
  %v4739 = vsub.f32 %v4012, %v4738
  %v4740 = vand.u32 %v4739, 4294901760
  %4741 = vmatmul.mubr.f32.gmra.mrb[0].mxu0 %v4740
  %v4742 = vpop.f32.mrb[0].mxu0
  %v4743 = vadd.f32 %v4558, %v4742
  %v4744 = vpop.f32.mrb[0].mxu0
  %4745 = vmatprep.mubr.f32.mxu0 0.0
  %v4746 = vand.u32 %v4015, 4294901760
  %v4747 = vsub.f32 %v4015, %v4746
  %v4748 = vand.u32 %v4747, 4294901760
  %4749 = vmatmul.mubr.f32.gmra.mrb[0].mxu0 %v4748
  %v4750 = vpop.f32.mrb[0].mxu0
  %v4751 = vadd.f32 %v4565, %v4750
  %v4752 = vpop.f32.mrb[0].mxu0
  %4753 = vmatprep.mubr.f32.mxu0 0.0
  %v4754 = vand.u32 %v4018, 4294901760
  %v4755 = vsub.f32 %v4018, %v4754
  %v4756 = vand.u32 %v4755, 4294901760
  %4757 = vmatmul.mubr.f32.gmra.mrb[0].mxu0 %v4756
  %v4758 = vpop.f32.mrb[0].mxu0
  %v4759 = vadd.f32 %v4572, %v4758
  %v4760 = vpop.f32.mrb[0].mxu0
  %4761 = vmatprep.mubr.f32.mxu0 0.0
  %v4762 = vand.u32 %v4021, 4294901760
  %v4763 = vsub.f32 %v4021, %v4762
  %v4764 = vand.u32 %v4763, 4294901760
  %4765 = vmatmul.mubr.f32.gmra.mrb[0].mxu0 %v4764
  %v4766 = vpop.f32.mrb[0].mxu0
  %v4767 = vadd.f32 %v4579, %v4766
  %v4768 = vpop.f32.mrb[0].mxu0
  %4769 = vmatprep.mubr.f32.mxu0 0.0
  %v4770 = vand.u32 %v4024, 4294901760
  %v4771 = vsub.f32 %v4024, %v4770
  %v4772 = vand.u32 %v4771, 4294901760
  %4773 = vmatmul.mubr.f32.gmra.mrb[0].mxu0 %v4772
  %v4774 = vpop.f32.mrb[0].mxu0
  %v4775 = vadd.f32 %v4586, %v4774
  %v4776 = vpop.f32.mrb[0].mxu0
  %4777 = vmatprep.mubr.f32.mxu0 0.0
  %v4778 = vand.u32 %v4027, 4294901760
  %v4779 = vsub.f32 %v4027, %v4778
  %v4780 = vand.u32 %v4779, 4294901760
  %4781 = vmatmul.mubr.f32.gmra.mrb[0].mxu0 %v4780
  %v4782 = vpop.f32.mrb[0].mxu0
  %v4783 = vadd.f32 %v4593, %v4782
  %v4784 = vpop.f32.mrb[0].mxu0
  %4785 = vmatprep.mubr.f32.mxu0 0.0
  %v4786 = vand.u32 %v4030, 4294901760
  %v4787 = vsub.f32 %v4030, %v4786
  %v4788 = vand.u32 %v4787, 4294901760
  %4789 = vmatmul.mubr.f32.gmra.mrb[0].mxu0 %v4788
  %v4790 = vpop.f32.mrb[0].mxu0
  %v4791 = vadd.f32 %v4600, %v4790
  %v4792 = vpop.f32.mrb[0].mxu0
  %4793 = vmatprep.mubr.f32.mxu0 0.0
  %v4794 = vand.u32 %v4033, 4294901760
  %v4795 = vsub.f32 %v4033, %v4794
  %v4796 = vand.u32 %v4795, 4294901760
  %4797 = vmatmul.mubr.f32.gmra.mrb[0].mxu0 %v4796
  %v4798 = vpop.f32.mrb[0].mxu0
  %v4799 = vadd.f32 %v4607, %v4798
  %v4800 = vpop.f32.mrb[0].mxu0
  %4801 = vmatprep.mubr.f32.mxu0 0.0
  %v4802 = vand.u32 %v4036, 4294901760
  %v4803 = vsub.f32 %v4036, %v4802
  %v4804 = vand.u32 %v4803, 4294901760
  %4805 = vmatmul.mubr.f32.gmra.mrb[0].mxu0 %v4804
  %v4806 = vpop.f32.mrb[0].mxu0
  %v4807 = vadd.f32 %v4614, %v4806
  %v4808 = vpop.f32.mrb[0].mxu0
  %4809 = vmatprep.mubr.f32.mxu0 0.0
  %v4810 = vand.u32 %v4039, 4294901760
  %v4811 = vsub.f32 %v4039, %v4810
  %v4812 = vand.u32 %v4811, 4294901760
  %4813 = vmatmul.mubr.f32.gmra.mrb[0].mxu0 %v4812
  %v4814 = vpop.f32.mrb[0].mxu0
  %v4815 = vadd.f32 %v4621, %v4814
  %v4816 = vpop.f32.mrb[0].mxu0
  %4817 = vmatprep.mubr.f32.mxu0 0.0
  %v4818 = vand.u32 %v4042, 4294901760
  %v4819 = vsub.f32 %v4042, %v4818
  %v4820 = vand.u32 %v4819, 4294901760
  %4821 = vmatmul.mubr.f32.gmra.mrb[0].mxu0 %v4820
  %v4822 = vpop.f32.mrb[0].mxu0
  %v4823 = vadd.f32 %v4628, %v4822
  %v4824 = vpop.f32.mrb[0].mxu0
  %4825 = vmatprep.mubr.f32.mxu0 0.0
  %v4826 = vand.u32 %v4045, 4294901760
  %v4827 = vsub.f32 %v4045, %v4826
  %v4828 = vand.u32 %v4827, 4294901760
  %4829 = vmatmul.mubr.f32.gmra.mrb[0].mxu0 %v4828
  %v4830 = vpop.f32.mrb[0].mxu0
  %v4831 = vadd.f32 %v4635, %v4830
  %v4832 = vpop.f32.mrb[0].mxu0
  %4833 = vmatprep.mubr.f32.mxu0 0.0
  %v4834 = vand.u32 %v4048, 4294901760
  %v4835 = vsub.f32 %v4048, %v4834
  %v4836 = vand.u32 %v4835, 4294901760
  %4837 = vmatmul.mubr.f32.gmra.mrb[0].mxu0 %v4836
  %v4838 = vpop.f32.mrb[0].mxu0
  %v4839 = vadd.f32 %v4642, %v4838
  %v4840 = vpop.f32.mrb[0].mxu0
  %4841 = vdwg.mxu0
  %4842 = vmatprep.subr.mxu0 0.0
  %v4843 = vand.u32 %v1407, 4294901760
  %v4844 = vsub.f32 %v1407, %v4843
  %v4845 = vand.u32 %v4844, 4294901760
  %4846 = vmatpush1.msra.mxu0 %v4845
  %4847 = vmatprep.subr.mxu0 0.0
  %v4848 = vand.u32 %v1408, 4294901760
  %v4849 = vsub.f32 %v1408, %v4848
  %v4850 = vand.u32 %v4849, 4294901760
  %4851 = vmatpush1.msra.mxu0 %v4850
  %4852 = vmatprep.subr.mxu0 0.0
  %v4853 = vand.u32 %v1409, 4294901760
  %v4854 = vsub.f32 %v1409, %v4853
  %v4855 = vand.u32 %v4854, 4294901760
  %4856 = vmatpush1.msra.mxu0 %v4855
  %4857 = vmatprep.subr.mxu0 0.0
  %v4858 = vand.u32 %v1410, 4294901760
  %v4859 = vsub.f32 %v1410, %v4858
  %v4860 = vand.u32 %v4859, 4294901760
  %4861 = vmatpush1.msra.mxu0 %v4860
  %4862 = vmatprep.subr.mxu0 0.0
  %4863 = vmatpush1.msra.mxu0 0.0
  %4864 = vmatprep.subr.mxu0 0.0
  %4865 = vmatpush1.msra.mxu0 0.0
  %4866 = vmatprep.subr.mxu0 0.0
  %4867 = vmatpush1.msra.mxu0 0.0
  %4868 = vmatprep.subr.mxu0 0.0
  %4869 = vmatpush1.msra.mxu0 0.0
  %4870 = vmatprep.subr.mxu0 0.0
  %4871 = vmatpush1.msra.mxu0 0.0
  %4872 = vmatprep.subr.mxu0 0.0
  %4873 = vmatpush1.msra.mxu0 0.0
  %4874 = vmatprep.subr.mxu0 0.0
  %4875 = vmatpush1.msra.mxu0 0.0
  %4876 = vmatprep.subr.mxu0 0.0
  %4877 = vmatpush1.msra.mxu0 0.0
  %4878 = vmatprep.subr.mxu0 0.0
  %4879 = vmatpush1.msra.mxu0 0.0
  %4880 = vmatprep.subr.mxu0 0.0
  %4881 = vmatpush1.msra.mxu0 0.0
  %4882 = vmatprep.subr.mxu0 0.0
  %4883 = vmatpush1.msra.mxu0 0.0
  %4884 = vmatprep.subr.mxu0 0.0
  %4885 = vmatpush1.msra.mxu0 0.0
  %4886 = vmatprep.subr.mxu0 0.0
  %4887 = vmatpush1.msra.mxu0 0.0
  %4888 = vmatprep.subr.mxu0 0.0
  %4889 = vmatpush1.msra.mxu0 0.0
  %4890 = vmatprep.subr.mxu0 0.0
  %4891 = vmatpush1.msra.mxu0 0.0
  %4892 = vmatprep.subr.mxu0 0.0
  %4893 = vmatpush1.msra.mxu0 0.0
  %4894 = vmatprep.subr.mxu0 0.0
  %4895 = vmatpush1.msra.mxu0 0.0
  %4896 = vmatprep.subr.mxu0 0.0
  %4897 = vmatpush1.msra.mxu0 0.0
  %4898 = vmatprep.subr.mxu0 0.0
  %4899 = vmatpush1.msra.mxu0 0.0
  %4900 = vmatprep.subr.mxu0 0.0
  %4901 = vmatpush1.msra.mxu0 0.0
  %4902 = vmatprep.subr.mxu0 0.0
  %4903 = vmatpush1.msra.mxu0 0.0
  %4904 = vmatprep.subr.mxu0 0.0
  %4905 = vmatpush1.msra.mxu0 0.0
  %4906 = vmatprep.subr.mxu0 0.0
  %4907 = vmatpush1.msra.mxu0 0.0
  %4908 = vmatprep.subr.mxu0 0.0
  %4909 = vmatpush1.msra.mxu0 0.0
  %4910 = vmatprep.subr.mxu0 0.0
  %4911 = vmatpush1.msra.mxu0 0.0
  %4912 = vmatprep.subr.mxu0 0.0
  %4913 = vmatpush1.msra.mxu0 0.0
  %4914 = vmatprep.subr.mxu0 0.0
  %4915 = vmatpush1.msra.mxu0 0.0
  %4916 = vmatprep.subr.mxu0 0.0
  %4917 = vmatpush1.msra.mxu0 0.0
  %4918 = vmatprep.mubr.f32.mxu0 0.0
  %v4919 = vand.u32 %v4003, 4294901760
  %4920 = vmatmul.mubr.f32.gmra.mrb[0].mxu0 %v4919
  %v4921 = vpop.f32.mrb[0].mxu0
  %v4922 = vadd.f32 %v4719, %v4921
  %v4923 = vpop.f32.mrb[0].mxu0
  %4924 = vmatprep.mubr.f32.mxu0 0.0
  %v4925 = vand.u32 %v4006, 4294901760
  %4926 = vmatmul.mubr.f32.gmra.mrb[0].mxu0 %v4925
  %v4927 = vpop.f32.mrb[0].mxu0
  %v4928 = vadd.f32 %v4727, %v4927
  %v4929 = vpop.f32.mrb[0].mxu0
  %4930 = vmatprep.mubr.f32.mxu0 0.0
  %v4931 = vand.u32 %v4009, 4294901760
  %4932 = vmatmul.mubr.f32.gmra.mrb[0].mxu0 %v4931
  %v4933 = vpop.f32.mrb[0].mxu0
  %v4934 = vadd.f32 %v4735, %v4933
  %v4935 = vpop.f32.mrb[0].mxu0
  %4936 = vmatprep.mubr.f32.mxu0 0.0
  %v4937 = vand.u32 %v4012, 4294901760
  %4938 = vmatmul.mubr.f32.gmra.mrb[0].mxu0 %v4937
  %v4939 = vpop.f32.mrb[0].mxu0
  %v4940 = vadd.f32 %v4743, %v4939
  %v4941 = vpop.f32.mrb[0].mxu0
  %4942 = vmatprep.mubr.f32.mxu0 0.0
  %v4943 = vand.u32 %v4015, 4294901760
  %4944 = vmatmul.mubr.f32.gmra.mrb[0].mxu0 %v4943
  %v4945 = vpop.f32.mrb[0].mxu0
  %v4946 = vadd.f32 %v4751, %v4945
  %v4947 = vpop.f32.mrb[0].mxu0
  %4948 = vmatprep.mubr.f32.mxu0 0.0
  %v4949 = vand.u32 %v4018, 4294901760
  %4950 = vmatmul.mubr.f32.gmra.mrb[0].mxu0 %v4949
  %v4951 = vpop.f32.mrb[0].mxu0
  %v4952 = vadd.f32 %v4759, %v4951
  %v4953 = vpop.f32.mrb[0].mxu0
  %4954 = vmatprep.mubr.f32.mxu0 0.0
  %v4955 = vand.u32 %v4021, 4294901760
  %4956 = vmatmul.mubr.f32.gmra.mrb[0].mxu0 %v4955
  %v4957 = vpop.f32.mrb[0].mxu0
  %v4958 = vadd.f32 %v4767, %v4957
  %v4959 = vpop.f32.mrb[0].mxu0
  %4960 = vmatprep.mubr.f32.mxu0 0.0
  %v4961 = vand.u32 %v4024, 4294901760
  %4962 = vmatmul.mubr.f32.gmra.mrb[0].mxu0 %v4961
  %v4963 = vpop.f32.mrb[0].mxu0
  %v4964 = vadd.f32 %v4775, %v4963
  %v4965 = vpop.f32.mrb[0].mxu0
  %4966 = vmatprep.mubr.f32.mxu0 0.0
  %v4967 = vand.u32 %v4027, 4294901760
  %4968 = vmatmul.mubr.f32.gmra.mrb[0].mxu0 %v4967
  %v4969 = vpop.f32.mrb[0].mxu0
  %v4970 = vadd.f32 %v4783, %v4969
  %v4971 = vpop.f32.mrb[0].mxu0
  %4972 = vmatprep.mubr.f32.mxu0 0.0
  %v4973 = vand.u32 %v4030, 4294901760
  %4974 = vmatmul.mubr.f32.gmra.mrb[0].mxu0 %v4973
  %v4975 = vpop.f32.mrb[0].mxu0
  %v4976 = vadd.f32 %v4791, %v4975
  %v4977 = vpop.f32.mrb[0].mxu0
  %4978 = vmatprep.mubr.f32.mxu0 0.0
  %v4979 = vand.u32 %v4033, 4294901760
  %4980 = vmatmul.mubr.f32.gmra.mrb[0].mxu0 %v4979
  %v4981 = vpop.f32.mrb[0].mxu0
  %v4982 = vadd.f32 %v4799, %v4981
  %v4983 = vpop.f32.mrb[0].mxu0
  %4984 = vmatprep.mubr.f32.mxu0 0.0
  %v4985 = vand.u32 %v4036, 4294901760
  %4986 = vmatmul.mubr.f32.gmra.mrb[0].mxu0 %v4985
  %v4987 = vpop.f32.mrb[0].mxu0
  %v4988 = vadd.f32 %v4807, %v4987
  %v4989 = vpop.f32.mrb[0].mxu0
  %4990 = vmatprep.mubr.f32.mxu0 0.0
  %v4991 = vand.u32 %v4039, 4294901760
  %4992 = vmatmul.mubr.f32.gmra.mrb[0].mxu0 %v4991
  %v4993 = vpop.f32.mrb[0].mxu0
  %v4994 = vadd.f32 %v4815, %v4993
  %v4995 = vpop.f32.mrb[0].mxu0
  %4996 = vmatprep.mubr.f32.mxu0 0.0
  %v4997 = vand.u32 %v4042, 4294901760
  %4998 = vmatmul.mubr.f32.gmra.mrb[0].mxu0 %v4997
  %v4999 = vpop.f32.mrb[0].mxu0
  %v5000 = vadd.f32 %v4823, %v4999
  %v5001 = vpop.f32.mrb[0].mxu0
  %5002 = vmatprep.mubr.f32.mxu0 0.0
  %v5003 = vand.u32 %v4045, 4294901760
  %5004 = vmatmul.mubr.f32.gmra.mrb[0].mxu0 %v5003
  %v5005 = vpop.f32.mrb[0].mxu0
  %v5006 = vadd.f32 %v4831, %v5005
  %v5007 = vpop.f32.mrb[0].mxu0
  %5008 = vmatprep.mubr.f32.mxu0 0.0
  %v5009 = vand.u32 %v4048, 4294901760
  %5010 = vmatmul.mubr.f32.gmra.mrb[0].mxu0 %v5009
  %v5011 = vpop.f32.mrb[0].mxu0
  %v5012 = vadd.f32 %v4839, %v5011
  %v5013 = vpop.f32.mrb[0].mxu0
  %5014 = vdwg.mxu0
  %5015 = vmatprep.subr.mxu0 0.0
  %v5016 = vand.u32 %v1407, 4294901760
  %5017 = vmatpush1.msra.mxu0 %v5016
  %5018 = vmatprep.subr.mxu0 0.0
  %v5019 = vand.u32 %v1408, 4294901760
  %5020 = vmatpush1.msra.mxu0 %v5019
  %5021 = vmatprep.subr.mxu0 0.0
  %v5022 = vand.u32 %v1409, 4294901760
  %5023 = vmatpush1.msra.mxu0 %v5022
  %5024 = vmatprep.subr.mxu0 0.0
  %v5025 = vand.u32 %v1410, 4294901760
  %5026 = vmatpush1.msra.mxu0 %v5025
  %5027 = vmatprep.subr.mxu0 0.0
  %5028 = vmatpush1.msra.mxu0 0.0
  %5029 = vmatprep.subr.mxu0 0.0
  %5030 = vmatpush1.msra.mxu0 0.0
  %5031 = vmatprep.subr.mxu0 0.0
  %5032 = vmatpush1.msra.mxu0 0.0
  %5033 = vmatprep.subr.mxu0 0.0
  %5034 = vmatpush1.msra.mxu0 0.0
  %5035 = vmatprep.subr.mxu0 0.0
  %5036 = vmatpush1.msra.mxu0 0.0
  %5037 = vmatprep.subr.mxu0 0.0
  %5038 = vmatpush1.msra.mxu0 0.0
  %5039 = vmatprep.subr.mxu0 0.0
  %5040 = vmatpush1.msra.mxu0 0.0
  %5041 = vmatprep.subr.mxu0 0.0
  %5042 = vmatpush1.msra.mxu0 0.0
  %5043 = vmatprep.subr.mxu0 0.0
  %5044 = vmatpush1.msra.mxu0 0.0
  %5045 = vmatprep.subr.mxu0 0.0
  %5046 = vmatpush1.msra.mxu0 0.0
  %5047 = vmatprep.subr.mxu0 0.0
  %5048 = vmatpush1.msra.mxu0 0.0
  %5049 = vmatprep.subr.mxu0 0.0
  %5050 = vmatpush1.msra.mxu0 0.0
  %5051 = vmatprep.subr.mxu0 0.0
  %5052 = vmatpush1.msra.mxu0 0.0
  %5053 = vmatprep.subr.mxu0 0.0
  %5054 = vmatpush1.msra.mxu0 0.0
  %5055 = vmatprep.subr.mxu0 0.0
  %5056 = vmatpush1.msra.mxu0 0.0
  %5057 = vmatprep.subr.mxu0 0.0
  %5058 = vmatpush1.msra.mxu0 0.0
  %5059 = vmatprep.subr.mxu0 0.0
  %5060 = vmatpush1.msra.mxu0 0.0
  %5061 = vmatprep.subr.mxu0 0.0
  %5062 = vmatpush1.msra.mxu0 0.0
  %5063 = vmatprep.subr.mxu0 0.0
  %5064 = vmatpush1.msra.mxu0 0.0
  %5065 = vmatprep.subr.mxu0 0.0
  %5066 = vmatpush1.msra.mxu0 0.0
  %5067 = vmatprep.subr.mxu0 0.0
  %5068 = vmatpush1.msra.mxu0 0.0
  %5069 = vmatprep.subr.mxu0 0.0
  %5070 = vmatpush1.msra.mxu0 0.0
  %5071 = vmatprep.subr.mxu0 0.0
  %5072 = vmatpush1.msra.mxu0 0.0
  %5073 = vmatprep.subr.mxu0 0.0
  %5074 = vmatpush1.msra.mxu0 0.0
  %5075 = vmatprep.subr.mxu0 0.0
  %5076 = vmatpush1.msra.mxu0 0.0
  %5077 = vmatprep.subr.mxu0 0.0
  %5078 = vmatpush1.msra.mxu0 0.0
  %5079 = vmatprep.subr.mxu0 0.0
  %5080 = vmatpush1.msra.mxu0 0.0
  %5081 = vmatprep.subr.mxu0 0.0
  %5082 = vmatpush1.msra.mxu0 0.0
  %5083 = vmatprep.mubr.f32.mxu0 0.0
  %v5084 = vand.u32 %v4003, 4294901760
  %5085 = vmatmul.mubr.f32.gmra.mrb[0].mxu0 %v5084
  %v5086 = vpop.f32.mrb[0].mxu0
  %v5087 = vadd.f32 %v4922, %v5086
  %v5088 = vpop.f32.mrb[0].mxu0
  %5089 = vmatprep.mubr.f32.mxu0 0.0
  %v5090 = vand.u32 %v4006, 4294901760
  %5091 = vmatmul.mubr.f32.gmra.mrb[0].mxu0 %v5090
  %v5092 = vpop.f32.mrb[0].mxu0
  %v5093 = vadd.f32 %v4928, %v5092
  %v5094 = vpop.f32.mrb[0].mxu0
  %5095 = vmatprep.mubr.f32.mxu0 0.0
  %v5096 = vand.u32 %v4009, 4294901760
  %5097 = vmatmul.mubr.f32.gmra.mrb[0].mxu0 %v5096
  %v5098 = vpop.f32.mrb[0].mxu0
  %v5099 = vadd.f32 %v4934, %v5098
  %v5100 = vpop.f32.mrb[0].mxu0
  %5101 = vmatprep.mubr.f32.mxu0 0.0
  %v5102 = vand.u32 %v4012, 4294901760
  %5103 = vmatmul.mubr.f32.gmra.mrb[0].mxu0 %v5102
  %v5104 = vpop.f32.mrb[0].mxu0
  %v5105 = vadd.f32 %v4940, %v5104
  %v5106 = vpop.f32.mrb[0].mxu0
  %5107 = vmatprep.mubr.f32.mxu0 0.0
  %v5108 = vand.u32 %v4015, 4294901760
  %5109 = vmatmul.mubr.f32.gmra.mrb[0].mxu0 %v5108
  %v5110 = vpop.f32.mrb[0].mxu0
  %v5111 = vadd.f32 %v4946, %v5110
  %v5112 = vpop.f32.mrb[0].mxu0
  %5113 = vmatprep.mubr.f32.mxu0 0.0
  %v5114 = vand.u32 %v4018, 4294901760
  %5115 = vmatmul.mubr.f32.gmra.mrb[0].mxu0 %v5114
  %v5116 = vpop.f32.mrb[0].mxu0
  %v5117 = vadd.f32 %v4952, %v5116
  %v5118 = vpop.f32.mrb[0].mxu0
  %5119 = vmatprep.mubr.f32.mxu0 0.0
  %v5120 = vand.u32 %v4021, 4294901760
  %5121 = vmatmul.mubr.f32.gmra.mrb[0].mxu0 %v5120
  %v5122 = vpop.f32.mrb[0].mxu0
  %v5123 = vadd.f32 %v4958, %v5122
  %v5124 = vpop.f32.mrb[0].mxu0
  %5125 = vmatprep.mubr.f32.mxu0 0.0
  %v5126 = vand.u32 %v4024, 4294901760
  %5127 = vmatmul.mubr.f32.gmra.mrb[0].mxu0 %v5126
  %v5128 = vpop.f32.mrb[0].mxu0
  %v5129 = vadd.f32 %v4964, %v5128
  %v5130 = vpop.f32.mrb[0].mxu0
  %5131 = vmatprep.mubr.f32.mxu0 0.0
  %v5132 = vand.u32 %v4027, 4294901760
  %5133 = vmatmul.mubr.f32.gmra.mrb[0].mxu0 %v5132
  %v5134 = vpop.f32.mrb[0].mxu0
  %v5135 = vadd.f32 %v4970, %v5134
  %v5136 = vpop.f32.mrb[0].mxu0
  %5137 = vmatprep.mubr.f32.mxu0 0.0
  %v5138 = vand.u32 %v4030, 4294901760
  %5139 = vmatmul.mubr.f32.gmra.mrb[0].mxu0 %v5138
  %v5140 = vpop.f32.mrb[0].mxu0
  %v5141 = vadd.f32 %v4976, %v5140
  %v5142 = vpop.f32.mrb[0].mxu0
  %5143 = vmatprep.mubr.f32.mxu0 0.0
  %v5144 = vand.u32 %v4033, 4294901760
  %5145 = vmatmul.mubr.f32.gmra.mrb[0].mxu0 %v5144
  %v5146 = vpop.f32.mrb[0].mxu0
  %v5147 = vadd.f32 %v4982, %v5146
  %v5148 = vpop.f32.mrb[0].mxu0
  %5149 = vmatprep.mubr.f32.mxu0 0.0
  %v5150 = vand.u32 %v4036, 4294901760
  %5151 = vmatmul.mubr.f32.gmra.mrb[0].mxu0 %v5150
  %v5152 = vpop.f32.mrb[0].mxu0
  %v5153 = vadd.f32 %v4988, %v5152
  %v5154 = vpop.f32.mrb[0].mxu0
  %5155 = vmatprep.mubr.f32.mxu0 0.0
  %v5156 = vand.u32 %v4039, 4294901760
  %5157 = vmatmul.mubr.f32.gmra.mrb[0].mxu0 %v5156
  %v5158 = vpop.f32.mrb[0].mxu0
  %v5159 = vadd.f32 %v4994, %v5158
  %v5160 = vpop.f32.mrb[0].mxu0
  %5161 = vmatprep.mubr.f32.mxu0 0.0
  %v5162 = vand.u32 %v4042, 4294901760
  %5163 = vmatmul.mubr.f32.gmra.mrb[0].mxu0 %v5162
  %v5164 = vpop.f32.mrb[0].mxu0
  %v5165 = vadd.f32 %v5000, %v5164
  %v5166 = vpop.f32.mrb[0].mxu0
  %5167 = vmatprep.mubr.f32.mxu0 0.0
  %v5168 = vand.u32 %v4045, 4294901760
  %5169 = vmatmul.mubr.f32.gmra.mrb[0].mxu0 %v5168
  %v5170 = vpop.f32.mrb[0].mxu0
  %v5171 = vadd.f32 %v5006, %v5170
  %v5172 = vpop.f32.mrb[0].mxu0
  %5173 = vmatprep.mubr.f32.mxu0 0.0
  %v5174 = vand.u32 %v4048, 4294901760
  %5175 = vmatmul.mubr.f32.gmra.mrb[0].mxu0 %v5174
  %v5176 = vpop.f32.mrb[0].mxu0
  %v5177 = vadd.f32 %v5012, %v5176
  %v5178 = vpop.f32.mrb[0].mxu0
  %5179 = vdwg.mxu0
  %v5180 = vadd.f32 %v3909, %v5087
  %v5181 = vadd.f32 %v3915, %v5093
  %v5182 = vadd.f32 %v3921, %v5099
  %v5183 = vadd.f32 %v3927, %v5105
  %v5184 = vadd.f32 %v3933, %v5111
  %v5185 = vadd.f32 %v3939, %v5117
  %v5186 = vadd.f32 %v3945, %v5123
  %v5187 = vadd.f32 %v3951, %v5129
  %v5188 = vadd.f32 %v3957, %v5135
  %v5189 = vadd.f32 %v3963, %v5141
  %v5190 = vadd.f32 %v3969, %v5147
  %v5191 = vadd.f32 %v3975, %v5153
  %v5192 = vadd.f32 %v3981, %v5159
  %v5193 = vadd.f32 %v3987, %v5165
  %v5194 = vadd.f32 %v3993, %v5171
  %v5195 = vadd.f32 %v3999, %v5177
  %v5196 = vrot.slane %v1273, 1
  %v5197 = vrot.slane %v1279, 1
  %v5198 = vrot.slane %v1285, 1
  %v5199 = vrot.slane %v1291, 1
  %v5200 = vrot.slane %v1297, 1
  %v5201 = vrot.slane %v1303, 1
  %v5202 = vrot.slane %v1309, 1
  %v5203 = vrot.slane %v1315, 1
  %v5204 = vrot.slane %v1321, 1
  %v5205 = vrot.slane %v1327, 1
  %v5206 = vrot.slane %v1333, 1
  %v5207 = vrot.slane %v1339, 1
  %v5208 = vrot.slane %v1345, 1
  %v5209 = vrot.slane %v1351, 1
  %v5210 = vrot.slane %v1357, 1
  %v5211 = vrot.slane %v1363, 1
  %vm5212 = vcmp.lt.s32.totalorder %v1367, 7
  %v5213 = vsel %vm5212, %v5210, %v5211
  %v5214 = vsel %vm5212, %v5209, %v5210
  %v5215 = vsel %vm5212, %v5208, %v5209
  %v5216 = vsel %vm5212, %v5207, %v5208
  %v5217 = vsel %vm5212, %v5206, %v5207
  %v5218 = vsel %vm5212, %v5205, %v5206
  %v5219 = vsel %vm5212, %v5204, %v5205
  %v5220 = vsel %vm5212, %v5203, %v5204
  %v5221 = vsel %vm5212, %v5202, %v5203
  %v5222 = vsel %vm5212, %v5201, %v5202
  %v5223 = vsel %vm5212, %v5200, %v5201
  %v5224 = vsel %vm5212, %v5199, %v5200
  %v5225 = vsel %vm5212, %v5198, %v5199
  %v5226 = vsel %vm5212, %v5197, %v5198
  %v5227 = vsel %vm5212, %v5196, %v5197
  %v5228 = vsel %vm5212, %v5211, %v5196
  %v5229 = vadd.s32 %v1383, 1
  %v5230 = vadd.s32 %v1384, 1
  %v5231 = vadd.s32 %v1385, 1
  %v5232 = vadd.s32 %v1386, 1
  %v5233 = vadd.s32 %v1387, 1
  %v5234 = vadd.s32 %v1388, 1
  %v5235 = vadd.s32 %v1389, 1
  %v5236 = vadd.s32 %v1390, 1
  %v5237 = vadd.s32 %v1391, 1
  %v5238 = vadd.s32 %v1392, 1
  %v5239 = vadd.s32 %v1393, 1
  %v5240 = vadd.s32 %v1394, 1
  %v5241 = vadd.s32 %v1395, 1
  %v5242 = vadd.s32 %v1396, 1
  %v5243 = vadd.s32 %v1397, 1
  %v5244 = vadd.s32 %v1398, 1
  %vm5245 = vcmp.ge.s32.totalorder %v5229, 0
  %vm5246 = vcmp.ge.s32.totalorder %v5230, 0
  %vm5247 = vcmp.ge.s32.totalorder %v5231, 0
  %vm5248 = vcmp.ge.s32.totalorder %v5232, 0
  %vm5249 = vcmp.ge.s32.totalorder %v5233, 0
  %vm5250 = vcmp.ge.s32.totalorder %v5234, 0
  %vm5251 = vcmp.ge.s32.totalorder %v5235, 0
  %vm5252 = vcmp.ge.s32.totalorder %v5236, 0
  %vm5253 = vcmp.ge.s32.totalorder %v5237, 0
  %vm5254 = vcmp.ge.s32.totalorder %v5238, 0
  %vm5255 = vcmp.ge.s32.totalorder %v5239, 0
  %vm5256 = vcmp.ge.s32.totalorder %v5240, 0
  %vm5257 = vcmp.ge.s32.totalorder %v5241, 0
  %vm5258 = vcmp.ge.s32.totalorder %v5242, 0
  %vm5259 = vcmp.ge.s32.totalorder %v5243, 0
  %vm5260 = vcmp.ge.s32.totalorder %v5244, 0
  %vm5261 = vcmp.lt.s32.totalorder %v5229, 16
  %vm5262 = vcmp.lt.s32.totalorder %v5230, 16
  %vm5263 = vcmp.lt.s32.totalorder %v5231, 16
  %vm5264 = vcmp.lt.s32.totalorder %v5232, 16
  %vm5265 = vcmp.lt.s32.totalorder %v5233, 16
  %vm5266 = vcmp.lt.s32.totalorder %v5234, 16
  %vm5267 = vcmp.lt.s32.totalorder %v5235, 16
  %vm5268 = vcmp.lt.s32.totalorder %v5236, 16
  %vm5269 = vcmp.lt.s32.totalorder %v5237, 16
  %vm5270 = vcmp.lt.s32.totalorder %v5238, 16
  %vm5271 = vcmp.lt.s32.totalorder %v5239, 16
  %vm5272 = vcmp.lt.s32.totalorder %v5240, 16
  %vm5273 = vcmp.lt.s32.totalorder %v5241, 16
  %vm5274 = vcmp.lt.s32.totalorder %v5242, 16
  %vm5275 = vcmp.lt.s32.totalorder %v5243, 16
  %vm5276 = vcmp.lt.s32.totalorder %v5244, 16
  %vm5277 = vmand %vm5245, %vm5261
  %vm5278 = vmand %vm5246, %vm5262
  %vm5279 = vmand %vm5247, %vm5263
  %vm5280 = vmand %vm5248, %vm5264
  %vm5281 = vmand %vm5249, %vm5265
  %vm5282 = vmand %vm5250, %vm5266
  %vm5283 = vmand %vm5251, %vm5267
  %vm5284 = vmand %vm5252, %vm5268
  %vm5285 = vmand %vm5253, %vm5269
  %vm5286 = vmand %vm5254, %vm5270
  %vm5287 = vmand %vm5255, %vm5271
  %vm5288 = vmand %vm5256, %vm5272
  %vm5289 = vmand %vm5257, %vm5273
  %vm5290 = vmand %vm5258, %vm5274
  %vm5291 = vmand %vm5259, %vm5275
  %vm5292 = vmand %vm5260, %vm5276
  %v5293 = vsel %vm5277, %v5227, 0.0
  %v5294 = vsel %vm5278, %v5226, 0.0
  %v5295 = vsel %vm5279, %v5225, 0.0
  %v5296 = vsel %vm5280, %v5224, 0.0
  %v5297 = vsel %vm5281, %v5223, 0.0
  %v5298 = vsel %vm5282, %v5222, 0.0
  %v5299 = vsel %vm5283, %v5221, 0.0
  %v5300 = vsel %vm5284, %v5220, 0.0
  %v5301 = vsel %vm5285, %v5219, 0.0
  %v5302 = vsel %vm5286, %v5218, 0.0
  %v5303 = vsel %vm5287, %v5217, 0.0
  %v5304 = vsel %vm5288, %v5216, 0.0
  %v5305 = vsel %vm5289, %v5215, 0.0
  %v5306 = vsel %vm5290, %v5214, 0.0
  %v5307 = vsel %vm5291, %v5213, 0.0
  %v5308 = vsel %vm5292, %v5228, 0.0
  %v5310 = vsel %vm1645, %v5293, 0
  %v5313 = vsel %vm1645, %v5294, 0
  %v5316 = vsel %vm1645, %v5295, 0
  %v5319 = vsel %vm1645, %v5296, 0
  %v5322 = vsel %vm1645, %v5297, 0
  %v5325 = vsel %vm1645, %v5298, 0
  %v5328 = vsel %vm1645, %v5299, 0
  %v5331 = vsel %vm1645, %v5300, 0
  %v5334 = vsel %vm1645, %v5301, 0
  %v5337 = vsel %vm1645, %v5302, 0
  %v5340 = vsel %vm1645, %v5303, 0
  %v5343 = vsel %vm1645, %v5304, 0
  %v5346 = vsel %vm1645, %v5305, 0
  %v5349 = vsel %vm1645, %v5306, 0
  %v5352 = vsel %vm1645, %v5307, 0
  %v5355 = vsel %vm1645, %v5308, 0
  %5357 = vmatprep.subr.mxu0 0.0
  %v5358 = vand.u32 %v1411, 4294901760
  %5359 = vmatpush1.msra.mxu0 %v5358
  %5360 = vmatprep.subr.mxu0 0.0
  %v5361 = vand.u32 %v1412, 4294901760
  %5362 = vmatpush1.msra.mxu0 %v5361
  %5363 = vmatprep.subr.mxu0 0.0
  %v5364 = vand.u32 %v1413, 4294901760
  %5365 = vmatpush1.msra.mxu0 %v5364
  %5366 = vmatprep.subr.mxu0 0.0
  %v5367 = vand.u32 %v1414, 4294901760
  %5368 = vmatpush1.msra.mxu0 %v5367
  %5369 = vmatprep.subr.mxu0 0.0
  %5370 = vmatpush1.msra.mxu0 0.0
  %5371 = vmatprep.subr.mxu0 0.0
  %5372 = vmatpush1.msra.mxu0 0.0
  %5373 = vmatprep.subr.mxu0 0.0
  %5374 = vmatpush1.msra.mxu0 0.0
  %5375 = vmatprep.subr.mxu0 0.0
  %5376 = vmatpush1.msra.mxu0 0.0
  %5377 = vmatprep.subr.mxu0 0.0
  %5378 = vmatpush1.msra.mxu0 0.0
  %5379 = vmatprep.subr.mxu0 0.0
  %5380 = vmatpush1.msra.mxu0 0.0
  %5381 = vmatprep.subr.mxu0 0.0
  %5382 = vmatpush1.msra.mxu0 0.0
  %5383 = vmatprep.subr.mxu0 0.0
  %5384 = vmatpush1.msra.mxu0 0.0
  %5385 = vmatprep.subr.mxu0 0.0
  %5386 = vmatpush1.msra.mxu0 0.0
  %5387 = vmatprep.subr.mxu0 0.0
  %5388 = vmatpush1.msra.mxu0 0.0
  %5389 = vmatprep.subr.mxu0 0.0
  %5390 = vmatpush1.msra.mxu0 0.0
  %5391 = vmatprep.subr.mxu0 0.0
  %5392 = vmatpush1.msra.mxu0 0.0
  %5393 = vmatprep.subr.mxu0 0.0
  %5394 = vmatpush1.msra.mxu0 0.0
  %5395 = vmatprep.subr.mxu0 0.0
  %5396 = vmatpush1.msra.mxu0 0.0
  %5397 = vmatprep.subr.mxu0 0.0
  %5398 = vmatpush1.msra.mxu0 0.0
  %5399 = vmatprep.subr.mxu0 0.0
  %5400 = vmatpush1.msra.mxu0 0.0
  %5401 = vmatprep.subr.mxu0 0.0
  %5402 = vmatpush1.msra.mxu0 0.0
  %5403 = vmatprep.subr.mxu0 0.0
  %5404 = vmatpush1.msra.mxu0 0.0
  %5405 = vmatprep.subr.mxu0 0.0
  %5406 = vmatpush1.msra.mxu0 0.0
  %5407 = vmatprep.subr.mxu0 0.0
  %5408 = vmatpush1.msra.mxu0 0.0
  %5409 = vmatprep.subr.mxu0 0.0
  %5410 = vmatpush1.msra.mxu0 0.0
  %5411 = vmatprep.subr.mxu0 0.0
  %5412 = vmatpush1.msra.mxu0 0.0
  %5413 = vmatprep.subr.mxu0 0.0
  %5414 = vmatpush1.msra.mxu0 0.0
  %5415 = vmatprep.subr.mxu0 0.0
  %5416 = vmatpush1.msra.mxu0 0.0
  %5417 = vmatprep.subr.mxu0 0.0
  %5418 = vmatpush1.msra.mxu0 0.0
  %5419 = vmatprep.subr.mxu0 0.0
  %5420 = vmatpush1.msra.mxu0 0.0
  %5421 = vmatprep.subr.mxu0 0.0
  %5422 = vmatpush1.msra.mxu0 0.0
  %5423 = vmatprep.subr.mxu0 0.0
  %5424 = vmatpush1.msra.mxu0 0.0
  %5425 = vmatprep.mubr.f32.mxu0 0.0
  %v5426 = vand.u32 %v5310, 4294901760
  %v5427 = vsub.f32 %v5310, %v5426
  %v5428 = vand.u32 %v5427, 4294901760
  %v5429 = vsub.f32 %v5427, %v5428
  %v5430 = vand.u32 %v5429, 4294901760
  %5431 = vmatmul.mubr.f32.gmra.mrb[0].mxu0 %v5430
  %v5432 = vpop.f32.mrb[0].mxu0
  %v5433 = vadd.f32 0.0, %v5432
  %v5434 = vpop.f32.mrb[0].mxu0
  %5435 = vmatprep.mubr.f32.mxu0 0.0
  %v5436 = vand.u32 %v5313, 4294901760
  %v5437 = vsub.f32 %v5313, %v5436
  %v5438 = vand.u32 %v5437, 4294901760
  %v5439 = vsub.f32 %v5437, %v5438
  %v5440 = vand.u32 %v5439, 4294901760
  %5441 = vmatmul.mubr.f32.gmra.mrb[0].mxu0 %v5440
  %v5442 = vpop.f32.mrb[0].mxu0
  %v5443 = vadd.f32 0.0, %v5442
  %v5444 = vpop.f32.mrb[0].mxu0
  %5445 = vmatprep.mubr.f32.mxu0 0.0
  %v5446 = vand.u32 %v5316, 4294901760
  %v5447 = vsub.f32 %v5316, %v5446
  %v5448 = vand.u32 %v5447, 4294901760
  %v5449 = vsub.f32 %v5447, %v5448
  %v5450 = vand.u32 %v5449, 4294901760
  %5451 = vmatmul.mubr.f32.gmra.mrb[0].mxu0 %v5450
  %v5452 = vpop.f32.mrb[0].mxu0
  %v5453 = vadd.f32 0.0, %v5452
  %v5454 = vpop.f32.mrb[0].mxu0
  %5455 = vmatprep.mubr.f32.mxu0 0.0
  %v5456 = vand.u32 %v5319, 4294901760
  %v5457 = vsub.f32 %v5319, %v5456
  %v5458 = vand.u32 %v5457, 4294901760
  %v5459 = vsub.f32 %v5457, %v5458
  %v5460 = vand.u32 %v5459, 4294901760
  %5461 = vmatmul.mubr.f32.gmra.mrb[0].mxu0 %v5460
  %v5462 = vpop.f32.mrb[0].mxu0
  %v5463 = vadd.f32 0.0, %v5462
  %v5464 = vpop.f32.mrb[0].mxu0
  %5465 = vmatprep.mubr.f32.mxu0 0.0
  %v5466 = vand.u32 %v5322, 4294901760
  %v5467 = vsub.f32 %v5322, %v5466
  %v5468 = vand.u32 %v5467, 4294901760
  %v5469 = vsub.f32 %v5467, %v5468
  %v5470 = vand.u32 %v5469, 4294901760
  %5471 = vmatmul.mubr.f32.gmra.mrb[0].mxu0 %v5470
  %v5472 = vpop.f32.mrb[0].mxu0
  %v5473 = vadd.f32 0.0, %v5472
  %v5474 = vpop.f32.mrb[0].mxu0
  %5475 = vmatprep.mubr.f32.mxu0 0.0
  %v5476 = vand.u32 %v5325, 4294901760
  %v5477 = vsub.f32 %v5325, %v5476
  %v5478 = vand.u32 %v5477, 4294901760
  %v5479 = vsub.f32 %v5477, %v5478
  %v5480 = vand.u32 %v5479, 4294901760
  %5481 = vmatmul.mubr.f32.gmra.mrb[0].mxu0 %v5480
  %v5482 = vpop.f32.mrb[0].mxu0
  %v5483 = vadd.f32 0.0, %v5482
  %v5484 = vpop.f32.mrb[0].mxu0
  %5485 = vmatprep.mubr.f32.mxu0 0.0
  %v5486 = vand.u32 %v5328, 4294901760
  %v5487 = vsub.f32 %v5328, %v5486
  %v5488 = vand.u32 %v5487, 4294901760
  %v5489 = vsub.f32 %v5487, %v5488
  %v5490 = vand.u32 %v5489, 4294901760
  %5491 = vmatmul.mubr.f32.gmra.mrb[0].mxu0 %v5490
  %v5492 = vpop.f32.mrb[0].mxu0
  %v5493 = vadd.f32 0.0, %v5492
  %v5494 = vpop.f32.mrb[0].mxu0
  %5495 = vmatprep.mubr.f32.mxu0 0.0
  %v5496 = vand.u32 %v5331, 4294901760
  %v5497 = vsub.f32 %v5331, %v5496
  %v5498 = vand.u32 %v5497, 4294901760
  %v5499 = vsub.f32 %v5497, %v5498
  %v5500 = vand.u32 %v5499, 4294901760
  %5501 = vmatmul.mubr.f32.gmra.mrb[0].mxu0 %v5500
  %v5502 = vpop.f32.mrb[0].mxu0
  %v5503 = vadd.f32 0.0, %v5502
  %v5504 = vpop.f32.mrb[0].mxu0
  %5505 = vmatprep.mubr.f32.mxu0 0.0
  %v5506 = vand.u32 %v5334, 4294901760
  %v5507 = vsub.f32 %v5334, %v5506
  %v5508 = vand.u32 %v5507, 4294901760
  %v5509 = vsub.f32 %v5507, %v5508
  %v5510 = vand.u32 %v5509, 4294901760
  %5511 = vmatmul.mubr.f32.gmra.mrb[0].mxu0 %v5510
  %v5512 = vpop.f32.mrb[0].mxu0
  %v5513 = vadd.f32 0.0, %v5512
  %v5514 = vpop.f32.mrb[0].mxu0
  %5515 = vmatprep.mubr.f32.mxu0 0.0
  %v5516 = vand.u32 %v5337, 4294901760
  %v5517 = vsub.f32 %v5337, %v5516
  %v5518 = vand.u32 %v5517, 4294901760
  %v5519 = vsub.f32 %v5517, %v5518
  %v5520 = vand.u32 %v5519, 4294901760
  %5521 = vmatmul.mubr.f32.gmra.mrb[0].mxu0 %v5520
  %v5522 = vpop.f32.mrb[0].mxu0
  %v5523 = vadd.f32 0.0, %v5522
  %v5524 = vpop.f32.mrb[0].mxu0
  %5525 = vmatprep.mubr.f32.mxu0 0.0
  %v5526 = vand.u32 %v5340, 4294901760
  %v5527 = vsub.f32 %v5340, %v5526
  %v5528 = vand.u32 %v5527, 4294901760
  %v5529 = vsub.f32 %v5527, %v5528
  %v5530 = vand.u32 %v5529, 4294901760
  %5531 = vmatmul.mubr.f32.gmra.mrb[0].mxu0 %v5530
  %v5532 = vpop.f32.mrb[0].mxu0
  %v5533 = vadd.f32 0.0, %v5532
  %v5534 = vpop.f32.mrb[0].mxu0
  %5535 = vmatprep.mubr.f32.mxu0 0.0
  %v5536 = vand.u32 %v5343, 4294901760
  %v5537 = vsub.f32 %v5343, %v5536
  %v5538 = vand.u32 %v5537, 4294901760
  %v5539 = vsub.f32 %v5537, %v5538
  %v5540 = vand.u32 %v5539, 4294901760
  %5541 = vmatmul.mubr.f32.gmra.mrb[0].mxu0 %v5540
  %v5542 = vpop.f32.mrb[0].mxu0
  %v5543 = vadd.f32 0.0, %v5542
  %v5544 = vpop.f32.mrb[0].mxu0
  %5545 = vmatprep.mubr.f32.mxu0 0.0
  %v5546 = vand.u32 %v5346, 4294901760
  %v5547 = vsub.f32 %v5346, %v5546
  %v5548 = vand.u32 %v5547, 4294901760
  %v5549 = vsub.f32 %v5547, %v5548
  %v5550 = vand.u32 %v5549, 4294901760
  %5551 = vmatmul.mubr.f32.gmra.mrb[0].mxu0 %v5550
  %v5552 = vpop.f32.mrb[0].mxu0
  %v5553 = vadd.f32 0.0, %v5552
  %v5554 = vpop.f32.mrb[0].mxu0
  %5555 = vmatprep.mubr.f32.mxu0 0.0
  %v5556 = vand.u32 %v5349, 4294901760
  %v5557 = vsub.f32 %v5349, %v5556
  %v5558 = vand.u32 %v5557, 4294901760
  %v5559 = vsub.f32 %v5557, %v5558
  %v5560 = vand.u32 %v5559, 4294901760
  %5561 = vmatmul.mubr.f32.gmra.mrb[0].mxu0 %v5560
  %v5562 = vpop.f32.mrb[0].mxu0
  %v5563 = vadd.f32 0.0, %v5562
  %v5564 = vpop.f32.mrb[0].mxu0
  %5565 = vmatprep.mubr.f32.mxu0 0.0
  %v5566 = vand.u32 %v5352, 4294901760
  %v5567 = vsub.f32 %v5352, %v5566
  %v5568 = vand.u32 %v5567, 4294901760
  %v5569 = vsub.f32 %v5567, %v5568
  %v5570 = vand.u32 %v5569, 4294901760
  %5571 = vmatmul.mubr.f32.gmra.mrb[0].mxu0 %v5570
  %v5572 = vpop.f32.mrb[0].mxu0
  %v5573 = vadd.f32 0.0, %v5572
  %v5574 = vpop.f32.mrb[0].mxu0
  %5575 = vmatprep.mubr.f32.mxu0 0.0
  %v5576 = vand.u32 %v5355, 4294901760
  %v5577 = vsub.f32 %v5355, %v5576
  %v5578 = vand.u32 %v5577, 4294901760
  %v5579 = vsub.f32 %v5577, %v5578
  %v5580 = vand.u32 %v5579, 4294901760
  %5581 = vmatmul.mubr.f32.gmra.mrb[0].mxu0 %v5580
  %v5582 = vpop.f32.mrb[0].mxu0
  %v5583 = vadd.f32 0.0, %v5582
  %v5584 = vpop.f32.mrb[0].mxu0
  %5585 = vdwg.mxu0
  %5586 = vmatprep.subr.mxu0 0.0
  %v5587 = vand.u32 %v1411, 4294901760
  %v5588 = vsub.f32 %v1411, %v5587
  %v5589 = vand.u32 %v5588, 4294901760
  %v5590 = vsub.f32 %v5588, %v5589
  %v5591 = vand.u32 %v5590, 4294901760
  %5592 = vmatpush1.msra.mxu0 %v5591
  %5593 = vmatprep.subr.mxu0 0.0
  %v5594 = vand.u32 %v1412, 4294901760
  %v5595 = vsub.f32 %v1412, %v5594
  %v5596 = vand.u32 %v5595, 4294901760
  %v5597 = vsub.f32 %v5595, %v5596
  %v5598 = vand.u32 %v5597, 4294901760
  %5599 = vmatpush1.msra.mxu0 %v5598
  %5600 = vmatprep.subr.mxu0 0.0
  %v5601 = vand.u32 %v1413, 4294901760
  %v5602 = vsub.f32 %v1413, %v5601
  %v5603 = vand.u32 %v5602, 4294901760
  %v5604 = vsub.f32 %v5602, %v5603
  %v5605 = vand.u32 %v5604, 4294901760
  %5606 = vmatpush1.msra.mxu0 %v5605
  %5607 = vmatprep.subr.mxu0 0.0
  %v5608 = vand.u32 %v1414, 4294901760
  %v5609 = vsub.f32 %v1414, %v5608
  %v5610 = vand.u32 %v5609, 4294901760
  %v5611 = vsub.f32 %v5609, %v5610
  %v5612 = vand.u32 %v5611, 4294901760
  %5613 = vmatpush1.msra.mxu0 %v5612
  %5614 = vmatprep.subr.mxu0 0.0
  %5615 = vmatpush1.msra.mxu0 0.0
  %5616 = vmatprep.subr.mxu0 0.0
  %5617 = vmatpush1.msra.mxu0 0.0
  %5618 = vmatprep.subr.mxu0 0.0
  %5619 = vmatpush1.msra.mxu0 0.0
  %5620 = vmatprep.subr.mxu0 0.0
  %5621 = vmatpush1.msra.mxu0 0.0
  %5622 = vmatprep.subr.mxu0 0.0
  %5623 = vmatpush1.msra.mxu0 0.0
  %5624 = vmatprep.subr.mxu0 0.0
  %5625 = vmatpush1.msra.mxu0 0.0
  %5626 = vmatprep.subr.mxu0 0.0
  %5627 = vmatpush1.msra.mxu0 0.0
  %5628 = vmatprep.subr.mxu0 0.0
  %5629 = vmatpush1.msra.mxu0 0.0
  %5630 = vmatprep.subr.mxu0 0.0
  %5631 = vmatpush1.msra.mxu0 0.0
  %5632 = vmatprep.subr.mxu0 0.0
  %5633 = vmatpush1.msra.mxu0 0.0
  %5634 = vmatprep.subr.mxu0 0.0
  %5635 = vmatpush1.msra.mxu0 0.0
  %5636 = vmatprep.subr.mxu0 0.0
  %5637 = vmatpush1.msra.mxu0 0.0
  %5638 = vmatprep.subr.mxu0 0.0
  %5639 = vmatpush1.msra.mxu0 0.0
  %5640 = vmatprep.subr.mxu0 0.0
  %5641 = vmatpush1.msra.mxu0 0.0
  %5642 = vmatprep.subr.mxu0 0.0
  %5643 = vmatpush1.msra.mxu0 0.0
  %5644 = vmatprep.subr.mxu0 0.0
  %5645 = vmatpush1.msra.mxu0 0.0
  %5646 = vmatprep.subr.mxu0 0.0
  %5647 = vmatpush1.msra.mxu0 0.0
  %5648 = vmatprep.subr.mxu0 0.0
  %5649 = vmatpush1.msra.mxu0 0.0
  %5650 = vmatprep.subr.mxu0 0.0
  %5651 = vmatpush1.msra.mxu0 0.0
  %5652 = vmatprep.subr.mxu0 0.0
  %5653 = vmatpush1.msra.mxu0 0.0
  %5654 = vmatprep.subr.mxu0 0.0
  %5655 = vmatpush1.msra.mxu0 0.0
  %5656 = vmatprep.subr.mxu0 0.0
  %5657 = vmatpush1.msra.mxu0 0.0
  %5658 = vmatprep.subr.mxu0 0.0
  %5659 = vmatpush1.msra.mxu0 0.0
  %5660 = vmatprep.subr.mxu0 0.0
  %5661 = vmatpush1.msra.mxu0 0.0
  %5662 = vmatprep.subr.mxu0 0.0
  %5663 = vmatpush1.msra.mxu0 0.0
  %5664 = vmatprep.subr.mxu0 0.0
  %5665 = vmatpush1.msra.mxu0 0.0
  %5666 = vmatprep.subr.mxu0 0.0
  %5667 = vmatpush1.msra.mxu0 0.0
  %5668 = vmatprep.subr.mxu0 0.0
  %5669 = vmatpush1.msra.mxu0 0.0
  %5670 = vmatprep.mubr.f32.mxu0 0.0
  %v5671 = vand.u32 %v5310, 4294901760
  %5672 = vmatmul.mubr.f32.gmra.mrb[0].mxu0 %v5671
  %v5673 = vpop.f32.mrb[0].mxu0
  %v5674 = vadd.f32 %v5433, %v5673
  %v5675 = vpop.f32.mrb[0].mxu0
  %5676 = vmatprep.mubr.f32.mxu0 0.0
  %v5677 = vand.u32 %v5313, 4294901760
  %5678 = vmatmul.mubr.f32.gmra.mrb[0].mxu0 %v5677
  %v5679 = vpop.f32.mrb[0].mxu0
  %v5680 = vadd.f32 %v5443, %v5679
  %v5681 = vpop.f32.mrb[0].mxu0
  %5682 = vmatprep.mubr.f32.mxu0 0.0
  %v5683 = vand.u32 %v5316, 4294901760
  %5684 = vmatmul.mubr.f32.gmra.mrb[0].mxu0 %v5683
  %v5685 = vpop.f32.mrb[0].mxu0
  %v5686 = vadd.f32 %v5453, %v5685
  %v5687 = vpop.f32.mrb[0].mxu0
  %5688 = vmatprep.mubr.f32.mxu0 0.0
  %v5689 = vand.u32 %v5319, 4294901760
  %5690 = vmatmul.mubr.f32.gmra.mrb[0].mxu0 %v5689
  %v5691 = vpop.f32.mrb[0].mxu0
  %v5692 = vadd.f32 %v5463, %v5691
  %v5693 = vpop.f32.mrb[0].mxu0
  %5694 = vmatprep.mubr.f32.mxu0 0.0
  %v5695 = vand.u32 %v5322, 4294901760
  %5696 = vmatmul.mubr.f32.gmra.mrb[0].mxu0 %v5695
  %v5697 = vpop.f32.mrb[0].mxu0
  %v5698 = vadd.f32 %v5473, %v5697
  %v5699 = vpop.f32.mrb[0].mxu0
  %5700 = vmatprep.mubr.f32.mxu0 0.0
  %v5701 = vand.u32 %v5325, 4294901760
  %5702 = vmatmul.mubr.f32.gmra.mrb[0].mxu0 %v5701
  %v5703 = vpop.f32.mrb[0].mxu0
  %v5704 = vadd.f32 %v5483, %v5703
  %v5705 = vpop.f32.mrb[0].mxu0
  %5706 = vmatprep.mubr.f32.mxu0 0.0
  %v5707 = vand.u32 %v5328, 4294901760
  %5708 = vmatmul.mubr.f32.gmra.mrb[0].mxu0 %v5707
  %v5709 = vpop.f32.mrb[0].mxu0
  %v5710 = vadd.f32 %v5493, %v5709
  %v5711 = vpop.f32.mrb[0].mxu0
  %5712 = vmatprep.mubr.f32.mxu0 0.0
  %v5713 = vand.u32 %v5331, 4294901760
  %5714 = vmatmul.mubr.f32.gmra.mrb[0].mxu0 %v5713
  %v5715 = vpop.f32.mrb[0].mxu0
  %v5716 = vadd.f32 %v5503, %v5715
  %v5717 = vpop.f32.mrb[0].mxu0
  %5718 = vmatprep.mubr.f32.mxu0 0.0
  %v5719 = vand.u32 %v5334, 4294901760
  %5720 = vmatmul.mubr.f32.gmra.mrb[0].mxu0 %v5719
  %v5721 = vpop.f32.mrb[0].mxu0
  %v5722 = vadd.f32 %v5513, %v5721
  %v5723 = vpop.f32.mrb[0].mxu0
  %5724 = vmatprep.mubr.f32.mxu0 0.0
  %v5725 = vand.u32 %v5337, 4294901760
  %5726 = vmatmul.mubr.f32.gmra.mrb[0].mxu0 %v5725
  %v5727 = vpop.f32.mrb[0].mxu0
  %v5728 = vadd.f32 %v5523, %v5727
  %v5729 = vpop.f32.mrb[0].mxu0
  %5730 = vmatprep.mubr.f32.mxu0 0.0
  %v5731 = vand.u32 %v5340, 4294901760
  %5732 = vmatmul.mubr.f32.gmra.mrb[0].mxu0 %v5731
  %v5733 = vpop.f32.mrb[0].mxu0
  %v5734 = vadd.f32 %v5533, %v5733
  %v5735 = vpop.f32.mrb[0].mxu0
  %5736 = vmatprep.mubr.f32.mxu0 0.0
  %v5737 = vand.u32 %v5343, 4294901760
  %5738 = vmatmul.mubr.f32.gmra.mrb[0].mxu0 %v5737
  %v5739 = vpop.f32.mrb[0].mxu0
  %v5740 = vadd.f32 %v5543, %v5739
  %v5741 = vpop.f32.mrb[0].mxu0
  %5742 = vmatprep.mubr.f32.mxu0 0.0
  %v5743 = vand.u32 %v5346, 4294901760
  %5744 = vmatmul.mubr.f32.gmra.mrb[0].mxu0 %v5743
  %v5745 = vpop.f32.mrb[0].mxu0
  %v5746 = vadd.f32 %v5553, %v5745
  %v5747 = vpop.f32.mrb[0].mxu0
  %5748 = vmatprep.mubr.f32.mxu0 0.0
  %v5749 = vand.u32 %v5349, 4294901760
  %5750 = vmatmul.mubr.f32.gmra.mrb[0].mxu0 %v5749
  %v5751 = vpop.f32.mrb[0].mxu0
  %v5752 = vadd.f32 %v5563, %v5751
  %v5753 = vpop.f32.mrb[0].mxu0
  %5754 = vmatprep.mubr.f32.mxu0 0.0
  %v5755 = vand.u32 %v5352, 4294901760
  %5756 = vmatmul.mubr.f32.gmra.mrb[0].mxu0 %v5755
  %v5757 = vpop.f32.mrb[0].mxu0
  %v5758 = vadd.f32 %v5573, %v5757
  %v5759 = vpop.f32.mrb[0].mxu0
  %5760 = vmatprep.mubr.f32.mxu0 0.0
  %v5761 = vand.u32 %v5355, 4294901760
  %5762 = vmatmul.mubr.f32.gmra.mrb[0].mxu0 %v5761
  %v5763 = vpop.f32.mrb[0].mxu0
  %v5764 = vadd.f32 %v5583, %v5763
  %v5765 = vpop.f32.mrb[0].mxu0
  %5766 = vdwg.mxu0
  %5767 = vmatprep.subr.mxu0 0.0
  %v5768 = vand.u32 %v1411, 4294901760
  %v5769 = vsub.f32 %v1411, %v5768
  %5770 = vmatpush1.msra.mxu0 %v5769
  %5771 = vmatprep.subr.mxu0 0.0
  %v5772 = vand.u32 %v1412, 4294901760
  %v5773 = vsub.f32 %v1412, %v5772
  %5774 = vmatpush1.msra.mxu0 %v5773
  %5775 = vmatprep.subr.mxu0 0.0
  %v5776 = vand.u32 %v1413, 4294901760
  %v5777 = vsub.f32 %v1413, %v5776
  %5778 = vmatpush1.msra.mxu0 %v5777
  %5779 = vmatprep.subr.mxu0 0.0
  %v5780 = vand.u32 %v1414, 4294901760
  %v5781 = vsub.f32 %v1414, %v5780
  %5782 = vmatpush1.msra.mxu0 %v5781
  %5783 = vmatprep.subr.mxu0 0.0
  %5784 = vmatpush1.msra.mxu0 0.0
  %5785 = vmatprep.subr.mxu0 0.0
  %5786 = vmatpush1.msra.mxu0 0.0
  %5787 = vmatprep.subr.mxu0 0.0
  %5788 = vmatpush1.msra.mxu0 0.0
  %5789 = vmatprep.subr.mxu0 0.0
  %5790 = vmatpush1.msra.mxu0 0.0
  %5791 = vmatprep.subr.mxu0 0.0
  %5792 = vmatpush1.msra.mxu0 0.0
  %5793 = vmatprep.subr.mxu0 0.0
  %5794 = vmatpush1.msra.mxu0 0.0
  %5795 = vmatprep.subr.mxu0 0.0
  %5796 = vmatpush1.msra.mxu0 0.0
  %5797 = vmatprep.subr.mxu0 0.0
  %5798 = vmatpush1.msra.mxu0 0.0
  %5799 = vmatprep.subr.mxu0 0.0
  %5800 = vmatpush1.msra.mxu0 0.0
  %5801 = vmatprep.subr.mxu0 0.0
  %5802 = vmatpush1.msra.mxu0 0.0
  %5803 = vmatprep.subr.mxu0 0.0
  %5804 = vmatpush1.msra.mxu0 0.0
  %5805 = vmatprep.subr.mxu0 0.0
  %5806 = vmatpush1.msra.mxu0 0.0
  %5807 = vmatprep.subr.mxu0 0.0
  %5808 = vmatpush1.msra.mxu0 0.0
  %5809 = vmatprep.subr.mxu0 0.0
  %5810 = vmatpush1.msra.mxu0 0.0
  %5811 = vmatprep.subr.mxu0 0.0
  %5812 = vmatpush1.msra.mxu0 0.0
  %5813 = vmatprep.subr.mxu0 0.0
  %5814 = vmatpush1.msra.mxu0 0.0
  %5815 = vmatprep.subr.mxu0 0.0
  %5816 = vmatpush1.msra.mxu0 0.0
  %5817 = vmatprep.subr.mxu0 0.0
  %5818 = vmatpush1.msra.mxu0 0.0
  %5819 = vmatprep.subr.mxu0 0.0
  %5820 = vmatpush1.msra.mxu0 0.0
  %5821 = vmatprep.subr.mxu0 0.0
  %5822 = vmatpush1.msra.mxu0 0.0
  %5823 = vmatprep.subr.mxu0 0.0
  %5824 = vmatpush1.msra.mxu0 0.0
  %5825 = vmatprep.subr.mxu0 0.0
  %5826 = vmatpush1.msra.mxu0 0.0
  %5827 = vmatprep.subr.mxu0 0.0
  %5828 = vmatpush1.msra.mxu0 0.0
  %5829 = vmatprep.subr.mxu0 0.0
  %5830 = vmatpush1.msra.mxu0 0.0
  %5831 = vmatprep.subr.mxu0 0.0
  %5832 = vmatpush1.msra.mxu0 0.0
  %5833 = vmatprep.subr.mxu0 0.0
  %5834 = vmatpush1.msra.mxu0 0.0
  %5835 = vmatprep.subr.mxu0 0.0
  %5836 = vmatpush1.msra.mxu0 0.0
  %5837 = vmatprep.subr.mxu0 0.0
  %5838 = vmatpush1.msra.mxu0 0.0
  %5839 = vmatprep.mubr.f32.mxu0 0.0
  %v5840 = vand.u32 %v5310, 4294901760
  %v5841 = vsub.f32 %v5310, %v5840
  %5842 = vmatmul.mubr.f32.gmra.mrb[0].mxu0 %v5841
  %v5843 = vpop.f32.mrb[0].mxu0
  %v5844 = vadd.f32 %v5674, %v5843
  %v5845 = vpop.f32.mrb[0].mxu0
  %5846 = vmatprep.mubr.f32.mxu0 0.0
  %v5847 = vand.u32 %v5313, 4294901760
  %v5848 = vsub.f32 %v5313, %v5847
  %5849 = vmatmul.mubr.f32.gmra.mrb[0].mxu0 %v5848
  %v5850 = vpop.f32.mrb[0].mxu0
  %v5851 = vadd.f32 %v5680, %v5850
  %v5852 = vpop.f32.mrb[0].mxu0
  %5853 = vmatprep.mubr.f32.mxu0 0.0
  %v5854 = vand.u32 %v5316, 4294901760
  %v5855 = vsub.f32 %v5316, %v5854
  %5856 = vmatmul.mubr.f32.gmra.mrb[0].mxu0 %v5855
  %v5857 = vpop.f32.mrb[0].mxu0
  %v5858 = vadd.f32 %v5686, %v5857
  %v5859 = vpop.f32.mrb[0].mxu0
  %5860 = vmatprep.mubr.f32.mxu0 0.0
  %v5861 = vand.u32 %v5319, 4294901760
  %v5862 = vsub.f32 %v5319, %v5861
  %5863 = vmatmul.mubr.f32.gmra.mrb[0].mxu0 %v5862
  %v5864 = vpop.f32.mrb[0].mxu0
  %v5865 = vadd.f32 %v5692, %v5864
  %v5866 = vpop.f32.mrb[0].mxu0
  %5867 = vmatprep.mubr.f32.mxu0 0.0
  %v5868 = vand.u32 %v5322, 4294901760
  %v5869 = vsub.f32 %v5322, %v5868
  %5870 = vmatmul.mubr.f32.gmra.mrb[0].mxu0 %v5869
  %v5871 = vpop.f32.mrb[0].mxu0
  %v5872 = vadd.f32 %v5698, %v5871
  %v5873 = vpop.f32.mrb[0].mxu0
  %5874 = vmatprep.mubr.f32.mxu0 0.0
  %v5875 = vand.u32 %v5325, 4294901760
  %v5876 = vsub.f32 %v5325, %v5875
  %5877 = vmatmul.mubr.f32.gmra.mrb[0].mxu0 %v5876
  %v5878 = vpop.f32.mrb[0].mxu0
  %v5879 = vadd.f32 %v5704, %v5878
  %v5880 = vpop.f32.mrb[0].mxu0
  %5881 = vmatprep.mubr.f32.mxu0 0.0
  %v5882 = vand.u32 %v5328, 4294901760
  %v5883 = vsub.f32 %v5328, %v5882
  %5884 = vmatmul.mubr.f32.gmra.mrb[0].mxu0 %v5883
  %v5885 = vpop.f32.mrb[0].mxu0
  %v5886 = vadd.f32 %v5710, %v5885
  %v5887 = vpop.f32.mrb[0].mxu0
  %5888 = vmatprep.mubr.f32.mxu0 0.0
  %v5889 = vand.u32 %v5331, 4294901760
  %v5890 = vsub.f32 %v5331, %v5889
  %5891 = vmatmul.mubr.f32.gmra.mrb[0].mxu0 %v5890
  %v5892 = vpop.f32.mrb[0].mxu0
  %v5893 = vadd.f32 %v5716, %v5892
  %v5894 = vpop.f32.mrb[0].mxu0
  %5895 = vmatprep.mubr.f32.mxu0 0.0
  %v5896 = vand.u32 %v5334, 4294901760
  %v5897 = vsub.f32 %v5334, %v5896
  %5898 = vmatmul.mubr.f32.gmra.mrb[0].mxu0 %v5897
  %v5899 = vpop.f32.mrb[0].mxu0
  %v5900 = vadd.f32 %v5722, %v5899
  %v5901 = vpop.f32.mrb[0].mxu0
  %5902 = vmatprep.mubr.f32.mxu0 0.0
  %v5903 = vand.u32 %v5337, 4294901760
  %v5904 = vsub.f32 %v5337, %v5903
  %5905 = vmatmul.mubr.f32.gmra.mrb[0].mxu0 %v5904
  %v5906 = vpop.f32.mrb[0].mxu0
  %v5907 = vadd.f32 %v5728, %v5906
  %v5908 = vpop.f32.mrb[0].mxu0
  %5909 = vmatprep.mubr.f32.mxu0 0.0
  %v5910 = vand.u32 %v5340, 4294901760
  %v5911 = vsub.f32 %v5340, %v5910
  %5912 = vmatmul.mubr.f32.gmra.mrb[0].mxu0 %v5911
  %v5913 = vpop.f32.mrb[0].mxu0
  %v5914 = vadd.f32 %v5734, %v5913
  %v5915 = vpop.f32.mrb[0].mxu0
  %5916 = vmatprep.mubr.f32.mxu0 0.0
  %v5917 = vand.u32 %v5343, 4294901760
  %v5918 = vsub.f32 %v5343, %v5917
  %5919 = vmatmul.mubr.f32.gmra.mrb[0].mxu0 %v5918
  %v5920 = vpop.f32.mrb[0].mxu0
  %v5921 = vadd.f32 %v5740, %v5920
  %v5922 = vpop.f32.mrb[0].mxu0
  %5923 = vmatprep.mubr.f32.mxu0 0.0
  %v5924 = vand.u32 %v5346, 4294901760
  %v5925 = vsub.f32 %v5346, %v5924
  %5926 = vmatmul.mubr.f32.gmra.mrb[0].mxu0 %v5925
  %v5927 = vpop.f32.mrb[0].mxu0
  %v5928 = vadd.f32 %v5746, %v5927
  %v5929 = vpop.f32.mrb[0].mxu0
  %5930 = vmatprep.mubr.f32.mxu0 0.0
  %v5931 = vand.u32 %v5349, 4294901760
  %v5932 = vsub.f32 %v5349, %v5931
  %5933 = vmatmul.mubr.f32.gmra.mrb[0].mxu0 %v5932
  %v5934 = vpop.f32.mrb[0].mxu0
  %v5935 = vadd.f32 %v5752, %v5934
  %v5936 = vpop.f32.mrb[0].mxu0
  %5937 = vmatprep.mubr.f32.mxu0 0.0
  %v5938 = vand.u32 %v5352, 4294901760
  %v5939 = vsub.f32 %v5352, %v5938
  %5940 = vmatmul.mubr.f32.gmra.mrb[0].mxu0 %v5939
  %v5941 = vpop.f32.mrb[0].mxu0
  %v5942 = vadd.f32 %v5758, %v5941
  %v5943 = vpop.f32.mrb[0].mxu0
  %5944 = vmatprep.mubr.f32.mxu0 0.0
  %v5945 = vand.u32 %v5355, 4294901760
  %v5946 = vsub.f32 %v5355, %v5945
  %5947 = vmatmul.mubr.f32.gmra.mrb[0].mxu0 %v5946
  %v5948 = vpop.f32.mrb[0].mxu0
  %v5949 = vadd.f32 %v5764, %v5948
  %v5950 = vpop.f32.mrb[0].mxu0
  %5951 = vdwg.mxu0
  %5952 = vmatprep.subr.mxu0 0.0
  %v5953 = vand.u32 %v1411, 4294901760
  %5954 = vmatpush1.msra.mxu0 %v5953
  %5955 = vmatprep.subr.mxu0 0.0
  %v5956 = vand.u32 %v1412, 4294901760
  %5957 = vmatpush1.msra.mxu0 %v5956
  %5958 = vmatprep.subr.mxu0 0.0
  %v5959 = vand.u32 %v1413, 4294901760
  %5960 = vmatpush1.msra.mxu0 %v5959
  %5961 = vmatprep.subr.mxu0 0.0
  %v5962 = vand.u32 %v1414, 4294901760
  %5963 = vmatpush1.msra.mxu0 %v5962
  %5964 = vmatprep.subr.mxu0 0.0
  %5965 = vmatpush1.msra.mxu0 0.0
  %5966 = vmatprep.subr.mxu0 0.0
  %5967 = vmatpush1.msra.mxu0 0.0
  %5968 = vmatprep.subr.mxu0 0.0
  %5969 = vmatpush1.msra.mxu0 0.0
  %5970 = vmatprep.subr.mxu0 0.0
  %5971 = vmatpush1.msra.mxu0 0.0
  %5972 = vmatprep.subr.mxu0 0.0
  %5973 = vmatpush1.msra.mxu0 0.0
  %5974 = vmatprep.subr.mxu0 0.0
  %5975 = vmatpush1.msra.mxu0 0.0
  %5976 = vmatprep.subr.mxu0 0.0
  %5977 = vmatpush1.msra.mxu0 0.0
  %5978 = vmatprep.subr.mxu0 0.0
  %5979 = vmatpush1.msra.mxu0 0.0
  %5980 = vmatprep.subr.mxu0 0.0
  %5981 = vmatpush1.msra.mxu0 0.0
  %5982 = vmatprep.subr.mxu0 0.0
  %5983 = vmatpush1.msra.mxu0 0.0
  %5984 = vmatprep.subr.mxu0 0.0
  %5985 = vmatpush1.msra.mxu0 0.0
  %5986 = vmatprep.subr.mxu0 0.0
  %5987 = vmatpush1.msra.mxu0 0.0
  %5988 = vmatprep.subr.mxu0 0.0
  %5989 = vmatpush1.msra.mxu0 0.0
  %5990 = vmatprep.subr.mxu0 0.0
  %5991 = vmatpush1.msra.mxu0 0.0
  %5992 = vmatprep.subr.mxu0 0.0
  %5993 = vmatpush1.msra.mxu0 0.0
  %5994 = vmatprep.subr.mxu0 0.0
  %5995 = vmatpush1.msra.mxu0 0.0
  %5996 = vmatprep.subr.mxu0 0.0
  %5997 = vmatpush1.msra.mxu0 0.0
  %5998 = vmatprep.subr.mxu0 0.0
  %5999 = vmatpush1.msra.mxu0 0.0
  %6000 = vmatprep.subr.mxu0 0.0
  %6001 = vmatpush1.msra.mxu0 0.0
  %6002 = vmatprep.subr.mxu0 0.0
  %6003 = vmatpush1.msra.mxu0 0.0
  %6004 = vmatprep.subr.mxu0 0.0
  %6005 = vmatpush1.msra.mxu0 0.0
  %6006 = vmatprep.subr.mxu0 0.0
  %6007 = vmatpush1.msra.mxu0 0.0
  %6008 = vmatprep.subr.mxu0 0.0
  %6009 = vmatpush1.msra.mxu0 0.0
  %6010 = vmatprep.subr.mxu0 0.0
  %6011 = vmatpush1.msra.mxu0 0.0
  %6012 = vmatprep.subr.mxu0 0.0
  %6013 = vmatpush1.msra.mxu0 0.0
  %6014 = vmatprep.subr.mxu0 0.0
  %6015 = vmatpush1.msra.mxu0 0.0
  %6016 = vmatprep.subr.mxu0 0.0
  %6017 = vmatpush1.msra.mxu0 0.0
  %6018 = vmatprep.subr.mxu0 0.0
  %6019 = vmatpush1.msra.mxu0 0.0
  %6020 = vmatprep.mubr.f32.mxu0 0.0
  %v6021 = vand.u32 %v5310, 4294901760
  %v6022 = vsub.f32 %v5310, %v6021
  %v6023 = vand.u32 %v6022, 4294901760
  %6024 = vmatmul.mubr.f32.gmra.mrb[0].mxu0 %v6023
  %v6025 = vpop.f32.mrb[0].mxu0
  %v6026 = vadd.f32 %v5844, %v6025
  %v6027 = vpop.f32.mrb[0].mxu0
  %6028 = vmatprep.mubr.f32.mxu0 0.0
  %v6029 = vand.u32 %v5313, 4294901760
  %v6030 = vsub.f32 %v5313, %v6029
  %v6031 = vand.u32 %v6030, 4294901760
  %6032 = vmatmul.mubr.f32.gmra.mrb[0].mxu0 %v6031
  %v6033 = vpop.f32.mrb[0].mxu0
  %v6034 = vadd.f32 %v5851, %v6033
  %v6035 = vpop.f32.mrb[0].mxu0
  %6036 = vmatprep.mubr.f32.mxu0 0.0
  %v6037 = vand.u32 %v5316, 4294901760
  %v6038 = vsub.f32 %v5316, %v6037
  %v6039 = vand.u32 %v6038, 4294901760
  %6040 = vmatmul.mubr.f32.gmra.mrb[0].mxu0 %v6039
  %v6041 = vpop.f32.mrb[0].mxu0
  %v6042 = vadd.f32 %v5858, %v6041
  %v6043 = vpop.f32.mrb[0].mxu0
  %6044 = vmatprep.mubr.f32.mxu0 0.0
  %v6045 = vand.u32 %v5319, 4294901760
  %v6046 = vsub.f32 %v5319, %v6045
  %v6047 = vand.u32 %v6046, 4294901760
  %6048 = vmatmul.mubr.f32.gmra.mrb[0].mxu0 %v6047
  %v6049 = vpop.f32.mrb[0].mxu0
  %v6050 = vadd.f32 %v5865, %v6049
  %v6051 = vpop.f32.mrb[0].mxu0
  %6052 = vmatprep.mubr.f32.mxu0 0.0
  %v6053 = vand.u32 %v5322, 4294901760
  %v6054 = vsub.f32 %v5322, %v6053
  %v6055 = vand.u32 %v6054, 4294901760
  %6056 = vmatmul.mubr.f32.gmra.mrb[0].mxu0 %v6055
  %v6057 = vpop.f32.mrb[0].mxu0
  %v6058 = vadd.f32 %v5872, %v6057
  %v6059 = vpop.f32.mrb[0].mxu0
  %6060 = vmatprep.mubr.f32.mxu0 0.0
  %v6061 = vand.u32 %v5325, 4294901760
  %v6062 = vsub.f32 %v5325, %v6061
  %v6063 = vand.u32 %v6062, 4294901760
  %6064 = vmatmul.mubr.f32.gmra.mrb[0].mxu0 %v6063
  %v6065 = vpop.f32.mrb[0].mxu0
  %v6066 = vadd.f32 %v5879, %v6065
  %v6067 = vpop.f32.mrb[0].mxu0
  %6068 = vmatprep.mubr.f32.mxu0 0.0
  %v6069 = vand.u32 %v5328, 4294901760
  %v6070 = vsub.f32 %v5328, %v6069
  %v6071 = vand.u32 %v6070, 4294901760
  %6072 = vmatmul.mubr.f32.gmra.mrb[0].mxu0 %v6071
  %v6073 = vpop.f32.mrb[0].mxu0
  %v6074 = vadd.f32 %v5886, %v6073
  %v6075 = vpop.f32.mrb[0].mxu0
  %6076 = vmatprep.mubr.f32.mxu0 0.0
  %v6077 = vand.u32 %v5331, 4294901760
  %v6078 = vsub.f32 %v5331, %v6077
  %v6079 = vand.u32 %v6078, 4294901760
  %6080 = vmatmul.mubr.f32.gmra.mrb[0].mxu0 %v6079
  %v6081 = vpop.f32.mrb[0].mxu0
  %v6082 = vadd.f32 %v5893, %v6081
  %v6083 = vpop.f32.mrb[0].mxu0
  %6084 = vmatprep.mubr.f32.mxu0 0.0
  %v6085 = vand.u32 %v5334, 4294901760
  %v6086 = vsub.f32 %v5334, %v6085
  %v6087 = vand.u32 %v6086, 4294901760
  %6088 = vmatmul.mubr.f32.gmra.mrb[0].mxu0 %v6087
  %v6089 = vpop.f32.mrb[0].mxu0
  %v6090 = vadd.f32 %v5900, %v6089
  %v6091 = vpop.f32.mrb[0].mxu0
  %6092 = vmatprep.mubr.f32.mxu0 0.0
  %v6093 = vand.u32 %v5337, 4294901760
  %v6094 = vsub.f32 %v5337, %v6093
  %v6095 = vand.u32 %v6094, 4294901760
  %6096 = vmatmul.mubr.f32.gmra.mrb[0].mxu0 %v6095
  %v6097 = vpop.f32.mrb[0].mxu0
  %v6098 = vadd.f32 %v5907, %v6097
  %v6099 = vpop.f32.mrb[0].mxu0
  %6100 = vmatprep.mubr.f32.mxu0 0.0
  %v6101 = vand.u32 %v5340, 4294901760
  %v6102 = vsub.f32 %v5340, %v6101
  %v6103 = vand.u32 %v6102, 4294901760
  %6104 = vmatmul.mubr.f32.gmra.mrb[0].mxu0 %v6103
  %v6105 = vpop.f32.mrb[0].mxu0
  %v6106 = vadd.f32 %v5914, %v6105
  %v6107 = vpop.f32.mrb[0].mxu0
  %6108 = vmatprep.mubr.f32.mxu0 0.0
  %v6109 = vand.u32 %v5343, 4294901760
  %v6110 = vsub.f32 %v5343, %v6109
  %v6111 = vand.u32 %v6110, 4294901760
  %6112 = vmatmul.mubr.f32.gmra.mrb[0].mxu0 %v6111
  %v6113 = vpop.f32.mrb[0].mxu0
  %v6114 = vadd.f32 %v5921, %v6113
  %v6115 = vpop.f32.mrb[0].mxu0
  %6116 = vmatprep.mubr.f32.mxu0 0.0
  %v6117 = vand.u32 %v5346, 4294901760
  %v6118 = vsub.f32 %v5346, %v6117
  %v6119 = vand.u32 %v6118, 4294901760
  %6120 = vmatmul.mubr.f32.gmra.mrb[0].mxu0 %v6119
  %v6121 = vpop.f32.mrb[0].mxu0
  %v6122 = vadd.f32 %v5928, %v6121
  %v6123 = vpop.f32.mrb[0].mxu0
  %6124 = vmatprep.mubr.f32.mxu0 0.0
  %v6125 = vand.u32 %v5349, 4294901760
  %v6126 = vsub.f32 %v5349, %v6125
  %v6127 = vand.u32 %v6126, 4294901760
  %6128 = vmatmul.mubr.f32.gmra.mrb[0].mxu0 %v6127
  %v6129 = vpop.f32.mrb[0].mxu0
  %v6130 = vadd.f32 %v5935, %v6129
  %v6131 = vpop.f32.mrb[0].mxu0
  %6132 = vmatprep.mubr.f32.mxu0 0.0
  %v6133 = vand.u32 %v5352, 4294901760
  %v6134 = vsub.f32 %v5352, %v6133
  %v6135 = vand.u32 %v6134, 4294901760
  %6136 = vmatmul.mubr.f32.gmra.mrb[0].mxu0 %v6135
  %v6137 = vpop.f32.mrb[0].mxu0
  %v6138 = vadd.f32 %v5942, %v6137
  %v6139 = vpop.f32.mrb[0].mxu0
  %6140 = vmatprep.mubr.f32.mxu0 0.0
  %v6141 = vand.u32 %v5355, 4294901760
  %v6142 = vsub.f32 %v5355, %v6141
  %v6143 = vand.u32 %v6142, 4294901760
  %6144 = vmatmul.mubr.f32.gmra.mrb[0].mxu0 %v6143
  %v6145 = vpop.f32.mrb[0].mxu0
  %v6146 = vadd.f32 %v5949, %v6145
  %v6147 = vpop.f32.mrb[0].mxu0
  %6148 = vdwg.mxu0
  %6149 = vmatprep.subr.mxu0 0.0
  %v6150 = vand.u32 %v1411, 4294901760
  %v6151 = vsub.f32 %v1411, %v6150
  %v6152 = vand.u32 %v6151, 4294901760
  %6153 = vmatpush1.msra.mxu0 %v6152
  %6154 = vmatprep.subr.mxu0 0.0
  %v6155 = vand.u32 %v1412, 4294901760
  %v6156 = vsub.f32 %v1412, %v6155
  %v6157 = vand.u32 %v6156, 4294901760
  %6158 = vmatpush1.msra.mxu0 %v6157
  %6159 = vmatprep.subr.mxu0 0.0
  %v6160 = vand.u32 %v1413, 4294901760
  %v6161 = vsub.f32 %v1413, %v6160
  %v6162 = vand.u32 %v6161, 4294901760
  %6163 = vmatpush1.msra.mxu0 %v6162
  %6164 = vmatprep.subr.mxu0 0.0
  %v6165 = vand.u32 %v1414, 4294901760
  %v6166 = vsub.f32 %v1414, %v6165
  %v6167 = vand.u32 %v6166, 4294901760
  %6168 = vmatpush1.msra.mxu0 %v6167
  %6169 = vmatprep.subr.mxu0 0.0
  %6170 = vmatpush1.msra.mxu0 0.0
  %6171 = vmatprep.subr.mxu0 0.0
  %6172 = vmatpush1.msra.mxu0 0.0
  %6173 = vmatprep.subr.mxu0 0.0
  %6174 = vmatpush1.msra.mxu0 0.0
  %6175 = vmatprep.subr.mxu0 0.0
  %6176 = vmatpush1.msra.mxu0 0.0
  %6177 = vmatprep.subr.mxu0 0.0
  %6178 = vmatpush1.msra.mxu0 0.0
  %6179 = vmatprep.subr.mxu0 0.0
  %6180 = vmatpush1.msra.mxu0 0.0
  %6181 = vmatprep.subr.mxu0 0.0
  %6182 = vmatpush1.msra.mxu0 0.0
  %6183 = vmatprep.subr.mxu0 0.0
  %6184 = vmatpush1.msra.mxu0 0.0
  %6185 = vmatprep.subr.mxu0 0.0
  %6186 = vmatpush1.msra.mxu0 0.0
  %6187 = vmatprep.subr.mxu0 0.0
  %6188 = vmatpush1.msra.mxu0 0.0
  %6189 = vmatprep.subr.mxu0 0.0
  %6190 = vmatpush1.msra.mxu0 0.0
  %6191 = vmatprep.subr.mxu0 0.0
  %6192 = vmatpush1.msra.mxu0 0.0
  %6193 = vmatprep.subr.mxu0 0.0
  %6194 = vmatpush1.msra.mxu0 0.0
  %6195 = vmatprep.subr.mxu0 0.0
  %6196 = vmatpush1.msra.mxu0 0.0
  %6197 = vmatprep.subr.mxu0 0.0
  %6198 = vmatpush1.msra.mxu0 0.0
  %6199 = vmatprep.subr.mxu0 0.0
  %6200 = vmatpush1.msra.mxu0 0.0
  %6201 = vmatprep.subr.mxu0 0.0
  %6202 = vmatpush1.msra.mxu0 0.0
  %6203 = vmatprep.subr.mxu0 0.0
  %6204 = vmatpush1.msra.mxu0 0.0
  %6205 = vmatprep.subr.mxu0 0.0
  %6206 = vmatpush1.msra.mxu0 0.0
  %6207 = vmatprep.subr.mxu0 0.0
  %6208 = vmatpush1.msra.mxu0 0.0
  %6209 = vmatprep.subr.mxu0 0.0
  %6210 = vmatpush1.msra.mxu0 0.0
  %6211 = vmatprep.subr.mxu0 0.0
  %6212 = vmatpush1.msra.mxu0 0.0
  %6213 = vmatprep.subr.mxu0 0.0
  %6214 = vmatpush1.msra.mxu0 0.0
  %6215 = vmatprep.subr.mxu0 0.0
  %6216 = vmatpush1.msra.mxu0 0.0
  %6217 = vmatprep.subr.mxu0 0.0
  %6218 = vmatpush1.msra.mxu0 0.0
  %6219 = vmatprep.subr.mxu0 0.0
  %6220 = vmatpush1.msra.mxu0 0.0
  %6221 = vmatprep.subr.mxu0 0.0
  %6222 = vmatpush1.msra.mxu0 0.0
  %6223 = vmatprep.subr.mxu0 0.0
  %6224 = vmatpush1.msra.mxu0 0.0
  %6225 = vmatprep.mubr.f32.mxu0 0.0
  %v6226 = vand.u32 %v5310, 4294901760
  %6227 = vmatmul.mubr.f32.gmra.mrb[0].mxu0 %v6226
  %v6228 = vpop.f32.mrb[0].mxu0
  %v6229 = vadd.f32 %v6026, %v6228
  %v6230 = vpop.f32.mrb[0].mxu0
  %6231 = vmatprep.mubr.f32.mxu0 0.0
  %v6232 = vand.u32 %v5313, 4294901760
  %6233 = vmatmul.mubr.f32.gmra.mrb[0].mxu0 %v6232
  %v6234 = vpop.f32.mrb[0].mxu0
  %v6235 = vadd.f32 %v6034, %v6234
  %v6236 = vpop.f32.mrb[0].mxu0
  %6237 = vmatprep.mubr.f32.mxu0 0.0
  %v6238 = vand.u32 %v5316, 4294901760
  %6239 = vmatmul.mubr.f32.gmra.mrb[0].mxu0 %v6238
  %v6240 = vpop.f32.mrb[0].mxu0
  %v6241 = vadd.f32 %v6042, %v6240
  %v6242 = vpop.f32.mrb[0].mxu0
  %6243 = vmatprep.mubr.f32.mxu0 0.0
  %v6244 = vand.u32 %v5319, 4294901760
  %6245 = vmatmul.mubr.f32.gmra.mrb[0].mxu0 %v6244
  %v6246 = vpop.f32.mrb[0].mxu0
  %v6247 = vadd.f32 %v6050, %v6246
  %v6248 = vpop.f32.mrb[0].mxu0
  %6249 = vmatprep.mubr.f32.mxu0 0.0
  %v6250 = vand.u32 %v5322, 4294901760
  %6251 = vmatmul.mubr.f32.gmra.mrb[0].mxu0 %v6250
  %v6252 = vpop.f32.mrb[0].mxu0
  %v6253 = vadd.f32 %v6058, %v6252
  %v6254 = vpop.f32.mrb[0].mxu0
  %6255 = vmatprep.mubr.f32.mxu0 0.0
  %v6256 = vand.u32 %v5325, 4294901760
  %6257 = vmatmul.mubr.f32.gmra.mrb[0].mxu0 %v6256
  %v6258 = vpop.f32.mrb[0].mxu0
  %v6259 = vadd.f32 %v6066, %v6258
  %v6260 = vpop.f32.mrb[0].mxu0
  %6261 = vmatprep.mubr.f32.mxu0 0.0
  %v6262 = vand.u32 %v5328, 4294901760
  %6263 = vmatmul.mubr.f32.gmra.mrb[0].mxu0 %v6262
  %v6264 = vpop.f32.mrb[0].mxu0
  %v6265 = vadd.f32 %v6074, %v6264
  %v6266 = vpop.f32.mrb[0].mxu0
  %6267 = vmatprep.mubr.f32.mxu0 0.0
  %v6268 = vand.u32 %v5331, 4294901760
  %6269 = vmatmul.mubr.f32.gmra.mrb[0].mxu0 %v6268
  %v6270 = vpop.f32.mrb[0].mxu0
  %v6271 = vadd.f32 %v6082, %v6270
  %v6272 = vpop.f32.mrb[0].mxu0
  %6273 = vmatprep.mubr.f32.mxu0 0.0
  %v6274 = vand.u32 %v5334, 4294901760
  %6275 = vmatmul.mubr.f32.gmra.mrb[0].mxu0 %v6274
  %v6276 = vpop.f32.mrb[0].mxu0
  %v6277 = vadd.f32 %v6090, %v6276
  %v6278 = vpop.f32.mrb[0].mxu0
  %6279 = vmatprep.mubr.f32.mxu0 0.0
  %v6280 = vand.u32 %v5337, 4294901760
  %6281 = vmatmul.mubr.f32.gmra.mrb[0].mxu0 %v6280
  %v6282 = vpop.f32.mrb[0].mxu0
  %v6283 = vadd.f32 %v6098, %v6282
  %v6284 = vpop.f32.mrb[0].mxu0
  %6285 = vmatprep.mubr.f32.mxu0 0.0
  %v6286 = vand.u32 %v5340, 4294901760
  %6287 = vmatmul.mubr.f32.gmra.mrb[0].mxu0 %v6286
  %v6288 = vpop.f32.mrb[0].mxu0
  %v6289 = vadd.f32 %v6106, %v6288
  %v6290 = vpop.f32.mrb[0].mxu0
  %6291 = vmatprep.mubr.f32.mxu0 0.0
  %v6292 = vand.u32 %v5343, 4294901760
  %6293 = vmatmul.mubr.f32.gmra.mrb[0].mxu0 %v6292
  %v6294 = vpop.f32.mrb[0].mxu0
  %v6295 = vadd.f32 %v6114, %v6294
  %v6296 = vpop.f32.mrb[0].mxu0
  %6297 = vmatprep.mubr.f32.mxu0 0.0
  %v6298 = vand.u32 %v5346, 4294901760
  %6299 = vmatmul.mubr.f32.gmra.mrb[0].mxu0 %v6298
  %v6300 = vpop.f32.mrb[0].mxu0
  %v6301 = vadd.f32 %v6122, %v6300
  %v6302 = vpop.f32.mrb[0].mxu0
  %6303 = vmatprep.mubr.f32.mxu0 0.0
  %v6304 = vand.u32 %v5349, 4294901760
  %6305 = vmatmul.mubr.f32.gmra.mrb[0].mxu0 %v6304
  %v6306 = vpop.f32.mrb[0].mxu0
  %v6307 = vadd.f32 %v6130, %v6306
  %v6308 = vpop.f32.mrb[0].mxu0
  %6309 = vmatprep.mubr.f32.mxu0 0.0
  %v6310 = vand.u32 %v5352, 4294901760
  %6311 = vmatmul.mubr.f32.gmra.mrb[0].mxu0 %v6310
  %v6312 = vpop.f32.mrb[0].mxu0
  %v6313 = vadd.f32 %v6138, %v6312
  %v6314 = vpop.f32.mrb[0].mxu0
  %6315 = vmatprep.mubr.f32.mxu0 0.0
  %v6316 = vand.u32 %v5355, 4294901760
  %6317 = vmatmul.mubr.f32.gmra.mrb[0].mxu0 %v6316
  %v6318 = vpop.f32.mrb[0].mxu0
  %v6319 = vadd.f32 %v6146, %v6318
  %v6320 = vpop.f32.mrb[0].mxu0
  %6321 = vdwg.mxu0
  %6322 = vmatprep.subr.mxu0 0.0
  %v6323 = vand.u32 %v1411, 4294901760
  %6324 = vmatpush1.msra.mxu0 %v6323
  %6325 = vmatprep.subr.mxu0 0.0
  %v6326 = vand.u32 %v1412, 4294901760
  %6327 = vmatpush1.msra.mxu0 %v6326
  %6328 = vmatprep.subr.mxu0 0.0
  %v6329 = vand.u32 %v1413, 4294901760
  %6330 = vmatpush1.msra.mxu0 %v6329
  %6331 = vmatprep.subr.mxu0 0.0
  %v6332 = vand.u32 %v1414, 4294901760
  %6333 = vmatpush1.msra.mxu0 %v6332
  %6334 = vmatprep.subr.mxu0 0.0
  %6335 = vmatpush1.msra.mxu0 0.0
  %6336 = vmatprep.subr.mxu0 0.0
  %6337 = vmatpush1.msra.mxu0 0.0
  %6338 = vmatprep.subr.mxu0 0.0
  %6339 = vmatpush1.msra.mxu0 0.0
  %6340 = vmatprep.subr.mxu0 0.0
  %6341 = vmatpush1.msra.mxu0 0.0
  %6342 = vmatprep.subr.mxu0 0.0
  %6343 = vmatpush1.msra.mxu0 0.0
  %6344 = vmatprep.subr.mxu0 0.0
  %6345 = vmatpush1.msra.mxu0 0.0
  %6346 = vmatprep.subr.mxu0 0.0
  %6347 = vmatpush1.msra.mxu0 0.0
  %6348 = vmatprep.subr.mxu0 0.0
  %6349 = vmatpush1.msra.mxu0 0.0
  %6350 = vmatprep.subr.mxu0 0.0
  %6351 = vmatpush1.msra.mxu0 0.0
  %6352 = vmatprep.subr.mxu0 0.0
  %6353 = vmatpush1.msra.mxu0 0.0
  %6354 = vmatprep.subr.mxu0 0.0
  %6355 = vmatpush1.msra.mxu0 0.0
  %6356 = vmatprep.subr.mxu0 0.0
  %6357 = vmatpush1.msra.mxu0 0.0
  %6358 = vmatprep.subr.mxu0 0.0
  %6359 = vmatpush1.msra.mxu0 0.0
  %6360 = vmatprep.subr.mxu0 0.0
  %6361 = vmatpush1.msra.mxu0 0.0
  %6362 = vmatprep.subr.mxu0 0.0
  %6363 = vmatpush1.msra.mxu0 0.0
  %6364 = vmatprep.subr.mxu0 0.0
  %6365 = vmatpush1.msra.mxu0 0.0
  %6366 = vmatprep.subr.mxu0 0.0
  %6367 = vmatpush1.msra.mxu0 0.0
  %6368 = vmatprep.subr.mxu0 0.0
  %6369 = vmatpush1.msra.mxu0 0.0
  %6370 = vmatprep.subr.mxu0 0.0
  %6371 = vmatpush1.msra.mxu0 0.0
  %6372 = vmatprep.subr.mxu0 0.0
  %6373 = vmatpush1.msra.mxu0 0.0
  %6374 = vmatprep.subr.mxu0 0.0
  %6375 = vmatpush1.msra.mxu0 0.0
  %6376 = vmatprep.subr.mxu0 0.0
  %6377 = vmatpush1.msra.mxu0 0.0
  %6378 = vmatprep.subr.mxu0 0.0
  %6379 = vmatpush1.msra.mxu0 0.0
  %6380 = vmatprep.subr.mxu0 0.0
  %6381 = vmatpush1.msra.mxu0 0.0
  %6382 = vmatprep.subr.mxu0 0.0
  %6383 = vmatpush1.msra.mxu0 0.0
  %6384 = vmatprep.subr.mxu0 0.0
  %6385 = vmatpush1.msra.mxu0 0.0
  %6386 = vmatprep.subr.mxu0 0.0
  %6387 = vmatpush1.msra.mxu0 0.0
  %6388 = vmatprep.subr.mxu0 0.0
  %6389 = vmatpush1.msra.mxu0 0.0
  %6390 = vmatprep.mubr.f32.mxu0 0.0
  %v6391 = vand.u32 %v5310, 4294901760
  %6392 = vmatmul.mubr.f32.gmra.mrb[0].mxu0 %v6391
  %v6393 = vpop.f32.mrb[0].mxu0
  %v6394 = vadd.f32 %v6229, %v6393
  %v6395 = vpop.f32.mrb[0].mxu0
  %6396 = vmatprep.mubr.f32.mxu0 0.0
  %v6397 = vand.u32 %v5313, 4294901760
  %6398 = vmatmul.mubr.f32.gmra.mrb[0].mxu0 %v6397
  %v6399 = vpop.f32.mrb[0].mxu0
  %v6400 = vadd.f32 %v6235, %v6399
  %v6401 = vpop.f32.mrb[0].mxu0
  %6402 = vmatprep.mubr.f32.mxu0 0.0
  %v6403 = vand.u32 %v5316, 4294901760
  %6404 = vmatmul.mubr.f32.gmra.mrb[0].mxu0 %v6403
  %v6405 = vpop.f32.mrb[0].mxu0
  %v6406 = vadd.f32 %v6241, %v6405
  %v6407 = vpop.f32.mrb[0].mxu0
  %6408 = vmatprep.mubr.f32.mxu0 0.0
  %v6409 = vand.u32 %v5319, 4294901760
  %6410 = vmatmul.mubr.f32.gmra.mrb[0].mxu0 %v6409
  %v6411 = vpop.f32.mrb[0].mxu0
  %v6412 = vadd.f32 %v6247, %v6411
  %v6413 = vpop.f32.mrb[0].mxu0
  %6414 = vmatprep.mubr.f32.mxu0 0.0
  %v6415 = vand.u32 %v5322, 4294901760
  %6416 = vmatmul.mubr.f32.gmra.mrb[0].mxu0 %v6415
  %v6417 = vpop.f32.mrb[0].mxu0
  %v6418 = vadd.f32 %v6253, %v6417
  %v6419 = vpop.f32.mrb[0].mxu0
  %6420 = vmatprep.mubr.f32.mxu0 0.0
  %v6421 = vand.u32 %v5325, 4294901760
  %6422 = vmatmul.mubr.f32.gmra.mrb[0].mxu0 %v6421
  %v6423 = vpop.f32.mrb[0].mxu0
  %v6424 = vadd.f32 %v6259, %v6423
  %v6425 = vpop.f32.mrb[0].mxu0
  %6426 = vmatprep.mubr.f32.mxu0 0.0
  %v6427 = vand.u32 %v5328, 4294901760
  %6428 = vmatmul.mubr.f32.gmra.mrb[0].mxu0 %v6427
  %v6429 = vpop.f32.mrb[0].mxu0
  %v6430 = vadd.f32 %v6265, %v6429
  %v6431 = vpop.f32.mrb[0].mxu0
  %6432 = vmatprep.mubr.f32.mxu0 0.0
  %v6433 = vand.u32 %v5331, 4294901760
  %6434 = vmatmul.mubr.f32.gmra.mrb[0].mxu0 %v6433
  %v6435 = vpop.f32.mrb[0].mxu0
  %v6436 = vadd.f32 %v6271, %v6435
  %v6437 = vpop.f32.mrb[0].mxu0
  %6438 = vmatprep.mubr.f32.mxu0 0.0
  %v6439 = vand.u32 %v5334, 4294901760
  %6440 = vmatmul.mubr.f32.gmra.mrb[0].mxu0 %v6439
  %v6441 = vpop.f32.mrb[0].mxu0
  %v6442 = vadd.f32 %v6277, %v6441
  %v6443 = vpop.f32.mrb[0].mxu0
  %6444 = vmatprep.mubr.f32.mxu0 0.0
  %v6445 = vand.u32 %v5337, 4294901760
  %6446 = vmatmul.mubr.f32.gmra.mrb[0].mxu0 %v6445
  %v6447 = vpop.f32.mrb[0].mxu0
  %v6448 = vadd.f32 %v6283, %v6447
  %v6449 = vpop.f32.mrb[0].mxu0
  %6450 = vmatprep.mubr.f32.mxu0 0.0
  %v6451 = vand.u32 %v5340, 4294901760
  %6452 = vmatmul.mubr.f32.gmra.mrb[0].mxu0 %v6451
  %v6453 = vpop.f32.mrb[0].mxu0
  %v6454 = vadd.f32 %v6289, %v6453
  %v6455 = vpop.f32.mrb[0].mxu0
  %6456 = vmatprep.mubr.f32.mxu0 0.0
  %v6457 = vand.u32 %v5343, 4294901760
  %6458 = vmatmul.mubr.f32.gmra.mrb[0].mxu0 %v6457
  %v6459 = vpop.f32.mrb[0].mxu0
  %v6460 = vadd.f32 %v6295, %v6459
  %v6461 = vpop.f32.mrb[0].mxu0
  %6462 = vmatprep.mubr.f32.mxu0 0.0
  %v6463 = vand.u32 %v5346, 4294901760
  %6464 = vmatmul.mubr.f32.gmra.mrb[0].mxu0 %v6463
  %v6465 = vpop.f32.mrb[0].mxu0
  %v6466 = vadd.f32 %v6301, %v6465
  %v6467 = vpop.f32.mrb[0].mxu0
  %6468 = vmatprep.mubr.f32.mxu0 0.0
  %v6469 = vand.u32 %v5349, 4294901760
  %6470 = vmatmul.mubr.f32.gmra.mrb[0].mxu0 %v6469
  %v6471 = vpop.f32.mrb[0].mxu0
  %v6472 = vadd.f32 %v6307, %v6471
  %v6473 = vpop.f32.mrb[0].mxu0
  %6474 = vmatprep.mubr.f32.mxu0 0.0
  %v6475 = vand.u32 %v5352, 4294901760
  %6476 = vmatmul.mubr.f32.gmra.mrb[0].mxu0 %v6475
  %v6477 = vpop.f32.mrb[0].mxu0
  %v6478 = vadd.f32 %v6313, %v6477
  %v6479 = vpop.f32.mrb[0].mxu0
  %6480 = vmatprep.mubr.f32.mxu0 0.0
  %v6481 = vand.u32 %v5355, 4294901760
  %6482 = vmatmul.mubr.f32.gmra.mrb[0].mxu0 %v6481
  %v6483 = vpop.f32.mrb[0].mxu0
  %v6484 = vadd.f32 %v6319, %v6483
  %v6485 = vpop.f32.mrb[0].mxu0
  %6486 = vdwg.mxu0
  %v6487 = vadd.f32 %v5180, %v6394
  %v6488 = vadd.f32 %v5181, %v6400
  %v6489 = vadd.f32 %v5182, %v6406
  %v6490 = vadd.f32 %v5183, %v6412
  %v6491 = vadd.f32 %v5184, %v6418
  %v6492 = vadd.f32 %v5185, %v6424
  %v6493 = vadd.f32 %v5186, %v6430
  %v6494 = vadd.f32 %v5187, %v6436
  %v6495 = vadd.f32 %v5188, %v6442
  %v6496 = vadd.f32 %v5189, %v6448
  %v6497 = vadd.f32 %v5190, %v6454
  %v6498 = vadd.f32 %v5191, %v6460
  %v6499 = vadd.f32 %v5192, %v6466
  %v6500 = vadd.f32 %v5193, %v6472
  %v6501 = vadd.f32 %v5194, %v6478
  %v6502 = vadd.f32 %v5195, %v6484
  %v6503 = vrot.slane %v1273, 2
  %v6504 = vrot.slane %v1279, 2
  %v6505 = vrot.slane %v1285, 2
  %v6506 = vrot.slane %v1291, 2
  %v6507 = vrot.slane %v1297, 2
  %v6508 = vrot.slane %v1303, 2
  %v6509 = vrot.slane %v1309, 2
  %v6510 = vrot.slane %v1315, 2
  %v6511 = vrot.slane %v1321, 2
  %v6512 = vrot.slane %v1327, 2
  %v6513 = vrot.slane %v1333, 2
  %v6514 = vrot.slane %v1339, 2
  %v6515 = vrot.slane %v1345, 2
  %v6516 = vrot.slane %v1351, 2
  %v6517 = vrot.slane %v1357, 2
  %v6518 = vrot.slane %v1363, 2
  %vm6519 = vcmp.lt.s32.totalorder %v1367, 6
  %v6520 = vsel %vm6519, %v6517, %v6518
  %v6521 = vsel %vm6519, %v6516, %v6517
  %v6522 = vsel %vm6519, %v6515, %v6516
  %v6523 = vsel %vm6519, %v6514, %v6515
  %v6524 = vsel %vm6519, %v6513, %v6514
  %v6525 = vsel %vm6519, %v6512, %v6513
  %v6526 = vsel %vm6519, %v6511, %v6512
  %v6527 = vsel %vm6519, %v6510, %v6511
  %v6528 = vsel %vm6519, %v6509, %v6510
  %v6529 = vsel %vm6519, %v6508, %v6509
  %v6530 = vsel %vm6519, %v6507, %v6508
  %v6531 = vsel %vm6519, %v6506, %v6507
  %v6532 = vsel %vm6519, %v6505, %v6506
  %v6533 = vsel %vm6519, %v6504, %v6505
  %v6534 = vsel %vm6519, %v6503, %v6504
  %v6535 = vsel %vm6519, %v6518, %v6503
  %v6536 = vadd.s32 %v1383, 2
  %v6537 = vadd.s32 %v1384, 2
  %v6538 = vadd.s32 %v1385, 2
  %v6539 = vadd.s32 %v1386, 2
  %v6540 = vadd.s32 %v1387, 2
  %v6541 = vadd.s32 %v1388, 2
  %v6542 = vadd.s32 %v1389, 2
  %v6543 = vadd.s32 %v1390, 2
  %v6544 = vadd.s32 %v1391, 2
  %v6545 = vadd.s32 %v1392, 2
  %v6546 = vadd.s32 %v1393, 2
  %v6547 = vadd.s32 %v1394, 2
  %v6548 = vadd.s32 %v1395, 2
  %v6549 = vadd.s32 %v1396, 2
  %v6550 = vadd.s32 %v1397, 2
  %v6551 = vadd.s32 %v1398, 2
  %vm6552 = vcmp.ge.s32.totalorder %v6536, 0
  %vm6553 = vcmp.ge.s32.totalorder %v6537, 0
  %vm6554 = vcmp.ge.s32.totalorder %v6538, 0
  %vm6555 = vcmp.ge.s32.totalorder %v6539, 0
  %vm6556 = vcmp.ge.s32.totalorder %v6540, 0
  %vm6557 = vcmp.ge.s32.totalorder %v6541, 0
  %vm6558 = vcmp.ge.s32.totalorder %v6542, 0
  %vm6559 = vcmp.ge.s32.totalorder %v6543, 0
  %vm6560 = vcmp.ge.s32.totalorder %v6544, 0
  %vm6561 = vcmp.ge.s32.totalorder %v6545, 0
  %vm6562 = vcmp.ge.s32.totalorder %v6546, 0
  %vm6563 = vcmp.ge.s32.totalorder %v6547, 0
  %vm6564 = vcmp.ge.s32.totalorder %v6548, 0
  %vm6565 = vcmp.ge.s32.totalorder %v6549, 0
  %vm6566 = vcmp.ge.s32.totalorder %v6550, 0
  %vm6567 = vcmp.ge.s32.totalorder %v6551, 0
  %vm6568 = vcmp.lt.s32.totalorder %v6536, 16
  %vm6569 = vcmp.lt.s32.totalorder %v6537, 16
  %vm6570 = vcmp.lt.s32.totalorder %v6538, 16
  %vm6571 = vcmp.lt.s32.totalorder %v6539, 16
  %vm6572 = vcmp.lt.s32.totalorder %v6540, 16
  %vm6573 = vcmp.lt.s32.totalorder %v6541, 16
  %vm6574 = vcmp.lt.s32.totalorder %v6542, 16
  %vm6575 = vcmp.lt.s32.totalorder %v6543, 16
  %vm6576 = vcmp.lt.s32.totalorder %v6544, 16
  %vm6577 = vcmp.lt.s32.totalorder %v6545, 16
  %vm6578 = vcmp.lt.s32.totalorder %v6546, 16
  %vm6579 = vcmp.lt.s32.totalorder %v6547, 16
  %vm6580 = vcmp.lt.s32.totalorder %v6548, 16
  %vm6581 = vcmp.lt.s32.totalorder %v6549, 16
  %vm6582 = vcmp.lt.s32.totalorder %v6550, 16
  %vm6583 = vcmp.lt.s32.totalorder %v6551, 16
  %vm6584 = vmand %vm6552, %vm6568
  %vm6585 = vmand %vm6553, %vm6569
  %vm6586 = vmand %vm6554, %vm6570
  %vm6587 = vmand %vm6555, %vm6571
  %vm6588 = vmand %vm6556, %vm6572
  %vm6589 = vmand %vm6557, %vm6573
  %vm6590 = vmand %vm6558, %vm6574
  %vm6591 = vmand %vm6559, %vm6575
  %vm6592 = vmand %vm6560, %vm6576
  %vm6593 = vmand %vm6561, %vm6577
  %vm6594 = vmand %vm6562, %vm6578
  %vm6595 = vmand %vm6563, %vm6579
  %vm6596 = vmand %vm6564, %vm6580
  %vm6597 = vmand %vm6565, %vm6581
  %vm6598 = vmand %vm6566, %vm6582
  %vm6599 = vmand %vm6567, %vm6583
  %v6600 = vsel %vm6584, %v6534, 0.0
  %v6601 = vsel %vm6585, %v6533, 0.0
  %v6602 = vsel %vm6586, %v6532, 0.0
  %v6603 = vsel %vm6587, %v6531, 0.0
  %v6604 = vsel %vm6588, %v6530, 0.0
  %v6605 = vsel %vm6589, %v6529, 0.0
  %v6606 = vsel %vm6590, %v6528, 0.0
  %v6607 = vsel %vm6591, %v6527, 0.0
  %v6608 = vsel %vm6592, %v6526, 0.0
  %v6609 = vsel %vm6593, %v6525, 0.0
  %v6610 = vsel %vm6594, %v6524, 0.0
  %v6611 = vsel %vm6595, %v6523, 0.0
  %v6612 = vsel %vm6596, %v6522, 0.0
  %v6613 = vsel %vm6597, %v6521, 0.0
  %v6614 = vsel %vm6598, %v6520, 0.0
  %v6615 = vsel %vm6599, %v6535, 0.0
  %v6617 = vsel %vm1645, %v6600, 0
  %v6620 = vsel %vm1645, %v6601, 0
  %v6623 = vsel %vm1645, %v6602, 0
  %v6626 = vsel %vm1645, %v6603, 0
  %v6629 = vsel %vm1645, %v6604, 0
  %v6632 = vsel %vm1645, %v6605, 0
  %v6635 = vsel %vm1645, %v6606, 0
  %v6638 = vsel %vm1645, %v6607, 0
  %v6641 = vsel %vm1645, %v6608, 0
  %v6644 = vsel %vm1645, %v6609, 0
  %v6647 = vsel %vm1645, %v6610, 0
  %v6650 = vsel %vm1645, %v6611, 0
  %v6653 = vsel %vm1645, %v6612, 0
  %v6656 = vsel %vm1645, %v6613, 0
  %v6659 = vsel %vm1645, %v6614, 0
  %v6662 = vsel %vm1645, %v6615, 0
  %6664 = vmatprep.subr.mxu0 0.0
  %v6665 = vand.u32 %v1415, 4294901760
  %6666 = vmatpush1.msra.mxu0 %v6665
  %6667 = vmatprep.subr.mxu0 0.0
  %v6668 = vand.u32 %v1416, 4294901760
  %6669 = vmatpush1.msra.mxu0 %v6668
  %6670 = vmatprep.subr.mxu0 0.0
  %v6671 = vand.u32 %v1417, 4294901760
  %6672 = vmatpush1.msra.mxu0 %v6671
  %6673 = vmatprep.subr.mxu0 0.0
  %v6674 = vand.u32 %v1418, 4294901760
  %6675 = vmatpush1.msra.mxu0 %v6674
  %6676 = vmatprep.subr.mxu0 0.0
  %6677 = vmatpush1.msra.mxu0 0.0
  %6678 = vmatprep.subr.mxu0 0.0
  %6679 = vmatpush1.msra.mxu0 0.0
  %6680 = vmatprep.subr.mxu0 0.0
  %6681 = vmatpush1.msra.mxu0 0.0
  %6682 = vmatprep.subr.mxu0 0.0
  %6683 = vmatpush1.msra.mxu0 0.0
  %6684 = vmatprep.subr.mxu0 0.0
  %6685 = vmatpush1.msra.mxu0 0.0
  %6686 = vmatprep.subr.mxu0 0.0
  %6687 = vmatpush1.msra.mxu0 0.0
  %6688 = vmatprep.subr.mxu0 0.0
  %6689 = vmatpush1.msra.mxu0 0.0
  %6690 = vmatprep.subr.mxu0 0.0
  %6691 = vmatpush1.msra.mxu0 0.0
  %6692 = vmatprep.subr.mxu0 0.0
  %6693 = vmatpush1.msra.mxu0 0.0
  %6694 = vmatprep.subr.mxu0 0.0
  %6695 = vmatpush1.msra.mxu0 0.0
  %6696 = vmatprep.subr.mxu0 0.0
  %6697 = vmatpush1.msra.mxu0 0.0
  %6698 = vmatprep.subr.mxu0 0.0
  %6699 = vmatpush1.msra.mxu0 0.0
  %6700 = vmatprep.subr.mxu0 0.0
  %6701 = vmatpush1.msra.mxu0 0.0
  %6702 = vmatprep.subr.mxu0 0.0
  %6703 = vmatpush1.msra.mxu0 0.0
  %6704 = vmatprep.subr.mxu0 0.0
  %6705 = vmatpush1.msra.mxu0 0.0
  %6706 = vmatprep.subr.mxu0 0.0
  %6707 = vmatpush1.msra.mxu0 0.0
  %6708 = vmatprep.subr.mxu0 0.0
  %6709 = vmatpush1.msra.mxu0 0.0
  %6710 = vmatprep.subr.mxu0 0.0
  %6711 = vmatpush1.msra.mxu0 0.0
  %6712 = vmatprep.subr.mxu0 0.0
  %6713 = vmatpush1.msra.mxu0 0.0
  %6714 = vmatprep.subr.mxu0 0.0
  %6715 = vmatpush1.msra.mxu0 0.0
  %6716 = vmatprep.subr.mxu0 0.0
  %6717 = vmatpush1.msra.mxu0 0.0
  %6718 = vmatprep.subr.mxu0 0.0
  %6719 = vmatpush1.msra.mxu0 0.0
  %6720 = vmatprep.subr.mxu0 0.0
  %6721 = vmatpush1.msra.mxu0 0.0
  %6722 = vmatprep.subr.mxu0 0.0
  %6723 = vmatpush1.msra.mxu0 0.0
  %6724 = vmatprep.subr.mxu0 0.0
  %6725 = vmatpush1.msra.mxu0 0.0
  %6726 = vmatprep.subr.mxu0 0.0
  %6727 = vmatpush1.msra.mxu0 0.0
  %6728 = vmatprep.subr.mxu0 0.0
  %6729 = vmatpush1.msra.mxu0 0.0
  %6730 = vmatprep.subr.mxu0 0.0
  %6731 = vmatpush1.msra.mxu0 0.0
  %6732 = vmatprep.mubr.f32.mxu0 0.0
  %v6733 = vand.u32 %v6617, 4294901760
  %v6734 = vsub.f32 %v6617, %v6733
  %v6735 = vand.u32 %v6734, 4294901760
  %v6736 = vsub.f32 %v6734, %v6735
  %v6737 = vand.u32 %v6736, 4294901760
  %6738 = vmatmul.mubr.f32.gmra.mrb[0].mxu0 %v6737
  %v6739 = vpop.f32.mrb[0].mxu0
  %v6740 = vadd.f32 0.0, %v6739
  %v6741 = vpop.f32.mrb[0].mxu0
  %6742 = vmatprep.mubr.f32.mxu0 0.0
  %v6743 = vand.u32 %v6620, 4294901760
  %v6744 = vsub.f32 %v6620, %v6743
  %v6745 = vand.u32 %v6744, 4294901760
  %v6746 = vsub.f32 %v6744, %v6745
  %v6747 = vand.u32 %v6746, 4294901760
  %6748 = vmatmul.mubr.f32.gmra.mrb[0].mxu0 %v6747
  %v6749 = vpop.f32.mrb[0].mxu0
  %v6750 = vadd.f32 0.0, %v6749
  %v6751 = vpop.f32.mrb[0].mxu0
  %6752 = vmatprep.mubr.f32.mxu0 0.0
  %v6753 = vand.u32 %v6623, 4294901760
  %v6754 = vsub.f32 %v6623, %v6753
  %v6755 = vand.u32 %v6754, 4294901760
  %v6756 = vsub.f32 %v6754, %v6755
  %v6757 = vand.u32 %v6756, 4294901760
  %6758 = vmatmul.mubr.f32.gmra.mrb[0].mxu0 %v6757
  %v6759 = vpop.f32.mrb[0].mxu0
  %v6760 = vadd.f32 0.0, %v6759
  %v6761 = vpop.f32.mrb[0].mxu0
  %6762 = vmatprep.mubr.f32.mxu0 0.0
  %v6763 = vand.u32 %v6626, 4294901760
  %v6764 = vsub.f32 %v6626, %v6763
  %v6765 = vand.u32 %v6764, 4294901760
  %v6766 = vsub.f32 %v6764, %v6765
  %v6767 = vand.u32 %v6766, 4294901760
  %6768 = vmatmul.mubr.f32.gmra.mrb[0].mxu0 %v6767
  %v6769 = vpop.f32.mrb[0].mxu0
  %v6770 = vadd.f32 0.0, %v6769
  %v6771 = vpop.f32.mrb[0].mxu0
  %6772 = vmatprep.mubr.f32.mxu0 0.0
  %v6773 = vand.u32 %v6629, 4294901760
  %v6774 = vsub.f32 %v6629, %v6773
  %v6775 = vand.u32 %v6774, 4294901760
  %v6776 = vsub.f32 %v6774, %v6775
  %v6777 = vand.u32 %v6776, 4294901760
  %6778 = vmatmul.mubr.f32.gmra.mrb[0].mxu0 %v6777
  %v6779 = vpop.f32.mrb[0].mxu0
  %v6780 = vadd.f32 0.0, %v6779
  %v6781 = vpop.f32.mrb[0].mxu0
  %6782 = vmatprep.mubr.f32.mxu0 0.0
  %v6783 = vand.u32 %v6632, 4294901760
  %v6784 = vsub.f32 %v6632, %v6783
  %v6785 = vand.u32 %v6784, 4294901760
  %v6786 = vsub.f32 %v6784, %v6785
  %v6787 = vand.u32 %v6786, 4294901760
  %6788 = vmatmul.mubr.f32.gmra.mrb[0].mxu0 %v6787
  %v6789 = vpop.f32.mrb[0].mxu0
  %v6790 = vadd.f32 0.0, %v6789
  %v6791 = vpop.f32.mrb[0].mxu0
  %6792 = vmatprep.mubr.f32.mxu0 0.0
  %v6793 = vand.u32 %v6635, 4294901760
  %v6794 = vsub.f32 %v6635, %v6793
  %v6795 = vand.u32 %v6794, 4294901760
  %v6796 = vsub.f32 %v6794, %v6795
  %v6797 = vand.u32 %v6796, 4294901760
  %6798 = vmatmul.mubr.f32.gmra.mrb[0].mxu0 %v6797
  %v6799 = vpop.f32.mrb[0].mxu0
  %v6800 = vadd.f32 0.0, %v6799
  %v6801 = vpop.f32.mrb[0].mxu0
  %6802 = vmatprep.mubr.f32.mxu0 0.0
  %v6803 = vand.u32 %v6638, 4294901760
  %v6804 = vsub.f32 %v6638, %v6803
  %v6805 = vand.u32 %v6804, 4294901760
  %v6806 = vsub.f32 %v6804, %v6805
  %v6807 = vand.u32 %v6806, 4294901760
  %6808 = vmatmul.mubr.f32.gmra.mrb[0].mxu0 %v6807
  %v6809 = vpop.f32.mrb[0].mxu0
  %v6810 = vadd.f32 0.0, %v6809
  %v6811 = vpop.f32.mrb[0].mxu0
  %6812 = vmatprep.mubr.f32.mxu0 0.0
  %v6813 = vand.u32 %v6641, 4294901760
  %v6814 = vsub.f32 %v6641, %v6813
  %v6815 = vand.u32 %v6814, 4294901760
  %v6816 = vsub.f32 %v6814, %v6815
  %v6817 = vand.u32 %v6816, 4294901760
  %6818 = vmatmul.mubr.f32.gmra.mrb[0].mxu0 %v6817
  %v6819 = vpop.f32.mrb[0].mxu0
  %v6820 = vadd.f32 0.0, %v6819
  %v6821 = vpop.f32.mrb[0].mxu0
  %6822 = vmatprep.mubr.f32.mxu0 0.0
  %v6823 = vand.u32 %v6644, 4294901760
  %v6824 = vsub.f32 %v6644, %v6823
  %v6825 = vand.u32 %v6824, 4294901760
  %v6826 = vsub.f32 %v6824, %v6825
  %v6827 = vand.u32 %v6826, 4294901760
  %6828 = vmatmul.mubr.f32.gmra.mrb[0].mxu0 %v6827
  %v6829 = vpop.f32.mrb[0].mxu0
  %v6830 = vadd.f32 0.0, %v6829
  %v6831 = vpop.f32.mrb[0].mxu0
  %6832 = vmatprep.mubr.f32.mxu0 0.0
  %v6833 = vand.u32 %v6647, 4294901760
  %v6834 = vsub.f32 %v6647, %v6833
  %v6835 = vand.u32 %v6834, 4294901760
  %v6836 = vsub.f32 %v6834, %v6835
  %v6837 = vand.u32 %v6836, 4294901760
  %6838 = vmatmul.mubr.f32.gmra.mrb[0].mxu0 %v6837
  %v6839 = vpop.f32.mrb[0].mxu0
  %v6840 = vadd.f32 0.0, %v6839
  %v6841 = vpop.f32.mrb[0].mxu0
  %6842 = vmatprep.mubr.f32.mxu0 0.0
  %v6843 = vand.u32 %v6650, 4294901760
  %v6844 = vsub.f32 %v6650, %v6843
  %v6845 = vand.u32 %v6844, 4294901760
  %v6846 = vsub.f32 %v6844, %v6845
  %v6847 = vand.u32 %v6846, 4294901760
  %6848 = vmatmul.mubr.f32.gmra.mrb[0].mxu0 %v6847
  %v6849 = vpop.f32.mrb[0].mxu0
  %v6850 = vadd.f32 0.0, %v6849
  %v6851 = vpop.f32.mrb[0].mxu0
  %6852 = vmatprep.mubr.f32.mxu0 0.0
  %v6853 = vand.u32 %v6653, 4294901760
  %v6854 = vsub.f32 %v6653, %v6853
  %v6855 = vand.u32 %v6854, 4294901760
  %v6856 = vsub.f32 %v6854, %v6855
  %v6857 = vand.u32 %v6856, 4294901760
  %6858 = vmatmul.mubr.f32.gmra.mrb[0].mxu0 %v6857
  %v6859 = vpop.f32.mrb[0].mxu0
  %v6860 = vadd.f32 0.0, %v6859
  %v6861 = vpop.f32.mrb[0].mxu0
  %6862 = vmatprep.mubr.f32.mxu0 0.0
  %v6863 = vand.u32 %v6656, 4294901760
  %v6864 = vsub.f32 %v6656, %v6863
  %v6865 = vand.u32 %v6864, 4294901760
  %v6866 = vsub.f32 %v6864, %v6865
  %v6867 = vand.u32 %v6866, 4294901760
  %6868 = vmatmul.mubr.f32.gmra.mrb[0].mxu0 %v6867
  %v6869 = vpop.f32.mrb[0].mxu0
  %v6870 = vadd.f32 0.0, %v6869
  %v6871 = vpop.f32.mrb[0].mxu0
  %6872 = vmatprep.mubr.f32.mxu0 0.0
  %v6873 = vand.u32 %v6659, 4294901760
  %v6874 = vsub.f32 %v6659, %v6873
  %v6875 = vand.u32 %v6874, 4294901760
  %v6876 = vsub.f32 %v6874, %v6875
  %v6877 = vand.u32 %v6876, 4294901760
  %6878 = vmatmul.mubr.f32.gmra.mrb[0].mxu0 %v6877
  %v6879 = vpop.f32.mrb[0].mxu0
  %v6880 = vadd.f32 0.0, %v6879
  %v6881 = vpop.f32.mrb[0].mxu0
  %6882 = vmatprep.mubr.f32.mxu0 0.0
  %v6883 = vand.u32 %v6662, 4294901760
  %v6884 = vsub.f32 %v6662, %v6883
  %v6885 = vand.u32 %v6884, 4294901760
  %v6886 = vsub.f32 %v6884, %v6885
  %v6887 = vand.u32 %v6886, 4294901760
  %6888 = vmatmul.mubr.f32.gmra.mrb[0].mxu0 %v6887
  %v6889 = vpop.f32.mrb[0].mxu0
  %v6890 = vadd.f32 0.0, %v6889
  %v6891 = vpop.f32.mrb[0].mxu0
  %6892 = vdwg.mxu0
  %6893 = vmatprep.subr.mxu0 0.0
  %v6894 = vand.u32 %v1415, 4294901760
  %v6895 = vsub.f32 %v1415, %v6894
  %v6896 = vand.u32 %v6895, 4294901760
  %v6897 = vsub.f32 %v6895, %v6896
  %v6898 = vand.u32 %v6897, 4294901760
  %6899 = vmatpush1.msra.mxu0 %v6898
  %6900 = vmatprep.subr.mxu0 0.0
  %v6901 = vand.u32 %v1416, 4294901760
  %v6902 = vsub.f32 %v1416, %v6901
  %v6903 = vand.u32 %v6902, 4294901760
  %v6904 = vsub.f32 %v6902, %v6903
  %v6905 = vand.u32 %v6904, 4294901760
  %6906 = vmatpush1.msra.mxu0 %v6905
  %6907 = vmatprep.subr.mxu0 0.0
  %v6908 = vand.u32 %v1417, 4294901760
  %v6909 = vsub.f32 %v1417, %v6908
  %v6910 = vand.u32 %v6909, 4294901760
  %v6911 = vsub.f32 %v6909, %v6910
  %v6912 = vand.u32 %v6911, 4294901760
  %6913 = vmatpush1.msra.mxu0 %v6912
  %6914 = vmatprep.subr.mxu0 0.0
  %v6915 = vand.u32 %v1418, 4294901760
  %v6916 = vsub.f32 %v1418, %v6915
  %v6917 = vand.u32 %v6916, 4294901760
  %v6918 = vsub.f32 %v6916, %v6917
  %v6919 = vand.u32 %v6918, 4294901760
  %6920 = vmatpush1.msra.mxu0 %v6919
  %6921 = vmatprep.subr.mxu0 0.0
  %6922 = vmatpush1.msra.mxu0 0.0
  %6923 = vmatprep.subr.mxu0 0.0
  %6924 = vmatpush1.msra.mxu0 0.0
  %6925 = vmatprep.subr.mxu0 0.0
  %6926 = vmatpush1.msra.mxu0 0.0
  %6927 = vmatprep.subr.mxu0 0.0
  %6928 = vmatpush1.msra.mxu0 0.0
  %6929 = vmatprep.subr.mxu0 0.0
  %6930 = vmatpush1.msra.mxu0 0.0
  %6931 = vmatprep.subr.mxu0 0.0
  %6932 = vmatpush1.msra.mxu0 0.0
  %6933 = vmatprep.subr.mxu0 0.0
  %6934 = vmatpush1.msra.mxu0 0.0
  %6935 = vmatprep.subr.mxu0 0.0
  %6936 = vmatpush1.msra.mxu0 0.0
  %6937 = vmatprep.subr.mxu0 0.0
  %6938 = vmatpush1.msra.mxu0 0.0
  %6939 = vmatprep.subr.mxu0 0.0
  %6940 = vmatpush1.msra.mxu0 0.0
  %6941 = vmatprep.subr.mxu0 0.0
  %6942 = vmatpush1.msra.mxu0 0.0
  %6943 = vmatprep.subr.mxu0 0.0
  %6944 = vmatpush1.msra.mxu0 0.0
  %6945 = vmatprep.subr.mxu0 0.0
  %6946 = vmatpush1.msra.mxu0 0.0
  %6947 = vmatprep.subr.mxu0 0.0
  %6948 = vmatpush1.msra.mxu0 0.0
  %6949 = vmatprep.subr.mxu0 0.0
  %6950 = vmatpush1.msra.mxu0 0.0
  %6951 = vmatprep.subr.mxu0 0.0
  %6952 = vmatpush1.msra.mxu0 0.0
  %6953 = vmatprep.subr.mxu0 0.0
  %6954 = vmatpush1.msra.mxu0 0.0
  %6955 = vmatprep.subr.mxu0 0.0
  %6956 = vmatpush1.msra.mxu0 0.0
  %6957 = vmatprep.subr.mxu0 0.0
  %6958 = vmatpush1.msra.mxu0 0.0
  %6959 = vmatprep.subr.mxu0 0.0
  %6960 = vmatpush1.msra.mxu0 0.0
  %6961 = vmatprep.subr.mxu0 0.0
  %6962 = vmatpush1.msra.mxu0 0.0
  %6963 = vmatprep.subr.mxu0 0.0
  %6964 = vmatpush1.msra.mxu0 0.0
  %6965 = vmatprep.subr.mxu0 0.0
  %6966 = vmatpush1.msra.mxu0 0.0
  %6967 = vmatprep.subr.mxu0 0.0
  %6968 = vmatpush1.msra.mxu0 0.0
  %6969 = vmatprep.subr.mxu0 0.0
  %6970 = vmatpush1.msra.mxu0 0.0
  %6971 = vmatprep.subr.mxu0 0.0
  %6972 = vmatpush1.msra.mxu0 0.0
  %6973 = vmatprep.subr.mxu0 0.0
  %6974 = vmatpush1.msra.mxu0 0.0
  %6975 = vmatprep.subr.mxu0 0.0
  %6976 = vmatpush1.msra.mxu0 0.0
  %6977 = vmatprep.mubr.f32.mxu0 0.0
  %v6978 = vand.u32 %v6617, 4294901760
  %6979 = vmatmul.mubr.f32.gmra.mrb[0].mxu0 %v6978
  %v6980 = vpop.f32.mrb[0].mxu0
  %v6981 = vadd.f32 %v6740, %v6980
  %v6982 = vpop.f32.mrb[0].mxu0
  %6983 = vmatprep.mubr.f32.mxu0 0.0
  %v6984 = vand.u32 %v6620, 4294901760
  %6985 = vmatmul.mubr.f32.gmra.mrb[0].mxu0 %v6984
  %v6986 = vpop.f32.mrb[0].mxu0
  %v6987 = vadd.f32 %v6750, %v6986
  %v6988 = vpop.f32.mrb[0].mxu0
  %6989 = vmatprep.mubr.f32.mxu0 0.0
  %v6990 = vand.u32 %v6623, 4294901760
  %6991 = vmatmul.mubr.f32.gmra.mrb[0].mxu0 %v6990
  %v6992 = vpop.f32.mrb[0].mxu0
  %v6993 = vadd.f32 %v6760, %v6992
  %v6994 = vpop.f32.mrb[0].mxu0
  %6995 = vmatprep.mubr.f32.mxu0 0.0
  %v6996 = vand.u32 %v6626, 4294901760
  %6997 = vmatmul.mubr.f32.gmra.mrb[0].mxu0 %v6996
  %v6998 = vpop.f32.mrb[0].mxu0
  %v6999 = vadd.f32 %v6770, %v6998
  %v7000 = vpop.f32.mrb[0].mxu0
  %7001 = vmatprep.mubr.f32.mxu0 0.0
  %v7002 = vand.u32 %v6629, 4294901760
  %7003 = vmatmul.mubr.f32.gmra.mrb[0].mxu0 %v7002
  %v7004 = vpop.f32.mrb[0].mxu0
  %v7005 = vadd.f32 %v6780, %v7004
  %v7006 = vpop.f32.mrb[0].mxu0
  %7007 = vmatprep.mubr.f32.mxu0 0.0
  %v7008 = vand.u32 %v6632, 4294901760
  %7009 = vmatmul.mubr.f32.gmra.mrb[0].mxu0 %v7008
  %v7010 = vpop.f32.mrb[0].mxu0
  %v7011 = vadd.f32 %v6790, %v7010
  %v7012 = vpop.f32.mrb[0].mxu0
  %7013 = vmatprep.mubr.f32.mxu0 0.0
  %v7014 = vand.u32 %v6635, 4294901760
  %7015 = vmatmul.mubr.f32.gmra.mrb[0].mxu0 %v7014
  %v7016 = vpop.f32.mrb[0].mxu0
  %v7017 = vadd.f32 %v6800, %v7016
  %v7018 = vpop.f32.mrb[0].mxu0
  %7019 = vmatprep.mubr.f32.mxu0 0.0
  %v7020 = vand.u32 %v6638, 4294901760
  %7021 = vmatmul.mubr.f32.gmra.mrb[0].mxu0 %v7020
  %v7022 = vpop.f32.mrb[0].mxu0
  %v7023 = vadd.f32 %v6810, %v7022
  %v7024 = vpop.f32.mrb[0].mxu0
  %7025 = vmatprep.mubr.f32.mxu0 0.0
  %v7026 = vand.u32 %v6641, 4294901760
  %7027 = vmatmul.mubr.f32.gmra.mrb[0].mxu0 %v7026
  %v7028 = vpop.f32.mrb[0].mxu0
  %v7029 = vadd.f32 %v6820, %v7028
  %v7030 = vpop.f32.mrb[0].mxu0
  %7031 = vmatprep.mubr.f32.mxu0 0.0
  %v7032 = vand.u32 %v6644, 4294901760
  %7033 = vmatmul.mubr.f32.gmra.mrb[0].mxu0 %v7032
  %v7034 = vpop.f32.mrb[0].mxu0
  %v7035 = vadd.f32 %v6830, %v7034
  %v7036 = vpop.f32.mrb[0].mxu0
  %7037 = vmatprep.mubr.f32.mxu0 0.0
  %v7038 = vand.u32 %v6647, 4294901760
  %7039 = vmatmul.mubr.f32.gmra.mrb[0].mxu0 %v7038
  %v7040 = vpop.f32.mrb[0].mxu0
  %v7041 = vadd.f32 %v6840, %v7040
  %v7042 = vpop.f32.mrb[0].mxu0
  %7043 = vmatprep.mubr.f32.mxu0 0.0
  %v7044 = vand.u32 %v6650, 4294901760
  %7045 = vmatmul.mubr.f32.gmra.mrb[0].mxu0 %v7044
  %v7046 = vpop.f32.mrb[0].mxu0
  %v7047 = vadd.f32 %v6850, %v7046
  %v7048 = vpop.f32.mrb[0].mxu0
  %7049 = vmatprep.mubr.f32.mxu0 0.0
  %v7050 = vand.u32 %v6653, 4294901760
  %7051 = vmatmul.mubr.f32.gmra.mrb[0].mxu0 %v7050
  %v7052 = vpop.f32.mrb[0].mxu0
  %v7053 = vadd.f32 %v6860, %v7052
  %v7054 = vpop.f32.mrb[0].mxu0
  %7055 = vmatprep.mubr.f32.mxu0 0.0
  %v7056 = vand.u32 %v6656, 4294901760
  %7057 = vmatmul.mubr.f32.gmra.mrb[0].mxu0 %v7056
  %v7058 = vpop.f32.mrb[0].mxu0
  %v7059 = vadd.f32 %v6870, %v7058
  %v7060 = vpop.f32.mrb[0].mxu0
  %7061 = vmatprep.mubr.f32.mxu0 0.0
  %v7062 = vand.u32 %v6659, 4294901760
  %7063 = vmatmul.mubr.f32.gmra.mrb[0].mxu0 %v7062
  %v7064 = vpop.f32.mrb[0].mxu0
  %v7065 = vadd.f32 %v6880, %v7064
  %v7066 = vpop.f32.mrb[0].mxu0
  %7067 = vmatprep.mubr.f32.mxu0 0.0
  %v7068 = vand.u32 %v6662, 4294901760
  %7069 = vmatmul.mubr.f32.gmra.mrb[0].mxu0 %v7068
  %v7070 = vpop.f32.mrb[0].mxu0
  %v7071 = vadd.f32 %v6890, %v7070
  %v7072 = vpop.f32.mrb[0].mxu0
  %7073 = vdwg.mxu0
  %7074 = vmatprep.subr.mxu0 0.0
  %v7075 = vand.u32 %v1415, 4294901760
  %v7076 = vsub.f32 %v1415, %v7075
  %7077 = vmatpush1.msra.mxu0 %v7076
  %7078 = vmatprep.subr.mxu0 0.0
  %v7079 = vand.u32 %v1416, 4294901760
  %v7080 = vsub.f32 %v1416, %v7079
  %7081 = vmatpush1.msra.mxu0 %v7080
  %7082 = vmatprep.subr.mxu0 0.0
  %v7083 = vand.u32 %v1417, 4294901760
  %v7084 = vsub.f32 %v1417, %v7083
  %7085 = vmatpush1.msra.mxu0 %v7084
  %7086 = vmatprep.subr.mxu0 0.0
  %v7087 = vand.u32 %v1418, 4294901760
  %v7088 = vsub.f32 %v1418, %v7087
  %7089 = vmatpush1.msra.mxu0 %v7088
  %7090 = vmatprep.subr.mxu0 0.0
  %7091 = vmatpush1.msra.mxu0 0.0
  %7092 = vmatprep.subr.mxu0 0.0
  %7093 = vmatpush1.msra.mxu0 0.0
  %7094 = vmatprep.subr.mxu0 0.0
  %7095 = vmatpush1.msra.mxu0 0.0
  %7096 = vmatprep.subr.mxu0 0.0
  %7097 = vmatpush1.msra.mxu0 0.0
  %7098 = vmatprep.subr.mxu0 0.0
  %7099 = vmatpush1.msra.mxu0 0.0
  %7100 = vmatprep.subr.mxu0 0.0
  %7101 = vmatpush1.msra.mxu0 0.0
  %7102 = vmatprep.subr.mxu0 0.0
  %7103 = vmatpush1.msra.mxu0 0.0
  %7104 = vmatprep.subr.mxu0 0.0
  %7105 = vmatpush1.msra.mxu0 0.0
  %7106 = vmatprep.subr.mxu0 0.0
  %7107 = vmatpush1.msra.mxu0 0.0
  %7108 = vmatprep.subr.mxu0 0.0
  %7109 = vmatpush1.msra.mxu0 0.0
  %7110 = vmatprep.subr.mxu0 0.0
  %7111 = vmatpush1.msra.mxu0 0.0
  %7112 = vmatprep.subr.mxu0 0.0
  %7113 = vmatpush1.msra.mxu0 0.0
  %7114 = vmatprep.subr.mxu0 0.0
  %7115 = vmatpush1.msra.mxu0 0.0
  %7116 = vmatprep.subr.mxu0 0.0
  %7117 = vmatpush1.msra.mxu0 0.0
  %7118 = vmatprep.subr.mxu0 0.0
  %7119 = vmatpush1.msra.mxu0 0.0
  %7120 = vmatprep.subr.mxu0 0.0
  %7121 = vmatpush1.msra.mxu0 0.0
  %7122 = vmatprep.subr.mxu0 0.0
  %7123 = vmatpush1.msra.mxu0 0.0
  %7124 = vmatprep.subr.mxu0 0.0
  %7125 = vmatpush1.msra.mxu0 0.0
  %7126 = vmatprep.subr.mxu0 0.0
  %7127 = vmatpush1.msra.mxu0 0.0
  %7128 = vmatprep.subr.mxu0 0.0
  %7129 = vmatpush1.msra.mxu0 0.0
  %7130 = vmatprep.subr.mxu0 0.0
  %7131 = vmatpush1.msra.mxu0 0.0
  %7132 = vmatprep.subr.mxu0 0.0
  %7133 = vmatpush1.msra.mxu0 0.0
  %7134 = vmatprep.subr.mxu0 0.0
  %7135 = vmatpush1.msra.mxu0 0.0
  %7136 = vmatprep.subr.mxu0 0.0
  %7137 = vmatpush1.msra.mxu0 0.0
  %7138 = vmatprep.subr.mxu0 0.0
  %7139 = vmatpush1.msra.mxu0 0.0
  %7140 = vmatprep.subr.mxu0 0.0
  %7141 = vmatpush1.msra.mxu0 0.0
  %7142 = vmatprep.subr.mxu0 0.0
  %7143 = vmatpush1.msra.mxu0 0.0
  %7144 = vmatprep.subr.mxu0 0.0
  %7145 = vmatpush1.msra.mxu0 0.0
  %7146 = vmatprep.mubr.f32.mxu0 0.0
  %v7147 = vand.u32 %v6617, 4294901760
  %v7148 = vsub.f32 %v6617, %v7147
  %7149 = vmatmul.mubr.f32.gmra.mrb[0].mxu0 %v7148
  %v7150 = vpop.f32.mrb[0].mxu0
  %v7151 = vadd.f32 %v6981, %v7150
  %v7152 = vpop.f32.mrb[0].mxu0
  %7153 = vmatprep.mubr.f32.mxu0 0.0
  %v7154 = vand.u32 %v6620, 4294901760
  %v7155 = vsub.f32 %v6620, %v7154
  %7156 = vmatmul.mubr.f32.gmra.mrb[0].mxu0 %v7155
  %v7157 = vpop.f32.mrb[0].mxu0
  %v7158 = vadd.f32 %v6987, %v7157
  %v7159 = vpop.f32.mrb[0].mxu0
  %7160 = vmatprep.mubr.f32.mxu0 0.0
  %v7161 = vand.u32 %v6623, 4294901760
  %v7162 = vsub.f32 %v6623, %v7161
  %7163 = vmatmul.mubr.f32.gmra.mrb[0].mxu0 %v7162
  %v7164 = vpop.f32.mrb[0].mxu0
  %v7165 = vadd.f32 %v6993, %v7164
  %v7166 = vpop.f32.mrb[0].mxu0
  %7167 = vmatprep.mubr.f32.mxu0 0.0
  %v7168 = vand.u32 %v6626, 4294901760
  %v7169 = vsub.f32 %v6626, %v7168
  %7170 = vmatmul.mubr.f32.gmra.mrb[0].mxu0 %v7169
  %v7171 = vpop.f32.mrb[0].mxu0
  %v7172 = vadd.f32 %v6999, %v7171
  %v7173 = vpop.f32.mrb[0].mxu0
  %7174 = vmatprep.mubr.f32.mxu0 0.0
  %v7175 = vand.u32 %v6629, 4294901760
  %v7176 = vsub.f32 %v6629, %v7175
  %7177 = vmatmul.mubr.f32.gmra.mrb[0].mxu0 %v7176
  %v7178 = vpop.f32.mrb[0].mxu0
  %v7179 = vadd.f32 %v7005, %v7178
  %v7180 = vpop.f32.mrb[0].mxu0
  %7181 = vmatprep.mubr.f32.mxu0 0.0
  %v7182 = vand.u32 %v6632, 4294901760
  %v7183 = vsub.f32 %v6632, %v7182
  %7184 = vmatmul.mubr.f32.gmra.mrb[0].mxu0 %v7183
  %v7185 = vpop.f32.mrb[0].mxu0
  %v7186 = vadd.f32 %v7011, %v7185
  %v7187 = vpop.f32.mrb[0].mxu0
  %7188 = vmatprep.mubr.f32.mxu0 0.0
  %v7189 = vand.u32 %v6635, 4294901760
  %v7190 = vsub.f32 %v6635, %v7189
  %7191 = vmatmul.mubr.f32.gmra.mrb[0].mxu0 %v7190
  %v7192 = vpop.f32.mrb[0].mxu0
  %v7193 = vadd.f32 %v7017, %v7192
  %v7194 = vpop.f32.mrb[0].mxu0
  %7195 = vmatprep.mubr.f32.mxu0 0.0
  %v7196 = vand.u32 %v6638, 4294901760
  %v7197 = vsub.f32 %v6638, %v7196
  %7198 = vmatmul.mubr.f32.gmra.mrb[0].mxu0 %v7197
  %v7199 = vpop.f32.mrb[0].mxu0
  %v7200 = vadd.f32 %v7023, %v7199
  %v7201 = vpop.f32.mrb[0].mxu0
  %7202 = vmatprep.mubr.f32.mxu0 0.0
  %v7203 = vand.u32 %v6641, 4294901760
  %v7204 = vsub.f32 %v6641, %v7203
  %7205 = vmatmul.mubr.f32.gmra.mrb[0].mxu0 %v7204
  %v7206 = vpop.f32.mrb[0].mxu0
  %v7207 = vadd.f32 %v7029, %v7206
  %v7208 = vpop.f32.mrb[0].mxu0
  %7209 = vmatprep.mubr.f32.mxu0 0.0
  %v7210 = vand.u32 %v6644, 4294901760
  %v7211 = vsub.f32 %v6644, %v7210
  %7212 = vmatmul.mubr.f32.gmra.mrb[0].mxu0 %v7211
  %v7213 = vpop.f32.mrb[0].mxu0
  %v7214 = vadd.f32 %v7035, %v7213
  %v7215 = vpop.f32.mrb[0].mxu0
  %7216 = vmatprep.mubr.f32.mxu0 0.0
  %v7217 = vand.u32 %v6647, 4294901760
  %v7218 = vsub.f32 %v6647, %v7217
  %7219 = vmatmul.mubr.f32.gmra.mrb[0].mxu0 %v7218
  %v7220 = vpop.f32.mrb[0].mxu0
  %v7221 = vadd.f32 %v7041, %v7220
  %v7222 = vpop.f32.mrb[0].mxu0
  %7223 = vmatprep.mubr.f32.mxu0 0.0
  %v7224 = vand.u32 %v6650, 4294901760
  %v7225 = vsub.f32 %v6650, %v7224
  %7226 = vmatmul.mubr.f32.gmra.mrb[0].mxu0 %v7225
  %v7227 = vpop.f32.mrb[0].mxu0
  %v7228 = vadd.f32 %v7047, %v7227
  %v7229 = vpop.f32.mrb[0].mxu0
  %7230 = vmatprep.mubr.f32.mxu0 0.0
  %v7231 = vand.u32 %v6653, 4294901760
  %v7232 = vsub.f32 %v6653, %v7231
  %7233 = vmatmul.mubr.f32.gmra.mrb[0].mxu0 %v7232
  %v7234 = vpop.f32.mrb[0].mxu0
  %v7235 = vadd.f32 %v7053, %v7234
  %v7236 = vpop.f32.mrb[0].mxu0
  %7237 = vmatprep.mubr.f32.mxu0 0.0
  %v7238 = vand.u32 %v6656, 4294901760
  %v7239 = vsub.f32 %v6656, %v7238
  %7240 = vmatmul.mubr.f32.gmra.mrb[0].mxu0 %v7239
  %v7241 = vpop.f32.mrb[0].mxu0
  %v7242 = vadd.f32 %v7059, %v7241
  %v7243 = vpop.f32.mrb[0].mxu0
  %7244 = vmatprep.mubr.f32.mxu0 0.0
  %v7245 = vand.u32 %v6659, 4294901760
  %v7246 = vsub.f32 %v6659, %v7245
  %7247 = vmatmul.mubr.f32.gmra.mrb[0].mxu0 %v7246
  %v7248 = vpop.f32.mrb[0].mxu0
  %v7249 = vadd.f32 %v7065, %v7248
  %v7250 = vpop.f32.mrb[0].mxu0
  %7251 = vmatprep.mubr.f32.mxu0 0.0
  %v7252 = vand.u32 %v6662, 4294901760
  %v7253 = vsub.f32 %v6662, %v7252
  %7254 = vmatmul.mubr.f32.gmra.mrb[0].mxu0 %v7253
  %v7255 = vpop.f32.mrb[0].mxu0
  %v7256 = vadd.f32 %v7071, %v7255
  %v7257 = vpop.f32.mrb[0].mxu0
  %7258 = vdwg.mxu0
  %7259 = vmatprep.subr.mxu0 0.0
  %v7260 = vand.u32 %v1415, 4294901760
  %7261 = vmatpush1.msra.mxu0 %v7260
  %7262 = vmatprep.subr.mxu0 0.0
  %v7263 = vand.u32 %v1416, 4294901760
  %7264 = vmatpush1.msra.mxu0 %v7263
  %7265 = vmatprep.subr.mxu0 0.0
  %v7266 = vand.u32 %v1417, 4294901760
  %7267 = vmatpush1.msra.mxu0 %v7266
  %7268 = vmatprep.subr.mxu0 0.0
  %v7269 = vand.u32 %v1418, 4294901760
  %7270 = vmatpush1.msra.mxu0 %v7269
  %7271 = vmatprep.subr.mxu0 0.0
  %7272 = vmatpush1.msra.mxu0 0.0
  %7273 = vmatprep.subr.mxu0 0.0
  %7274 = vmatpush1.msra.mxu0 0.0
  %7275 = vmatprep.subr.mxu0 0.0
  %7276 = vmatpush1.msra.mxu0 0.0
  %7277 = vmatprep.subr.mxu0 0.0
  %7278 = vmatpush1.msra.mxu0 0.0
  %7279 = vmatprep.subr.mxu0 0.0
  %7280 = vmatpush1.msra.mxu0 0.0
  %7281 = vmatprep.subr.mxu0 0.0
  %7282 = vmatpush1.msra.mxu0 0.0
  %7283 = vmatprep.subr.mxu0 0.0
  %7284 = vmatpush1.msra.mxu0 0.0
  %7285 = vmatprep.subr.mxu0 0.0
  %7286 = vmatpush1.msra.mxu0 0.0
  %7287 = vmatprep.subr.mxu0 0.0
  %7288 = vmatpush1.msra.mxu0 0.0
  %7289 = vmatprep.subr.mxu0 0.0
  %7290 = vmatpush1.msra.mxu0 0.0
  %7291 = vmatprep.subr.mxu0 0.0
  %7292 = vmatpush1.msra.mxu0 0.0
  %7293 = vmatprep.subr.mxu0 0.0
  %7294 = vmatpush1.msra.mxu0 0.0
  %7295 = vmatprep.subr.mxu0 0.0
  %7296 = vmatpush1.msra.mxu0 0.0
  %7297 = vmatprep.subr.mxu0 0.0
  %7298 = vmatpush1.msra.mxu0 0.0
  %7299 = vmatprep.subr.mxu0 0.0
  %7300 = vmatpush1.msra.mxu0 0.0
  %7301 = vmatprep.subr.mxu0 0.0
  %7302 = vmatpush1.msra.mxu0 0.0
  %7303 = vmatprep.subr.mxu0 0.0
  %7304 = vmatpush1.msra.mxu0 0.0
  %7305 = vmatprep.subr.mxu0 0.0
  %7306 = vmatpush1.msra.mxu0 0.0
  %7307 = vmatprep.subr.mxu0 0.0
  %7308 = vmatpush1.msra.mxu0 0.0
  %7309 = vmatprep.subr.mxu0 0.0
  %7310 = vmatpush1.msra.mxu0 0.0
  %7311 = vmatprep.subr.mxu0 0.0
  %7312 = vmatpush1.msra.mxu0 0.0
  %7313 = vmatprep.subr.mxu0 0.0
  %7314 = vmatpush1.msra.mxu0 0.0
  %7315 = vmatprep.subr.mxu0 0.0
  %7316 = vmatpush1.msra.mxu0 0.0
  %7317 = vmatprep.subr.mxu0 0.0
  %7318 = vmatpush1.msra.mxu0 0.0
  %7319 = vmatprep.subr.mxu0 0.0
  %7320 = vmatpush1.msra.mxu0 0.0
  %7321 = vmatprep.subr.mxu0 0.0
  %7322 = vmatpush1.msra.mxu0 0.0
  %7323 = vmatprep.subr.mxu0 0.0
  %7324 = vmatpush1.msra.mxu0 0.0
  %7325 = vmatprep.subr.mxu0 0.0
  %7326 = vmatpush1.msra.mxu0 0.0
  %7327 = vmatprep.mubr.f32.mxu0 0.0
  %v7328 = vand.u32 %v6617, 4294901760
  %v7329 = vsub.f32 %v6617, %v7328
  %v7330 = vand.u32 %v7329, 4294901760
  %7331 = vmatmul.mubr.f32.gmra.mrb[0].mxu0 %v7330
  %v7332 = vpop.f32.mrb[0].mxu0
  %v7333 = vadd.f32 %v7151, %v7332
  %v7334 = vpop.f32.mrb[0].mxu0
  %7335 = vmatprep.mubr.f32.mxu0 0.0
  %v7336 = vand.u32 %v6620, 4294901760
  %v7337 = vsub.f32 %v6620, %v7336
  %v7338 = vand.u32 %v7337, 4294901760
  %7339 = vmatmul.mubr.f32.gmra.mrb[0].mxu0 %v7338
  %v7340 = vpop.f32.mrb[0].mxu0
  %v7341 = vadd.f32 %v7158, %v7340
  %v7342 = vpop.f32.mrb[0].mxu0
  %7343 = vmatprep.mubr.f32.mxu0 0.0
  %v7344 = vand.u32 %v6623, 4294901760
  %v7345 = vsub.f32 %v6623, %v7344
  %v7346 = vand.u32 %v7345, 4294901760
  %7347 = vmatmul.mubr.f32.gmra.mrb[0].mxu0 %v7346
  %v7348 = vpop.f32.mrb[0].mxu0
  %v7349 = vadd.f32 %v7165, %v7348
  %v7350 = vpop.f32.mrb[0].mxu0
  %7351 = vmatprep.mubr.f32.mxu0 0.0
  %v7352 = vand.u32 %v6626, 4294901760
  %v7353 = vsub.f32 %v6626, %v7352
  %v7354 = vand.u32 %v7353, 4294901760
  %7355 = vmatmul.mubr.f32.gmra.mrb[0].mxu0 %v7354
  %v7356 = vpop.f32.mrb[0].mxu0
  %v7357 = vadd.f32 %v7172, %v7356
  %v7358 = vpop.f32.mrb[0].mxu0
  %7359 = vmatprep.mubr.f32.mxu0 0.0
  %v7360 = vand.u32 %v6629, 4294901760
  %v7361 = vsub.f32 %v6629, %v7360
  %v7362 = vand.u32 %v7361, 4294901760
  %7363 = vmatmul.mubr.f32.gmra.mrb[0].mxu0 %v7362
  %v7364 = vpop.f32.mrb[0].mxu0
  %v7365 = vadd.f32 %v7179, %v7364
  %v7366 = vpop.f32.mrb[0].mxu0
  %7367 = vmatprep.mubr.f32.mxu0 0.0
  %v7368 = vand.u32 %v6632, 4294901760
  %v7369 = vsub.f32 %v6632, %v7368
  %v7370 = vand.u32 %v7369, 4294901760
  %7371 = vmatmul.mubr.f32.gmra.mrb[0].mxu0 %v7370
  %v7372 = vpop.f32.mrb[0].mxu0
  %v7373 = vadd.f32 %v7186, %v7372
  %v7374 = vpop.f32.mrb[0].mxu0
  %7375 = vmatprep.mubr.f32.mxu0 0.0
  %v7376 = vand.u32 %v6635, 4294901760
  %v7377 = vsub.f32 %v6635, %v7376
  %v7378 = vand.u32 %v7377, 4294901760
  %7379 = vmatmul.mubr.f32.gmra.mrb[0].mxu0 %v7378
  %v7380 = vpop.f32.mrb[0].mxu0
  %v7381 = vadd.f32 %v7193, %v7380
  %v7382 = vpop.f32.mrb[0].mxu0
  %7383 = vmatprep.mubr.f32.mxu0 0.0
  %v7384 = vand.u32 %v6638, 4294901760
  %v7385 = vsub.f32 %v6638, %v7384
  %v7386 = vand.u32 %v7385, 4294901760
  %7387 = vmatmul.mubr.f32.gmra.mrb[0].mxu0 %v7386
  %v7388 = vpop.f32.mrb[0].mxu0
  %v7389 = vadd.f32 %v7200, %v7388
  %v7390 = vpop.f32.mrb[0].mxu0
  %7391 = vmatprep.mubr.f32.mxu0 0.0
  %v7392 = vand.u32 %v6641, 4294901760
  %v7393 = vsub.f32 %v6641, %v7392
  %v7394 = vand.u32 %v7393, 4294901760
  %7395 = vmatmul.mubr.f32.gmra.mrb[0].mxu0 %v7394
  %v7396 = vpop.f32.mrb[0].mxu0
  %v7397 = vadd.f32 %v7207, %v7396
  %v7398 = vpop.f32.mrb[0].mxu0
  %7399 = vmatprep.mubr.f32.mxu0 0.0
  %v7400 = vand.u32 %v6644, 4294901760
  %v7401 = vsub.f32 %v6644, %v7400
  %v7402 = vand.u32 %v7401, 4294901760
  %7403 = vmatmul.mubr.f32.gmra.mrb[0].mxu0 %v7402
  %v7404 = vpop.f32.mrb[0].mxu0
  %v7405 = vadd.f32 %v7214, %v7404
  %v7406 = vpop.f32.mrb[0].mxu0
  %7407 = vmatprep.mubr.f32.mxu0 0.0
  %v7408 = vand.u32 %v6647, 4294901760
  %v7409 = vsub.f32 %v6647, %v7408
  %v7410 = vand.u32 %v7409, 4294901760
  %7411 = vmatmul.mubr.f32.gmra.mrb[0].mxu0 %v7410
  %v7412 = vpop.f32.mrb[0].mxu0
  %v7413 = vadd.f32 %v7221, %v7412
  %v7414 = vpop.f32.mrb[0].mxu0
  %7415 = vmatprep.mubr.f32.mxu0 0.0
  %v7416 = vand.u32 %v6650, 4294901760
  %v7417 = vsub.f32 %v6650, %v7416
  %v7418 = vand.u32 %v7417, 4294901760
  %7419 = vmatmul.mubr.f32.gmra.mrb[0].mxu0 %v7418
  %v7420 = vpop.f32.mrb[0].mxu0
  %v7421 = vadd.f32 %v7228, %v7420
  %v7422 = vpop.f32.mrb[0].mxu0
  %7423 = vmatprep.mubr.f32.mxu0 0.0
  %v7424 = vand.u32 %v6653, 4294901760
  %v7425 = vsub.f32 %v6653, %v7424
  %v7426 = vand.u32 %v7425, 4294901760
  %7427 = vmatmul.mubr.f32.gmra.mrb[0].mxu0 %v7426
  %v7428 = vpop.f32.mrb[0].mxu0
  %v7429 = vadd.f32 %v7235, %v7428
  %v7430 = vpop.f32.mrb[0].mxu0
  %7431 = vmatprep.mubr.f32.mxu0 0.0
  %v7432 = vand.u32 %v6656, 4294901760
  %v7433 = vsub.f32 %v6656, %v7432
  %v7434 = vand.u32 %v7433, 4294901760
  %7435 = vmatmul.mubr.f32.gmra.mrb[0].mxu0 %v7434
  %v7436 = vpop.f32.mrb[0].mxu0
  %v7437 = vadd.f32 %v7242, %v7436
  %v7438 = vpop.f32.mrb[0].mxu0
  %7439 = vmatprep.mubr.f32.mxu0 0.0
  %v7440 = vand.u32 %v6659, 4294901760
  %v7441 = vsub.f32 %v6659, %v7440
  %v7442 = vand.u32 %v7441, 4294901760
  %7443 = vmatmul.mubr.f32.gmra.mrb[0].mxu0 %v7442
  %v7444 = vpop.f32.mrb[0].mxu0
  %v7445 = vadd.f32 %v7249, %v7444
  %v7446 = vpop.f32.mrb[0].mxu0
  %7447 = vmatprep.mubr.f32.mxu0 0.0
  %v7448 = vand.u32 %v6662, 4294901760
  %v7449 = vsub.f32 %v6662, %v7448
  %v7450 = vand.u32 %v7449, 4294901760
  %7451 = vmatmul.mubr.f32.gmra.mrb[0].mxu0 %v7450
  %v7452 = vpop.f32.mrb[0].mxu0
  %v7453 = vadd.f32 %v7256, %v7452
  %v7454 = vpop.f32.mrb[0].mxu0
  %7455 = vdwg.mxu0
  %7456 = vmatprep.subr.mxu0 0.0
  %v7457 = vand.u32 %v1415, 4294901760
  %v7458 = vsub.f32 %v1415, %v7457
  %v7459 = vand.u32 %v7458, 4294901760
  %7460 = vmatpush1.msra.mxu0 %v7459
  %7461 = vmatprep.subr.mxu0 0.0
  %v7462 = vand.u32 %v1416, 4294901760
  %v7463 = vsub.f32 %v1416, %v7462
  %v7464 = vand.u32 %v7463, 4294901760
  %7465 = vmatpush1.msra.mxu0 %v7464
  %7466 = vmatprep.subr.mxu0 0.0
  %v7467 = vand.u32 %v1417, 4294901760
  %v7468 = vsub.f32 %v1417, %v7467
  %v7469 = vand.u32 %v7468, 4294901760
  %7470 = vmatpush1.msra.mxu0 %v7469
  %7471 = vmatprep.subr.mxu0 0.0
  %v7472 = vand.u32 %v1418, 4294901760
  %v7473 = vsub.f32 %v1418, %v7472
  %v7474 = vand.u32 %v7473, 4294901760
  %7475 = vmatpush1.msra.mxu0 %v7474
  %7476 = vmatprep.subr.mxu0 0.0
  %7477 = vmatpush1.msra.mxu0 0.0
  %7478 = vmatprep.subr.mxu0 0.0
  %7479 = vmatpush1.msra.mxu0 0.0
  %7480 = vmatprep.subr.mxu0 0.0
  %7481 = vmatpush1.msra.mxu0 0.0
  %7482 = vmatprep.subr.mxu0 0.0
  %7483 = vmatpush1.msra.mxu0 0.0
  %7484 = vmatprep.subr.mxu0 0.0
  %7485 = vmatpush1.msra.mxu0 0.0
  %7486 = vmatprep.subr.mxu0 0.0
  %7487 = vmatpush1.msra.mxu0 0.0
  %7488 = vmatprep.subr.mxu0 0.0
  %7489 = vmatpush1.msra.mxu0 0.0
  %7490 = vmatprep.subr.mxu0 0.0
  %7491 = vmatpush1.msra.mxu0 0.0
  %7492 = vmatprep.subr.mxu0 0.0
  %7493 = vmatpush1.msra.mxu0 0.0
  %7494 = vmatprep.subr.mxu0 0.0
  %7495 = vmatpush1.msra.mxu0 0.0
  %7496 = vmatprep.subr.mxu0 0.0
  %7497 = vmatpush1.msra.mxu0 0.0
  %7498 = vmatprep.subr.mxu0 0.0
  %7499 = vmatpush1.msra.mxu0 0.0
  %7500 = vmatprep.subr.mxu0 0.0
  %7501 = vmatpush1.msra.mxu0 0.0
  %7502 = vmatprep.subr.mxu0 0.0
  %7503 = vmatpush1.msra.mxu0 0.0
  %7504 = vmatprep.subr.mxu0 0.0
  %7505 = vmatpush1.msra.mxu0 0.0
  %7506 = vmatprep.subr.mxu0 0.0
  %7507 = vmatpush1.msra.mxu0 0.0
  %7508 = vmatprep.subr.mxu0 0.0
  %7509 = vmatpush1.msra.mxu0 0.0
  %7510 = vmatprep.subr.mxu0 0.0
  %7511 = vmatpush1.msra.mxu0 0.0
  %7512 = vmatprep.subr.mxu0 0.0
  %7513 = vmatpush1.msra.mxu0 0.0
  %7514 = vmatprep.subr.mxu0 0.0
  %7515 = vmatpush1.msra.mxu0 0.0
  %7516 = vmatprep.subr.mxu0 0.0
  %7517 = vmatpush1.msra.mxu0 0.0
  %7518 = vmatprep.subr.mxu0 0.0
  %7519 = vmatpush1.msra.mxu0 0.0
  %7520 = vmatprep.subr.mxu0 0.0
  %7521 = vmatpush1.msra.mxu0 0.0
  %7522 = vmatprep.subr.mxu0 0.0
  %7523 = vmatpush1.msra.mxu0 0.0
  %7524 = vmatprep.subr.mxu0 0.0
  %7525 = vmatpush1.msra.mxu0 0.0
  %7526 = vmatprep.subr.mxu0 0.0
  %7527 = vmatpush1.msra.mxu0 0.0
  %7528 = vmatprep.subr.mxu0 0.0
  %7529 = vmatpush1.msra.mxu0 0.0
  %7530 = vmatprep.subr.mxu0 0.0
  %7531 = vmatpush1.msra.mxu0 0.0
  %7532 = vmatprep.mubr.f32.mxu0 0.0
  %v7533 = vand.u32 %v6617, 4294901760
  %7534 = vmatmul.mubr.f32.gmra.mrb[0].mxu0 %v7533
  %v7535 = vpop.f32.mrb[0].mxu0
  %v7536 = vadd.f32 %v7333, %v7535
  %v7537 = vpop.f32.mrb[0].mxu0
  %7538 = vmatprep.mubr.f32.mxu0 0.0
  %v7539 = vand.u32 %v6620, 4294901760
  %7540 = vmatmul.mubr.f32.gmra.mrb[0].mxu0 %v7539
  %v7541 = vpop.f32.mrb[0].mxu0
  %v7542 = vadd.f32 %v7341, %v7541
  %v7543 = vpop.f32.mrb[0].mxu0
  %7544 = vmatprep.mubr.f32.mxu0 0.0
  %v7545 = vand.u32 %v6623, 4294901760
  %7546 = vmatmul.mubr.f32.gmra.mrb[0].mxu0 %v7545
  %v7547 = vpop.f32.mrb[0].mxu0
  %v7548 = vadd.f32 %v7349, %v7547
  %v7549 = vpop.f32.mrb[0].mxu0
  %7550 = vmatprep.mubr.f32.mxu0 0.0
  %v7551 = vand.u32 %v6626, 4294901760
  %7552 = vmatmul.mubr.f32.gmra.mrb[0].mxu0 %v7551
  %v7553 = vpop.f32.mrb[0].mxu0
  %v7554 = vadd.f32 %v7357, %v7553
  %v7555 = vpop.f32.mrb[0].mxu0
  %7556 = vmatprep.mubr.f32.mxu0 0.0
  %v7557 = vand.u32 %v6629, 4294901760
  %7558 = vmatmul.mubr.f32.gmra.mrb[0].mxu0 %v7557
  %v7559 = vpop.f32.mrb[0].mxu0
  %v7560 = vadd.f32 %v7365, %v7559
  %v7561 = vpop.f32.mrb[0].mxu0
  %7562 = vmatprep.mubr.f32.mxu0 0.0
  %v7563 = vand.u32 %v6632, 4294901760
  %7564 = vmatmul.mubr.f32.gmra.mrb[0].mxu0 %v7563
  %v7565 = vpop.f32.mrb[0].mxu0
  %v7566 = vadd.f32 %v7373, %v7565
  %v7567 = vpop.f32.mrb[0].mxu0
  %7568 = vmatprep.mubr.f32.mxu0 0.0
  %v7569 = vand.u32 %v6635, 4294901760
  %7570 = vmatmul.mubr.f32.gmra.mrb[0].mxu0 %v7569
  %v7571 = vpop.f32.mrb[0].mxu0
  %v7572 = vadd.f32 %v7381, %v7571
  %v7573 = vpop.f32.mrb[0].mxu0
  %7574 = vmatprep.mubr.f32.mxu0 0.0
  %v7575 = vand.u32 %v6638, 4294901760
  %7576 = vmatmul.mubr.f32.gmra.mrb[0].mxu0 %v7575
  %v7577 = vpop.f32.mrb[0].mxu0
  %v7578 = vadd.f32 %v7389, %v7577
  %v7579 = vpop.f32.mrb[0].mxu0
  %7580 = vmatprep.mubr.f32.mxu0 0.0
  %v7581 = vand.u32 %v6641, 4294901760
  %7582 = vmatmul.mubr.f32.gmra.mrb[0].mxu0 %v7581
  %v7583 = vpop.f32.mrb[0].mxu0
  %v7584 = vadd.f32 %v7397, %v7583
  %v7585 = vpop.f32.mrb[0].mxu0
  %7586 = vmatprep.mubr.f32.mxu0 0.0
  %v7587 = vand.u32 %v6644, 4294901760
  %7588 = vmatmul.mubr.f32.gmra.mrb[0].mxu0 %v7587
  %v7589 = vpop.f32.mrb[0].mxu0
  %v7590 = vadd.f32 %v7405, %v7589
  %v7591 = vpop.f32.mrb[0].mxu0
  %7592 = vmatprep.mubr.f32.mxu0 0.0
  %v7593 = vand.u32 %v6647, 4294901760
  %7594 = vmatmul.mubr.f32.gmra.mrb[0].mxu0 %v7593
  %v7595 = vpop.f32.mrb[0].mxu0
  %v7596 = vadd.f32 %v7413, %v7595
  %v7597 = vpop.f32.mrb[0].mxu0
  %7598 = vmatprep.mubr.f32.mxu0 0.0
  %v7599 = vand.u32 %v6650, 4294901760
  %7600 = vmatmul.mubr.f32.gmra.mrb[0].mxu0 %v7599
  %v7601 = vpop.f32.mrb[0].mxu0
  %v7602 = vadd.f32 %v7421, %v7601
  %v7603 = vpop.f32.mrb[0].mxu0
  %7604 = vmatprep.mubr.f32.mxu0 0.0
  %v7605 = vand.u32 %v6653, 4294901760
  %7606 = vmatmul.mubr.f32.gmra.mrb[0].mxu0 %v7605
  %v7607 = vpop.f32.mrb[0].mxu0
  %v7608 = vadd.f32 %v7429, %v7607
  %v7609 = vpop.f32.mrb[0].mxu0
  %7610 = vmatprep.mubr.f32.mxu0 0.0
  %v7611 = vand.u32 %v6656, 4294901760
  %7612 = vmatmul.mubr.f32.gmra.mrb[0].mxu0 %v7611
  %v7613 = vpop.f32.mrb[0].mxu0
  %v7614 = vadd.f32 %v7437, %v7613
  %v7615 = vpop.f32.mrb[0].mxu0
  %7616 = vmatprep.mubr.f32.mxu0 0.0
  %v7617 = vand.u32 %v6659, 4294901760
  %7618 = vmatmul.mubr.f32.gmra.mrb[0].mxu0 %v7617
  %v7619 = vpop.f32.mrb[0].mxu0
  %v7620 = vadd.f32 %v7445, %v7619
  %v7621 = vpop.f32.mrb[0].mxu0
  %7622 = vmatprep.mubr.f32.mxu0 0.0
  %v7623 = vand.u32 %v6662, 4294901760
  %7624 = vmatmul.mubr.f32.gmra.mrb[0].mxu0 %v7623
  %v7625 = vpop.f32.mrb[0].mxu0
  %v7626 = vadd.f32 %v7453, %v7625
  %v7627 = vpop.f32.mrb[0].mxu0
  %7628 = vdwg.mxu0
  %7629 = vmatprep.subr.mxu0 0.0
  %v7630 = vand.u32 %v1415, 4294901760
  %7631 = vmatpush1.msra.mxu0 %v7630
  %7632 = vmatprep.subr.mxu0 0.0
  %v7633 = vand.u32 %v1416, 4294901760
  %7634 = vmatpush1.msra.mxu0 %v7633
  %7635 = vmatprep.subr.mxu0 0.0
  %v7636 = vand.u32 %v1417, 4294901760
  %7637 = vmatpush1.msra.mxu0 %v7636
  %7638 = vmatprep.subr.mxu0 0.0
  %v7639 = vand.u32 %v1418, 4294901760
  %7640 = vmatpush1.msra.mxu0 %v7639
  %7641 = vmatprep.subr.mxu0 0.0
  %7642 = vmatpush1.msra.mxu0 0.0
  %7643 = vmatprep.subr.mxu0 0.0
  %7644 = vmatpush1.msra.mxu0 0.0
  %7645 = vmatprep.subr.mxu0 0.0
  %7646 = vmatpush1.msra.mxu0 0.0
  %7647 = vmatprep.subr.mxu0 0.0
  %7648 = vmatpush1.msra.mxu0 0.0
  %7649 = vmatprep.subr.mxu0 0.0
  %7650 = vmatpush1.msra.mxu0 0.0
  %7651 = vmatprep.subr.mxu0 0.0
  %7652 = vmatpush1.msra.mxu0 0.0
  %7653 = vmatprep.subr.mxu0 0.0
  %7654 = vmatpush1.msra.mxu0 0.0
  %7655 = vmatprep.subr.mxu0 0.0
  %7656 = vmatpush1.msra.mxu0 0.0
  %7657 = vmatprep.subr.mxu0 0.0
  %7658 = vmatpush1.msra.mxu0 0.0
  %7659 = vmatprep.subr.mxu0 0.0
  %7660 = vmatpush1.msra.mxu0 0.0
  %7661 = vmatprep.subr.mxu0 0.0
  %7662 = vmatpush1.msra.mxu0 0.0
  %7663 = vmatprep.subr.mxu0 0.0
  %7664 = vmatpush1.msra.mxu0 0.0
  %7665 = vmatprep.subr.mxu0 0.0
  %7666 = vmatpush1.msra.mxu0 0.0
  %7667 = vmatprep.subr.mxu0 0.0
  %7668 = vmatpush1.msra.mxu0 0.0
  %7669 = vmatprep.subr.mxu0 0.0
  %7670 = vmatpush1.msra.mxu0 0.0
  %7671 = vmatprep.subr.mxu0 0.0
  %7672 = vmatpush1.msra.mxu0 0.0
  %7673 = vmatprep.subr.mxu0 0.0
  %7674 = vmatpush1.msra.mxu0 0.0
  %7675 = vmatprep.subr.mxu0 0.0
  %7676 = vmatpush1.msra.mxu0 0.0
  %7677 = vmatprep.subr.mxu0 0.0
  %7678 = vmatpush1.msra.mxu0 0.0
  %7679 = vmatprep.subr.mxu0 0.0
  %7680 = vmatpush1.msra.mxu0 0.0
  %7681 = vmatprep.subr.mxu0 0.0
  %7682 = vmatpush1.msra.mxu0 0.0
  %7683 = vmatprep.subr.mxu0 0.0
  %7684 = vmatpush1.msra.mxu0 0.0
  %7685 = vmatprep.subr.mxu0 0.0
  %7686 = vmatpush1.msra.mxu0 0.0
  %7687 = vmatprep.subr.mxu0 0.0
  %7688 = vmatpush1.msra.mxu0 0.0
  %7689 = vmatprep.subr.mxu0 0.0
  %7690 = vmatpush1.msra.mxu0 0.0
  %7691 = vmatprep.subr.mxu0 0.0
  %7692 = vmatpush1.msra.mxu0 0.0
  %7693 = vmatprep.subr.mxu0 0.0
  %7694 = vmatpush1.msra.mxu0 0.0
  %7695 = vmatprep.subr.mxu0 0.0
  %7696 = vmatpush1.msra.mxu0 0.0
  %7697 = vmatprep.mubr.f32.mxu0 0.0
  %v7698 = vand.u32 %v6617, 4294901760
  %7699 = vmatmul.mubr.f32.gmra.mrb[0].mxu0 %v7698
  %v7700 = vpop.f32.mrb[0].mxu0
  %v7701 = vadd.f32 %v7536, %v7700
  %v7702 = vpop.f32.mrb[0].mxu0
  %7703 = vmatprep.mubr.f32.mxu0 0.0
  %v7704 = vand.u32 %v6620, 4294901760
  %7705 = vmatmul.mubr.f32.gmra.mrb[0].mxu0 %v7704
  %v7706 = vpop.f32.mrb[0].mxu0
  %v7707 = vadd.f32 %v7542, %v7706
  %v7708 = vpop.f32.mrb[0].mxu0
  %7709 = vmatprep.mubr.f32.mxu0 0.0
  %v7710 = vand.u32 %v6623, 4294901760
  %7711 = vmatmul.mubr.f32.gmra.mrb[0].mxu0 %v7710
  %v7712 = vpop.f32.mrb[0].mxu0
  %v7713 = vadd.f32 %v7548, %v7712
  %v7714 = vpop.f32.mrb[0].mxu0
  %7715 = vmatprep.mubr.f32.mxu0 0.0
  %v7716 = vand.u32 %v6626, 4294901760
  %7717 = vmatmul.mubr.f32.gmra.mrb[0].mxu0 %v7716
  %v7718 = vpop.f32.mrb[0].mxu0
  %v7719 = vadd.f32 %v7554, %v7718
  %v7720 = vpop.f32.mrb[0].mxu0
  %7721 = vmatprep.mubr.f32.mxu0 0.0
  %v7722 = vand.u32 %v6629, 4294901760
  %7723 = vmatmul.mubr.f32.gmra.mrb[0].mxu0 %v7722
  %v7724 = vpop.f32.mrb[0].mxu0
  %v7725 = vadd.f32 %v7560, %v7724
  %v7726 = vpop.f32.mrb[0].mxu0
  %7727 = vmatprep.mubr.f32.mxu0 0.0
  %v7728 = vand.u32 %v6632, 4294901760
  %7729 = vmatmul.mubr.f32.gmra.mrb[0].mxu0 %v7728
  %v7730 = vpop.f32.mrb[0].mxu0
  %v7731 = vadd.f32 %v7566, %v7730
  %v7732 = vpop.f32.mrb[0].mxu0
  %7733 = vmatprep.mubr.f32.mxu0 0.0
  %v7734 = vand.u32 %v6635, 4294901760
  %7735 = vmatmul.mubr.f32.gmra.mrb[0].mxu0 %v7734
  %v7736 = vpop.f32.mrb[0].mxu0
  %v7737 = vadd.f32 %v7572, %v7736
  %v7738 = vpop.f32.mrb[0].mxu0
  %7739 = vmatprep.mubr.f32.mxu0 0.0
  %v7740 = vand.u32 %v6638, 4294901760
  %7741 = vmatmul.mubr.f32.gmra.mrb[0].mxu0 %v7740
  %v7742 = vpop.f32.mrb[0].mxu0
  %v7743 = vadd.f32 %v7578, %v7742
  %v7744 = vpop.f32.mrb[0].mxu0
  %7745 = vmatprep.mubr.f32.mxu0 0.0
  %v7746 = vand.u32 %v6641, 4294901760
  %7747 = vmatmul.mubr.f32.gmra.mrb[0].mxu0 %v7746
  %v7748 = vpop.f32.mrb[0].mxu0
  %v7749 = vadd.f32 %v7584, %v7748
  %v7750 = vpop.f32.mrb[0].mxu0
  %7751 = vmatprep.mubr.f32.mxu0 0.0
  %v7752 = vand.u32 %v6644, 4294901760
  %7753 = vmatmul.mubr.f32.gmra.mrb[0].mxu0 %v7752
  %v7754 = vpop.f32.mrb[0].mxu0
  %v7755 = vadd.f32 %v7590, %v7754
  %v7756 = vpop.f32.mrb[0].mxu0
  %7757 = vmatprep.mubr.f32.mxu0 0.0
  %v7758 = vand.u32 %v6647, 4294901760
  %7759 = vmatmul.mubr.f32.gmra.mrb[0].mxu0 %v7758
  %v7760 = vpop.f32.mrb[0].mxu0
  %v7761 = vadd.f32 %v7596, %v7760
  %v7762 = vpop.f32.mrb[0].mxu0
  %7763 = vmatprep.mubr.f32.mxu0 0.0
  %v7764 = vand.u32 %v6650, 4294901760
  %7765 = vmatmul.mubr.f32.gmra.mrb[0].mxu0 %v7764
  %v7766 = vpop.f32.mrb[0].mxu0
  %v7767 = vadd.f32 %v7602, %v7766
  %v7768 = vpop.f32.mrb[0].mxu0
  %7769 = vmatprep.mubr.f32.mxu0 0.0
  %v7770 = vand.u32 %v6653, 4294901760
  %7771 = vmatmul.mubr.f32.gmra.mrb[0].mxu0 %v7770
  %v7772 = vpop.f32.mrb[0].mxu0
  %v7773 = vadd.f32 %v7608, %v7772
  %v7774 = vpop.f32.mrb[0].mxu0
  %7775 = vmatprep.mubr.f32.mxu0 0.0
  %v7776 = vand.u32 %v6656, 4294901760
  %7777 = vmatmul.mubr.f32.gmra.mrb[0].mxu0 %v7776
  %v7778 = vpop.f32.mrb[0].mxu0
  %v7779 = vadd.f32 %v7614, %v7778
  %v7780 = vpop.f32.mrb[0].mxu0
  %7781 = vmatprep.mubr.f32.mxu0 0.0
  %v7782 = vand.u32 %v6659, 4294901760
  %7783 = vmatmul.mubr.f32.gmra.mrb[0].mxu0 %v7782
  %v7784 = vpop.f32.mrb[0].mxu0
  %v7785 = vadd.f32 %v7620, %v7784
  %v7786 = vpop.f32.mrb[0].mxu0
  %7787 = vmatprep.mubr.f32.mxu0 0.0
  %v7788 = vand.u32 %v6662, 4294901760
  %7789 = vmatmul.mubr.f32.gmra.mrb[0].mxu0 %v7788
  %v7790 = vpop.f32.mrb[0].mxu0
  %v7791 = vadd.f32 %v7626, %v7790
  %v7792 = vpop.f32.mrb[0].mxu0
  %7793 = vdwg.mxu0
  %v7794 = vadd.f32 %v6487, %v7701
  %v7795 = vadd.f32 %v6488, %v7707
  %v7796 = vadd.f32 %v6489, %v7713
  %v7797 = vadd.f32 %v6490, %v7719
  %v7798 = vadd.f32 %v6491, %v7725
  %v7799 = vadd.f32 %v6492, %v7731
  %v7800 = vadd.f32 %v6493, %v7737
  %v7801 = vadd.f32 %v6494, %v7743
  %v7802 = vadd.f32 %v6495, %v7749
  %v7803 = vadd.f32 %v6496, %v7755
  %v7804 = vadd.f32 %v6497, %v7761
  %v7805 = vadd.f32 %v6498, %v7767
  %v7806 = vadd.f32 %v6499, %v7773
  %v7807 = vadd.f32 %v6500, %v7779
  %v7808 = vadd.f32 %v6501, %v7785
  %v7809 = vadd.f32 %v6502, %v7791
  %v7810 = vld [vmem:[%s3] sm:$0x1]
  %v7812 = vlaneseq
  %v7813 = vshrl.u32 %v7812, 7
  %v7814 = vsub.s32 0, %v7813
  %v7815 = vrot.slane %v7810, %v7814
  %v7817 = vadd.f32 %v7794, %v7815
  %v7818 = vadd.f32 %v7795, %v7815
  %v7819 = vadd.f32 %v7796, %v7815
  %v7820 = vadd.f32 %v7797, %v7815
  %v7821 = vadd.f32 %v7798, %v7815
  %v7822 = vadd.f32 %v7799, %v7815
  %v7823 = vadd.f32 %v7800, %v7815
  %v7824 = vadd.f32 %v7801, %v7815
  %v7825 = vadd.f32 %v7802, %v7815
  %v7826 = vadd.f32 %v7803, %v7815
  %v7827 = vadd.f32 %v7804, %v7815
  %v7828 = vadd.f32 %v7805, %v7815
  %v7829 = vadd.f32 %v7806, %v7815
  %v7830 = vadd.f32 %v7807, %v7815
  %v7831 = vadd.f32 %v7808, %v7815
  %v7832 = vadd.f32 %v7809, %v7815
  %v7833 = vmax.f32 %v7817, 0.0
  %v7834 = vmax.f32 %v7818, 0.0
  %v7835 = vmax.f32 %v7819, 0.0
  %v7836 = vmax.f32 %v7820, 0.0
  %v7837 = vmax.f32 %v7821, 0.0
  %v7838 = vmax.f32 %v7822, 0.0
  %v7839 = vmax.f32 %v7823, 0.0
  %v7840 = vmax.f32 %v7824, 0.0
  %v7841 = vmax.f32 %v7825, 0.0
  %v7842 = vmax.f32 %v7826, 0.0
  %v7843 = vmax.f32 %v7827, 0.0
  %v7844 = vmax.f32 %v7828, 0.0
  %v7845 = vmax.f32 %v7829, 0.0
  %v7846 = vmax.f32 %v7830, 0.0
  %v7847 = vmax.f32 %v7831, 0.0
  %v7848 = vmax.f32 %v7832, 0.0
  %vm7849 = vcmp.ge.s32.totalorder %v1383, 15
  %vm7850 = vcmp.ge.s32.totalorder %v1384, 15
  %vm7851 = vcmp.ge.s32.totalorder %v1385, 15
  %vm7852 = vcmp.ge.s32.totalorder %v1386, 15
  %vm7853 = vcmp.ge.s32.totalorder %v1387, 15
  %vm7854 = vcmp.ge.s32.totalorder %v1388, 15
  %vm7855 = vcmp.ge.s32.totalorder %v1389, 15
  %vm7856 = vcmp.ge.s32.totalorder %v1390, 15
  %vm7857 = vcmp.ge.s32.totalorder %v1391, 15
  %vm7858 = vcmp.ge.s32.totalorder %v1392, 15
  %vm7859 = vcmp.ge.s32.totalorder %v1393, 15
  %vm7860 = vcmp.ge.s32.totalorder %v1394, 15
  %vm7861 = vcmp.ge.s32.totalorder %v1395, 15
  %vm7862 = vcmp.ge.s32.totalorder %v1396, 15
  %vm7863 = vcmp.ge.s32.totalorder %v1397, 15
  %vm7864 = vcmp.ge.s32.totalorder %v1398, 15
  %vm7865 = vcmp.ge.s32.totalorder %v40, 8
  %vm7866 = vmand %vm7849, %vm7865
  %vm7867 = vmand %vm7850, %vm7865
  %vm7868 = vmand %vm7851, %vm7865
  %vm7869 = vmand %vm7852, %vm7865
  %vm7870 = vmand %vm7853, %vm7865
  %vm7871 = vmand %vm7854, %vm7865
  %vm7872 = vmand %vm7855, %vm7865
  %vm7873 = vmand %vm7856, %vm7865
  %vm7874 = vmand %vm7857, %vm7865
  %vm7875 = vmand %vm7858, %vm7865
  %vm7876 = vmand %vm7859, %vm7865
  %vm7877 = vmand %vm7860, %vm7865
  %vm7878 = vmand %vm7861, %vm7865
  %vm7879 = vmand %vm7862, %vm7865
  %vm7880 = vmand %vm7863, %vm7865
  %vm7881 = vmand %vm7864, %vm7865
  %vm7882 = vcmp.lt.s32.totalorder %v40, 16
  %vm7883 = vmand %vm7866, %vm7882
  %vm7884 = vmand %vm7867, %vm7882
  %vm7885 = vmand %vm7868, %vm7882
  %vm7886 = vmand %vm7869, %vm7882
  %vm7887 = vmand %vm7870, %vm7882
  %vm7888 = vmand %vm7871, %vm7882
  %vm7889 = vmand %vm7872, %vm7882
  %vm7890 = vmand %vm7873, %vm7882
  %vm7891 = vmand %vm7874, %vm7882
  %vm7892 = vmand %vm7875, %vm7882
  %vm7893 = vmand %vm7876, %vm7882
  %vm7894 = vmand %vm7877, %vm7882
  %vm7895 = vmand %vm7878, %vm7882
  %vm7896 = vmand %vm7879, %vm7882
  %vm7897 = vmand %vm7880, %vm7882
  %vm7898 = vmand %vm7881, %vm7882
  %v7899 = vsel %vm7883, 0.0, %v7833
  %v7900 = vsel %vm7884, 0.0, %v7834
  %v7901 = vsel %vm7885, 0.0, %v7835
  %v7902 = vsel %vm7886, 0.0, %v7836
  %v7903 = vsel %vm7887, 0.0, %v7837
  %v7904 = vsel %vm7888, 0.0, %v7838
  %v7905 = vsel %vm7889, 0.0, %v7839
  %v7906 = vsel %vm7890, 0.0, %v7840
  %v7907 = vsel %vm7891, 0.0, %v7841
  %v7908 = vsel %vm7892, 0.0, %v7842
  %v7909 = vsel %vm7893, 0.0, %v7843
  %v7910 = vsel %vm7894, 0.0, %v7844
  %v7911 = vsel %vm7895, 0.0, %v7845
  %v7912 = vsel %vm7896, 0.0, %v7846
  %v7913 = vsel %vm7897, 0.0, %v7847
  %v7914 = vsel %vm7898, 0.0, %v7848
  %vm7915 = vcmask 195584
  %v7916 = vsel %vm7915, %v7899, -inf
  %v7917 = vsel %vm7915, %v7900, -inf
  %v7918 = vmax.f32 %v7916, %v7917
  %v7919 = vrot.slane %v7918, 4
  %v7920 = vmax.f32 %v7918, %v7919
  %v7921 = vrot.slane %v7920, 2
  %v7922 = vmax.f32 %v7920, %v7921
  %v7923 = vrot.slane %v7922, 1
  %v7924 = vmax.f32 %v7922, %v7923
  %v7925 = vsel %vm7915, %v7901, -inf
  %v7926 = vsel %vm7915, %v7902, -inf
  %v7927 = vmax.f32 %v7925, %v7926
  %v7928 = vrot.slane %v7927, 4
  %v7929 = vmax.f32 %v7927, %v7928
  %v7930 = vrot.slane %v7929, 2
  %v7931 = vmax.f32 %v7929, %v7930
  %v7932 = vrot.slane %v7931, 1
  %v7933 = vmax.f32 %v7931, %v7932
  %v7934 = vsel %vm7915, %v7903, -inf
  %v7935 = vsel %vm7915, %v7904, -inf
  %v7936 = vmax.f32 %v7934, %v7935
  %v7937 = vrot.slane %v7936, 4
  %v7938 = vmax.f32 %v7936, %v7937
  %v7939 = vrot.slane %v7938, 2
  %v7940 = vmax.f32 %v7938, %v7939
  %v7941 = vrot.slane %v7940, 1
  %v7942 = vmax.f32 %v7940, %v7941
  %v7943 = vsel %vm7915, %v7905, -inf
  %v7944 = vsel %vm7915, %v7906, -inf
  %v7945 = vmax.f32 %v7943, %v7944
  %v7946 = vrot.slane %v7945, 4
  %v7947 = vmax.f32 %v7945, %v7946
  %v7948 = vrot.slane %v7947, 2
  %v7949 = vmax.f32 %v7947, %v7948
  %v7950 = vrot.slane %v7949, 1
  %v7951 = vmax.f32 %v7949, %v7950
  %v7952 = vsel %vm7915, %v7907, -inf
  %v7953 = vsel %vm7915, %v7908, -inf
  %v7954 = vmax.f32 %v7952, %v7953
  %v7955 = vrot.slane %v7954, 4
  %v7956 = vmax.f32 %v7954, %v7955
  %v7957 = vrot.slane %v7956, 2
  %v7958 = vmax.f32 %v7956, %v7957
  %v7959 = vrot.slane %v7958, 1
  %v7960 = vmax.f32 %v7958, %v7959
  %v7961 = vsel %vm7915, %v7909, -inf
  %v7962 = vsel %vm7915, %v7910, -inf
  %v7963 = vmax.f32 %v7961, %v7962
  %v7964 = vrot.slane %v7963, 4
  %v7965 = vmax.f32 %v7963, %v7964
  %v7966 = vrot.slane %v7965, 2
  %v7967 = vmax.f32 %v7965, %v7966
  %v7968 = vrot.slane %v7967, 1
  %v7969 = vmax.f32 %v7967, %v7968
  %v7970 = vsel %vm7915, %v7911, -inf
  %v7971 = vsel %vm7915, %v7912, -inf
  %v7972 = vmax.f32 %v7970, %v7971
  %v7973 = vrot.slane %v7972, 4
  %v7974 = vmax.f32 %v7972, %v7973
  %v7975 = vrot.slane %v7974, 2
  %v7976 = vmax.f32 %v7974, %v7975
  %v7977 = vrot.slane %v7976, 1
  %v7978 = vmax.f32 %v7976, %v7977
  %v7979 = vsel %vm7915, %v7913, -inf
  %v7980 = vsel %vm7915, %v7914, -inf
  %v7981 = vmax.f32 %v7979, %v7980
  %v7982 = vrot.slane %v7981, 4
  %v7983 = vmax.f32 %v7981, %v7982
  %v7984 = vrot.slane %v7983, 2
  %v7985 = vmax.f32 %v7983, %v7984
  %v7986 = vrot.slane %v7985, 1
  %v7987 = vmax.f32 %v7985, %v7986
  %v7988 = vld [vmem:[%s4] sm:$0xff]
  %v7989 = vld [vmem:[%s4 + $0x8] sm:$0xff]
  %v7990 = vld [vmem:[%s4 + $0x10] sm:$0xff]
  %v7991 = vld [vmem:[%s5] sm:$0x1]
  %v7993 = vlaneseq
  %v7994 = vshrl.u32 %v7993, 7
  %v7995 = vsub.s32 0, %v7994
  %v7996 = vrot.slane %v7991, %v7995
  %vm8006 = vcmask 1041409
  %v8007 = vsel %vm8006, %v7933, %v7924
  %vm8008 = vcmask 1042434
  %v8009 = vsel %vm8008, %v7942, %v8007
  %vm8010 = vcmask 1043459
  %v8011 = vsel %vm8010, %v7951, %v8009
  %vm8012 = vcmask 1044484
  %v8013 = vsel %vm8012, %v7960, %v8011
  %vm8014 = vcmask 1045509
  %v8015 = vsel %vm8014, %v7969, %v8013
  %vm8016 = vcmask 1046534
  %v8017 = vsel %vm8016, %v7978, %v8015
  %vm8018 = vcmask 1047559
  %v8019 = vsel %vm8018, %v7987, %v8017
  %v8020 = vsel %vm7915, %v8019, 0
  %8022 = vmatprep.subr.mxu0 0.0
  %v8023 = vand.u32 %v7988, 4294901760
  %8024 = vmatpush1.msra.mxu0 %v8023
  %8025 = vmatprep.subr.mxu0 0.0
  %v8026 = vand.u32 %v7989, 4294901760
  %8027 = vmatpush1.msra.mxu0 %v8026
  %8028 = vmatprep.subr.mxu0 0.0
  %v8029 = vand.u32 %v7990, 4294901760
  %8030 = vmatpush1.msra.mxu0 %v8029
  %8031 = vmatprep.subr.mxu0 0.0
  %8032 = vmatpush1.msra.mxu0 0.0
  %8033 = vmatprep.subr.mxu0 0.0
  %8034 = vmatpush1.msra.mxu0 0.0
  %8035 = vmatprep.subr.mxu0 0.0
  %8036 = vmatpush1.msra.mxu0 0.0
  %8037 = vmatprep.subr.mxu0 0.0
  %8038 = vmatpush1.msra.mxu0 0.0
  %8039 = vmatprep.subr.mxu0 0.0
  %8040 = vmatpush1.msra.mxu0 0.0
  %8041 = vmatprep.subr.mxu0 0.0
  %8042 = vmatpush1.msra.mxu0 0.0
  %8043 = vmatprep.subr.mxu0 0.0
  %8044 = vmatpush1.msra.mxu0 0.0
  %8045 = vmatprep.subr.mxu0 0.0
  %8046 = vmatpush1.msra.mxu0 0.0
  %8047 = vmatprep.subr.mxu0 0.0
  %8048 = vmatpush1.msra.mxu0 0.0
  %8049 = vmatprep.subr.mxu0 0.0
  %8050 = vmatpush1.msra.mxu0 0.0
  %8051 = vmatprep.subr.mxu0 0.0
  %8052 = vmatpush1.msra.mxu0 0.0
  %8053 = vmatprep.subr.mxu0 0.0
  %8054 = vmatpush1.msra.mxu0 0.0
  %8055 = vmatprep.subr.mxu0 0.0
  %8056 = vmatpush1.msra.mxu0 0.0
  %8057 = vmatprep.subr.mxu0 0.0
  %8058 = vmatpush1.msra.mxu0 0.0
  %8059 = vmatprep.subr.mxu0 0.0
  %8060 = vmatpush1.msra.mxu0 0.0
  %8061 = vmatprep.subr.mxu0 0.0
  %8062 = vmatpush1.msra.mxu0 0.0
  %8063 = vmatprep.subr.mxu0 0.0
  %8064 = vmatpush1.msra.mxu0 0.0
  %8065 = vmatprep.subr.mxu0 0.0
  %8066 = vmatpush1.msra.mxu0 0.0
  %8067 = vmatprep.subr.mxu0 0.0
  %8068 = vmatpush1.msra.mxu0 0.0
  %8069 = vmatprep.subr.mxu0 0.0
  %8070 = vmatpush1.msra.mxu0 0.0
  %8071 = vmatprep.subr.mxu0 0.0
  %8072 = vmatpush1.msra.mxu0 0.0
  %8073 = vmatprep.subr.mxu0 0.0
  %8074 = vmatpush1.msra.mxu0 0.0
  %8075 = vmatprep.subr.mxu0 0.0
  %8076 = vmatpush1.msra.mxu0 0.0
  %8077 = vmatprep.subr.mxu0 0.0
  %8078 = vmatpush1.msra.mxu0 0.0
  %8079 = vmatprep.subr.mxu0 0.0
  %8080 = vmatpush1.msra.mxu0 0.0
  %8081 = vmatprep.subr.mxu0 0.0
  %8082 = vmatpush1.msra.mxu0 0.0
  %8083 = vmatprep.subr.mxu0 0.0
  %8084 = vmatpush1.msra.mxu0 0.0
  %8085 = vmatprep.subr.mxu0 0.0
  %8086 = vmatpush1.msra.mxu0 0.0
  %8087 = vmatprep.subr.mxu0 0.0
  %8088 = vmatpush1.msra.mxu0 0.0
  %8089 = vmatprep.mubr.f32.mxu0 0.0
  %v8090 = vand.u32 %v8020, 4294901760
  %v8091 = vsub.f32 %v8020, %v8090
  %v8092 = vand.u32 %v8091, 4294901760
  %v8093 = vsub.f32 %v8091, %v8092
  %v8094 = vand.u32 %v8093, 4294901760
  %8095 = vmatmul.mubr.f32.gmra.mrb[0].mxu0 %v8094
  %v8096 = vpop.f32.mrb[0].mxu0
  %v8097 = vadd.f32 %v7996, %v8096
  %v8098 = vpop.f32.mrb[0].mxu0
  %8099 = vdwg.mxu0
  %8100 = vmatprep.subr.mxu0 0.0
  %v8101 = vand.u32 %v7988, 4294901760
  %v8102 = vsub.f32 %v7988, %v8101
  %v8103 = vand.u32 %v8102, 4294901760
  %v8104 = vsub.f32 %v8102, %v8103
  %v8105 = vand.u32 %v8104, 4294901760
  %8106 = vmatpush1.msra.mxu0 %v8105
  %8107 = vmatprep.subr.mxu0 0.0
  %v8108 = vand.u32 %v7989, 4294901760
  %v8109 = vsub.f32 %v7989, %v8108
  %v8110 = vand.u32 %v8109, 4294901760
  %v8111 = vsub.f32 %v8109, %v8110
  %v8112 = vand.u32 %v8111, 4294901760
  %8113 = vmatpush1.msra.mxu0 %v8112
  %8114 = vmatprep.subr.mxu0 0.0
  %v8115 = vand.u32 %v7990, 4294901760
  %v8116 = vsub.f32 %v7990, %v8115
  %v8117 = vand.u32 %v8116, 4294901760
  %v8118 = vsub.f32 %v8116, %v8117
  %v8119 = vand.u32 %v8118, 4294901760
  %8120 = vmatpush1.msra.mxu0 %v8119
  %8121 = vmatprep.subr.mxu0 0.0
  %8122 = vmatpush1.msra.mxu0 0.0
  %8123 = vmatprep.subr.mxu0 0.0
  %8124 = vmatpush1.msra.mxu0 0.0
  %8125 = vmatprep.subr.mxu0 0.0
  %8126 = vmatpush1.msra.mxu0 0.0
  %8127 = vmatprep.subr.mxu0 0.0
  %8128 = vmatpush1.msra.mxu0 0.0
  %8129 = vmatprep.subr.mxu0 0.0
  %8130 = vmatpush1.msra.mxu0 0.0
  %8131 = vmatprep.subr.mxu0 0.0
  %8132 = vmatpush1.msra.mxu0 0.0
  %8133 = vmatprep.subr.mxu0 0.0
  %8134 = vmatpush1.msra.mxu0 0.0
  %8135 = vmatprep.subr.mxu0 0.0
  %8136 = vmatpush1.msra.mxu0 0.0
  %8137 = vmatprep.subr.mxu0 0.0
  %8138 = vmatpush1.msra.mxu0 0.0
  %8139 = vmatprep.subr.mxu0 0.0
  %8140 = vmatpush1.msra.mxu0 0.0
  %8141 = vmatprep.subr.mxu0 0.0
  %8142 = vmatpush1.msra.mxu0 0.0
  %8143 = vmatprep.subr.mxu0 0.0
  %8144 = vmatpush1.msra.mxu0 0.0
  %8145 = vmatprep.subr.mxu0 0.0
  %8146 = vmatpush1.msra.mxu0 0.0
  %8147 = vmatprep.subr.mxu0 0.0
  %8148 = vmatpush1.msra.mxu0 0.0
  %8149 = vmatprep.subr.mxu0 0.0
  %8150 = vmatpush1.msra.mxu0 0.0
  %8151 = vmatprep.subr.mxu0 0.0
  %8152 = vmatpush1.msra.mxu0 0.0
  %8153 = vmatprep.subr.mxu0 0.0
  %8154 = vmatpush1.msra.mxu0 0.0
  %8155 = vmatprep.subr.mxu0 0.0
  %8156 = vmatpush1.msra.mxu0 0.0
  %8157 = vmatprep.subr.mxu0 0.0
  %8158 = vmatpush1.msra.mxu0 0.0
  %8159 = vmatprep.subr.mxu0 0.0
  %8160 = vmatpush1.msra.mxu0 0.0
  %8161 = vmatprep.subr.mxu0 0.0
  %8162 = vmatpush1.msra.mxu0 0.0
  %8163 = vmatprep.subr.mxu0 0.0
  %8164 = vmatpush1.msra.mxu0 0.0
  %8165 = vmatprep.subr.mxu0 0.0
  %8166 = vmatpush1.msra.mxu0 0.0
  %8167 = vmatprep.subr.mxu0 0.0
  %8168 = vmatpush1.msra.mxu0 0.0
  %8169 = vmatprep.subr.mxu0 0.0
  %8170 = vmatpush1.msra.mxu0 0.0
  %8171 = vmatprep.subr.mxu0 0.0
  %8172 = vmatpush1.msra.mxu0 0.0
  %8173 = vmatprep.subr.mxu0 0.0
  %8174 = vmatpush1.msra.mxu0 0.0
  %8175 = vmatprep.subr.mxu0 0.0
  %8176 = vmatpush1.msra.mxu0 0.0
  %8177 = vmatprep.subr.mxu0 0.0
  %8178 = vmatpush1.msra.mxu0 0.0
  %8179 = vmatprep.mubr.f32.mxu0 0.0
  %v8180 = vand.u32 %v8020, 4294901760
  %8181 = vmatmul.mubr.f32.gmra.mrb[0].mxu0 %v8180
  %v8182 = vpop.f32.mrb[0].mxu0
  %v8183 = vadd.f32 %v8097, %v8182
  %v8184 = vpop.f32.mrb[0].mxu0
  %8185 = vdwg.mxu0
  %8186 = vmatprep.subr.mxu0 0.0
  %v8187 = vand.u32 %v7988, 4294901760
  %v8188 = vsub.f32 %v7988, %v8187
  %8189 = vmatpush1.msra.mxu0 %v8188
  %8190 = vmatprep.subr.mxu0 0.0
  %v8191 = vand.u32 %v7989, 4294901760
  %v8192 = vsub.f32 %v7989, %v8191
  %8193 = vmatpush1.msra.mxu0 %v8192
  %8194 = vmatprep.subr.mxu0 0.0
  %v8195 = vand.u32 %v7990, 4294901760
  %v8196 = vsub.f32 %v7990, %v8195
  %8197 = vmatpush1.msra.mxu0 %v8196
  %8198 = vmatprep.subr.mxu0 0.0
  %8199 = vmatpush1.msra.mxu0 0.0
  %8200 = vmatprep.subr.mxu0 0.0
  %8201 = vmatpush1.msra.mxu0 0.0
  %8202 = vmatprep.subr.mxu0 0.0
  %8203 = vmatpush1.msra.mxu0 0.0
  %8204 = vmatprep.subr.mxu0 0.0
  %8205 = vmatpush1.msra.mxu0 0.0
  %8206 = vmatprep.subr.mxu0 0.0
  %8207 = vmatpush1.msra.mxu0 0.0
  %8208 = vmatprep.subr.mxu0 0.0
  %8209 = vmatpush1.msra.mxu0 0.0
  %8210 = vmatprep.subr.mxu0 0.0
  %8211 = vmatpush1.msra.mxu0 0.0
  %8212 = vmatprep.subr.mxu0 0.0
  %8213 = vmatpush1.msra.mxu0 0.0
  %8214 = vmatprep.subr.mxu0 0.0
  %8215 = vmatpush1.msra.mxu0 0.0
  %8216 = vmatprep.subr.mxu0 0.0
  %8217 = vmatpush1.msra.mxu0 0.0
  %8218 = vmatprep.subr.mxu0 0.0
  %8219 = vmatpush1.msra.mxu0 0.0
  %8220 = vmatprep.subr.mxu0 0.0
  %8221 = vmatpush1.msra.mxu0 0.0
  %8222 = vmatprep.subr.mxu0 0.0
  %8223 = vmatpush1.msra.mxu0 0.0
  %8224 = vmatprep.subr.mxu0 0.0
  %8225 = vmatpush1.msra.mxu0 0.0
  %8226 = vmatprep.subr.mxu0 0.0
  %8227 = vmatpush1.msra.mxu0 0.0
  %8228 = vmatprep.subr.mxu0 0.0
  %8229 = vmatpush1.msra.mxu0 0.0
  %8230 = vmatprep.subr.mxu0 0.0
  %8231 = vmatpush1.msra.mxu0 0.0
  %8232 = vmatprep.subr.mxu0 0.0
  %8233 = vmatpush1.msra.mxu0 0.0
  %8234 = vmatprep.subr.mxu0 0.0
  %8235 = vmatpush1.msra.mxu0 0.0
  %8236 = vmatprep.subr.mxu0 0.0
  %8237 = vmatpush1.msra.mxu0 0.0
  %8238 = vmatprep.subr.mxu0 0.0
  %8239 = vmatpush1.msra.mxu0 0.0
  %8240 = vmatprep.subr.mxu0 0.0
  %8241 = vmatpush1.msra.mxu0 0.0
  %8242 = vmatprep.subr.mxu0 0.0
  %8243 = vmatpush1.msra.mxu0 0.0
  %8244 = vmatprep.subr.mxu0 0.0
  %8245 = vmatpush1.msra.mxu0 0.0
  %8246 = vmatprep.subr.mxu0 0.0
  %8247 = vmatpush1.msra.mxu0 0.0
  %8248 = vmatprep.subr.mxu0 0.0
  %8249 = vmatpush1.msra.mxu0 0.0
  %8250 = vmatprep.subr.mxu0 0.0
  %8251 = vmatpush1.msra.mxu0 0.0
  %8252 = vmatprep.subr.mxu0 0.0
  %8253 = vmatpush1.msra.mxu0 0.0
  %8254 = vmatprep.subr.mxu0 0.0
  %8255 = vmatpush1.msra.mxu0 0.0
  %8256 = vmatprep.mubr.f32.mxu0 0.0
  %v8257 = vand.u32 %v8020, 4294901760
  %v8258 = vsub.f32 %v8020, %v8257
  %8259 = vmatmul.mubr.f32.gmra.mrb[0].mxu0 %v8258
  %v8260 = vpop.f32.mrb[0].mxu0
  %v8261 = vadd.f32 %v8183, %v8260
  %v8262 = vpop.f32.mrb[0].mxu0
  %8263 = vdwg.mxu0
  %8264 = vmatprep.subr.mxu0 0.0
  %v8265 = vand.u32 %v7988, 4294901760
  %8266 = vmatpush1.msra.mxu0 %v8265
  %8267 = vmatprep.subr.mxu0 0.0
  %v8268 = vand.u32 %v7989, 4294901760
  %8269 = vmatpush1.msra.mxu0 %v8268
  %8270 = vmatprep.subr.mxu0 0.0
  %v8271 = vand.u32 %v7990, 4294901760
  %8272 = vmatpush1.msra.mxu0 %v8271
  %8273 = vmatprep.subr.mxu0 0.0
  %8274 = vmatpush1.msra.mxu0 0.0
  %8275 = vmatprep.subr.mxu0 0.0
  %8276 = vmatpush1.msra.mxu0 0.0
  %8277 = vmatprep.subr.mxu0 0.0
  %8278 = vmatpush1.msra.mxu0 0.0
  %8279 = vmatprep.subr.mxu0 0.0
  %8280 = vmatpush1.msra.mxu0 0.0
  %8281 = vmatprep.subr.mxu0 0.0
  %8282 = vmatpush1.msra.mxu0 0.0
  %8283 = vmatprep.subr.mxu0 0.0
  %8284 = vmatpush1.msra.mxu0 0.0
  %8285 = vmatprep.subr.mxu0 0.0
  %8286 = vmatpush1.msra.mxu0 0.0
  %8287 = vmatprep.subr.mxu0 0.0
  %8288 = vmatpush1.msra.mxu0 0.0
  %8289 = vmatprep.subr.mxu0 0.0
  %8290 = vmatpush1.msra.mxu0 0.0
  %8291 = vmatprep.subr.mxu0 0.0
  %8292 = vmatpush1.msra.mxu0 0.0
  %8293 = vmatprep.subr.mxu0 0.0
  %8294 = vmatpush1.msra.mxu0 0.0
  %8295 = vmatprep.subr.mxu0 0.0
  %8296 = vmatpush1.msra.mxu0 0.0
  %8297 = vmatprep.subr.mxu0 0.0
  %8298 = vmatpush1.msra.mxu0 0.0
  %8299 = vmatprep.subr.mxu0 0.0
  %8300 = vmatpush1.msra.mxu0 0.0
  %8301 = vmatprep.subr.mxu0 0.0
  %8302 = vmatpush1.msra.mxu0 0.0
  %8303 = vmatprep.subr.mxu0 0.0
  %8304 = vmatpush1.msra.mxu0 0.0
  %8305 = vmatprep.subr.mxu0 0.0
  %8306 = vmatpush1.msra.mxu0 0.0
  %8307 = vmatprep.subr.mxu0 0.0
  %8308 = vmatpush1.msra.mxu0 0.0
  %8309 = vmatprep.subr.mxu0 0.0
  %8310 = vmatpush1.msra.mxu0 0.0
  %8311 = vmatprep.subr.mxu0 0.0
  %8312 = vmatpush1.msra.mxu0 0.0
  %8313 = vmatprep.subr.mxu0 0.0
  %8314 = vmatpush1.msra.mxu0 0.0
  %8315 = vmatprep.subr.mxu0 0.0
  %8316 = vmatpush1.msra.mxu0 0.0
  %8317 = vmatprep.subr.mxu0 0.0
  %8318 = vmatpush1.msra.mxu0 0.0
  %8319 = vmatprep.subr.mxu0 0.0
  %8320 = vmatpush1.msra.mxu0 0.0
  %8321 = vmatprep.subr.mxu0 0.0
  %8322 = vmatpush1.msra.mxu0 0.0
  %8323 = vmatprep.subr.mxu0 0.0
  %8324 = vmatpush1.msra.mxu0 0.0
  %8325 = vmatprep.subr.mxu0 0.0
  %8326 = vmatpush1.msra.mxu0 0.0
  %8327 = vmatprep.subr.mxu0 0.0
  %8328 = vmatpush1.msra.mxu0 0.0
  %8329 = vmatprep.subr.mxu0 0.0
  %8330 = vmatpush1.msra.mxu0 0.0
  %8331 = vmatprep.mubr.f32.mxu0 0.0
  %v8332 = vand.u32 %v8020, 4294901760
  %v8333 = vsub.f32 %v8020, %v8332
  %v8334 = vand.u32 %v8333, 4294901760
  %8335 = vmatmul.mubr.f32.gmra.mrb[0].mxu0 %v8334
  %v8336 = vpop.f32.mrb[0].mxu0
  %v8337 = vadd.f32 %v8261, %v8336
  %v8338 = vpop.f32.mrb[0].mxu0
  %8339 = vdwg.mxu0
  %8340 = vmatprep.subr.mxu0 0.0
  %v8341 = vand.u32 %v7988, 4294901760
  %v8342 = vsub.f32 %v7988, %v8341
  %v8343 = vand.u32 %v8342, 4294901760
  %8344 = vmatpush1.msra.mxu0 %v8343
  %8345 = vmatprep.subr.mxu0 0.0
  %v8346 = vand.u32 %v7989, 4294901760
  %v8347 = vsub.f32 %v7989, %v8346
  %v8348 = vand.u32 %v8347, 4294901760
  %8349 = vmatpush1.msra.mxu0 %v8348
  %8350 = vmatprep.subr.mxu0 0.0
  %v8351 = vand.u32 %v7990, 4294901760
  %v8352 = vsub.f32 %v7990, %v8351
  %v8353 = vand.u32 %v8352, 4294901760
  %8354 = vmatpush1.msra.mxu0 %v8353
  %8355 = vmatprep.subr.mxu0 0.0
  %8356 = vmatpush1.msra.mxu0 0.0
  %8357 = vmatprep.subr.mxu0 0.0
  %8358 = vmatpush1.msra.mxu0 0.0
  %8359 = vmatprep.subr.mxu0 0.0
  %8360 = vmatpush1.msra.mxu0 0.0
  %8361 = vmatprep.subr.mxu0 0.0
  %8362 = vmatpush1.msra.mxu0 0.0
  %8363 = vmatprep.subr.mxu0 0.0
  %8364 = vmatpush1.msra.mxu0 0.0
  %8365 = vmatprep.subr.mxu0 0.0
  %8366 = vmatpush1.msra.mxu0 0.0
  %8367 = vmatprep.subr.mxu0 0.0
  %8368 = vmatpush1.msra.mxu0 0.0
  %8369 = vmatprep.subr.mxu0 0.0
  %8370 = vmatpush1.msra.mxu0 0.0
  %8371 = vmatprep.subr.mxu0 0.0
  %8372 = vmatpush1.msra.mxu0 0.0
  %8373 = vmatprep.subr.mxu0 0.0
  %8374 = vmatpush1.msra.mxu0 0.0
  %8375 = vmatprep.subr.mxu0 0.0
  %8376 = vmatpush1.msra.mxu0 0.0
  %8377 = vmatprep.subr.mxu0 0.0
  %8378 = vmatpush1.msra.mxu0 0.0
  %8379 = vmatprep.subr.mxu0 0.0
  %8380 = vmatpush1.msra.mxu0 0.0
  %8381 = vmatprep.subr.mxu0 0.0
  %8382 = vmatpush1.msra.mxu0 0.0
  %8383 = vmatprep.subr.mxu0 0.0
  %8384 = vmatpush1.msra.mxu0 0.0
  %8385 = vmatprep.subr.mxu0 0.0
  %8386 = vmatpush1.msra.mxu0 0.0
  %8387 = vmatprep.subr.mxu0 0.0
  %8388 = vmatpush1.msra.mxu0 0.0
  %8389 = vmatprep.subr.mxu0 0.0
  %8390 = vmatpush1.msra.mxu0 0.0
  %8391 = vmatprep.subr.mxu0 0.0
  %8392 = vmatpush1.msra.mxu0 0.0
  %8393 = vmatprep.subr.mxu0 0.0
  %8394 = vmatpush1.msra.mxu0 0.0
  %8395 = vmatprep.subr.mxu0 0.0
  %8396 = vmatpush1.msra.mxu0 0.0
  %8397 = vmatprep.subr.mxu0 0.0
  %8398 = vmatpush1.msra.mxu0 0.0
  %8399 = vmatprep.subr.mxu0 0.0
  %8400 = vmatpush1.msra.mxu0 0.0
  %8401 = vmatprep.subr.mxu0 0.0
  %8402 = vmatpush1.msra.mxu0 0.0
  %8403 = vmatprep.subr.mxu0 0.0
  %8404 = vmatpush1.msra.mxu0 0.0
  %8405 = vmatprep.subr.mxu0 0.0
  %8406 = vmatpush1.msra.mxu0 0.0
  %8407 = vmatprep.subr.mxu0 0.0
  %8408 = vmatpush1.msra.mxu0 0.0
  %8409 = vmatprep.subr.mxu0 0.0
  %8410 = vmatpush1.msra.mxu0 0.0
  %8411 = vmatprep.subr.mxu0 0.0
  %8412 = vmatpush1.msra.mxu0 0.0
  %8413 = vmatprep.mubr.f32.mxu0 0.0
  %v8414 = vand.u32 %v8020, 4294901760
  %8415 = vmatmul.mubr.f32.gmra.mrb[0].mxu0 %v8414
  %v8416 = vpop.f32.mrb[0].mxu0
  %v8417 = vadd.f32 %v8337, %v8416
  %v8418 = vpop.f32.mrb[0].mxu0
  %8419 = vdwg.mxu0
  %8420 = vmatprep.subr.mxu0 0.0
  %v8421 = vand.u32 %v7988, 4294901760
  %8422 = vmatpush1.msra.mxu0 %v8421
  %8423 = vmatprep.subr.mxu0 0.0
  %v8424 = vand.u32 %v7989, 4294901760
  %8425 = vmatpush1.msra.mxu0 %v8424
  %8426 = vmatprep.subr.mxu0 0.0
  %v8427 = vand.u32 %v7990, 4294901760
  %8428 = vmatpush1.msra.mxu0 %v8427
  %8429 = vmatprep.subr.mxu0 0.0
  %8430 = vmatpush1.msra.mxu0 0.0
  %8431 = vmatprep.subr.mxu0 0.0
  %8432 = vmatpush1.msra.mxu0 0.0
  %8433 = vmatprep.subr.mxu0 0.0
  %8434 = vmatpush1.msra.mxu0 0.0
  %8435 = vmatprep.subr.mxu0 0.0
  %8436 = vmatpush1.msra.mxu0 0.0
  %8437 = vmatprep.subr.mxu0 0.0
  %8438 = vmatpush1.msra.mxu0 0.0
  %8439 = vmatprep.subr.mxu0 0.0
  %8440 = vmatpush1.msra.mxu0 0.0
  %8441 = vmatprep.subr.mxu0 0.0
  %8442 = vmatpush1.msra.mxu0 0.0
  %8443 = vmatprep.subr.mxu0 0.0
  %8444 = vmatpush1.msra.mxu0 0.0
  %8445 = vmatprep.subr.mxu0 0.0
  %8446 = vmatpush1.msra.mxu0 0.0
  %8447 = vmatprep.subr.mxu0 0.0
  %8448 = vmatpush1.msra.mxu0 0.0
  %8449 = vmatprep.subr.mxu0 0.0
  %8450 = vmatpush1.msra.mxu0 0.0
  %8451 = vmatprep.subr.mxu0 0.0
  %8452 = vmatpush1.msra.mxu0 0.0
  %8453 = vmatprep.subr.mxu0 0.0
  %8454 = vmatpush1.msra.mxu0 0.0
  %8455 = vmatprep.subr.mxu0 0.0
  %8456 = vmatpush1.msra.mxu0 0.0
  %8457 = vmatprep.subr.mxu0 0.0
  %8458 = vmatpush1.msra.mxu0 0.0
  %8459 = vmatprep.subr.mxu0 0.0
  %8460 = vmatpush1.msra.mxu0 0.0
  %8461 = vmatprep.subr.mxu0 0.0
  %8462 = vmatpush1.msra.mxu0 0.0
  %8463 = vmatprep.subr.mxu0 0.0
  %8464 = vmatpush1.msra.mxu0 0.0
  %8465 = vmatprep.subr.mxu0 0.0
  %8466 = vmatpush1.msra.mxu0 0.0
  %8467 = vmatprep.subr.mxu0 0.0
  %8468 = vmatpush1.msra.mxu0 0.0
  %8469 = vmatprep.subr.mxu0 0.0
  %8470 = vmatpush1.msra.mxu0 0.0
  %8471 = vmatprep.subr.mxu0 0.0
  %8472 = vmatpush1.msra.mxu0 0.0
  %8473 = vmatprep.subr.mxu0 0.0
  %8474 = vmatpush1.msra.mxu0 0.0
  %8475 = vmatprep.subr.mxu0 0.0
  %8476 = vmatpush1.msra.mxu0 0.0
  %8477 = vmatprep.subr.mxu0 0.0
  %8478 = vmatpush1.msra.mxu0 0.0
  %8479 = vmatprep.subr.mxu0 0.0
  %8480 = vmatpush1.msra.mxu0 0.0
  %8481 = vmatprep.subr.mxu0 0.0
  %8482 = vmatpush1.msra.mxu0 0.0
  %8483 = vmatprep.subr.mxu0 0.0
  %8484 = vmatpush1.msra.mxu0 0.0
  %8485 = vmatprep.subr.mxu0 0.0
  %8486 = vmatpush1.msra.mxu0 0.0
  %8487 = vmatprep.mubr.f32.mxu0 0.0
  %v8488 = vand.u32 %v8020, 4294901760
  %8489 = vmatmul.mubr.f32.gmra.mrb[0].mxu0 %v8488
  %v8490 = vpop.f32.mrb[0].mxu0
  %v8491 = vadd.f32 %v8417, %v8490
  %v8492 = vpop.f32.mrb[0].mxu0
  %8493 = vdwg.mxu0
  %8494 = vst [vmem:[%s6] sm:$0xff] %v8491
  // Predicated region
  $region26: #{textcnn_forward.1} parent=0 // pred_check
    _
  $region27: #{textcnn_forward.1} parent=0 // pred_check_branch
    %8496 = sbr.rel (0) target = $region29
  $region28: #{textcnn_forward.1} parent=0 // pred_region
    _
  $region29: #{textcnn_forward.1} parent=0 // pred_fallthru
    _
  // Predicated region
  $region30: #{textcnn_forward.1} parent=0 // pred_check
    _
  $region31: #{textcnn_forward.1} parent=0 // pred_check_branch
    %8498 = sbr.rel (0) target = $region33
  $region32: #{textcnn_forward.1} parent=0 // pred_region
    _
  $region33: #{textcnn_forward.1} parent=0 // pred_fallthru
    _

</llo_original>
